<compile_context>
chip_gen: v7x
topology: tpu7x:2x2x1
jax: 0.10.0
libtpu: 0.0.40
codegen_flags: <defaults>
</compile_context>

<pallas_src>
import functools

import jax
import jax.numpy as jnp
from jax.experimental import pallas as pl
from jax.experimental.pallas import tpu as pltpu


# -----------------------------------------------------------------------------
# Fused decoder kernel: one grid step per batch element.
#   inputs : upsampled x (1,Ho,Wo,Cx) bf16, optional skip e (1,Ho,Wo,Ce) bf16,
#            per-tap folded conv weights (9,Cin,C1)/(9,Cout,C1) bf16, f32 biases,
#            SCSE weights (pre-transposed so every dot is a plain A@B / A@B^T).
#   output : channel-major (1, Cout, Ho*Wo) f32  (lane-dense stores).
#   scratch: bf16 zero-halo padded activation buffers (conv padding=1).
# -----------------------------------------------------------------------------
def _decoder_kernel(has_skip, *refs):
    if has_skip:
        (x_ref, e_ref, w1_ref, b1_ref, w2_ref, b2_ref,
         sw1_ref, sb1_ref, sw2_ref, sb2_ref, sws_ref,
         o_ref, xpad_ref, ypad_ref) = refs
    else:
        (x_ref, w1_ref, b1_ref, w2_ref, b2_ref,
         sw1_ref, sb1_ref, sw2_ref, sb2_ref, sws_ref,
         o_ref, xpad_ref, ypad_ref) = refs
        e_ref = None

    Hp, Wp, Cin = xpad_ref.shape
    Ho, Wo = Hp - 2, Wp - 2
    C1 = ypad_ref.shape[-1]
    Cout = o_ref.shape[1]
    HW = Ho * Wo

    # ---- zero only the 1-pixel halo border (not the whole buffer) ----
    def zero_border(ref, c):
        z_row = jnp.zeros((1, Wp, c), ref.dtype)
        z_col = jnp.zeros((Hp, 1, c), ref.dtype)
        ref[0:1, :, :] = z_row
        ref[Hp - 1:Hp, :, :] = z_row
        ref[:, 0:1, :] = z_col
        ref[:, Wp - 1:Wp, :] = z_col

    zero_border(xpad_ref, Cin)
    zero_border(ypad_ref, C1)

    # ---- stage 0: (upsampled x [, skip]) -> bf16 padded scratch interior ----
    if has_skip:
        xcat = jnp.concatenate([x_ref[0], e_ref[0]], axis=-1)      # (Ho,Wo,Cin)
    else:
        xcat = x_ref[0]
    xpad_ref[1:Ho + 1, 1:Wo + 1, :] = xcat.astype(jnp.bfloat16)

    # ---- conv1 (+folded BN, ReLU): 9 shifted dots accumulated, row-major ----
    acc1 = None
    t = 0
    for kh in range(3):
        for kw in range(3):
            sl = xpad_ref[kh:kh + Ho, kw:kw + Wo, :].reshape(HW, Cin)   # bf16
            d = jnp.dot(sl, w1_ref[t], preferred_element_type=jnp.float32)
            acc1 = d if acc1 is None else acc1 + d
            t += 1
    y1 = jnp.maximum(acc1 + b1_ref[...], 0.0)                      # (HW, C1) f32
    ypad_ref[1:Ho + 1, 1:Wo + 1, :] = y1.reshape(Ho, Wo, C1).astype(jnp.bfloat16)

    # ---- conv2 (+folded BN, ReLU): accumulate directly channel-major --------
    # dot_general(w2_tap (Cout,C1), patch (HW,C1)) contracting the last dims
    # emits (Cout, HW) from the MXU -- no transpose / identity matmul needed.
    acc2 = None
    t = 0
    for kh in range(3):
        for kw in range(3):
            sl = ypad_ref[kh:kh + Ho, kw:kw + Wo, :].reshape(HW, C1)    # bf16
            d = jax.lax.dot_general(w2_ref[t], sl, (((1,), (1,)), ((), ())),
                                    preferred_element_type=jnp.float32)
            acc2 = d if acc2 is None else acc2 + d
            t += 1
    y2 = jnp.maximum(acc2 + b2_ref[...], 0.0)                      # (Cout, HW)

    # ---- ModifiedSCSEBlock (channel-major, all f32) ----
    chn = jnp.mean(y2, axis=1, keepdims=True)                      # (Cout, 1)
    hid = jnp.maximum(
        jnp.dot(sw1_ref[...], chn, preferred_element_type=jnp.float32)
        + sb1_ref[...], 0.0)                                       # (Cr, 1)
    chn_se = jax.nn.sigmoid(
        jnp.dot(sw2_ref[...], hid, preferred_element_type=jnp.float32)
        + sb2_ref[...])                                            # (Cout, 1)
    # spatial SE (1x1 conv C->1, no bias) on the VPU/XLU: broadcast-mul + reduce
    spa_se = jax.nn.sigmoid(jnp.sum(y2 * sws_ref[...], axis=0, keepdims=True))

    o_ref[0] = (y2 * chn_se * spa_se).astype(o_ref.dtype)          # (Cout, HW)


# -----------------------------------------------------------------------------
# Host-side helpers
# -----------------------------------------------------------------------------
def _interp_matrix(n_in, n_out):
    """Row-stochastic bilinear interpolation matrix, align_corners=True."""
    if n_in == 1:
        return jnp.ones((n_out, 1), jnp.float32)
    src = jnp.arange(n_out, dtype=jnp.float32) * (n_in - 1) / (n_out - 1)
    idx = jnp.arange(n_in, dtype=jnp.float32)
    return jnp.maximum(0.0, 1.0 - jnp.abs(src[:, None] - idx[None, :]))


def _fold_bn(conv_w, conv_b, gamma, beta, mean, var, eps=1e-5):
    """Fold eval-mode BN into the conv weight/bias."""
    scale = gamma / jnp.sqrt(var + eps)                 # (Cout,)
    w = conv_w * scale[:, None, None, None]             # (Cout, Cin, 3, 3)
    b = beta + (conv_b - mean) * scale
    return w, b.astype(jnp.float32)


def _taps_rowmajor(w):   # (Cout,Cin,3,3) -> (9, Cin, Cout), tap = kh*3+kw
    return jnp.transpose(w, (2, 3, 1, 0)).reshape(9, w.shape[1], w.shape[0])


def _taps_chanmajor(w):  # (Cout,Cin,3,3) -> (9, Cout, Cin), tap = kh*3+kw
    return jnp.transpose(w, (2, 3, 0, 1)).reshape(9, w.shape[0], w.shape[1])


def _vmem_limit_bytes():
    """Per-generation VMEM request (~3/4 of physical, capped at 100 MiB)."""
    try:
        cap = int(pltpu.get_tpu_info().vmem_capacity_bytes)
    except Exception:
        cap = 64 * 1024 * 1024
    return max(32 * 1024 * 1024, min(cap * 3 // 4, 100 * 1024 * 1024))


@jax.jit
def decoder_forward(params, x_nchw, e_nchw=None):
    B, Cx, H, W = x_nchw.shape
    Ho, Wo = 2 * H, 2 * W
    HW = Ho * Wo

    # bilinear x2 upsample (align_corners=True), emitted directly in NHWC bf16:
    # interpolation + layout change fused into a single XLA einsum, and bf16
    # halves the HBM traffic of the kernel's largest input.
    xup = jnp.einsum("oh,bchw,pw->bopc",
                     _interp_matrix(H, Ho), x_nchw,
                     _interp_matrix(W, Wo)).astype(jnp.bfloat16)

    has_skip = e_nchw is not None
    if has_skip:
        e_nhwc = jnp.transpose(e_nchw, (0, 2, 3, 1)).astype(jnp.bfloat16)
        Ce = e_nhwc.shape[-1]
    else:
        e_nhwc = None
        Ce = 0
    Cin = Cx + Ce

    w1f, b1 = _fold_bn(params["w1"], params["cb1"], params["g1"],
                       params["be1"], params["m1"], params["v1"])
    w2f, b2 = _fold_bn(params["w2"], params["cb2"], params["g2"],
                       params["be2"], params["m2"], params["v2"])
    C1, Cout = int(w1f.shape[0]), int(w2f.shape[0])

    w1 = _taps_rowmajor(w1f).astype(jnp.bfloat16)       # (9, Cin, C1)
    w2 = _taps_chanmajor(w2f).astype(jnp.bfloat16)      # (9, Cout, C1)
    b1 = b1[None, :]                                    # (1, C1)   row-major path
    b2 = b2[:, None]                                    # (Cout, 1) channel-major path

    # SCSE weights pre-transposed so every in-kernel dot is plain A@B / A@B^T.
    sw1t = jnp.transpose(params["se_w1"])               # (Cr, Cout)
    sb1t = jnp.transpose(params["se_b1"])               # (Cr, 1)
    sw2t = jnp.transpose(params["se_w2"])               # (Cout, Cr)
    sb2t = jnp.transpose(params["se_b2"])               # (Cout, 1)
    sws = params["se_ws"]                               # (Cout, 1)
    Cr = int(sw1t.shape[0])

    def resident(a):
        n = a.ndim
        return pl.BlockSpec(tuple(a.shape), lambda b, n=n: (0,) * n)

    inputs = [xup]
    in_specs = [pl.BlockSpec((1, Ho, Wo, Cx), lambda b: (b, 0, 0, 0))]
    if has_skip:
        inputs.append(e_nhwc)
        in_specs.append(pl.BlockSpec((1, Ho, Wo, Ce), lambda b: (b, 0, 0, 0)))
    small = [w1, b1, w2, b2, sw1t, sb1t, sw2t, sb2t, sws]
    inputs += small
    in_specs += [resident(a) for a in small]

    flops = (2 * B * HW * 9 * Cin * C1 + 2 * B * HW * 9 * C1 * Cout
             + 4 * B * HW * Cout + 4 * B * Cout * Cr)
    transcendentals = B * (HW + Cout)
    bytes_accessed = (2 * B * HW * (Cx + Ce) + 4 * B * Cout * HW
                      + 2 * (9 * Cin * C1 + 9 * C1 * Cout)
                      + 4 * (2 * Cout * Cr + 2 * Cr + 3 * Cout + C1))

    out_cmaj = pl.pallas_call(
        functools.partial(_decoder_kernel, has_skip),
        out_shape=jax.ShapeDtypeStruct((B, Cout, HW), jnp.float32),
        grid_spec=pltpu.PrefetchScalarGridSpec(
            num_scalar_prefetch=0,
            grid=(B,),                                  # per-batch blocks: pipelined
            in_specs=in_specs,
            out_specs=pl.BlockSpec((1, Cout, HW), lambda b: (b, 0, 0)),
            scratch_shapes=[
                pltpu.VMEM((Ho + 2, Wo + 2, Cin), jnp.bfloat16),   # padded input
                pltpu.VMEM((Ho + 2, Wo + 2, C1), jnp.bfloat16),    # padded conv1 out
            ]),
        compiler_params=pltpu.CompilerParams(
            dimension_semantics=("parallel",),
            vmem_limit_bytes=_vmem_limit_bytes()),
        cost_estimate=pl.CostEstimate(flops=int(flops),
                                      transcendentals=int(transcendentals),
                                      bytes_accessed=int(bytes_accessed)),
    )(*inputs)

    # channel-major kernel output -> NCHW via a free (contiguous) reshape.
    return out_cmaj.reshape(B, Cout, Ho, Wo)


# -----------------------------------------------------------------------------
# Pure-JAX reference (mirrors the PyTorch module, eval-mode BN) for validation
# -----------------------------------------------------------------------------
def decoder_reference(params, x, e=None):
    B, Cx, H, W = x.shape
    Ho, Wo = 2 * H, 2 * W
    xup = jnp.einsum("oh,bchw,pw->bcop",
                     _interp_matrix(H, Ho), x, _interp_matrix(W, Wo))
    if e is not None:
        xup = jnp.concatenate([xup, e], axis=1)

    def convbn_relu(z, w, cb, g, be, m, v, eps=1e-5):
        y = jax.lax.conv_general_dilated(
            z, w, window_strides=(1, 1), padding=((1, 1), (1, 1)),
            dimension_numbers=("NCHW", "OIHW", "NCHW"))
        y = y + cb[None, :, None, None]
        y = (y - m[None, :, None, None]) / jnp.sqrt(v[None, :, None, None] + eps)
        y = g[None, :, None, None] * y + be[None, :, None, None]
        return jax.nn.relu(y)

    y = convbn_relu(xup, params["w1"], params["cb1"], params["g1"],
                    params["be1"], params["m1"], params["v1"])
    y = convbn_relu(y, params["w2"], params["cb2"], params["g2"],
                    params["be2"], params["m2"], params["v2"])
    chn = jnp.mean(y, axis=(2, 3))
    hid = jax.nn.relu(chn @ params["se_w1"] + params["se_b1"])
    chn_se = jax.nn.sigmoid(hid @ params["se_w2"] + params["se_b2"])
    spa_se = jax.nn.sigmoid(jnp.einsum("bchw,co->bohw", y, params["se_ws"]))
    return y * chn_se[:, :, None, None] * spa_se


# -----------------------------------------------------------------------------
# Parameter construction (independent PRNG keys for every tensor)
# -----------------------------------------------------------------------------
def make_decoder_params(key, in_channels, channels, out_channels, reduction=2):
    ks = jax.random.split(key, 17)
    cr = max(1, out_channels // reduction)

    def u(k, shape, s=0.1):
        return jax.random.uniform(k, shape, jnp.float32, -s, s)

    p = {}
    # conv1 + bn1
    p["w1"] = u(ks[0], (channels, in_channels, 3, 3))
    p["cb1"] = u(ks[1], (channels,))
    p["g1"] = 1.0 + u(ks[2], (channels,))
    p["be1"] = u(ks[3], (channels,))
    p["m1"] = u(ks[4], (channels,))
    p["v1"] = 1.0 + jnp.abs(u(ks[5], (channels,)))
    # conv2 + bn2
    p["w2"] = u(ks[6], (out_channels, channels, 3, 3))
    p["cb2"] = u(ks[7], (out_channels,))
    p["g2"] = 1.0 + u(ks[8], (out_channels,))
    p["be2"] = u(ks[9], (out_channels,))
    p["m2"] = u(ks[10], (out_channels,))
    p["v2"] = 1.0 + jnp.abs(u(ks[11], (out_channels,)))
    # SCSE
    p["se_w1"] = u(ks[12], (out_channels, cr))      # Linear C -> C/r  (x @ W)
    p["se_b1"] = u(ks[13], (1, cr))
    p["se_w2"] = u(ks[14], (cr, out_channels))      # Linear C/r -> C
    p["se_b2"] = u(ks[15], (1, out_channels))
    p["se_ws"] = u(ks[16], (out_channels, 1))       # 1x1 conv C -> 1, no bias
    return p


if __name__ == "__main__":
    key = jax.random.PRNGKey(0)
    k_x, k_e, k_p = jax.random.split(key, 3)

    B, Cx, H, W = 2, 4, 8, 8          # low-res feature map
    Ce = 4                            # skip-connection channels
    in_channels = Cx + Ce             # after upsample + concat
    channels = 8
    out_channels = 8

    x = jax.random.normal(k_x, (B, Cx, H, W), jnp.float32)
    e = jax.random.normal(k_e, (B, Ce, 2 * H, 2 * W), jnp.float32)
    params = make_decoder_params(k_p, in_channels, channels, out_channels,
                                 reduction=2)

    out = jax.block_until_ready(decoder_forward(params, x, e))
    assert out.shape == (B, out_channels, 2 * H, 2 * W), out.shape
    assert bool(jnp.all(jnp.isfinite(out)))

    # loose numerical check vs. an f32 XLA reference (kernel uses bf16 matmuls)
    ref = jax.block_until_ready(decoder_reference(params, x, e))
    max_err = float(jnp.max(jnp.abs(out - ref)))
    scale = float(jnp.max(jnp.abs(ref))) + 1e-6
    assert max_err <= 0.1 * scale, (max_err, scale)

    print("KERNEL_OK")
</pallas_src>

<mosaic_0001>
module attributes {stable_mosaic.version = 11 : i64} {
  func.func @_decoder_kernel(%arg0: i32, %arg1: memref<1x16x16x4xbf16, #tpu.memory_space<vmem>>, %arg2: memref<1x16x16x4xbf16, #tpu.memory_space<vmem>>, %arg3: memref<9x8x8xbf16, #tpu.memory_space<vmem>>, %arg4: memref<1x8xf32, #tpu.memory_space<vmem>>, %arg5: memref<9x8x8xbf16, #tpu.memory_space<vmem>>, %arg6: memref<8x1xf32, #tpu.memory_space<vmem>>, %arg7: memref<4x8xf32, #tpu.memory_space<vmem>>, %arg8: memref<4x1xf32, #tpu.memory_space<vmem>>, %arg9: memref<8x4xf32, #tpu.memory_space<vmem>>, %arg10: memref<8x1xf32, #tpu.memory_space<vmem>>, %arg11: memref<8x1xf32, #tpu.memory_space<vmem>>, %arg12: memref<1x8x256xf32, #tpu.memory_space<vmem>>, %arg13: memref<18x18x8xbf16, #tpu.memory_space<vmem>>, %arg14: memref<18x18x8xbf16, #tpu.memory_space<vmem>>) attributes {dimension_semantics = [#tpu.dimension_semantics<parallel>], iteration_bounds = array<i64: 2>, scalar_prefetch = 0 : i64, scratch_operands = 2 : i64, tpu.core_type = #tpu.core_type<tc>, window_params = [{transform_indices = @transform_0, window_bounds = array<i64: 1, 16, 16, 4>}, {transform_indices = @transform_1, window_bounds = array<i64: 1, 16, 16, 4>}, {pipeline_mode = #tpu.pipeline_mode<synchronous>, transform_indices = @transform_2, window_bounds = array<i64: 9, 8, 8>}, {pipeline_mode = #tpu.pipeline_mode<synchronous>, transform_indices = @transform_3, window_bounds = array<i64: 1, 8>}, {pipeline_mode = #tpu.pipeline_mode<synchronous>, transform_indices = @transform_4, window_bounds = array<i64: 9, 8, 8>}, {pipeline_mode = #tpu.pipeline_mode<synchronous>, transform_indices = @transform_5, window_bounds = array<i64: 8, 1>}, {pipeline_mode = #tpu.pipeline_mode<synchronous>, transform_indices = @transform_6, window_bounds = array<i64: 4, 8>}, {pipeline_mode = #tpu.pipeline_mode<synchronous>, transform_indices = @transform_7, window_bounds = array<i64: 4, 1>}, {pipeline_mode = #tpu.pipeline_mode<synchronous>, transform_indices = @transform_8, window_bounds = array<i64: 8, 4>}, {pipeline_mode = #tpu.pipeline_mode<synchronous>, transform_indices = @transform_9, window_bounds = array<i64: 8, 1>}, {pipeline_mode = #tpu.pipeline_mode<synchronous>, transform_indices = @transform_10, window_bounds = array<i64: 8, 1>}, {transform_indices = @transform_11, window_bounds = array<i64: 1, 8, 256>}]} {
    %cst = arith.constant 0.000000e+00 : bf16
    %0 = vector.broadcast %cst : bf16 to vector<1x18x8xbf16>
    %cst_0 = arith.constant 0.000000e+00 : bf16
    %1 = vector.broadcast %cst_0 : bf16 to vector<18x1x8xbf16>
    %c0 = arith.constant 0 : index
    %c0_1 = arith.constant 0 : index
    %c0_2 = arith.constant 0 : index
    %2 = vector.load %arg13[%c0, %c0_1, %c0_2] : memref<18x18x8xbf16, #tpu.memory_space<vmem>>, vector<1x18x8xbf16>
    tpu.vector_store %arg13[%c0, %c0_1, %c0_2], %0 {strides = array<i32>} : memref<18x18x8xbf16, #tpu.memory_space<vmem>>, vector<1x18x8xbf16>,
    %c17 = arith.constant 17 : index
    %c0_3 = arith.constant 0 : index
    %c0_4 = arith.constant 0 : index
    %3 = vector.load %arg13[%c17, %c0_3, %c0_4] : memref<18x18x8xbf16, #tpu.memory_space<vmem>>, vector<1x18x8xbf16>
    tpu.vector_store %arg13[%c17, %c0_3, %c0_4], %0 {strides = array<i32>} : memref<18x18x8xbf16, #tpu.memory_space<vmem>>, vector<1x18x8xbf16>,
    %c0_5 = arith.constant 0 : index
    %c0_6 = arith.constant 0 : index
    %c0_7 = arith.constant 0 : index
    %4 = vector.load %arg13[%c0_5, %c0_6, %c0_7] : memref<18x18x8xbf16, #tpu.memory_space<vmem>>, vector<18x1x8xbf16>
    tpu.vector_store %arg13[%c0_5, %c0_6, %c0_7], %1 {strides = array<i32>} : memref<18x18x8xbf16, #tpu.memory_space<vmem>>, vector<18x1x8xbf16>,
    %c0_8 = arith.constant 0 : index
    %c17_9 = arith.constant 17 : index
    %c0_10 = arith.constant 0 : index
    %5 = vector.load %arg13[%c0_8, %c17_9, %c0_10] : memref<18x18x8xbf16, #tpu.memory_space<vmem>>, vector<18x1x8xbf16>
    tpu.vector_store %arg13[%c0_8, %c17_9, %c0_10], %1 {strides = array<i32>} : memref<18x18x8xbf16, #tpu.memory_space<vmem>>, vector<18x1x8xbf16>,
    %cst_11 = arith.constant 0.000000e+00 : bf16
    %6 = vector.broadcast %cst_11 : bf16 to vector<1x18x8xbf16>
    %cst_12 = arith.constant 0.000000e+00 : bf16
    %7 = vector.broadcast %cst_12 : bf16 to vector<18x1x8xbf16>
    %c0_13 = arith.constant 0 : index
    %c0_14 = arith.constant 0 : index
    %c0_15 = arith.constant 0 : index
    %8 = vector.load %arg14[%c0_13, %c0_14, %c0_15] : memref<18x18x8xbf16, #tpu.memory_space<vmem>>, vector<1x18x8xbf16>
    tpu.vector_store %arg14[%c0_13, %c0_14, %c0_15], %6 {strides = array<i32>} : memref<18x18x8xbf16, #tpu.memory_space<vmem>>, vector<1x18x8xbf16>,
    %c17_16 = arith.constant 17 : index
    %c0_17 = arith.constant 0 : index
    %c0_18 = arith.constant 0 : index
    %9 = vector.load %arg14[%c17_16, %c0_17, %c0_18] : memref<18x18x8xbf16, #tpu.memory_space<vmem>>, vector<1x18x8xbf16>
    tpu.vector_store %arg14[%c17_16, %c0_17, %c0_18], %6 {strides = array<i32>} : memref<18x18x8xbf16, #tpu.memory_space<vmem>>, vector<1x18x8xbf16>,
    %c0_19 = arith.constant 0 : index
    %c0_20 = arith.constant 0 : index
    %c0_21 = arith.constant 0 : index
    %10 = vector.load %arg14[%c0_19, %c0_20, %c0_21] : memref<18x18x8xbf16, #tpu.memory_space<vmem>>, vector<18x1x8xbf16>
    tpu.vector_store %arg14[%c0_19, %c0_20, %c0_21], %7 {strides = array<i32>} : memref<18x18x8xbf16, #tpu.memory_space<vmem>>, vector<18x1x8xbf16>,
    %c0_22 = arith.constant 0 : index
    %c17_23 = arith.constant 17 : index
    %c0_24 = arith.constant 0 : index
    %11 = vector.load %arg14[%c0_22, %c17_23, %c0_24] : memref<18x18x8xbf16, #tpu.memory_space<vmem>>, vector<18x1x8xbf16>
    tpu.vector_store %arg14[%c0_22, %c17_23, %c0_24], %7 {strides = array<i32>} : memref<18x18x8xbf16, #tpu.memory_space<vmem>>, vector<18x1x8xbf16>,
    %c0_25 = arith.constant 0 : index
    %c0_26 = arith.constant 0 : index
    %c0_27 = arith.constant 0 : index
    %c0_28 = arith.constant 0 : index
    %12 = vector.load %arg1[%c0_25, %c0_26, %c0_27, %c0_28] : memref<1x16x16x4xbf16, #tpu.memory_space<vmem>>, vector<1x16x16x4xbf16>
    %13 = vector.shape_cast %12 : vector<1x16x16x4xbf16> to vector<16x16x4xbf16>
    %c0_29 = arith.constant 0 : index
    %c0_30 = arith.constant 0 : index
    %c0_31 = arith.constant 0 : index
    %c0_32 = arith.constant 0 : index
    %14 = vector.load %arg2[%c0_29, %c0_30, %c0_31, %c0_32] : memref<1x16x16x4xbf16, #tpu.memory_space<vmem>>, vector<1x16x16x4xbf16>
    %15 = vector.shape_cast %14 : vector<1x16x16x4xbf16> to vector<16x16x4xbf16>
    %16 = tpu.concatenate %13, %15 in 2 : vector<16x16x4xbf16>, vector<16x16x4xbf16> -> vector<16x16x8xbf16>
    %c1 = arith.constant 1 : index
    %c1_33 = arith.constant 1 : index
    %c0_34 = arith.constant 0 : index
    %17 = vector.load %arg13[%c1, %c1_33, %c0_34] : memref<18x18x8xbf16, #tpu.memory_space<vmem>>, vector<16x16x8xbf16>
    tpu.vector_store %arg13[%c1, %c1_33, %c0_34], %16 {strides = array<i32>} : memref<18x18x8xbf16, #tpu.memory_space<vmem>>, vector<16x16x8xbf16>,
    %c0_35 = arith.constant 0 : index
    %c0_36 = arith.constant 0 : index
    %c0_37 = arith.constant 0 : index
    %18 = vector.load %arg13[%c0_35, %c0_36, %c0_37] : memref<18x18x8xbf16, #tpu.memory_space<vmem>>, vector<16x16x8xbf16>
    %19 = vector.shape_cast %18 : vector<16x16x8xbf16> to vector<256x8xbf16>
    %c0_38 = arith.constant 0 : index
    %c0_39 = arith.constant 0 : index
    %c0_40 = arith.constant 0 : index
    %20 = vector.load %arg3[%c0_38, %c0_39, %c0_40] : memref<9x8x8xbf16, #tpu.memory_space<vmem>>, vector<1x8x8xbf16>
    %21 = vector.shape_cast %20 : vector<1x8x8xbf16> to vector<8x8xbf16>
    %cst_41 = arith.constant dense<0.000000e+00> : vector<256x8xf32>
    %22 = tpu.matmul %19, %21, %cst_41 {dimension_numbers = #tpu.dot_dimension_numbers<[1], [0], [0], [1], [0, 0, 1, 1], [], []>} : vector<256x8xbf16>, vector<8x8xbf16>, vector<256x8xf32> -> vector<256x8xf32>
    %c0_42 = arith.constant 0 : index
    %c1_43 = arith.constant 1 : index
    %c0_44 = arith.constant 0 : index
    %23 = vector.load %arg13[%c0_42, %c1_43, %c0_44] : memref<18x18x8xbf16, #tpu.memory_space<vmem>>, vector<16x16x8xbf16>
    %24 = vector.shape_cast %23 : vector<16x16x8xbf16> to vector<256x8xbf16>
    %c1_45 = arith.constant 1 : index
    %c0_46 = arith.constant 0 : index
    %c0_47 = arith.constant 0 : index
    %25 = vector.load %arg3[%c1_45, %c0_46, %c0_47] : memref<9x8x8xbf16, #tpu.memory_space<vmem>>, vector<1x8x8xbf16>
    %26 = vector.shape_cast %25 : vector<1x8x8xbf16> to vector<8x8xbf16>
    %cst_48 = arith.constant dense<0.000000e+00> : vector<256x8xf32>
    %27 = tpu.matmul %24, %26, %cst_48 {dimension_numbers = #tpu.dot_dimension_numbers<[1], [0], [0], [1], [0, 0, 1, 1], [], []>} : vector<256x8xbf16>, vector<8x8xbf16>, vector<256x8xf32> -> vector<256x8xf32>
    %28 = arith.addf %22, %27 : vector<256x8xf32>
    %c0_49 = arith.constant 0 : index
    %c2 = arith.constant 2 : index
    %c0_50 = arith.constant 0 : index
    %29 = vector.load %arg13[%c0_49, %c2, %c0_50] : memref<18x18x8xbf16, #tpu.memory_space<vmem>>, vector<16x16x8xbf16>
    %30 = vector.shape_cast %29 : vector<16x16x8xbf16> to vector<256x8xbf16>
    %c2_51 = arith.constant 2 : index
    %c0_52 = arith.constant 0 : index
    %c0_53 = arith.constant 0 : index
    %31 = vector.load %arg3[%c2_51, %c0_52, %c0_53] : memref<9x8x8xbf16, #tpu.memory_space<vmem>>, vector<1x8x8xbf16>
    %32 = vector.shape_cast %31 : vector<1x8x8xbf16> to vector<8x8xbf16>
    %cst_54 = arith.constant dense<0.000000e+00> : vector<256x8xf32>
    %33 = tpu.matmul %30, %32, %cst_54 {dimension_numbers = #tpu.dot_dimension_numbers<[1], [0], [0], [1], [0, 0, 1, 1], [], []>} : vector<256x8xbf16>, vector<8x8xbf16>, vector<256x8xf32> -> vector<256x8xf32>
    %34 = arith.addf %28, %33 : vector<256x8xf32>
    %c1_55 = arith.constant 1 : index
    %c0_56 = arith.constant 0 : index
    %c0_57 = arith.constant 0 : index
    %35 = vector.load %arg13[%c1_55, %c0_56, %c0_57] : memref<18x18x8xbf16, #tpu.memory_space<vmem>>, vector<16x16x8xbf16>
    %36 = vector.shape_cast %35 : vector<16x16x8xbf16> to vector<256x8xbf16>
    %c3 = arith.constant 3 : index
    %c0_58 = arith.constant 0 : index
    %c0_59 = arith.constant 0 : index
    %37 = vector.load %arg3[%c3, %c0_58, %c0_59] : memref<9x8x8xbf16, #tpu.memory_space<vmem>>, vector<1x8x8xbf16>
    %38 = vector.shape_cast %37 : vector<1x8x8xbf16> to vector<8x8xbf16>
    %cst_60 = arith.constant dense<0.000000e+00> : vector<256x8xf32>
    %39 = tpu.matmul %36, %38, %cst_60 {dimension_numbers = #tpu.dot_dimension_numbers<[1], [0], [0], [1], [0, 0, 1, 1], [], []>} : vector<256x8xbf16>, vector<8x8xbf16>, vector<256x8xf32> -> vector<256x8xf32>
    %40 = arith.addf %34, %39 : vector<256x8xf32>
    %c1_61 = arith.constant 1 : index
    %c1_62 = arith.constant 1 : index
    %c0_63 = arith.constant 0 : index
    %41 = vector.load %arg13[%c1_61, %c1_62, %c0_63] : memref<18x18x8xbf16, #tpu.memory_space<vmem>>, vector<16x16x8xbf16>
    %42 = vector.shape_cast %41 : vector<16x16x8xbf16> to vector<256x8xbf16>
    %c4 = arith.constant 4 : index
    %c0_64 = arith.constant 0 : index
    %c0_65 = arith.constant 0 : index
    %43 = vector.load %arg3[%c4, %c0_64, %c0_65] : memref<9x8x8xbf16, #tpu.memory_space<vmem>>, vector<1x8x8xbf16>
    %44 = vector.shape_cast %43 : vector<1x8x8xbf16> to vector<8x8xbf16>
    %cst_66 = arith.constant dense<0.000000e+00> : vector<256x8xf32>
    %45 = tpu.matmul %42, %44, %cst_66 {dimension_numbers = #tpu.dot_dimension_numbers<[1], [0], [0], [1], [0, 0, 1, 1], [], []>} : vector<256x8xbf16>, vector<8x8xbf16>, vector<256x8xf32> -> vector<256x8xf32>
    %46 = arith.addf %40, %45 : vector<256x8xf32>
    %c1_67 = arith.constant 1 : index
    %c2_68 = arith.constant 2 : index
    %c0_69 = arith.constant 0 : index
    %47 = vector.load %arg13[%c1_67, %c2_68, %c0_69] : memref<18x18x8xbf16, #tpu.memory_space<vmem>>, vector<16x16x8xbf16>
    %48 = vector.shape_cast %47 : vector<16x16x8xbf16> to vector<256x8xbf16>
    %c5 = arith.constant 5 : index
    %c0_70 = arith.constant 0 : index
    %c0_71 = arith.constant 0 : index
    %49 = vector.load %arg3[%c5, %c0_70, %c0_71] : memref<9x8x8xbf16, #tpu.memory_space<vmem>>, vector<1x8x8xbf16>
    %50 = vector.shape_cast %49 : vector<1x8x8xbf16> to vector<8x8xbf16>
    %cst_72 = arith.constant dense<0.000000e+00> : vector<256x8xf32>
    %51 = tpu.matmul %48, %50, %cst_72 {dimension_numbers = #tpu.dot_dimension_numbers<[1], [0], [0], [1], [0, 0, 1, 1], [], []>} : vector<256x8xbf16>, vector<8x8xbf16>, vector<256x8xf32> -> vector<256x8xf32>
    %52 = arith.addf %46, %51 : vector<256x8xf32>
    %c2_73 = arith.constant 2 : index
    %c0_74 = arith.constant 0 : index
    %c0_75 = arith.constant 0 : index
    %53 = vector.load %arg13[%c2_73, %c0_74, %c0_75] : memref<18x18x8xbf16, #tpu.memory_space<vmem>>, vector<16x16x8xbf16>
    %54 = vector.shape_cast %53 : vector<16x16x8xbf16> to vector<256x8xbf16>
    %c6 = arith.constant 6 : index
    %c0_76 = arith.constant 0 : index
    %c0_77 = arith.constant 0 : index
    %55 = vector.load %arg3[%c6, %c0_76, %c0_77] : memref<9x8x8xbf16, #tpu.memory_space<vmem>>, vector<1x8x8xbf16>
    %56 = vector.shape_cast %55 : vector<1x8x8xbf16> to vector<8x8xbf16>
    %cst_78 = arith.constant dense<0.000000e+00> : vector<256x8xf32>
    %57 = tpu.matmul %54, %56, %cst_78 {dimension_numbers = #tpu.dot_dimension_numbers<[1], [0], [0], [1], [0, 0, 1, 1], [], []>} : vector<256x8xbf16>, vector<8x8xbf16>, vector<256x8xf32> -> vector<256x8xf32>
    %58 = arith.addf %52, %57 : vector<256x8xf32>
    %c2_79 = arith.constant 2 : index
    %c1_80 = arith.constant 1 : index
    %c0_81 = arith.constant 0 : index
    %59 = vector.load %arg13[%c2_79, %c1_80, %c0_81] : memref<18x18x8xbf16, #tpu.memory_space<vmem>>, vector<16x16x8xbf16>
    %60 = vector.shape_cast %59 : vector<16x16x8xbf16> to vector<256x8xbf16>
    %c7 = arith.constant 7 : index
    %c0_82 = arith.constant 0 : index
    %c0_83 = arith.constant 0 : index
    %61 = vector.load %arg3[%c7, %c0_82, %c0_83] : memref<9x8x8xbf16, #tpu.memory_space<vmem>>, vector<1x8x8xbf16>
    %62 = vector.shape_cast %61 : vector<1x8x8xbf16> to vector<8x8xbf16>
    %cst_84 = arith.constant dense<0.000000e+00> : vector<256x8xf32>
    %63 = tpu.matmul %60, %62, %cst_84 {dimension_numbers = #tpu.dot_dimension_numbers<[1], [0], [0], [1], [0, 0, 1, 1], [], []>} : vector<256x8xbf16>, vector<8x8xbf16>, vector<256x8xf32> -> vector<256x8xf32>
    %64 = arith.addf %58, %63 : vector<256x8xf32>
    %c2_85 = arith.constant 2 : index
    %c2_86 = arith.constant 2 : index
    %c0_87 = arith.constant 0 : index
    %65 = vector.load %arg13[%c2_85, %c2_86, %c0_87] : memref<18x18x8xbf16, #tpu.memory_space<vmem>>, vector<16x16x8xbf16>
    %66 = vector.shape_cast %65 : vector<16x16x8xbf16> to vector<256x8xbf16>
    %c8 = arith.constant 8 : index
    %c0_88 = arith.constant 0 : index
    %c0_89 = arith.constant 0 : index
    %67 = vector.load %arg3[%c8, %c0_88, %c0_89] : memref<9x8x8xbf16, #tpu.memory_space<vmem>>, vector<1x8x8xbf16>
    %68 = vector.shape_cast %67 : vector<1x8x8xbf16> to vector<8x8xbf16>
    %cst_90 = arith.constant dense<0.000000e+00> : vector<256x8xf32>
    %69 = tpu.matmul %66, %68, %cst_90 {dimension_numbers = #tpu.dot_dimension_numbers<[1], [0], [0], [1], [0, 0, 1, 1], [], []>} : vector<256x8xbf16>, vector<8x8xbf16>, vector<256x8xf32> -> vector<256x8xf32>
    %70 = arith.addf %64, %69 : vector<256x8xf32>
    %c0_91 = arith.constant 0 : index
    %c0_92 = arith.constant 0 : index
    %71 = vector.load %arg4[%c0_91, %c0_92] : memref<1x8xf32, #tpu.memory_space<vmem>>, vector<1x8xf32>
    %72 = vector.broadcast %71 : vector<1x8xf32> to vector<256x8xf32>
    %73 = arith.addf %70, %72 : vector<256x8xf32>
    %cst_93 = arith.constant 0.000000e+00 : f32
    %74 = vector.broadcast %cst_93 : f32 to vector<256x8xf32>
    %75 = arith.maximumf %73, %74 : vector<256x8xf32>
    %76 = vector.shape_cast %75 : vector<256x8xf32> to vector<16x16x8xf32>
    %77 = arith.truncf %76 : vector<16x16x8xf32> to vector<16x16x8xbf16>
    %c1_94 = arith.constant 1 : index
    %c1_95 = arith.constant 1 : index
    %c0_96 = arith.constant 0 : index
    %78 = vector.load %arg14[%c1_94, %c1_95, %c0_96] : memref<18x18x8xbf16, #tpu.memory_space<vmem>>, vector<16x16x8xbf16>
    tpu.vector_store %arg14[%c1_94, %c1_95, %c0_96], %77 {strides = array<i32>} : memref<18x18x8xbf16, #tpu.memory_space<vmem>>, vector<16x16x8xbf16>,
    %c0_97 = arith.constant 0 : index
    %c0_98 = arith.constant 0 : index
    %c0_99 = arith.constant 0 : index
    %79 = vector.load %arg14[%c0_97, %c0_98, %c0_99] : memref<18x18x8xbf16, #tpu.memory_space<vmem>>, vector<16x16x8xbf16>
    %80 = vector.shape_cast %79 : vector<16x16x8xbf16> to vector<256x8xbf16>
    %c0_100 = arith.constant 0 : index
    %c0_101 = arith.constant 0 : index
    %c0_102 = arith.constant 0 : index
    %81 = vector.load %arg5[%c0_100, %c0_101, %c0_102] : memref<9x8x8xbf16, #tpu.memory_space<vmem>>, vector<1x8x8xbf16>
    %82 = vector.shape_cast %81 : vector<1x8x8xbf16> to vector<8x8xbf16>
    %cst_103 = arith.constant dense<0.000000e+00> : vector<8x256xf32>
    %83 = tpu.matmul %82, %80, %cst_103 {dimension_numbers = #tpu.dot_dimension_numbers<[1], [1], [0], [0], [0, 0, 1, 0], [], []>} : vector<8x8xbf16>, vector<256x8xbf16>, vector<8x256xf32> -> vector<8x256xf32>
    %c0_104 = arith.constant 0 : index
    %c1_105 = arith.constant 1 : index
    %c0_106 = arith.constant 0 : index
    %84 = vector.load %arg14[%c0_104, %c1_105, %c0_106] : memref<18x18x8xbf16, #tpu.memory_space<vmem>>, vector<16x16x8xbf16>
    %85 = vector.shape_cast %84 : vector<16x16x8xbf16> to vector<256x8xbf16>
    %c1_107 = arith.constant 1 : index
    %c0_108 = arith.constant 0 : index
    %c0_109 = arith.constant 0 : index
    %86 = vector.load %arg5[%c1_107, %c0_108, %c0_109] : memref<9x8x8xbf16, #tpu.memory_space<vmem>>, vector<1x8x8xbf16>
    %87 = vector.shape_cast %86 : vector<1x8x8xbf16> to vector<8x8xbf16>
    %cst_110 = arith.constant dense<0.000000e+00> : vector<8x256xf32>
    %88 = tpu.matmul %87, %85, %cst_110 {dimension_numbers = #tpu.dot_dimension_numbers<[1], [1], [0], [0], [0, 0, 1, 0], [], []>} : vector<8x8xbf16>, vector<256x8xbf16>, vector<8x256xf32> -> vector<8x256xf32>
    %89 = arith.addf %83, %88 : vector<8x256xf32>
    %c0_111 = arith.constant 0 : index
    %c2_112 = arith.constant 2 : index
    %c0_113 = arith.constant 0 : index
    %90 = vector.load %arg14[%c0_111, %c2_112, %c0_113] : memref<18x18x8xbf16, #tpu.memory_space<vmem>>, vector<16x16x8xbf16>
    %91 = vector.shape_cast %90 : vector<16x16x8xbf16> to vector<256x8xbf16>
    %c2_114 = arith.constant 2 : index
    %c0_115 = arith.constant 0 : index
    %c0_116 = arith.constant 0 : index
    %92 = vector.load %arg5[%c2_114, %c0_115, %c0_116] : memref<9x8x8xbf16, #tpu.memory_space<vmem>>, vector<1x8x8xbf16>
    %93 = vector.shape_cast %92 : vector<1x8x8xbf16> to vector<8x8xbf16>
    %cst_117 = arith.constant dense<0.000000e+00> : vector<8x256xf32>
    %94 = tpu.matmul %93, %91, %cst_117 {dimension_numbers = #tpu.dot_dimension_numbers<[1], [1], [0], [0], [0, 0, 1, 0], [], []>} : vector<8x8xbf16>, vector<256x8xbf16>, vector<8x256xf32> -> vector<8x256xf32>
    %95 = arith.addf %89, %94 : vector<8x256xf32>
    %c1_118 = arith.constant 1 : index
    %c0_119 = arith.constant 0 : index
    %c0_120 = arith.constant 0 : index
    %96 = vector.load %arg14[%c1_118, %c0_119, %c0_120] : memref<18x18x8xbf16, #tpu.memory_space<vmem>>, vector<16x16x8xbf16>
    %97 = vector.shape_cast %96 : vector<16x16x8xbf16> to vector<256x8xbf16>
    %c3_121 = arith.constant 3 : index
    %c0_122 = arith.constant 0 : index
    %c0_123 = arith.constant 0 : index
    %98 = vector.load %arg5[%c3_121, %c0_122, %c0_123] : memref<9x8x8xbf16, #tpu.memory_space<vmem>>, vector<1x8x8xbf16>
    %99 = vector.shape_cast %98 : vector<1x8x8xbf16> to vector<8x8xbf16>
    %cst_124 = arith.constant dense<0.000000e+00> : vector<8x256xf32>
    %100 = tpu.matmul %99, %97, %cst_124 {dimension_numbers = #tpu.dot_dimension_numbers<[1], [1], [0], [0], [0, 0, 1, 0], [], []>} : vector<8x8xbf16>, vector<256x8xbf16>, vector<8x256xf32> -> vector<8x256xf32>
    %101 = arith.addf %95, %100 : vector<8x256xf32>
    %c1_125 = arith.constant 1 : index
    %c1_126 = arith.constant 1 : index
    %c0_127 = arith.constant 0 : index
    %102 = vector.load %arg14[%c1_125, %c1_126, %c0_127] : memref<18x18x8xbf16, #tpu.memory_space<vmem>>, vector<16x16x8xbf16>
    %103 = vector.shape_cast %102 : vector<16x16x8xbf16> to vector<256x8xbf16>
    %c4_128 = arith.constant 4 : index
    %c0_129 = arith.constant 0 : index
    %c0_130 = arith.constant 0 : index
    %104 = vector.load %arg5[%c4_128, %c0_129, %c0_130] : memref<9x8x8xbf16, #tpu.memory_space<vmem>>, vector<1x8x8xbf16>
    %105 = vector.shape_cast %104 : vector<1x8x8xbf16> to vector<8x8xbf16>
    %cst_131 = arith.constant dense<0.000000e+00> : vector<8x256xf32>
    %106 = tpu.matmul %105, %103, %cst_131 {dimension_numbers = #tpu.dot_dimension_numbers<[1], [1], [0], [0], [0, 0, 1, 0], [], []>} : vector<8x8xbf16>, vector<256x8xbf16>, vector<8x256xf32> -> vector<8x256xf32>
    %107 = arith.addf %101, %106 : vector<8x256xf32>
    %c1_132 = arith.constant 1 : index
    %c2_133 = arith.constant 2 : index
    %c0_134 = arith.constant 0 : index
    %108 = vector.load %arg14[%c1_132, %c2_133, %c0_134] : memref<18x18x8xbf16, #tpu.memory_space<vmem>>, vector<16x16x8xbf16>
    %109 = vector.shape_cast %108 : vector<16x16x8xbf16> to vector<256x8xbf16>
    %c5_135 = arith.constant 5 : index
    %c0_136 = arith.constant 0 : index
    %c0_137 = arith.constant 0 : index
    %110 = vector.load %arg5[%c5_135, %c0_136, %c0_137] : memref<9x8x8xbf16, #tpu.memory_space<vmem>>, vector<1x8x8xbf16>
    %111 = vector.shape_cast %110 : vector<1x8x8xbf16> to vector<8x8xbf16>
    %cst_138 = arith.constant dense<0.000000e+00> : vector<8x256xf32>
    %112 = tpu.matmul %111, %109, %cst_138 {dimension_numbers = #tpu.dot_dimension_numbers<[1], [1], [0], [0], [0, 0, 1, 0], [], []>} : vector<8x8xbf16>, vector<256x8xbf16>, vector<8x256xf32> -> vector<8x256xf32>
    %113 = arith.addf %107, %112 : vector<8x256xf32>
    %c2_139 = arith.constant 2 : index
    %c0_140 = arith.constant 0 : index
    %c0_141 = arith.constant 0 : index
    %114 = vector.load %arg14[%c2_139, %c0_140, %c0_141] : memref<18x18x8xbf16, #tpu.memory_space<vmem>>, vector<16x16x8xbf16>
    %115 = vector.shape_cast %114 : vector<16x16x8xbf16> to vector<256x8xbf16>
    %c6_142 = arith.constant 6 : index
    %c0_143 = arith.constant 0 : index
    %c0_144 = arith.constant 0 : index
    %116 = vector.load %arg5[%c6_142, %c0_143, %c0_144] : memref<9x8x8xbf16, #tpu.memory_space<vmem>>, vector<1x8x8xbf16>
    %117 = vector.shape_cast %116 : vector<1x8x8xbf16> to vector<8x8xbf16>
    %cst_145 = arith.constant dense<0.000000e+00> : vector<8x256xf32>
    %118 = tpu.matmul %117, %115, %cst_145 {dimension_numbers = #tpu.dot_dimension_numbers<[1], [1], [0], [0], [0, 0, 1, 0], [], []>} : vector<8x8xbf16>, vector<256x8xbf16>, vector<8x256xf32> -> vector<8x256xf32>
    %119 = arith.addf %113, %118 : vector<8x256xf32>
    %c2_146 = arith.constant 2 : index
    %c1_147 = arith.constant 1 : index
    %c0_148 = arith.constant 0 : index
    %120 = vector.load %arg14[%c2_146, %c1_147, %c0_148] : memref<18x18x8xbf16, #tpu.memory_space<vmem>>, vector<16x16x8xbf16>
    %121 = vector.shape_cast %120 : vector<16x16x8xbf16> to vector<256x8xbf16>
    %c7_149 = arith.constant 7 : index
    %c0_150 = arith.constant 0 : index
    %c0_151 = arith.constant 0 : index
    %122 = vector.load %arg5[%c7_149, %c0_150, %c0_151] : memref<9x8x8xbf16, #tpu.memory_space<vmem>>, vector<1x8x8xbf16>
    %123 = vector.shape_cast %122 : vector<1x8x8xbf16> to vector<8x8xbf16>
    %cst_152 = arith.constant dense<0.000000e+00> : vector<8x256xf32>
    %124 = tpu.matmul %123, %121, %cst_152 {dimension_numbers = #tpu.dot_dimension_numbers<[1], [1], [0], [0], [0, 0, 1, 0], [], []>} : vector<8x8xbf16>, vector<256x8xbf16>, vector<8x256xf32> -> vector<8x256xf32>
    %125 = arith.addf %119, %124 : vector<8x256xf32>
    %c2_153 = arith.constant 2 : index
    %c2_154 = arith.constant 2 : index
    %c0_155 = arith.constant 0 : index
    %126 = vector.load %arg14[%c2_153, %c2_154, %c0_155] : memref<18x18x8xbf16, #tpu.memory_space<vmem>>, vector<16x16x8xbf16>
    %127 = vector.shape_cast %126 : vector<16x16x8xbf16> to vector<256x8xbf16>
    %c8_156 = arith.constant 8 : index
    %c0_157 = arith.constant 0 : index
    %c0_158 = arith.constant 0 : index
    %128 = vector.load %arg5[%c8_156, %c0_157, %c0_158] : memref<9x8x8xbf16, #tpu.memory_space<vmem>>, vector<1x8x8xbf16>
    %129 = vector.shape_cast %128 : vector<1x8x8xbf16> to vector<8x8xbf16>
    %cst_159 = arith.constant dense<0.000000e+00> : vector<8x256xf32>
    %130 = tpu.matmul %129, %127, %cst_159 {dimension_numbers = #tpu.dot_dimension_numbers<[1], [1], [0], [0], [0, 0, 1, 0], [], []>} : vector<8x8xbf16>, vector<256x8xbf16>, vector<8x256xf32> -> vector<8x256xf32>
    %131 = arith.addf %125, %130 : vector<8x256xf32>
    %c0_160 = arith.constant 0 : index
    %c0_161 = arith.constant 0 : index
    %132 = vector.load %arg6[%c0_160, %c0_161] : memref<8x1xf32, #tpu.memory_space<vmem>>, vector<8x1xf32>
    %133 = vector.broadcast %132 : vector<8x1xf32> to vector<8x256xf32>
    %134 = arith.addf %131, %133 : vector<8x256xf32>
    %cst_162 = arith.constant 0.000000e+00 : f32
    %135 = vector.broadcast %cst_162 : f32 to vector<8x256xf32>
    %136 = arith.maximumf %134, %135 : vector<8x256xf32>
    %cst_163 = arith.constant dense<0.000000e+00> : vector<8xf32>
    %137 = vector.multi_reduction <add>, %136, %cst_163 [1] : vector<8x256xf32> to vector<8xf32>
    %138 = vector.shape_cast %137 : vector<8xf32> to vector<8x1xf32>
    %cst_164 = arith.constant 2.560000e+02 : f32
    %139 = vector.broadcast %cst_164 : f32 to vector<8x1xf32>
    %140 = arith.divf %138, %139 : vector<8x1xf32>
    %c0_165 = arith.constant 0 : index
    %c0_166 = arith.constant 0 : index
    %141 = vector.load %arg7[%c0_165, %c0_166] : memref<4x8xf32, #tpu.memory_space<vmem>>, vector<4x8xf32>
    %cst_167 = arith.constant dense<0.000000e+00> : vector<4x1xf32>
    %142 = tpu.matmul %141, %140, %cst_167 {dimension_numbers = #tpu.dot_dimension_numbers<[1], [0], [0], [1], [0, 0, 1, 1], [], []>} : vector<4x8xf32>, vector<8x1xf32>, vector<4x1xf32> -> vector<4x1xf32>
    %c0_168 = arith.constant 0 : index
    %c0_169 = arith.constant 0 : index
    %143 = vector.load %arg8[%c0_168, %c0_169] : memref<4x1xf32, #tpu.memory_space<vmem>>, vector<4x1xf32>
    %144 = arith.addf %142, %143 : vector<4x1xf32>
    %cst_170 = arith.constant 0.000000e+00 : f32
    %145 = vector.broadcast %cst_170 : f32 to vector<4x1xf32>
    %146 = arith.maximumf %144, %145 : vector<4x1xf32>
    %c0_171 = arith.constant 0 : index
    %c0_172 = arith.constant 0 : index
    %147 = vector.load %arg9[%c0_171, %c0_172] : memref<8x4xf32, #tpu.memory_space<vmem>>, vector<8x4xf32>
    %cst_173 = arith.constant dense<0.000000e+00> : vector<8x1xf32>
    %148 = tpu.matmul %147, %146, %cst_173 {dimension_numbers = #tpu.dot_dimension_numbers<[1], [0], [0], [1], [0, 0, 1, 1], [], []>} : vector<8x4xf32>, vector<4x1xf32>, vector<8x1xf32> -> vector<8x1xf32>
    %c0_174 = arith.constant 0 : index
    %c0_175 = arith.constant 0 : index
    %149 = vector.load %arg10[%c0_174, %c0_175] : memref<8x1xf32, #tpu.memory_space<vmem>>, vector<8x1xf32>
    %150 = arith.addf %148, %149 : vector<8x1xf32>
    %151 = arith.negf %150 : vector<8x1xf32>
    %152 = math.exp %151 : vector<8x1xf32>
    %cst_176 = arith.constant 1.000000e+00 : f32
    %153 = vector.broadcast %cst_176 : f32 to vector<8x1xf32>
    %154 = arith.addf %153, %152 : vector<8x1xf32>
    %155 = arith.divf %153, %154 : vector<8x1xf32>
    %c0_177 = arith.constant 0 : index
    %c0_178 = arith.constant 0 : index
    %156 = vector.load %arg11[%c0_177, %c0_178] : memref<8x1xf32, #tpu.memory_space<vmem>>, vector<8x1xf32>
    %157 = vector.broadcast %156 : vector<8x1xf32> to vector<8x256xf32>
    %158 = arith.mulf %136, %157 : vector<8x256xf32>
    %cst_179 = arith.constant dense<0.000000e+00> : vector<256xf32>
    %159 = vector.multi_reduction <add>, %158, %cst_179 [0] : vector<8x256xf32> to vector<256xf32>
    %160 = vector.shape_cast %159 : vector<256xf32> to vector<1x256xf32>
    %161 = arith.negf %160 : vector<1x256xf32>
    %162 = math.exp %161 : vector<1x256xf32>
    %cst_180 = arith.constant 1.000000e+00 : f32
    %163 = vector.broadcast %cst_180 : f32 to vector<1x256xf32>
    %164 = arith.addf %163, %162 : vector<1x256xf32>
    %165 = arith.divf %163, %164 : vector<1x256xf32>
    %166 = vector.broadcast %155 : vector<8x1xf32> to vector<8x256xf32>
    %167 = arith.mulf %136, %166 : vector<8x256xf32>
    %168 = vector.broadcast %165 : vector<1x256xf32> to vector<8x256xf32>
    %169 = arith.mulf %167, %168 : vector<8x256xf32>
    %c0_181 = arith.constant 0 : index
    %c0_182 = arith.constant 0 : index
    %c0_183 = arith.constant 0 : index
    %170 = vector.load %arg12[%c0_181, %c0_182, %c0_183] : memref<1x8x256xf32, #tpu.memory_space<vmem>>, vector<1x8x256xf32>
    %171 = vector.shape_cast %170 : vector<1x8x256xf32> to vector<8x256xf32>
    %172 = vector.shape_cast %169 : vector<8x256xf32> to vector<1x8x256xf32>
    tpu.vector_store %arg12[%c0_181, %c0_182, %c0_183], %172 {strides = array<i32>} : memref<1x8x256xf32, #tpu.memory_space<vmem>>, vector<1x8x256xf32>,
    return
  }
  func.func @transform_0(%arg0: i32) -> (i32, i32, i32, i32) {
    %c0_i32 = arith.constant 0 : i32
    %c0_i32_0 = arith.constant 0 : i32
    %c0_i32_1 = arith.constant 0 : i32
    %c0_i32_2 = arith.constant 0 : i32
    return %arg0, %c0_i32, %c0_i32_0, %c0_i32_1 : i32, i32, i32, i32
  }
  func.func @transform_1(%arg0: i32) -> (i32, i32, i32, i32) {
    %c0_i32 = arith.constant 0 : i32
    %c0_i32_0 = arith.constant 0 : i32
    %c0_i32_1 = arith.constant 0 : i32
    %c0_i32_2 = arith.constant 0 : i32
    return %arg0, %c0_i32, %c0_i32_0, %c0_i32_1 : i32, i32, i32, i32
  }
  func.func @transform_2(%arg0: i32) -> (i32, i32, i32) {
    %c0_i32 = arith.constant 0 : i32
    %c0_i32_0 = arith.constant 0 : i32
    %c0_i32_1 = arith.constant 0 : i32
    %c0_i32_2 = arith.constant 0 : i32
    return %c0_i32, %c0_i32_0, %c0_i32_1 : i32, i32, i32
  }
  func.func @transform_3(%arg0: i32) -> (i32, i32) {
    %c0_i32 = arith.constant 0 : i32
    %c0_i32_0 = arith.constant 0 : i32
    %c0_i32_1 = arith.constant 0 : i32
    return %c0_i32, %c0_i32_0 : i32, i32
  }
  func.func @transform_4(%arg0: i32) -> (i32, i32, i32) {
    %c0_i32 = arith.constant 0 : i32
    %c0_i32_0 = arith.constant 0 : i32
    %c0_i32_1 = arith.constant 0 : i32
    %c0_i32_2 = arith.constant 0 : i32
    return %c0_i32, %c0_i32_0, %c0_i32_1 : i32, i32, i32
  }
  func.func @transform_5(%arg0: i32) -> (i32, i32) {
    %c0_i32 = arith.constant 0 : i32
    %c0_i32_0 = arith.constant 0 : i32
    %c0_i32_1 = arith.constant 0 : i32
    return %c0_i32, %c0_i32_0 : i32, i32
  }
  func.func @transform_6(%arg0: i32) -> (i32, i32) {
    %c0_i32 = arith.constant 0 : i32
    %c0_i32_0 = arith.constant 0 : i32
    %c0_i32_1 = arith.constant 0 : i32
    return %c0_i32, %c0_i32_0 : i32, i32
  }
  func.func @transform_7(%arg0: i32) -> (i32, i32) {
    %c0_i32 = arith.constant 0 : i32
    %c0_i32_0 = arith.constant 0 : i32
    %c0_i32_1 = arith.constant 0 : i32
    return %c0_i32, %c0_i32_0 : i32, i32
  }
  func.func @transform_8(%arg0: i32) -> (i32, i32) {
    %c0_i32 = arith.constant 0 : i32
    %c0_i32_0 = arith.constant 0 : i32
    %c0_i32_1 = arith.constant 0 : i32
    return %c0_i32, %c0_i32_0 : i32, i32
  }
  func.func @transform_9(%arg0: i32) -> (i32, i32) {
    %c0_i32 = arith.constant 0 : i32
    %c0_i32_0 = arith.constant 0 : i32
    %c0_i32_1 = arith.constant 0 : i32
    return %c0_i32, %c0_i32_0 : i32, i32
  }
  func.func @transform_10(%arg0: i32) -> (i32, i32) {
    %c0_i32 = arith.constant 0 : i32
    %c0_i32_0 = arith.constant 0 : i32
    %c0_i32_1 = arith.constant 0 : i32
    return %c0_i32, %c0_i32_0 : i32, i32
  }
  func.func @transform_11(%arg0: i32) -> (i32, i32, i32) {
    %c0_i32 = arith.constant 0 : i32
    %c0_i32_0 = arith.constant 0 : i32
    %c0_i32_1 = arith.constant 0 : i32
    return %arg0, %c0_i32, %c0_i32_0 : i32, i32, i32
  }
}

</mosaic_0001>

<llo_original>
// kernel: decoder_forward.1
$region0: #{decoder_forward.1}
  #allocation0 [shape = 'u32[]', space=smem, size = 0x4, offset = 0x4, fixed_abs, tag = 'smem constant byte address 0x4 - core index']
  #allocation1 [shape = 'u32[144,128]{1,0:T(1,128)}', space=vmem, size = 0x12000, scoped, tag = 'internal scratch']
  #allocation2 [shape = 'bf16[18,18,8]{2,1,0:T(8,128)(2,1)}', space=vmem, size = 0x1b000, scoped, tag = 'scratch operand']
  #allocation3 [shape = 'bf16[18,18,8]{2,1,0:T(8,128)(2,1)}', space=vmem, size = 0x1b000, scoped, tag = 'scratch operand']
  %s0 = inlined_call_operand.vmem [shape: bf16[2,16,16,4], index: 0, kind: input, shape index: {}]
  %s1 = inlined_call_operand.vmem [shape: bf16[2,16,16,4], index: 1, kind: input, shape index: {}]
  %s2 = inlined_call_operand.vmem [shape: bf16[9,8,8], index: 2, kind: input, shape index: {}]
  %s3 = inlined_call_operand.vmem [shape: f32[1,8], index: 3, kind: input, shape index: {}]
  %s4 = inlined_call_operand.vmem [shape: bf16[9,8,8], index: 4, kind: input, shape index: {}]
  %s5 = inlined_call_operand.vmem [shape: f32[8,1], index: 5, kind: input, shape index: {}]
  %s6 = inlined_call_operand.vmem [shape: f32[4,8], index: 6, kind: input, shape index: {}]
  %s7 = inlined_call_operand.vmem [shape: f32[4,1], index: 7, kind: input, shape index: {}]
  %s8 = inlined_call_operand.vmem [shape: f32[8,4], index: 8, kind: input, shape index: {}]
  %s9 = inlined_call_operand.vmem [shape: f32[8,1], index: 9, kind: input, shape index: {}]
  %s10 = inlined_call_operand.vmem [shape: f32[8,1], index: 10, kind: input, shape index: {}]
  %s11 = inlined_call_operand.vmem [shape: f32[2,8,256], index: 11, kind: output, shape index: {}]
  %s12 = sld [smem:[#allocation0]]
  $region77: #{decoder_forward.1} parent=0
    _
  %s14 = ssub.s32 1, %s12
  %s15 = scalar_select 0, %s14, %s12
  loop: start=0, step=1, limit=4
  $region2: #{decoder_forward.1} parent=0 // loop_pre_header
    _
  $region3: #{decoder_forward.1} parent=0 // loop_header
    %s17 = sphi 0, %s21
    %p18 = scmp.ge.s32.totalorder %s17, 4
    %s27 = sphi 0, %s29
    %s30 = sphi 0, %s27
    %s31 = sphi 0, %s30
    %s47 = sphi 0, %s31
    %s53 = sphi 0, %s55
    %s56 = sphi 0, %s53
    %s57 = sphi 0, %s56
    %s73 = sphi 0, %s57
    %s77 = sphi 0, %s77
    %s79 = sphi 0, %s77
    %s80 = sphi 0, %s79
    %s94 = sphi 0, %s80
    %s98 = sphi 0, %s98
    %s100 = sphi 0, %s98
    %s101 = sphi 0, %s100
    %s115 = sphi 0, %s101
    %s119 = sphi 0, %s119
    %s121 = sphi 0, %s119
    %s122 = sphi 0, %s121
    %s136 = sphi 0, %s122
    %s140 = sphi 0, %s140
    %s142 = sphi 0, %s140
    %s143 = sphi 0, %s142
    %s157 = sphi 0, %s143
    %s161 = sphi 0, %s161
    %s163 = sphi 0, %s161
    %s164 = sphi 0, %s163
    %s178 = sphi 0, %s164
    %s182 = sphi 0, %s182
    %s184 = sphi 0, %s182
    %s185 = sphi 0, %s184
    %s199 = sphi 0, %s185
    %s203 = sphi 0, %s203
    %s205 = sphi 0, %s203
    %s206 = sphi 0, %s205
    %s220 = sphi 0, %s206
    %s224 = sphi 0, %s224
    %s226 = sphi 0, %s224
    %s227 = sphi 0, %s226
    %s241 = sphi 0, %s227
    %s245 = sphi 0, %s245
    %s247 = sphi 0, %s245
    %s248 = sphi 0, %s247
    %s262 = sphi 0, %s248
    %s268 = sphi 0, %s270
    %s271 = sphi 0, %s268
    %s272 = sphi 0, %s271
    %s288 = sphi 0, %s272
  $region4: #{decoder_forward.1} parent=0 // loop_header_branch
    %20 = sbr.rel (%p18) target = $region8
  $region5: #{decoder_forward.1} parent=0 // loop_body
    %s22 = ssub.s32 %s17, 1
    %s23 = ssub.s32 %s17, 2
    %s24 = sadd.s32 %s17, 1
    %s25 = ssub.s32 %s17, %s24
    %p26 = scmp.eq.s32.totalorder %s25, 0
    %s28 = sadd.s32 %s27, 1
    %s29 = scalar_select %p26, %s27, %s28
    %p32 = pneg %p26
    %p33 = scmp.eq.s32.totalorder %s17, 1
    %p34 = por %p32, %p33
    %p35 = scmp.ne.s32.totalorder %s27, %s30
    %p36 = scmp.eq.s32.totalorder %s17, 0
    %p37 = por %p35, %p36
    %p38 = scmp.ne.s32.totalorder %s27, %s30
    %p39 = scmp.eq.s32.totalorder %s22, 1
    %p40 = por %p38, %p39
    %p41 = scmp.ne.s32.totalorder %s30, %s31
    %p42 = scmp.eq.s32.totalorder %s22, 0
    %p43 = por %p41, %p42
    %p44 = scmp.ne.s32.totalorder %s30, %s31
    %p45 = scmp.eq.s32.totalorder %s23, 1
    %p46 = por %p44, %p45
    %p48 = scmp.ne.s32.totalorder %s31, %s47
    %p49 = scmp.eq.s32.totalorder %s23, 0
    %p50 = por %p48, %p49
    %s51 = ssub.s32 %s17, %s24
    %p52 = scmp.eq.s32.totalorder %s51, 0
    %s54 = sadd.s32 %s53, 1
    %s55 = scalar_select %p52, %s53, %s54
    %p58 = pneg %p52
    %p59 = scmp.eq.s32.totalorder %s17, 1
    %p60 = por %p58, %p59
    %p61 = scmp.ne.s32.totalorder %s53, %s56
    %p62 = scmp.eq.s32.totalorder %s17, 0
    %p63 = por %p61, %p62
    %p64 = scmp.ne.s32.totalorder %s53, %s56
    %p65 = scmp.eq.s32.totalorder %s22, 1
    %p66 = por %p64, %p65
    %p67 = scmp.ne.s32.totalorder %s56, %s57
    %p68 = scmp.eq.s32.totalorder %s22, 0
    %p69 = por %p67, %p68
    %p70 = scmp.ne.s32.totalorder %s56, %s57
    %p71 = scmp.eq.s32.totalorder %s23, 1
    %p72 = por %p70, %p71
    %p74 = scmp.ne.s32.totalorder %s57, %s73
    %p75 = scmp.eq.s32.totalorder %s23, 0
    %p76 = por %p74, %p75
    %s78 = sadd.s32 %s77, 1
    %p81 = scmp.eq.s32.totalorder %s17, 1
    %p82 = scmp.ne.s32.totalorder %s77, %s79
    %p83 = scmp.eq.s32.totalorder %s17, 0
    %p84 = por %p82, %p83
    %p85 = scmp.ne.s32.totalorder %s77, %s79
    %p86 = scmp.eq.s32.totalorder %s22, 1
    %p87 = por %p85, %p86
    %p88 = scmp.ne.s32.totalorder %s79, %s80
    %p89 = scmp.eq.s32.totalorder %s22, 0
    %p90 = por %p88, %p89
    %p91 = scmp.ne.s32.totalorder %s79, %s80
    %p92 = scmp.eq.s32.totalorder %s23, 1
    %p93 = por %p91, %p92
    %p95 = scmp.ne.s32.totalorder %s80, %s94
    %p96 = scmp.eq.s32.totalorder %s23, 0
    %p97 = por %p95, %p96
    %s99 = sadd.s32 %s98, 1
    %p102 = scmp.eq.s32.totalorder %s17, 1
    %p103 = scmp.ne.s32.totalorder %s98, %s100
    %p104 = scmp.eq.s32.totalorder %s17, 0
    %p105 = por %p103, %p104
    %p106 = scmp.ne.s32.totalorder %s98, %s100
    %p107 = scmp.eq.s32.totalorder %s22, 1
    %p108 = por %p106, %p107
    %p109 = scmp.ne.s32.totalorder %s100, %s101
    %p110 = scmp.eq.s32.totalorder %s22, 0
    %p111 = por %p109, %p110
    %p112 = scmp.ne.s32.totalorder %s100, %s101
    %p113 = scmp.eq.s32.totalorder %s23, 1
    %p114 = por %p112, %p113
    %p116 = scmp.ne.s32.totalorder %s101, %s115
    %p117 = scmp.eq.s32.totalorder %s23, 0
    %p118 = por %p116, %p117
    %s120 = sadd.s32 %s119, 1
    %p123 = scmp.eq.s32.totalorder %s17, 1
    %p124 = scmp.ne.s32.totalorder %s119, %s121
    %p125 = scmp.eq.s32.totalorder %s17, 0
    %p126 = por %p124, %p125
    %p127 = scmp.ne.s32.totalorder %s119, %s121
    %p128 = scmp.eq.s32.totalorder %s22, 1
    %p129 = por %p127, %p128
    %p130 = scmp.ne.s32.totalorder %s121, %s122
    %p131 = scmp.eq.s32.totalorder %s22, 0
    %p132 = por %p130, %p131
    %p133 = scmp.ne.s32.totalorder %s121, %s122
    %p134 = scmp.eq.s32.totalorder %s23, 1
    %p135 = por %p133, %p134
    %p137 = scmp.ne.s32.totalorder %s122, %s136
    %p138 = scmp.eq.s32.totalorder %s23, 0
    %p139 = por %p137, %p138
    %s141 = sadd.s32 %s140, 1
    %p144 = scmp.eq.s32.totalorder %s17, 1
    %p145 = scmp.ne.s32.totalorder %s140, %s142
    %p146 = scmp.eq.s32.totalorder %s17, 0
    %p147 = por %p145, %p146
    %p148 = scmp.ne.s32.totalorder %s140, %s142
    %p149 = scmp.eq.s32.totalorder %s22, 1
    %p150 = por %p148, %p149
    %p151 = scmp.ne.s32.totalorder %s142, %s143
    %p152 = scmp.eq.s32.totalorder %s22, 0
    %p153 = por %p151, %p152
    %p154 = scmp.ne.s32.totalorder %s142, %s143
    %p155 = scmp.eq.s32.totalorder %s23, 1
    %p156 = por %p154, %p155
    %p158 = scmp.ne.s32.totalorder %s143, %s157
    %p159 = scmp.eq.s32.totalorder %s23, 0
    %p160 = por %p158, %p159
    %s162 = sadd.s32 %s161, 1
    %p165 = scmp.eq.s32.totalorder %s17, 1
    %p166 = scmp.ne.s32.totalorder %s161, %s163
    %p167 = scmp.eq.s32.totalorder %s17, 0
    %p168 = por %p166, %p167
    %p169 = scmp.ne.s32.totalorder %s161, %s163
    %p170 = scmp.eq.s32.totalorder %s22, 1
    %p171 = por %p169, %p170
    %p172 = scmp.ne.s32.totalorder %s163, %s164
    %p173 = scmp.eq.s32.totalorder %s22, 0
    %p174 = por %p172, %p173
    %p175 = scmp.ne.s32.totalorder %s163, %s164
    %p176 = scmp.eq.s32.totalorder %s23, 1
    %p177 = por %p175, %p176
    %p179 = scmp.ne.s32.totalorder %s164, %s178
    %p180 = scmp.eq.s32.totalorder %s23, 0
    %p181 = por %p179, %p180
    %s183 = sadd.s32 %s182, 1
    %p186 = scmp.eq.s32.totalorder %s17, 1
    %p187 = scmp.ne.s32.totalorder %s182, %s184
    %p188 = scmp.eq.s32.totalorder %s17, 0
    %p189 = por %p187, %p188
    %p190 = scmp.ne.s32.totalorder %s182, %s184
    %p191 = scmp.eq.s32.totalorder %s22, 1
    %p192 = por %p190, %p191
    %p193 = scmp.ne.s32.totalorder %s184, %s185
    %p194 = scmp.eq.s32.totalorder %s22, 0
    %p195 = por %p193, %p194
    %p196 = scmp.ne.s32.totalorder %s184, %s185
    %p197 = scmp.eq.s32.totalorder %s23, 1
    %p198 = por %p196, %p197
    %p200 = scmp.ne.s32.totalorder %s185, %s199
    %p201 = scmp.eq.s32.totalorder %s23, 0
    %p202 = por %p200, %p201
    %s204 = sadd.s32 %s203, 1
    %p207 = scmp.eq.s32.totalorder %s17, 1
    %p208 = scmp.ne.s32.totalorder %s203, %s205
    %p209 = scmp.eq.s32.totalorder %s17, 0
    %p210 = por %p208, %p209
    %p211 = scmp.ne.s32.totalorder %s203, %s205
    %p212 = scmp.eq.s32.totalorder %s22, 1
    %p213 = por %p211, %p212
    %p214 = scmp.ne.s32.totalorder %s205, %s206
    %p215 = scmp.eq.s32.totalorder %s22, 0
    %p216 = por %p214, %p215
    %p217 = scmp.ne.s32.totalorder %s205, %s206
    %p218 = scmp.eq.s32.totalorder %s23, 1
    %p219 = por %p217, %p218
    %p221 = scmp.ne.s32.totalorder %s206, %s220
    %p222 = scmp.eq.s32.totalorder %s23, 0
    %p223 = por %p221, %p222
    %s225 = sadd.s32 %s224, 1
    %p228 = scmp.eq.s32.totalorder %s17, 1
    %p229 = scmp.ne.s32.totalorder %s224, %s226
    %p230 = scmp.eq.s32.totalorder %s17, 0
    %p231 = por %p229, %p230
    %p232 = scmp.ne.s32.totalorder %s224, %s226
    %p233 = scmp.eq.s32.totalorder %s22, 1
    %p234 = por %p232, %p233
    %p235 = scmp.ne.s32.totalorder %s226, %s227
    %p236 = scmp.eq.s32.totalorder %s22, 0
    %p237 = por %p235, %p236
    %p238 = scmp.ne.s32.totalorder %s226, %s227
    %p239 = scmp.eq.s32.totalorder %s23, 1
    %p240 = por %p238, %p239
    %p242 = scmp.ne.s32.totalorder %s227, %s241
    %p243 = scmp.eq.s32.totalorder %s23, 0
    %p244 = por %p242, %p243
    %s246 = sadd.s32 %s245, 1
    %p249 = scmp.eq.s32.totalorder %s17, 1
    %p250 = scmp.ne.s32.totalorder %s245, %s247
    %p251 = scmp.eq.s32.totalorder %s17, 0
    %p252 = por %p250, %p251
    %p253 = scmp.ne.s32.totalorder %s245, %s247
    %p254 = scmp.eq.s32.totalorder %s22, 1
    %p255 = por %p253, %p254
    %p256 = scmp.ne.s32.totalorder %s247, %s248
    %p257 = scmp.eq.s32.totalorder %s22, 0
    %p258 = por %p256, %p257
    %p259 = scmp.ne.s32.totalorder %s247, %s248
    %p260 = scmp.eq.s32.totalorder %s23, 1
    %p261 = por %p259, %p260
    %p263 = scmp.ne.s32.totalorder %s248, %s262
    %p264 = scmp.eq.s32.totalorder %s23, 0
    %p265 = por %p263, %p264
    %s266 = ssub.s32 %s17, %s24
    %p267 = scmp.eq.s32.totalorder %s266, 0
    %s269 = sadd.s32 %s268, 1
    %s270 = scalar_select %p267, %s268, %s269
    %p273 = pneg %p267
    %p274 = scmp.eq.s32.totalorder %s17, 1
    %p275 = por %p273, %p274
    %p276 = scmp.ne.s32.totalorder %s268, %s271
    %p277 = scmp.eq.s32.totalorder %s17, 0
    %p278 = por %p276, %p277
    %p279 = scmp.ne.s32.totalorder %s268, %s271
    %p280 = scmp.eq.s32.totalorder %s22, 1
    %p281 = por %p279, %p280
    %p282 = scmp.ne.s32.totalorder %s271, %s272
    %p283 = scmp.eq.s32.totalorder %s22, 0
    %p284 = por %p282, %p283
    %p285 = scmp.ne.s32.totalorder %s271, %s272
    %p286 = scmp.eq.s32.totalorder %s23, 1
    %p287 = por %p285, %p286
    %p289 = scmp.ne.s32.totalorder %s272, %s288
    %p290 = scmp.eq.s32.totalorder %s23, 0
    %p291 = por %p289, %p290
    %p292 = scmp.le.s32.totalorder 1, %s17
    %p293 = scmp.lt.s32.totalorder %s17, 3
    %p294 = pnand %p292, %p293
    %p295 = pneg %p294
    // Predicated region
    $region9: #{decoder_forward.1} parent=5 // pred_check
      _
    $region10: #{decoder_forward.1} parent=5 // pred_check_branch
      %297 = sbr.rel (%p294) target = $region12
    $region11: #{decoder_forward.1} parent=5 // pred_region
      %s298 = ssub.s32 %s17, 1
      // Predicated region
      $region13: #{decoder_forward.1} parent=11 // pred_check
        %p299 = pneg %p90
      $region14: #{decoder_forward.1} parent=11 // pred_check_branch
        %301 = sbr.rel (%p299) target = $region16
      $region15: #{decoder_forward.1} parent=11 // pred_region
        _
      $region16: #{decoder_forward.1} parent=11 // pred_fallthru
        _
      // Predicated region
      $region17: #{decoder_forward.1} parent=11 // pred_check
        %p302 = pneg %p111
      $region18: #{decoder_forward.1} parent=11 // pred_check_branch
        %304 = sbr.rel (%p302) target = $region20
      $region19: #{decoder_forward.1} parent=11 // pred_region
        _
      $region20: #{decoder_forward.1} parent=11 // pred_fallthru
        _
      // Predicated region
      $region21: #{decoder_forward.1} parent=11 // pred_check
        %p305 = pneg %p132
      $region22: #{decoder_forward.1} parent=11 // pred_check_branch
        %307 = sbr.rel (%p305) target = $region24
      $region23: #{decoder_forward.1} parent=11 // pred_region
        _
      $region24: #{decoder_forward.1} parent=11 // pred_fallthru
        _
      // Predicated region
      $region25: #{decoder_forward.1} parent=11 // pred_check
        %p308 = pneg %p153
      $region26: #{decoder_forward.1} parent=11 // pred_check_branch
        %310 = sbr.rel (%p308) target = $region28
      $region27: #{decoder_forward.1} parent=11 // pred_region
        _
      $region28: #{decoder_forward.1} parent=11 // pred_fallthru
        _
      // Predicated region
      $region29: #{decoder_forward.1} parent=11 // pred_check
        %p311 = pneg %p174
      $region30: #{decoder_forward.1} parent=11 // pred_check_branch
        %313 = sbr.rel (%p311) target = $region32
      $region31: #{decoder_forward.1} parent=11 // pred_region
        _
      $region32: #{decoder_forward.1} parent=11 // pred_fallthru
        _
      // Predicated region
      $region33: #{decoder_forward.1} parent=11 // pred_check
        %p314 = pneg %p195
      $region34: #{decoder_forward.1} parent=11 // pred_check_branch
        %316 = sbr.rel (%p314) target = $region36
      $region35: #{decoder_forward.1} parent=11 // pred_region
        _
      $region36: #{decoder_forward.1} parent=11 // pred_fallthru
        _
      // Predicated region
      $region37: #{decoder_forward.1} parent=11 // pred_check
        %p317 = pneg %p216
      $region38: #{decoder_forward.1} parent=11 // pred_check_branch
        %319 = sbr.rel (%p317) target = $region40
      $region39: #{decoder_forward.1} parent=11 // pred_region
        _
      $region40: #{decoder_forward.1} parent=11 // pred_fallthru
        _
      // Predicated region
      $region41: #{decoder_forward.1} parent=11 // pred_check
        %p320 = pneg %p237
      $region42: #{decoder_forward.1} parent=11 // pred_check_branch
        %322 = sbr.rel (%p320) target = $region44
      $region43: #{decoder_forward.1} parent=11 // pred_region
        _
      $region44: #{decoder_forward.1} parent=11 // pred_fallthru
        _
      // Predicated region
      $region45: #{decoder_forward.1} parent=11 // pred_check
        %p323 = pneg %p258
      $region46: #{decoder_forward.1} parent=11 // pred_check_branch
        %325 = sbr.rel (%p323) target = $region48
      $region47: #{decoder_forward.1} parent=11 // pred_region
        _
      $region48: #{decoder_forward.1} parent=11 // pred_fallthru
        _
    $region12: #{decoder_forward.1} parent=5 // pred_fallthru
      _
    %p326 = scmp.lt.s32.totalorder %s17, 2
    // Predicated region
    $region49: #{decoder_forward.1} parent=5 // pred_check
      %p327 = pneg %p326
    $region50: #{decoder_forward.1} parent=5 // pred_check_branch
      %329 = sbr.rel (%p327) target = $region52
    $region51: #{decoder_forward.1} parent=5 // pred_region
      // Predicated region
      $region53: #{decoder_forward.1} parent=51 // pred_check
        %p330 = pneg %p37
      $region54: #{decoder_forward.1} parent=51 // pred_check_branch
        %332 = sbr.rel (%p330) target = $region56
      $region55: #{decoder_forward.1} parent=51 // pred_region
        %p333 = scmp.lt.s32.totalorder %s17, 1
        %s334 = scalar_select %p333, %s17, 1
        %s335 = smul.addr %s334, 32
        %s336 = smul.addr %s335, 4
        %s337 = scalar_lea.vmem %s0, %s336
      $region56: #{decoder_forward.1} parent=51 // pred_fallthru
        _
      // Predicated region
      $region57: #{decoder_forward.1} parent=51 // pred_check
        %p338 = pneg %p63
      $region58: #{decoder_forward.1} parent=51 // pred_check_branch
        %340 = sbr.rel (%p338) target = $region60
      $region59: #{decoder_forward.1} parent=51 // pred_region
        %p341 = scmp.lt.s32.totalorder %s17, 1
        %s342 = scalar_select %p341, %s17, 1
        %s343 = smul.addr %s342, 32
        %s344 = smul.addr %s343, 4
        %s345 = scalar_lea.vmem %s1, %s344
      $region60: #{decoder_forward.1} parent=51 // pred_fallthru
        _
    $region52: #{decoder_forward.1} parent=5 // pred_fallthru
      _
    %p346 = scmp.le.s32.totalorder 1, %s17
    %p347 = scmp.lt.s32.totalorder %s17, 3
    %p348 = pnand %p346, %p347
    %p349 = pneg %p348
    // Predicated region
    $region61: #{decoder_forward.1} parent=5 // pred_check
      _
    $region62: #{decoder_forward.1} parent=5 // pred_check_branch
      %351 = sbr.rel (%p348) target = $region64
    $region63: #{decoder_forward.1} parent=5 // pred_region
      %s352 = ssub.s32 %s17, 1
      %p353 = scmp.lt.s32.totalorder %s22, 1
      %s354 = scalar_select %p353, %s22, 1
      %s355 = smul.addr %s354, 32
      %s356 = smul.addr %s355, 4
      %s357 = scalar_lea.vmem %s0, %s356
      %p358 = pneg %p43
      %p359 = pneg %p40
      %p360 = scmp.lt.s32.totalorder %s22, 1
      %s361 = scalar_select %p360, %s22, 1
      %s362 = smul.addr %s361, 32
      %s363 = smul.addr %s362, 4
      %s364 = scalar_lea.vmem %s1, %s363
      %p365 = pneg %p69
      %p366 = pneg %p66
      %p367 = pneg %p90
      %p368 = pneg %p87
      %p369 = pneg %p111
      %p370 = pneg %p108
      %p371 = pneg %p132
      %p372 = pneg %p129
      %p373 = pneg %p153
      %p374 = pneg %p150
      %p375 = pneg %p174
      %p376 = pneg %p171
      %p377 = pneg %p195
      %p378 = pneg %p192
      %p379 = pneg %p216
      %p380 = pneg %p213
      %p381 = pneg %p237
      %p382 = pneg %p234
      %p383 = pneg %p258
      %p384 = pneg %p255
      %p385 = pneg %p284
      %p386 = pneg %p281
      %p387 = scmp.lt.s32.totalorder %s22, 1
      %s388 = scalar_select %p387, %s22, 1
      %s389 = smul.addr %s388, 2
      %s390 = smul.addr %s389, 8
      %s391 = scalar_lea.vmem %s11, %s390
      %p392 = scmp.lt.s32.totalorder %s22, 1
      %s393 = scalar_select %p392, %s22, 1
      %s394 = smul.addr %s393, 32
      %s395 = smul.addr %s394, 4
      %s396 = scalar_lea.vmem %s0, %s395
      %p397 = scmp.lt.s32.totalorder %s22, 1
      %s398 = scalar_select %p397, %s22, 1
      %s399 = smul.addr %s398, 32
      %s400 = smul.addr %s399, 4
      %s401 = scalar_lea.vmem %s1, %s400
      %p402 = scmp.lt.s32.totalorder %s22, 1
      %s403 = scalar_select %p402, %s22, 1
      %s404 = smul.addr %s403, 2
      %s405 = smul.addr %s404, 8
      %s406 = scalar_lea.vmem %s11, %s405
      %vm408 = vcmask 60416
      %409 = vst.msk [vmem:[#allocation2] sm:$0xf] %vm408, 0
      %410 = vst.msk [vmem:[#allocation2 + $0x4] sm:$0xf] %vm408, 0
      %vm411 = vcmask 57344
      %412 = vst.msk [vmem:[#allocation2 + $0x8] sm:$0x1] %vm411, 0
      %s413 = scalar_lea.vmem [#allocation2], 204
      %414 = vst.msk [vmem:[%s413] sm:$0xf] %vm408, 0
      %415 = vst.msk [vmem:[%s413 + $0x4] sm:$0xf] %vm408, 0
      %416 = vst.msk [vmem:[%s413 + $0x8] sm:$0x1] %vm411, 0
      %vm417 = vcmask 57344
      %vm418 = vsmask.f32 256
      %vm419 = vmand %vm417, %vm418
      %v420 = vld [vmem:[#allocation2] sm:$0x1]
      %v421 = vsel %vm419, 0, %v420
      %422 = vst [vmem:[#allocation2] sm:$0x1] %v421
      %v423 = vld [vmem:[#allocation2 + $0xc] sm:$0x1]
      %v424 = vsel %vm419, 0, %v423
      %425 = vst [vmem:[#allocation2 + $0xc] sm:$0x1] %v424
      %v426 = vld [vmem:[#allocation2 + $0x18] sm:$0x1]
      %v427 = vsel %vm419, 0, %v426
      %428 = vst [vmem:[#allocation2 + $0x18] sm:$0x1] %v427
      %v429 = vld [vmem:[#allocation2 + $0x24] sm:$0x1]
      %v430 = vsel %vm419, 0, %v429
      %431 = vst [vmem:[#allocation2 + $0x24] sm:$0x1] %v430
      %v432 = vld [vmem:[#allocation2 + $0x30] sm:$0x1]
      %v433 = vsel %vm419, 0, %v432
      %434 = vst [vmem:[#allocation2 + $0x30] sm:$0x1] %v433
      %v435 = vld [vmem:[#allocation2 + $0x3c] sm:$0x1]
      %v436 = vsel %vm419, 0, %v435
      %437 = vst [vmem:[#allocation2 + $0x3c] sm:$0x1] %v436
      %v438 = vld [vmem:[#allocation2 + $0x48] sm:$0x1]
      %v439 = vsel %vm419, 0, %v438
      %440 = vst [vmem:[#allocation2 + $0x48] sm:$0x1] %v439
      %v441 = vld [vmem:[#allocation2 + $0x54] sm:$0x1]
      %v442 = vsel %vm419, 0, %v441
      %443 = vst [vmem:[#allocation2 + $0x54] sm:$0x1] %v442
      %v444 = vld [vmem:[#allocation2 + $0x60] sm:$0x1]
      %v445 = vsel %vm419, 0, %v444
      %446 = vst [vmem:[#allocation2 + $0x60] sm:$0x1] %v445
      %v447 = vld [vmem:[#allocation2 + $0x6c] sm:$0x1]
      %v448 = vsel %vm419, 0, %v447
      %449 = vst [vmem:[#allocation2 + $0x6c] sm:$0x1] %v448
      %v450 = vld [vmem:[#allocation2 + $0x78] sm:$0x1]
      %v451 = vsel %vm419, 0, %v450
      %452 = vst [vmem:[#allocation2 + $0x78] sm:$0x1] %v451
      %v453 = vld [vmem:[#allocation2 + $0x84] sm:$0x1]
      %v454 = vsel %vm419, 0, %v453
      %455 = vst [vmem:[#allocation2 + $0x84] sm:$0x1] %v454
      %v456 = vld [vmem:[#allocation2 + $0x90] sm:$0x1]
      %v457 = vsel %vm419, 0, %v456
      %458 = vst [vmem:[#allocation2 + $0x90] sm:$0x1] %v457
      %v459 = vld [vmem:[#allocation2 + $0x9c] sm:$0x1]
      %v460 = vsel %vm419, 0, %v459
      %461 = vst [vmem:[#allocation2 + $0x9c] sm:$0x1] %v460
      %v462 = vld [vmem:[#allocation2 + $0xa8] sm:$0x1]
      %v463 = vsel %vm419, 0, %v462
      %464 = vst [vmem:[#allocation2 + $0xa8] sm:$0x1] %v463
      %v465 = vld [vmem:[#allocation2 + $0xb4] sm:$0x1]
      %v466 = vsel %vm419, 0, %v465
      %467 = vst [vmem:[#allocation2 + $0xb4] sm:$0x1] %v466
      %v468 = vld [vmem:[#allocation2 + $0xc0] sm:$0x1]
      %v469 = vsel %vm419, 0, %v468
      %470 = vst [vmem:[#allocation2 + $0xc0] sm:$0x1] %v469
      %v471 = vld [vmem:[#allocation2 + $0xcc] sm:$0x1]
      %v472 = vsel %vm419, 0, %v471
      %473 = vst [vmem:[#allocation2 + $0xcc] sm:$0x1] %v472
      %vm474 = vsmask.f32 7938
      %vm475 = vmand %vm417, %vm474
      %v476 = vld [vmem:[#allocation2 + $0x8] sm:$0x1]
      %v477 = vsel %vm475, 0, %v476
      %478 = vst [vmem:[#allocation2 + $0x8] sm:$0x1] %v477
      %v479 = vld [vmem:[#allocation2 + $0x14] sm:$0x1]
      %v480 = vsel %vm475, 0, %v479
      %481 = vst [vmem:[#allocation2 + $0x14] sm:$0x1] %v480
      %v482 = vld [vmem:[#allocation2 + $0x20] sm:$0x1]
      %v483 = vsel %vm475, 0, %v482
      %484 = vst [vmem:[#allocation2 + $0x20] sm:$0x1] %v483
      %v485 = vld [vmem:[#allocation2 + $0x2c] sm:$0x1]
      %v486 = vsel %vm475, 0, %v485
      %487 = vst [vmem:[#allocation2 + $0x2c] sm:$0x1] %v486
      %v488 = vld [vmem:[#allocation2 + $0x38] sm:$0x1]
      %v489 = vsel %vm475, 0, %v488
      %490 = vst [vmem:[#allocation2 + $0x38] sm:$0x1] %v489
      %v491 = vld [vmem:[#allocation2 + $0x44] sm:$0x1]
      %v492 = vsel %vm475, 0, %v491
      %493 = vst [vmem:[#allocation2 + $0x44] sm:$0x1] %v492
      %v494 = vld [vmem:[#allocation2 + $0x50] sm:$0x1]
      %v495 = vsel %vm475, 0, %v494
      %496 = vst [vmem:[#allocation2 + $0x50] sm:$0x1] %v495
      %v497 = vld [vmem:[#allocation2 + $0x5c] sm:$0x1]
      %v498 = vsel %vm475, 0, %v497
      %499 = vst [vmem:[#allocation2 + $0x5c] sm:$0x1] %v498
      %v500 = vld [vmem:[#allocation2 + $0x68] sm:$0x1]
      %v501 = vsel %vm475, 0, %v500
      %502 = vst [vmem:[#allocation2 + $0x68] sm:$0x1] %v501
      %v503 = vld [vmem:[#allocation2 + $0x74] sm:$0x1]
      %v504 = vsel %vm475, 0, %v503
      %505 = vst [vmem:[#allocation2 + $0x74] sm:$0x1] %v504
      %v506 = vld [vmem:[#allocation2 + $0x80] sm:$0x1]
      %v507 = vsel %vm475, 0, %v506
      %508 = vst [vmem:[#allocation2 + $0x80] sm:$0x1] %v507
      %v509 = vld [vmem:[#allocation2 + $0x8c] sm:$0x1]
      %v510 = vsel %vm475, 0, %v509
      %511 = vst [vmem:[#allocation2 + $0x8c] sm:$0x1] %v510
      %v512 = vld [vmem:[#allocation2 + $0x98] sm:$0x1]
      %v513 = vsel %vm475, 0, %v512
      %514 = vst [vmem:[#allocation2 + $0x98] sm:$0x1] %v513
      %v515 = vld [vmem:[#allocation2 + $0xa4] sm:$0x1]
      %v516 = vsel %vm475, 0, %v515
      %517 = vst [vmem:[#allocation2 + $0xa4] sm:$0x1] %v516
      %v518 = vld [vmem:[#allocation2 + $0xb0] sm:$0x1]
      %v519 = vsel %vm475, 0, %v518
      %520 = vst [vmem:[#allocation2 + $0xb0] sm:$0x1] %v519
      %v521 = vld [vmem:[#allocation2 + $0xbc] sm:$0x1]
      %v522 = vsel %vm475, 0, %v521
      %523 = vst [vmem:[#allocation2 + $0xbc] sm:$0x1] %v522
      %v524 = vld [vmem:[#allocation2 + $0xc8] sm:$0x1]
      %v525 = vsel %vm475, 0, %v524
      %526 = vst [vmem:[#allocation2 + $0xc8] sm:$0x1] %v525
      %v527 = vld [vmem:[#allocation2 + $0xd4] sm:$0x1]
      %v528 = vsel %vm475, 0, %v527
      %529 = vst [vmem:[#allocation2 + $0xd4] sm:$0x1] %v528
      %530 = vst.msk [vmem:[#allocation3] sm:$0xf] %vm408, 0
      %531 = vst.msk [vmem:[#allocation3 + $0x4] sm:$0xf] %vm408, 0
      %532 = vst.msk [vmem:[#allocation3 + $0x8] sm:$0x1] %vm411, 0
      %s533 = scalar_lea.vmem [#allocation3], 204
      %534 = vst.msk [vmem:[%s533] sm:$0xf] %vm408, 0
      %535 = vst.msk [vmem:[%s533 + $0x4] sm:$0xf] %vm408, 0
      %536 = vst.msk [vmem:[%s533 + $0x8] sm:$0x1] %vm411, 0
      %v537 = vld [vmem:[#allocation3] sm:$0x1]
      %v538 = vsel %vm419, 0, %v537
      %539 = vst [vmem:[#allocation3] sm:$0x1] %v538
      %v540 = vld [vmem:[#allocation3 + $0xc] sm:$0x1]
      %v541 = vsel %vm419, 0, %v540
      %542 = vst [vmem:[#allocation3 + $0xc] sm:$0x1] %v541
      %v543 = vld [vmem:[#allocation3 + $0x18] sm:$0x1]
      %v544 = vsel %vm419, 0, %v543
      %545 = vst [vmem:[#allocation3 + $0x18] sm:$0x1] %v544
      %v546 = vld [vmem:[#allocation3 + $0x24] sm:$0x1]
      %v547 = vsel %vm419, 0, %v546
      %548 = vst [vmem:[#allocation3 + $0x24] sm:$0x1] %v547
      %v549 = vld [vmem:[#allocation3 + $0x30] sm:$0x1]
      %v550 = vsel %vm419, 0, %v549
      %551 = vst [vmem:[#allocation3 + $0x30] sm:$0x1] %v550
      %v552 = vld [vmem:[#allocation3 + $0x3c] sm:$0x1]
      %v553 = vsel %vm419, 0, %v552
      %554 = vst [vmem:[#allocation3 + $0x3c] sm:$0x1] %v553
      %v555 = vld [vmem:[#allocation3 + $0x48] sm:$0x1]
      %v556 = vsel %vm419, 0, %v555
      %557 = vst [vmem:[#allocation3 + $0x48] sm:$0x1] %v556
      %v558 = vld [vmem:[#allocation3 + $0x54] sm:$0x1]
      %v559 = vsel %vm419, 0, %v558
      %560 = vst [vmem:[#allocation3 + $0x54] sm:$0x1] %v559
      %v561 = vld [vmem:[#allocation3 + $0x60] sm:$0x1]
      %v562 = vsel %vm419, 0, %v561
      %563 = vst [vmem:[#allocation3 + $0x60] sm:$0x1] %v562
      %v564 = vld [vmem:[#allocation3 + $0x6c] sm:$0x1]
      %v565 = vsel %vm419, 0, %v564
      %566 = vst [vmem:[#allocation3 + $0x6c] sm:$0x1] %v565
      %v567 = vld [vmem:[#allocation3 + $0x78] sm:$0x1]
      %v568 = vsel %vm419, 0, %v567
      %569 = vst [vmem:[#allocation3 + $0x78] sm:$0x1] %v568
      %v570 = vld [vmem:[#allocation3 + $0x84] sm:$0x1]
      %v571 = vsel %vm419, 0, %v570
      %572 = vst [vmem:[#allocation3 + $0x84] sm:$0x1] %v571
      %v573 = vld [vmem:[#allocation3 + $0x90] sm:$0x1]
      %v574 = vsel %vm419, 0, %v573
      %575 = vst [vmem:[#allocation3 + $0x90] sm:$0x1] %v574
      %v576 = vld [vmem:[#allocation3 + $0x9c] sm:$0x1]
      %v577 = vsel %vm419, 0, %v576
      %578 = vst [vmem:[#allocation3 + $0x9c] sm:$0x1] %v577
      %v579 = vld [vmem:[#allocation3 + $0xa8] sm:$0x1]
      %v580 = vsel %vm419, 0, %v579
      %581 = vst [vmem:[#allocation3 + $0xa8] sm:$0x1] %v580
      %v582 = vld [vmem:[#allocation3 + $0xb4] sm:$0x1]
      %v583 = vsel %vm419, 0, %v582
      %584 = vst [vmem:[#allocation3 + $0xb4] sm:$0x1] %v583
      %v585 = vld [vmem:[#allocation3 + $0xc0] sm:$0x1]
      %v586 = vsel %vm419, 0, %v585
      %587 = vst [vmem:[#allocation3 + $0xc0] sm:$0x1] %v586
      %v588 = vld [vmem:[#allocation3 + $0xcc] sm:$0x1]
      %v589 = vsel %vm419, 0, %v588
      %590 = vst [vmem:[#allocation3 + $0xcc] sm:$0x1] %v589
      %v591 = vld [vmem:[#allocation3 + $0x8] sm:$0x1]
      %v592 = vsel %vm475, 0, %v591
      %593 = vst [vmem:[#allocation3 + $0x8] sm:$0x1] %v592
      %v594 = vld [vmem:[#allocation3 + $0x14] sm:$0x1]
      %v595 = vsel %vm475, 0, %v594
      %596 = vst [vmem:[#allocation3 + $0x14] sm:$0x1] %v595
      %v597 = vld [vmem:[#allocation3 + $0x20] sm:$0x1]
      %v598 = vsel %vm475, 0, %v597
      %599 = vst [vmem:[#allocation3 + $0x20] sm:$0x1] %v598
      %v600 = vld [vmem:[#allocation3 + $0x2c] sm:$0x1]
      %v601 = vsel %vm475, 0, %v600
      %602 = vst [vmem:[#allocation3 + $0x2c] sm:$0x1] %v601
      %v603 = vld [vmem:[#allocation3 + $0x38] sm:$0x1]
      %v604 = vsel %vm475, 0, %v603
      %605 = vst [vmem:[#allocation3 + $0x38] sm:$0x1] %v604
      %v606 = vld [vmem:[#allocation3 + $0x44] sm:$0x1]
      %v607 = vsel %vm475, 0, %v606
      %608 = vst [vmem:[#allocation3 + $0x44] sm:$0x1] %v607
      %v609 = vld [vmem:[#allocation3 + $0x50] sm:$0x1]
      %v610 = vsel %vm475, 0, %v609
      %611 = vst [vmem:[#allocation3 + $0x50] sm:$0x1] %v610
      %v612 = vld [vmem:[#allocation3 + $0x5c] sm:$0x1]
      %v613 = vsel %vm475, 0, %v612
      %614 = vst [vmem:[#allocation3 + $0x5c] sm:$0x1] %v613
      %v615 = vld [vmem:[#allocation3 + $0x68] sm:$0x1]
      %v616 = vsel %vm475, 0, %v615
      %617 = vst [vmem:[#allocation3 + $0x68] sm:$0x1] %v616
      %v618 = vld [vmem:[#allocation3 + $0x74] sm:$0x1]
      %v619 = vsel %vm475, 0, %v618
      %620 = vst [vmem:[#allocation3 + $0x74] sm:$0x1] %v619
      %v621 = vld [vmem:[#allocation3 + $0x80] sm:$0x1]
      %v622 = vsel %vm475, 0, %v621
      %623 = vst [vmem:[#allocation3 + $0x80] sm:$0x1] %v622
      %v624 = vld [vmem:[#allocation3 + $0x8c] sm:$0x1]
      %v625 = vsel %vm475, 0, %v624
      %626 = vst [vmem:[#allocation3 + $0x8c] sm:$0x1] %v625
      %v627 = vld [vmem:[#allocation3 + $0x98] sm:$0x1]
      %v628 = vsel %vm475, 0, %v627
      %629 = vst [vmem:[#allocation3 + $0x98] sm:$0x1] %v628
      %v630 = vld [vmem:[#allocation3 + $0xa4] sm:$0x1]
      %v631 = vsel %vm475, 0, %v630
      %632 = vst [vmem:[#allocation3 + $0xa4] sm:$0x1] %v631
      %v633 = vld [vmem:[#allocation3 + $0xb0] sm:$0x1]
      %v634 = vsel %vm475, 0, %v633
      %635 = vst [vmem:[#allocation3 + $0xb0] sm:$0x1] %v634
      %v636 = vld [vmem:[#allocation3 + $0xbc] sm:$0x1]
      %v637 = vsel %vm475, 0, %v636
      %638 = vst [vmem:[#allocation3 + $0xbc] sm:$0x1] %v637
      %v639 = vld [vmem:[#allocation3 + $0xc8] sm:$0x1]
      %v640 = vsel %vm475, 0, %v639
      %641 = vst [vmem:[#allocation3 + $0xc8] sm:$0x1] %v640
      %v642 = vld [vmem:[#allocation3 + $0xd4] sm:$0x1]
      %v643 = vsel %vm475, 0, %v642
      %644 = vst [vmem:[#allocation3 + $0xd4] sm:$0x1] %v643
      %v645 = vld [vmem:[%s396] sm:$0xf]
      %v646 = vld [vmem:[%s396 + $0x4] sm:$0xf]
      %v647 = vld [vmem:[%s396 + $0x8] sm:$0xf]
      %v648 = vld [vmem:[%s396 + $0xc] sm:$0xf]
      %v649 = vld [vmem:[%s396 + $0x10] sm:$0xf]
      %v650 = vld [vmem:[%s396 + $0x14] sm:$0xf]
      %v651 = vld [vmem:[%s396 + $0x18] sm:$0xf]
      %v652 = vld [vmem:[%s396 + $0x1c] sm:$0xf]
      %v653 = vld [vmem:[%s396 + $0x20] sm:$0xf]
      %v654 = vld [vmem:[%s396 + $0x24] sm:$0xf]
      %v655 = vld [vmem:[%s396 + $0x28] sm:$0xf]
      %v656 = vld [vmem:[%s396 + $0x2c] sm:$0xf]
      %v657 = vld [vmem:[%s396 + $0x30] sm:$0xf]
      %v658 = vld [vmem:[%s396 + $0x34] sm:$0xf]
      %v659 = vld [vmem:[%s396 + $0x38] sm:$0xf]
      %v660 = vld [vmem:[%s396 + $0x3c] sm:$0xf]
      %v661 = vld [vmem:[%s396 + $0x40] sm:$0xf]
      %v662 = vld [vmem:[%s396 + $0x44] sm:$0xf]
      %v663 = vld [vmem:[%s396 + $0x48] sm:$0xf]
      %v664 = vld [vmem:[%s396 + $0x4c] sm:$0xf]
      %v665 = vld [vmem:[%s396 + $0x50] sm:$0xf]
      %v666 = vld [vmem:[%s396 + $0x54] sm:$0xf]
      %v667 = vld [vmem:[%s396 + $0x58] sm:$0xf]
      %v668 = vld [vmem:[%s396 + $0x5c] sm:$0xf]
      %v669 = vld [vmem:[%s396 + $0x60] sm:$0xf]
      %v670 = vld [vmem:[%s396 + $0x64] sm:$0xf]
      %v671 = vld [vmem:[%s396 + $0x68] sm:$0xf]
      %v672 = vld [vmem:[%s396 + $0x6c] sm:$0xf]
      %v673 = vld [vmem:[%s396 + $0x70] sm:$0xf]
      %v674 = vld [vmem:[%s396 + $0x74] sm:$0xf]
      %v675 = vld [vmem:[%s396 + $0x78] sm:$0xf]
      %v676 = vld [vmem:[%s396 + $0x7c] sm:$0xf]
      %v677 = vld [vmem:[%s401] sm:$0xf]
      %v678 = vld [vmem:[%s401 + $0x4] sm:$0xf]
      %v679 = vld [vmem:[%s401 + $0x8] sm:$0xf]
      %v680 = vld [vmem:[%s401 + $0xc] sm:$0xf]
      %v681 = vld [vmem:[%s401 + $0x10] sm:$0xf]
      %v682 = vld [vmem:[%s401 + $0x14] sm:$0xf]
      %v683 = vld [vmem:[%s401 + $0x18] sm:$0xf]
      %v684 = vld [vmem:[%s401 + $0x1c] sm:$0xf]
      %v685 = vld [vmem:[%s401 + $0x20] sm:$0xf]
      %v686 = vld [vmem:[%s401 + $0x24] sm:$0xf]
      %v687 = vld [vmem:[%s401 + $0x28] sm:$0xf]
      %v688 = vld [vmem:[%s401 + $0x2c] sm:$0xf]
      %v689 = vld [vmem:[%s401 + $0x30] sm:$0xf]
      %v690 = vld [vmem:[%s401 + $0x34] sm:$0xf]
      %v691 = vld [vmem:[%s401 + $0x38] sm:$0xf]
      %v692 = vld [vmem:[%s401 + $0x3c] sm:$0xf]
      %v693 = vld [vmem:[%s401 + $0x40] sm:$0xf]
      %v694 = vld [vmem:[%s401 + $0x44] sm:$0xf]
      %v695 = vld [vmem:[%s401 + $0x48] sm:$0xf]
      %v696 = vld [vmem:[%s401 + $0x4c] sm:$0xf]
      %v697 = vld [vmem:[%s401 + $0x50] sm:$0xf]
      %v698 = vld [vmem:[%s401 + $0x54] sm:$0xf]
      %v699 = vld [vmem:[%s401 + $0x58] sm:$0xf]
      %v700 = vld [vmem:[%s401 + $0x5c] sm:$0xf]
      %v701 = vld [vmem:[%s401 + $0x60] sm:$0xf]
      %v702 = vld [vmem:[%s401 + $0x64] sm:$0xf]
      %v703 = vld [vmem:[%s401 + $0x68] sm:$0xf]
      %v704 = vld [vmem:[%s401 + $0x6c] sm:$0xf]
      %v705 = vld [vmem:[%s401 + $0x70] sm:$0xf]
      %v706 = vld [vmem:[%s401 + $0x74] sm:$0xf]
      %v707 = vld [vmem:[%s401 + $0x78] sm:$0xf]
      %v708 = vld [vmem:[%s401 + $0x7c] sm:$0xf]
      %v741 = vunpack.c.l.b16 %v645
      %v742 = vunpack.c.l.b16 %v646
      %v743 = vunpack.c.l.b16 %v647
      %v744 = vunpack.c.l.b16 %v648
      %v745 = vunpack.c.l.b16 %v649
      %v746 = vunpack.c.l.b16 %v650
      %v747 = vunpack.c.l.b16 %v651
      %v748 = vunpack.c.l.b16 %v652
      %v749 = vunpack.c.l.b16 %v653
      %v750 = vunpack.c.l.b16 %v654
      %v751 = vunpack.c.l.b16 %v655
      %v752 = vunpack.c.l.b16 %v656
      %v753 = vunpack.c.l.b16 %v657
      %v754 = vunpack.c.l.b16 %v658
      %v755 = vunpack.c.l.b16 %v659
      %v756 = vunpack.c.l.b16 %v660
      %v757 = vunpack.c.l.b16 %v661
      %v758 = vunpack.c.l.b16 %v662
      %v759 = vunpack.c.l.b16 %v663
      %v760 = vunpack.c.l.b16 %v664
      %v761 = vunpack.c.l.b16 %v665
      %v762 = vunpack.c.l.b16 %v666
      %v763 = vunpack.c.l.b16 %v667
      %v764 = vunpack.c.l.b16 %v668
      %v765 = vunpack.c.l.b16 %v669
      %v766 = vunpack.c.l.b16 %v670
      %v767 = vunpack.c.l.b16 %v671
      %v768 = vunpack.c.l.b16 %v672
      %v769 = vunpack.c.l.b16 %v673
      %v770 = vunpack.c.l.b16 %v674
      %v771 = vunpack.c.l.b16 %v675
      %v772 = vunpack.c.l.b16 %v676
      %v773 = vpack.c.b16 %v742, %v741
      %v774 = vpack.c.b16 %v744, %v743
      %v775 = vpack.c.b16 %v746, %v745
      %v776 = vpack.c.b16 %v748, %v747
      %v777 = vpack.c.b16 %v750, %v749
      %v778 = vpack.c.b16 %v752, %v751
      %v779 = vpack.c.b16 %v754, %v753
      %v780 = vpack.c.b16 %v756, %v755
      %v781 = vpack.c.b16 %v758, %v757
      %v782 = vpack.c.b16 %v760, %v759
      %v783 = vpack.c.b16 %v762, %v761
      %v784 = vpack.c.b16 %v764, %v763
      %v785 = vpack.c.b16 %v766, %v765
      %v786 = vpack.c.b16 %v768, %v767
      %v787 = vpack.c.b16 %v770, %v769
      %v788 = vpack.c.b16 %v772, %v771
      %v821 = vunpack.c.l.b16 %v677
      %v822 = vunpack.c.l.b16 %v678
      %v823 = vunpack.c.l.b16 %v679
      %v824 = vunpack.c.l.b16 %v680
      %v825 = vunpack.c.l.b16 %v681
      %v826 = vunpack.c.l.b16 %v682
      %v827 = vunpack.c.l.b16 %v683
      %v828 = vunpack.c.l.b16 %v684
      %v829 = vunpack.c.l.b16 %v685
      %v830 = vunpack.c.l.b16 %v686
      %v831 = vunpack.c.l.b16 %v687
      %v832 = vunpack.c.l.b16 %v688
      %v833 = vunpack.c.l.b16 %v689
      %v834 = vunpack.c.l.b16 %v690
      %v835 = vunpack.c.l.b16 %v691
      %v836 = vunpack.c.l.b16 %v692
      %v837 = vunpack.c.l.b16 %v693
      %v838 = vunpack.c.l.b16 %v694
      %v839 = vunpack.c.l.b16 %v695
      %v840 = vunpack.c.l.b16 %v696
      %v841 = vunpack.c.l.b16 %v697
      %v842 = vunpack.c.l.b16 %v698
      %v843 = vunpack.c.l.b16 %v699
      %v844 = vunpack.c.l.b16 %v700
      %v845 = vunpack.c.l.b16 %v701
      %v846 = vunpack.c.l.b16 %v702
      %v847 = vunpack.c.l.b16 %v703
      %v848 = vunpack.c.l.b16 %v704
      %v849 = vunpack.c.l.b16 %v705
      %v850 = vunpack.c.l.b16 %v706
      %v851 = vunpack.c.l.b16 %v707
      %v852 = vunpack.c.l.b16 %v708
      %v853 = vpack.c.b16 %v822, %v821
      %v854 = vpack.c.b16 %v824, %v823
      %v855 = vpack.c.b16 %v826, %v825
      %v856 = vpack.c.b16 %v828, %v827
      %v857 = vpack.c.b16 %v830, %v829
      %v858 = vpack.c.b16 %v832, %v831
      %v859 = vpack.c.b16 %v834, %v833
      %v860 = vpack.c.b16 %v836, %v835
      %v861 = vpack.c.b16 %v838, %v837
      %v862 = vpack.c.b16 %v840, %v839
      %v863 = vpack.c.b16 %v842, %v841
      %v864 = vpack.c.b16 %v844, %v843
      %v865 = vpack.c.b16 %v846, %v845
      %v866 = vpack.c.b16 %v848, %v847
      %v867 = vpack.c.b16 %v850, %v849
      %v868 = vpack.c.b16 %v852, %v851
      %869 = vrot.lane.b32.xlu0 %v853, 4
      %v870 = vpop.permute.xlu0 %869
      %871 = vrot.lane.b32.xlu0 %v854, 4
      %v872 = vpop.permute.xlu0 %871
      %873 = vrot.lane.b32.xlu0 %v855, 4
      %v874 = vpop.permute.xlu0 %873
      %875 = vrot.lane.b32.xlu0 %v856, 4
      %v876 = vpop.permute.xlu0 %875
      %877 = vrot.lane.b32.xlu0 %v857, 4
      %v878 = vpop.permute.xlu0 %877
      %879 = vrot.lane.b32.xlu0 %v858, 4
      %v880 = vpop.permute.xlu0 %879
      %881 = vrot.lane.b32.xlu0 %v859, 4
      %v882 = vpop.permute.xlu0 %881
      %883 = vrot.lane.b32.xlu0 %v860, 4
      %v884 = vpop.permute.xlu0 %883
      %885 = vrot.lane.b32.xlu0 %v861, 4
      %v886 = vpop.permute.xlu0 %885
      %887 = vrot.lane.b32.xlu0 %v862, 4
      %v888 = vpop.permute.xlu0 %887
      %889 = vrot.lane.b32.xlu0 %v863, 4
      %v890 = vpop.permute.xlu0 %889
      %891 = vrot.lane.b32.xlu0 %v864, 4
      %v892 = vpop.permute.xlu0 %891
      %893 = vrot.lane.b32.xlu0 %v865, 4
      %v894 = vpop.permute.xlu0 %893
      %895 = vrot.lane.b32.xlu0 %v866, 4
      %v896 = vpop.permute.xlu0 %895
      %897 = vrot.lane.b32.xlu0 %v867, 4
      %v898 = vpop.permute.xlu0 %897
      %899 = vrot.lane.b32.xlu0 %v868, 4
      %v900 = vpop.permute.xlu0 %899
      %vm901 = vcmask 31744
      %v904 = vsel %vm901, %v773, %v870
      %v907 = vsel %vm901, %v774, %v872
      %v910 = vsel %vm901, %v775, %v874
      %v913 = vsel %vm901, %v776, %v876
      %v916 = vsel %vm901, %v777, %v878
      %v919 = vsel %vm901, %v778, %v880
      %v922 = vsel %vm901, %v779, %v882
      %v925 = vsel %vm901, %v780, %v884
      %v928 = vsel %vm901, %v781, %v886
      %v931 = vsel %vm901, %v782, %v888
      %v934 = vsel %vm901, %v783, %v890
      %v937 = vsel %vm901, %v784, %v892
      %v940 = vsel %vm901, %v785, %v894
      %v943 = vsel %vm901, %v786, %v896
      %v946 = vsel %vm901, %v787, %v898
      %v949 = vsel %vm901, %v788, %v900
      %v966 = vunpack.c.l.b16 %v904
      %v967 = vunpack.c.h.b16 %v904
      %v968 = vunpack.c.l.b16 %v907
      %v969 = vunpack.c.h.b16 %v907
      %v970 = vunpack.c.l.b16 %v910
      %v971 = vunpack.c.h.b16 %v910
      %v972 = vunpack.c.l.b16 %v913
      %v973 = vunpack.c.h.b16 %v913
      %v974 = vunpack.c.l.b16 %v916
      %v975 = vunpack.c.h.b16 %v916
      %v976 = vunpack.c.l.b16 %v919
      %v977 = vunpack.c.h.b16 %v919
      %v978 = vunpack.c.l.b16 %v922
      %v979 = vunpack.c.h.b16 %v922
      %v980 = vunpack.c.l.b16 %v925
      %v981 = vunpack.c.h.b16 %v925
      %v982 = vunpack.c.l.b16 %v928
      %v983 = vunpack.c.h.b16 %v928
      %v984 = vunpack.c.l.b16 %v931
      %v985 = vunpack.c.h.b16 %v931
      %v986 = vunpack.c.l.b16 %v934
      %v987 = vunpack.c.h.b16 %v934
      %v988 = vunpack.c.l.b16 %v937
      %v989 = vunpack.c.h.b16 %v937
      %v990 = vunpack.c.l.b16 %v940
      %v991 = vunpack.c.h.b16 %v940
      %v992 = vunpack.c.l.b16 %v943
      %v993 = vunpack.c.h.b16 %v943
      %v994 = vunpack.c.l.b16 %v946
      %v995 = vunpack.c.h.b16 %v946
      %v996 = vunpack.c.l.b16 %v949
      %v997 = vunpack.c.h.b16 %v949
      %v998 = vpack.c.b16 %v966, %v966
      %v999 = vpack.c.b16 %v967, %v967
      %v1000 = vpack.c.b16 %v968, %v968
      %v1001 = vpack.c.b16 %v969, %v969
      %v1002 = vpack.c.b16 %v970, %v970
      %v1003 = vpack.c.b16 %v971, %v971
      %v1004 = vpack.c.b16 %v972, %v972
      %v1005 = vpack.c.b16 %v973, %v973
      %v1006 = vpack.c.b16 %v974, %v974
      %v1007 = vpack.c.b16 %v975, %v975
      %v1008 = vpack.c.b16 %v976, %v976
      %v1009 = vpack.c.b16 %v977, %v977
      %v1010 = vpack.c.b16 %v978, %v978
      %v1011 = vpack.c.b16 %v979, %v979
      %v1012 = vpack.c.b16 %v980, %v980
      %v1013 = vpack.c.b16 %v981, %v981
      %v1014 = vpack.c.b16 %v982, %v982
      %v1015 = vpack.c.b16 %v983, %v983
      %v1016 = vpack.c.b16 %v984, %v984
      %v1017 = vpack.c.b16 %v985, %v985
      %v1018 = vpack.c.b16 %v986, %v986
      %v1019 = vpack.c.b16 %v987, %v987
      %v1020 = vpack.c.b16 %v988, %v988
      %v1021 = vpack.c.b16 %v989, %v989
      %v1022 = vpack.c.b16 %v990, %v990
      %v1023 = vpack.c.b16 %v991, %v991
      %v1024 = vpack.c.b16 %v992, %v992
      %v1025 = vpack.c.b16 %v993, %v993
      %v1026 = vpack.c.b16 %v994, %v994
      %v1027 = vpack.c.b16 %v995, %v995
      %v1028 = vpack.c.b16 %v996, %v996
      %v1029 = vpack.c.b16 %v997, %v997
      %vm1030 = vsmask.f32 4368
      %vm1031 = vmor %vm418, %vm1030
      %v1033 = vshrl.u32 %v998, 16
      %v1035 = vrot.slane %v1033, 7
      %v1036 = vshll.u32 %v998, 16
      %v1038 = vor.u32 %v1035, %v1036
      %v1039 = vrot.slane %v1035, 4
      %v1041 = vshrl.u32 %v999, 16
      %v1043 = vrot.slane %v1041, 7
      %v1044 = vshll.u32 %v999, 16
      %v1046 = vor.u32 %v1043, %v1044
      %v1047 = vsel %vm1031, %v1039, %v1046
      %v1048 = vrot.slane %v1043, 4
      %v1050 = vshrl.u32 %v1000, 16
      %v1052 = vrot.slane %v1050, 7
      %v1053 = vshll.u32 %v1000, 16
      %v1055 = vor.u32 %v1052, %v1053
      %v1056 = vrot.slane %v1052, 4
      %v1058 = vshrl.u32 %v1001, 16
      %v1060 = vrot.slane %v1058, 7
      %v1061 = vshll.u32 %v1001, 16
      %v1063 = vor.u32 %v1060, %v1061
      %v1064 = vsel %vm1031, %v1056, %v1063
      %v1065 = vrot.slane %v1060, 4
      %v1067 = vshrl.u32 %v1002, 16
      %v1069 = vrot.slane %v1067, 7
      %v1070 = vshll.u32 %v1002, 16
      %v1072 = vor.u32 %v1069, %v1070
      %v1073 = vrot.slane %v1069, 4
      %v1075 = vshrl.u32 %v1003, 16
      %v1077 = vrot.slane %v1075, 7
      %v1078 = vshll.u32 %v1003, 16
      %v1080 = vor.u32 %v1077, %v1078
      %v1081 = vsel %vm1031, %v1073, %v1080
      %v1082 = vrot.slane %v1077, 4
      %v1084 = vshrl.u32 %v1004, 16
      %v1086 = vrot.slane %v1084, 7
      %v1087 = vshll.u32 %v1004, 16
      %v1089 = vor.u32 %v1086, %v1087
      %v1090 = vrot.slane %v1086, 4
      %v1092 = vshrl.u32 %v1005, 16
      %v1094 = vrot.slane %v1092, 7
      %v1095 = vshll.u32 %v1005, 16
      %v1097 = vor.u32 %v1094, %v1095
      %v1098 = vsel %vm1031, %v1090, %v1097
      %v1099 = vrot.slane %v1094, 4
      %v1101 = vshrl.u32 %v1006, 16
      %v1103 = vrot.slane %v1101, 7
      %v1104 = vshll.u32 %v1006, 16
      %v1106 = vor.u32 %v1103, %v1104
      %v1107 = vrot.slane %v1103, 4
      %v1109 = vshrl.u32 %v1007, 16
      %v1111 = vrot.slane %v1109, 7
      %v1112 = vshll.u32 %v1007, 16
      %v1114 = vor.u32 %v1111, %v1112
      %v1115 = vsel %vm1031, %v1107, %v1114
      %v1116 = vrot.slane %v1111, 4
      %v1118 = vshrl.u32 %v1008, 16
      %v1120 = vrot.slane %v1118, 7
      %v1121 = vshll.u32 %v1008, 16
      %v1123 = vor.u32 %v1120, %v1121
      %v1124 = vrot.slane %v1120, 4
      %v1126 = vshrl.u32 %v1009, 16
      %v1128 = vrot.slane %v1126, 7
      %v1129 = vshll.u32 %v1009, 16
      %v1131 = vor.u32 %v1128, %v1129
      %v1132 = vsel %vm1031, %v1124, %v1131
      %v1133 = vrot.slane %v1128, 4
      %v1135 = vshrl.u32 %v1010, 16
      %v1137 = vrot.slane %v1135, 7
      %v1138 = vshll.u32 %v1010, 16
      %v1140 = vor.u32 %v1137, %v1138
      %v1141 = vrot.slane %v1137, 4
      %v1143 = vshrl.u32 %v1011, 16
      %v1145 = vrot.slane %v1143, 7
      %v1146 = vshll.u32 %v1011, 16
      %v1148 = vor.u32 %v1145, %v1146
      %v1149 = vsel %vm1031, %v1141, %v1148
      %v1150 = vrot.slane %v1145, 4
      %v1152 = vshrl.u32 %v1012, 16
      %v1154 = vrot.slane %v1152, 7
      %v1155 = vshll.u32 %v1012, 16
      %v1157 = vor.u32 %v1154, %v1155
      %v1158 = vrot.slane %v1154, 4
      %v1160 = vshrl.u32 %v1013, 16
      %v1162 = vrot.slane %v1160, 7
      %v1163 = vshll.u32 %v1013, 16
      %v1165 = vor.u32 %v1162, %v1163
      %v1166 = vsel %vm1031, %v1158, %v1165
      %v1167 = vrot.slane %v1162, 4
      %v1169 = vshrl.u32 %v1014, 16
      %v1171 = vrot.slane %v1169, 7
      %v1172 = vshll.u32 %v1014, 16
      %v1174 = vor.u32 %v1171, %v1172
      %v1175 = vrot.slane %v1171, 4
      %v1177 = vshrl.u32 %v1015, 16
      %v1179 = vrot.slane %v1177, 7
      %v1180 = vshll.u32 %v1015, 16
      %v1182 = vor.u32 %v1179, %v1180
      %v1183 = vsel %vm1031, %v1175, %v1182
      %v1184 = vrot.slane %v1179, 4
      %v1186 = vshrl.u32 %v1016, 16
      %v1188 = vrot.slane %v1186, 7
      %v1189 = vshll.u32 %v1016, 16
      %v1191 = vor.u32 %v1188, %v1189
      %v1192 = vrot.slane %v1188, 4
      %v1194 = vshrl.u32 %v1017, 16
      %v1196 = vrot.slane %v1194, 7
      %v1197 = vshll.u32 %v1017, 16
      %v1199 = vor.u32 %v1196, %v1197
      %v1200 = vsel %vm1031, %v1192, %v1199
      %v1201 = vrot.slane %v1196, 4
      %v1203 = vshrl.u32 %v1018, 16
      %v1205 = vrot.slane %v1203, 7
      %v1206 = vshll.u32 %v1018, 16
      %v1208 = vor.u32 %v1205, %v1206
      %v1209 = vrot.slane %v1205, 4
      %v1211 = vshrl.u32 %v1019, 16
      %v1213 = vrot.slane %v1211, 7
      %v1214 = vshll.u32 %v1019, 16
      %v1216 = vor.u32 %v1213, %v1214
      %v1217 = vsel %vm1031, %v1209, %v1216
      %v1218 = vrot.slane %v1213, 4
      %v1220 = vshrl.u32 %v1020, 16
      %v1222 = vrot.slane %v1220, 7
      %v1223 = vshll.u32 %v1020, 16
      %v1225 = vor.u32 %v1222, %v1223
      %v1226 = vrot.slane %v1222, 4
      %v1228 = vshrl.u32 %v1021, 16
      %v1230 = vrot.slane %v1228, 7
      %v1231 = vshll.u32 %v1021, 16
      %v1233 = vor.u32 %v1230, %v1231
      %v1234 = vsel %vm1031, %v1226, %v1233
      %v1235 = vrot.slane %v1230, 4
      %v1237 = vshrl.u32 %v1022, 16
      %v1239 = vrot.slane %v1237, 7
      %v1240 = vshll.u32 %v1022, 16
      %v1242 = vor.u32 %v1239, %v1240
      %v1243 = vrot.slane %v1239, 4
      %v1245 = vshrl.u32 %v1023, 16
      %v1247 = vrot.slane %v1245, 7
      %v1248 = vshll.u32 %v1023, 16
      %v1250 = vor.u32 %v1247, %v1248
      %v1251 = vsel %vm1031, %v1243, %v1250
      %v1252 = vrot.slane %v1247, 4
      %v1254 = vshrl.u32 %v1024, 16
      %v1256 = vrot.slane %v1254, 7
      %v1257 = vshll.u32 %v1024, 16
      %v1259 = vor.u32 %v1256, %v1257
      %v1260 = vrot.slane %v1256, 4
      %v1262 = vshrl.u32 %v1025, 16
      %v1264 = vrot.slane %v1262, 7
      %v1265 = vshll.u32 %v1025, 16
      %v1267 = vor.u32 %v1264, %v1265
      %v1268 = vsel %vm1031, %v1260, %v1267
      %v1269 = vrot.slane %v1264, 4
      %v1271 = vshrl.u32 %v1026, 16
      %v1273 = vrot.slane %v1271, 7
      %v1274 = vshll.u32 %v1026, 16
      %v1276 = vor.u32 %v1273, %v1274
      %v1277 = vrot.slane %v1273, 4
      %v1279 = vshrl.u32 %v1027, 16
      %v1281 = vrot.slane %v1279, 7
      %v1282 = vshll.u32 %v1027, 16
      %v1284 = vor.u32 %v1281, %v1282
      %v1285 = vsel %vm1031, %v1277, %v1284
      %v1286 = vrot.slane %v1281, 4
      %v1288 = vshrl.u32 %v1028, 16
      %v1290 = vrot.slane %v1288, 7
      %v1291 = vshll.u32 %v1028, 16
      %v1293 = vor.u32 %v1290, %v1291
      %v1294 = vrot.slane %v1290, 4
      %v1296 = vshrl.u32 %v1029, 16
      %v1298 = vrot.slane %v1296, 7
      %v1299 = vshll.u32 %v1029, 16
      %v1301 = vor.u32 %v1298, %v1299
      %v1302 = vsel %vm1031, %v1294, %v1301
      %v1303 = vrot.slane %v1298, 4
      %s1352 = scalar_lea.vmem [#allocation2], 12
      %vm1353 = vcmask 60416
      %vm1354 = vmand %vm1353, %vm474
      %v1355 = vld [vmem:[%s1352] sm:$0xf]
      %v1356 = vsel %vm1354, %v1038, %v1355
      %1357 = vst [vmem:[%s1352] sm:$0xf] %v1356
      %1358 = vst.msk [vmem:[%s1352 + $0x4] sm:$0xf] %vm408, %v1047
      %v1359 = vld [vmem:[%s1352 + $0x8] sm:$0x1]
      %v1360 = vsel %vm419, %v1048, %v1359
      %1361 = vst [vmem:[%s1352 + $0x8] sm:$0x1] %v1360
      %v1362 = vld [vmem:[%s1352 + $0xc] sm:$0xf]
      %v1363 = vsel %vm1354, %v1055, %v1362
      %1364 = vst [vmem:[%s1352 + $0xc] sm:$0xf] %v1363
      %1365 = vst.msk [vmem:[%s1352 + $0x10] sm:$0xf] %vm408, %v1064
      %v1366 = vld [vmem:[%s1352 + $0x14] sm:$0x1]
      %v1367 = vsel %vm419, %v1065, %v1366
      %1368 = vst [vmem:[%s1352 + $0x14] sm:$0x1] %v1367
      %v1369 = vld [vmem:[%s1352 + $0x18] sm:$0xf]
      %v1370 = vsel %vm1354, %v1072, %v1369
      %1371 = vst [vmem:[%s1352 + $0x18] sm:$0xf] %v1370
      %1372 = vst.msk [vmem:[%s1352 + $0x1c] sm:$0xf] %vm408, %v1081
      %v1373 = vld [vmem:[%s1352 + $0x20] sm:$0x1]
      %v1374 = vsel %vm419, %v1082, %v1373
      %1375 = vst [vmem:[%s1352 + $0x20] sm:$0x1] %v1374
      %v1376 = vld [vmem:[%s1352 + $0x24] sm:$0xf]
      %v1377 = vsel %vm1354, %v1089, %v1376
      %1378 = vst [vmem:[%s1352 + $0x24] sm:$0xf] %v1377
      %1379 = vst.msk [vmem:[%s1352 + $0x28] sm:$0xf] %vm408, %v1098
      %v1380 = vld [vmem:[%s1352 + $0x2c] sm:$0x1]
      %v1381 = vsel %vm419, %v1099, %v1380
      %1382 = vst [vmem:[%s1352 + $0x2c] sm:$0x1] %v1381
      %v1383 = vld [vmem:[%s1352 + $0x30] sm:$0xf]
      %v1384 = vsel %vm1354, %v1106, %v1383
      %1385 = vst [vmem:[%s1352 + $0x30] sm:$0xf] %v1384
      %1386 = vst.msk [vmem:[%s1352 + $0x34] sm:$0xf] %vm408, %v1115
      %v1387 = vld [vmem:[%s1352 + $0x38] sm:$0x1]
      %v1388 = vsel %vm419, %v1116, %v1387
      %1389 = vst [vmem:[%s1352 + $0x38] sm:$0x1] %v1388
      %v1390 = vld [vmem:[%s1352 + $0x3c] sm:$0xf]
      %v1391 = vsel %vm1354, %v1123, %v1390
      %1392 = vst [vmem:[%s1352 + $0x3c] sm:$0xf] %v1391
      %1393 = vst.msk [vmem:[%s1352 + $0x40] sm:$0xf] %vm408, %v1132
      %v1394 = vld [vmem:[%s1352 + $0x44] sm:$0x1]
      %v1395 = vsel %vm419, %v1133, %v1394
      %1396 = vst [vmem:[%s1352 + $0x44] sm:$0x1] %v1395
      %v1397 = vld [vmem:[%s1352 + $0x48] sm:$0xf]
      %v1398 = vsel %vm1354, %v1140, %v1397
      %1399 = vst [vmem:[%s1352 + $0x48] sm:$0xf] %v1398
      %1400 = vst.msk [vmem:[%s1352 + $0x4c] sm:$0xf] %vm408, %v1149
      %v1401 = vld [vmem:[%s1352 + $0x50] sm:$0x1]
      %v1402 = vsel %vm419, %v1150, %v1401
      %1403 = vst [vmem:[%s1352 + $0x50] sm:$0x1] %v1402
      %v1404 = vld [vmem:[%s1352 + $0x54] sm:$0xf]
      %v1405 = vsel %vm1354, %v1157, %v1404
      %1406 = vst [vmem:[%s1352 + $0x54] sm:$0xf] %v1405
      %1407 = vst.msk [vmem:[%s1352 + $0x58] sm:$0xf] %vm408, %v1166
      %v1408 = vld [vmem:[%s1352 + $0x5c] sm:$0x1]
      %v1409 = vsel %vm419, %v1167, %v1408
      %1410 = vst [vmem:[%s1352 + $0x5c] sm:$0x1] %v1409
      %v1411 = vld [vmem:[%s1352 + $0x60] sm:$0xf]
      %v1412 = vsel %vm1354, %v1174, %v1411
      %1413 = vst [vmem:[%s1352 + $0x60] sm:$0xf] %v1412
      %1414 = vst.msk [vmem:[%s1352 + $0x64] sm:$0xf] %vm408, %v1183
      %v1415 = vld [vmem:[%s1352 + $0x68] sm:$0x1]
      %v1416 = vsel %vm419, %v1184, %v1415
      %1417 = vst [vmem:[%s1352 + $0x68] sm:$0x1] %v1416
      %v1418 = vld [vmem:[%s1352 + $0x6c] sm:$0xf]
      %v1419 = vsel %vm1354, %v1191, %v1418
      %1420 = vst [vmem:[%s1352 + $0x6c] sm:$0xf] %v1419
      %1421 = vst.msk [vmem:[%s1352 + $0x70] sm:$0xf] %vm408, %v1200
      %v1422 = vld [vmem:[%s1352 + $0x74] sm:$0x1]
      %v1423 = vsel %vm419, %v1201, %v1422
      %1424 = vst [vmem:[%s1352 + $0x74] sm:$0x1] %v1423
      %v1425 = vld [vmem:[%s1352 + $0x78] sm:$0xf]
      %v1426 = vsel %vm1354, %v1208, %v1425
      %1427 = vst [vmem:[%s1352 + $0x78] sm:$0xf] %v1426
      %1428 = vst.msk [vmem:[%s1352 + $0x7c] sm:$0xf] %vm408, %v1217
      %v1429 = vld [vmem:[%s1352 + $0x80] sm:$0x1]
      %v1430 = vsel %vm419, %v1218, %v1429
      %1431 = vst [vmem:[%s1352 + $0x80] sm:$0x1] %v1430
      %v1432 = vld [vmem:[%s1352 + $0x84] sm:$0xf]
      %v1433 = vsel %vm1354, %v1225, %v1432
      %1434 = vst [vmem:[%s1352 + $0x84] sm:$0xf] %v1433
      %1435 = vst.msk [vmem:[%s1352 + $0x88] sm:$0xf] %vm408, %v1234
      %v1436 = vld [vmem:[%s1352 + $0x8c] sm:$0x1]
      %v1437 = vsel %vm419, %v1235, %v1436
      %1438 = vst [vmem:[%s1352 + $0x8c] sm:$0x1] %v1437
      %v1439 = vld [vmem:[%s1352 + $0x90] sm:$0xf]
      %v1440 = vsel %vm1354, %v1242, %v1439
      %1441 = vst [vmem:[%s1352 + $0x90] sm:$0xf] %v1440
      %1442 = vst.msk [vmem:[%s1352 + $0x94] sm:$0xf] %vm408, %v1251
      %v1443 = vld [vmem:[%s1352 + $0x98] sm:$0x1]
      %v1444 = vsel %vm419, %v1252, %v1443
      %1445 = vst [vmem:[%s1352 + $0x98] sm:$0x1] %v1444
      %v1446 = vld [vmem:[%s1352 + $0x9c] sm:$0xf]
      %v1447 = vsel %vm1354, %v1259, %v1446
      %1448 = vst [vmem:[%s1352 + $0x9c] sm:$0xf] %v1447
      %1449 = vst.msk [vmem:[%s1352 + $0xa0] sm:$0xf] %vm408, %v1268
      %v1450 = vld [vmem:[%s1352 + $0xa4] sm:$0x1]
      %v1451 = vsel %vm419, %v1269, %v1450
      %1452 = vst [vmem:[%s1352 + $0xa4] sm:$0x1] %v1451
      %v1453 = vld [vmem:[%s1352 + $0xa8] sm:$0xf]
      %v1454 = vsel %vm1354, %v1276, %v1453
      %1455 = vst [vmem:[%s1352 + $0xa8] sm:$0xf] %v1454
      %1456 = vst.msk [vmem:[%s1352 + $0xac] sm:$0xf] %vm408, %v1285
      %v1457 = vld [vmem:[%s1352 + $0xb0] sm:$0x1]
      %v1458 = vsel %vm419, %v1286, %v1457
      %1459 = vst [vmem:[%s1352 + $0xb0] sm:$0x1] %v1458
      %v1460 = vld [vmem:[%s1352 + $0xb4] sm:$0xf]
      %v1461 = vsel %vm1354, %v1293, %v1460
      %1462 = vst [vmem:[%s1352 + $0xb4] sm:$0xf] %v1461
      %1463 = vst.msk [vmem:[%s1352 + $0xb8] sm:$0xf] %vm408, %v1302
      %v1464 = vld [vmem:[%s1352 + $0xbc] sm:$0x1]
      %v1465 = vsel %vm419, %v1303, %v1464
      %1466 = vst [vmem:[%s1352 + $0xbc] sm:$0x1] %v1465
      %v1467 = vld [vmem:[#allocation2] sm:$0xf]
      %v1468 = vld [vmem:[#allocation2 + $0x4] sm:$0xf]
      %v1469 = vld [vmem:[#allocation2 + $0xc] sm:$0xf]
      %v1470 = vld [vmem:[#allocation2 + $0x10] sm:$0xf]
      %v1471 = vld [vmem:[#allocation2 + $0x18] sm:$0xf]
      %v1472 = vld [vmem:[#allocation2 + $0x1c] sm:$0xf]
      %v1473 = vld [vmem:[#allocation2 + $0x24] sm:$0xf]
      %v1474 = vld [vmem:[#allocation2 + $0x28] sm:$0xf]
      %v1475 = vld [vmem:[#allocation2 + $0x30] sm:$0xf]
      %v1476 = vld [vmem:[#allocation2 + $0x34] sm:$0xf]
      %v1477 = vld [vmem:[#allocation2 + $0x3c] sm:$0xf]
      %v1478 = vld [vmem:[#allocation2 + $0x40] sm:$0xf]
      %v1479 = vld [vmem:[#allocation2 + $0x48] sm:$0xf]
      %v1480 = vld [vmem:[#allocation2 + $0x4c] sm:$0xf]
      %v1481 = vld [vmem:[#allocation2 + $0x54] sm:$0xf]
      %v1482 = vld [vmem:[#allocation2 + $0x58] sm:$0xf]
      %v1483 = vld [vmem:[#allocation2 + $0x60] sm:$0xf]
      %v1484 = vld [vmem:[#allocation2 + $0x64] sm:$0xf]
      %v1485 = vld [vmem:[#allocation2 + $0x6c] sm:$0xf]
      %v1486 = vld [vmem:[#allocation2 + $0x70] sm:$0xf]
      %v1487 = vld [vmem:[#allocation2 + $0x78] sm:$0xf]
      %v1488 = vld [vmem:[#allocation2 + $0x7c] sm:$0xf]
      %v1489 = vld [vmem:[#allocation2 + $0x84] sm:$0xf]
      %v1490 = vld [vmem:[#allocation2 + $0x88] sm:$0xf]
      %v1491 = vld [vmem:[#allocation2 + $0x90] sm:$0xf]
      %v1492 = vld [vmem:[#allocation2 + $0x94] sm:$0xf]
      %v1493 = vld [vmem:[#allocation2 + $0x9c] sm:$0xf]
      %v1494 = vld [vmem:[#allocation2 + $0xa0] sm:$0xf]
      %v1495 = vld [vmem:[#allocation2 + $0xa8] sm:$0xf]
      %v1496 = vld [vmem:[#allocation2 + $0xac] sm:$0xf]
      %v1497 = vld [vmem:[#allocation2 + $0xb4] sm:$0xf]
      %v1498 = vld [vmem:[#allocation2 + $0xb8] sm:$0xf]
      %v1499 = vld [vmem:[%s2] sm:$0xf]
      %v1500 = vld [vmem:[#allocation2 + $0x8] sm:$0x1]
      %v1501 = vld [vmem:[#allocation2 + $0x14] sm:$0x1]
      %v1502 = vld [vmem:[#allocation2 + $0x20] sm:$0x1]
      %v1503 = vld [vmem:[#allocation2 + $0x2c] sm:$0x1]
      %v1504 = vld [vmem:[#allocation2 + $0x38] sm:$0x1]
      %v1505 = vld [vmem:[#allocation2 + $0x44] sm:$0x1]
      %v1506 = vld [vmem:[#allocation2 + $0x50] sm:$0x1]
      %v1507 = vld [vmem:[#allocation2 + $0x5c] sm:$0x1]
      %v1508 = vld [vmem:[#allocation2 + $0x68] sm:$0x1]
      %v1509 = vld [vmem:[#allocation2 + $0x74] sm:$0x1]
      %v1510 = vld [vmem:[#allocation2 + $0x80] sm:$0x1]
      %v1511 = vld [vmem:[#allocation2 + $0x8c] sm:$0x1]
      %v1512 = vld [vmem:[#allocation2 + $0x98] sm:$0x1]
      %v1513 = vld [vmem:[#allocation2 + $0xa4] sm:$0x1]
      %v1514 = vld [vmem:[#allocation2 + $0xb0] sm:$0x1]
      %v1515 = vld [vmem:[#allocation2 + $0xbc] sm:$0x1]
      %vm1516 = vsmask.f32 3328
      %vm1517 = vsmask.f32 7440
      %vm1518 = vmor %vm1516, %vm1517
      %v1520 = vshrl.u32 %v1467, 16
      %v1522 = vrot.slane %v1520, 4
      %v1523 = vshll.u32 %v1467, 16
      %v1525 = vrot.slane %v1523, 5
      %v1526 = vor.u32 %v1522, %v1525
      %v1527 = vrot.slane %v1526, 4
      %v1529 = vshll.u32 %v1468, 16
      %v1531 = vrot.slane %v1529, 5
      %v1532 = vsel %vm1518, %v1527, %v1531
      %v1533 = vshrl.u32 %v1468, 16
      %v1535 = vrot.slane %v1533, 4
      %v1536 = vor.u32 %v1535, %v1531
      %v1537 = vrot.slane %v1536, 4
      %v1539 = vshll.u32 %v1500, 16
      %v1541 = vrot.slane %v1539, 5
      %v1542 = vsel %vm1518, %v1537, %v1541
      %v1544 = vshrl.u32 %v1469, 16
      %v1546 = vrot.slane %v1544, 4
      %v1547 = vshll.u32 %v1469, 16
      %v1549 = vrot.slane %v1547, 5
      %v1550 = vor.u32 %v1546, %v1549
      %v1551 = vrot.slane %v1550, 4
      %v1553 = vshll.u32 %v1470, 16
      %v1555 = vrot.slane %v1553, 5
      %v1556 = vsel %vm1518, %v1551, %v1555
      %v1557 = vshrl.u32 %v1470, 16
      %v1559 = vrot.slane %v1557, 4
      %v1560 = vor.u32 %v1559, %v1555
      %v1561 = vrot.slane %v1560, 4
      %v1563 = vshll.u32 %v1501, 16
      %v1565 = vrot.slane %v1563, 5
      %v1566 = vsel %vm1518, %v1561, %v1565
      %v1568 = vshrl.u32 %v1471, 16
      %v1570 = vrot.slane %v1568, 4
      %v1571 = vshll.u32 %v1471, 16
      %v1573 = vrot.slane %v1571, 5
      %v1574 = vor.u32 %v1570, %v1573
      %v1575 = vrot.slane %v1574, 4
      %v1577 = vshll.u32 %v1472, 16
      %v1579 = vrot.slane %v1577, 5
      %v1580 = vsel %vm1518, %v1575, %v1579
      %v1581 = vshrl.u32 %v1472, 16
      %v1583 = vrot.slane %v1581, 4
      %v1584 = vor.u32 %v1583, %v1579
      %v1585 = vrot.slane %v1584, 4
      %v1587 = vshll.u32 %v1502, 16
      %v1589 = vrot.slane %v1587, 5
      %v1590 = vsel %vm1518, %v1585, %v1589
      %v1592 = vshrl.u32 %v1473, 16
      %v1594 = vrot.slane %v1592, 4
      %v1595 = vshll.u32 %v1473, 16
      %v1597 = vrot.slane %v1595, 5
      %v1598 = vor.u32 %v1594, %v1597
      %v1599 = vrot.slane %v1598, 4
      %v1601 = vshll.u32 %v1474, 16
      %v1603 = vrot.slane %v1601, 5
      %v1604 = vsel %vm1518, %v1599, %v1603
      %v1605 = vshrl.u32 %v1474, 16
      %v1607 = vrot.slane %v1605, 4
      %v1608 = vor.u32 %v1607, %v1603
      %v1609 = vrot.slane %v1608, 4
      %v1611 = vshll.u32 %v1503, 16
      %v1613 = vrot.slane %v1611, 5
      %v1614 = vsel %vm1518, %v1609, %v1613
      %v1616 = vshrl.u32 %v1475, 16
      %v1618 = vrot.slane %v1616, 4
      %v1619 = vshll.u32 %v1475, 16
      %v1621 = vrot.slane %v1619, 5
      %v1622 = vor.u32 %v1618, %v1621
      %v1623 = vrot.slane %v1622, 4
      %v1625 = vshll.u32 %v1476, 16
      %v1627 = vrot.slane %v1625, 5
      %v1628 = vsel %vm1518, %v1623, %v1627
      %v1629 = vshrl.u32 %v1476, 16
      %v1631 = vrot.slane %v1629, 4
      %v1632 = vor.u32 %v1631, %v1627
      %v1633 = vrot.slane %v1632, 4
      %v1635 = vshll.u32 %v1504, 16
      %v1637 = vrot.slane %v1635, 5
      %v1638 = vsel %vm1518, %v1633, %v1637
      %v1640 = vshrl.u32 %v1477, 16
      %v1642 = vrot.slane %v1640, 4
      %v1643 = vshll.u32 %v1477, 16
      %v1645 = vrot.slane %v1643, 5
      %v1646 = vor.u32 %v1642, %v1645
      %v1647 = vrot.slane %v1646, 4
      %v1649 = vshll.u32 %v1478, 16
      %v1651 = vrot.slane %v1649, 5
      %v1652 = vsel %vm1518, %v1647, %v1651
      %v1653 = vshrl.u32 %v1478, 16
      %v1655 = vrot.slane %v1653, 4
      %v1656 = vor.u32 %v1655, %v1651
      %v1657 = vrot.slane %v1656, 4
      %v1659 = vshll.u32 %v1505, 16
      %v1661 = vrot.slane %v1659, 5
      %v1662 = vsel %vm1518, %v1657, %v1661
      %v1664 = vshrl.u32 %v1479, 16
      %v1666 = vrot.slane %v1664, 4
      %v1667 = vshll.u32 %v1479, 16
      %v1669 = vrot.slane %v1667, 5
      %v1670 = vor.u32 %v1666, %v1669
      %v1671 = vrot.slane %v1670, 4
      %v1673 = vshll.u32 %v1480, 16
      %v1675 = vrot.slane %v1673, 5
      %v1676 = vsel %vm1518, %v1671, %v1675
      %v1677 = vshrl.u32 %v1480, 16
      %v1679 = vrot.slane %v1677, 4
      %v1680 = vor.u32 %v1679, %v1675
      %v1681 = vrot.slane %v1680, 4
      %v1683 = vshll.u32 %v1506, 16
      %v1685 = vrot.slane %v1683, 5
      %v1686 = vsel %vm1518, %v1681, %v1685
      %v1688 = vshrl.u32 %v1481, 16
      %v1690 = vrot.slane %v1688, 4
      %v1691 = vshll.u32 %v1481, 16
      %v1693 = vrot.slane %v1691, 5
      %v1694 = vor.u32 %v1690, %v1693
      %v1695 = vrot.slane %v1694, 4
      %v1697 = vshll.u32 %v1482, 16
      %v1699 = vrot.slane %v1697, 5
      %v1700 = vsel %vm1518, %v1695, %v1699
      %v1701 = vshrl.u32 %v1482, 16
      %v1703 = vrot.slane %v1701, 4
      %v1704 = vor.u32 %v1703, %v1699
      %v1705 = vrot.slane %v1704, 4
      %v1707 = vshll.u32 %v1507, 16
      %v1709 = vrot.slane %v1707, 5
      %v1710 = vsel %vm1518, %v1705, %v1709
      %v1712 = vshrl.u32 %v1483, 16
      %v1714 = vrot.slane %v1712, 4
      %v1715 = vshll.u32 %v1483, 16
      %v1717 = vrot.slane %v1715, 5
      %v1718 = vor.u32 %v1714, %v1717
      %v1719 = vrot.slane %v1718, 4
      %v1721 = vshll.u32 %v1484, 16
      %v1723 = vrot.slane %v1721, 5
      %v1724 = vsel %vm1518, %v1719, %v1723
      %v1725 = vshrl.u32 %v1484, 16
      %v1727 = vrot.slane %v1725, 4
      %v1728 = vor.u32 %v1727, %v1723
      %v1729 = vrot.slane %v1728, 4
      %v1731 = vshll.u32 %v1508, 16
      %v1733 = vrot.slane %v1731, 5
      %v1734 = vsel %vm1518, %v1729, %v1733
      %v1736 = vshrl.u32 %v1485, 16
      %v1738 = vrot.slane %v1736, 4
      %v1739 = vshll.u32 %v1485, 16
      %v1741 = vrot.slane %v1739, 5
      %v1742 = vor.u32 %v1738, %v1741
      %v1743 = vrot.slane %v1742, 4
      %v1745 = vshll.u32 %v1486, 16
      %v1747 = vrot.slane %v1745, 5
      %v1748 = vsel %vm1518, %v1743, %v1747
      %v1749 = vshrl.u32 %v1486, 16
      %v1751 = vrot.slane %v1749, 4
      %v1752 = vor.u32 %v1751, %v1747
      %v1753 = vrot.slane %v1752, 4
      %v1755 = vshll.u32 %v1509, 16
      %v1757 = vrot.slane %v1755, 5
      %v1758 = vsel %vm1518, %v1753, %v1757
      %v1760 = vshrl.u32 %v1487, 16
      %v1762 = vrot.slane %v1760, 4
      %v1763 = vshll.u32 %v1487, 16
      %v1765 = vrot.slane %v1763, 5
      %v1766 = vor.u32 %v1762, %v1765
      %v1767 = vrot.slane %v1766, 4
      %v1769 = vshll.u32 %v1488, 16
      %v1771 = vrot.slane %v1769, 5
      %v1772 = vsel %vm1518, %v1767, %v1771
      %v1773 = vshrl.u32 %v1488, 16
      %v1775 = vrot.slane %v1773, 4
      %v1776 = vor.u32 %v1775, %v1771
      %v1777 = vrot.slane %v1776, 4
      %v1779 = vshll.u32 %v1510, 16
      %v1781 = vrot.slane %v1779, 5
      %v1782 = vsel %vm1518, %v1777, %v1781
      %v1784 = vshrl.u32 %v1489, 16
      %v1786 = vrot.slane %v1784, 4
      %v1787 = vshll.u32 %v1489, 16
      %v1789 = vrot.slane %v1787, 5
      %v1790 = vor.u32 %v1786, %v1789
      %v1791 = vrot.slane %v1790, 4
      %v1793 = vshll.u32 %v1490, 16
      %v1795 = vrot.slane %v1793, 5
      %v1796 = vsel %vm1518, %v1791, %v1795
      %v1797 = vshrl.u32 %v1490, 16
      %v1799 = vrot.slane %v1797, 4
      %v1800 = vor.u32 %v1799, %v1795
      %v1801 = vrot.slane %v1800, 4
      %v1803 = vshll.u32 %v1511, 16
      %v1805 = vrot.slane %v1803, 5
      %v1806 = vsel %vm1518, %v1801, %v1805
      %v1808 = vshrl.u32 %v1491, 16
      %v1810 = vrot.slane %v1808, 4
      %v1811 = vshll.u32 %v1491, 16
      %v1813 = vrot.slane %v1811, 5
      %v1814 = vor.u32 %v1810, %v1813
      %v1815 = vrot.slane %v1814, 4
      %v1817 = vshll.u32 %v1492, 16
      %v1819 = vrot.slane %v1817, 5
      %v1820 = vsel %vm1518, %v1815, %v1819
      %v1821 = vshrl.u32 %v1492, 16
      %v1823 = vrot.slane %v1821, 4
      %v1824 = vor.u32 %v1823, %v1819
      %v1825 = vrot.slane %v1824, 4
      %v1827 = vshll.u32 %v1512, 16
      %v1829 = vrot.slane %v1827, 5
      %v1830 = vsel %vm1518, %v1825, %v1829
      %v1832 = vshrl.u32 %v1493, 16
      %v1834 = vrot.slane %v1832, 4
      %v1835 = vshll.u32 %v1493, 16
      %v1837 = vrot.slane %v1835, 5
      %v1838 = vor.u32 %v1834, %v1837
      %v1839 = vrot.slane %v1838, 4
      %v1841 = vshll.u32 %v1494, 16
      %v1843 = vrot.slane %v1841, 5
      %v1844 = vsel %vm1518, %v1839, %v1843
      %v1845 = vshrl.u32 %v1494, 16
      %v1847 = vrot.slane %v1845, 4
      %v1848 = vor.u32 %v1847, %v1843
      %v1849 = vrot.slane %v1848, 4
      %v1851 = vshll.u32 %v1513, 16
      %v1853 = vrot.slane %v1851, 5
      %v1854 = vsel %vm1518, %v1849, %v1853
      %v1856 = vshrl.u32 %v1495, 16
      %v1858 = vrot.slane %v1856, 4
      %v1859 = vshll.u32 %v1495, 16
      %v1861 = vrot.slane %v1859, 5
      %v1862 = vor.u32 %v1858, %v1861
      %v1863 = vrot.slane %v1862, 4
      %v1865 = vshll.u32 %v1496, 16
      %v1867 = vrot.slane %v1865, 5
      %v1868 = vsel %vm1518, %v1863, %v1867
      %v1869 = vshrl.u32 %v1496, 16
      %v1871 = vrot.slane %v1869, 4
      %v1872 = vor.u32 %v1871, %v1867
      %v1873 = vrot.slane %v1872, 4
      %v1875 = vshll.u32 %v1514, 16
      %v1877 = vrot.slane %v1875, 5
      %v1878 = vsel %vm1518, %v1873, %v1877
      %v1880 = vshrl.u32 %v1497, 16
      %v1882 = vrot.slane %v1880, 4
      %v1883 = vshll.u32 %v1497, 16
      %v1885 = vrot.slane %v1883, 5
      %v1886 = vor.u32 %v1882, %v1885
      %v1887 = vrot.slane %v1886, 4
      %v1889 = vshll.u32 %v1498, 16
      %v1891 = vrot.slane %v1889, 5
      %v1892 = vsel %vm1518, %v1887, %v1891
      %v1893 = vshrl.u32 %v1498, 16
      %v1895 = vrot.slane %v1893, 4
      %v1896 = vor.u32 %v1895, %v1891
      %v1897 = vrot.slane %v1896, 4
      %v1899 = vshll.u32 %v1515, 16
      %v1901 = vrot.slane %v1899, 5
      %v1902 = vsel %vm1518, %v1897, %v1901
      %s1903 = scalar_lea.vmem %s2, 4
      %v1904 = vld [vmem:[%s1903] sm:$0xf]
      %v1905 = vunpack.c.l.b16 %v1532
      %v1906 = vunpack.c.l.b16 %v1542
      %v1907 = vunpack.c.l.b16 %v1556
      %v1908 = vunpack.c.l.b16 %v1566
      %v1909 = vunpack.c.l.b16 %v1580
      %v1910 = vunpack.c.l.b16 %v1590
      %v1911 = vunpack.c.l.b16 %v1604
      %v1912 = vunpack.c.l.b16 %v1614
      %v1913 = vunpack.c.l.b16 %v1628
      %v1914 = vunpack.c.l.b16 %v1638
      %v1915 = vunpack.c.l.b16 %v1652
      %v1916 = vunpack.c.l.b16 %v1662
      %v1917 = vunpack.c.l.b16 %v1676
      %v1918 = vunpack.c.l.b16 %v1686
      %v1919 = vunpack.c.l.b16 %v1700
      %v1920 = vunpack.c.l.b16 %v1710
      %v1921 = vunpack.c.l.b16 %v1724
      %v1922 = vunpack.c.l.b16 %v1734
      %v1923 = vunpack.c.l.b16 %v1748
      %v1924 = vunpack.c.l.b16 %v1758
      %v1925 = vunpack.c.l.b16 %v1772
      %v1926 = vunpack.c.l.b16 %v1782
      %v1927 = vunpack.c.l.b16 %v1796
      %v1928 = vunpack.c.l.b16 %v1806
      %v1929 = vunpack.c.l.b16 %v1820
      %v1930 = vunpack.c.l.b16 %v1830
      %v1931 = vunpack.c.l.b16 %v1844
      %v1932 = vunpack.c.l.b16 %v1854
      %v1933 = vunpack.c.l.b16 %v1868
      %v1934 = vunpack.c.l.b16 %v1878
      %v1935 = vunpack.c.l.b16 %v1892
      %v1936 = vunpack.c.l.b16 %v1902
      %v1937 = vpack.c.b16 %v1906, %v1905
      %v1938 = vpack.c.b16 %v1908, %v1907
      %v1939 = vpack.c.b16 %v1910, %v1909
      %v1940 = vpack.c.b16 %v1912, %v1911
      %v1941 = vpack.c.b16 %v1914, %v1913
      %v1942 = vpack.c.b16 %v1916, %v1915
      %v1943 = vpack.c.b16 %v1918, %v1917
      %v1944 = vpack.c.b16 %v1920, %v1919
      %v1945 = vpack.c.b16 %v1922, %v1921
      %v1946 = vpack.c.b16 %v1924, %v1923
      %v1947 = vpack.c.b16 %v1926, %v1925
      %v1948 = vpack.c.b16 %v1928, %v1927
      %v1949 = vpack.c.b16 %v1930, %v1929
      %v1950 = vpack.c.b16 %v1932, %v1931
      %v1951 = vpack.c.b16 %v1934, %v1933
      %v1952 = vpack.c.b16 %v1936, %v1935
      %vm1953 = vcmask 64512
      %v1955 = vsel %vm1953, %v1937, 0
      %v1958 = vsel %vm1953, %v1938, 0
      %v1961 = vsel %vm1953, %v1939, 0
      %v1964 = vsel %vm1953, %v1940, 0
      %v1967 = vsel %vm1953, %v1941, 0
      %v1970 = vsel %vm1953, %v1942, 0
      %v1973 = vsel %vm1953, %v1943, 0
      %v1976 = vsel %vm1953, %v1944, 0
      %v1979 = vsel %vm1953, %v1945, 0
      %v1982 = vsel %vm1953, %v1946, 0
      %v1985 = vsel %vm1953, %v1947, 0
      %v1988 = vsel %vm1953, %v1948, 0
      %v1991 = vsel %vm1953, %v1949, 0
      %v1994 = vsel %vm1953, %v1950, 0
      %v1997 = vsel %vm1953, %v1951, 0
      %v2000 = vsel %vm1953, %v1952, 0
      %vm2002 = vcmask 1043456
      %v2004 = vsel %vm2002, %v1904, 0
      %2006 = vmatprep.subr.bf16.mxu0 0
      %2007 = vmatpush1.bf16.msra.mxu0 %v2004
      %2008 = vmatprep.subr.bf16.mxu0 0
      %2009 = vmatpush1.bf16.msra.mxu0 0
      %2010 = vmatprep.subr.bf16.mxu0 0
      %2011 = vmatpush1.bf16.msra.mxu0 0
      %2012 = vmatprep.subr.bf16.mxu0 0
      %2013 = vmatpush1.bf16.msra.mxu0 0
      %2014 = vmatprep.subr.bf16.mxu0 0
      %2015 = vmatpush1.bf16.msra.mxu0 0
      %2016 = vmatprep.subr.bf16.mxu0 0
      %2017 = vmatpush1.bf16.msra.mxu0 0
      %2018 = vmatprep.subr.bf16.mxu0 0
      %2019 = vmatpush1.bf16.msra.mxu0 0
      %2020 = vmatprep.subr.bf16.mxu0 0
      %2021 = vmatpush1.bf16.msra.mxu0 0
      %2022 = vmatprep.subr.bf16.mxu0 0
      %2023 = vmatpush1.bf16.msra.mxu0 0
      %2024 = vmatprep.subr.bf16.mxu0 0
      %2025 = vmatpush1.bf16.msra.mxu0 0
      %2026 = vmatprep.subr.bf16.mxu0 0
      %2027 = vmatpush1.bf16.msra.mxu0 0
      %2028 = vmatprep.subr.bf16.mxu0 0
      %2029 = vmatpush1.bf16.msra.mxu0 0
      %2030 = vmatprep.subr.bf16.mxu0 0
      %2031 = vmatpush1.bf16.msra.mxu0 0
      %2032 = vmatprep.subr.bf16.mxu0 0
      %2033 = vmatpush1.bf16.msra.mxu0 0
      %2034 = vmatprep.subr.bf16.mxu0 0
      %2035 = vmatpush1.bf16.msra.mxu0 0
      %2036 = vmatprep.subr.bf16.mxu0 0
      %2037 = vmatpush1.bf16.msra.mxu0 0
      %2038 = vmatprep.mubr.bf16.mxu0 0
      %2039 = vmatmul.mubr.bf16.gmra.mrb[0].mxu0 %v1955
      %v2040 = vpop.f32.mrb[0].mxu0
      %v2041 = vadd.f32 0.0, %v2040
      %v2042 = vpop.f32.mrb[0].mxu0
      %v2043 = vpop.f32.mrb[0].mxu0
      %v2044 = vadd.f32 0.0, %v2043
      %v2045 = vpop.f32.mrb[0].mxu0
      %2046 = vmatprep.mubr.bf16.mxu0 0
      %2047 = vmatmul.mubr.bf16.gmra.mrb[0].mxu0 %v1958
      %v2048 = vpop.f32.mrb[0].mxu0
      %v2049 = vadd.f32 0.0, %v2048
      %v2050 = vpop.f32.mrb[0].mxu0
      %v2051 = vpop.f32.mrb[0].mxu0
      %v2052 = vadd.f32 0.0, %v2051
      %v2053 = vpop.f32.mrb[0].mxu0
      %2054 = vmatprep.mubr.bf16.mxu0 0
      %2055 = vmatmul.mubr.bf16.gmra.mrb[0].mxu0 %v1961
      %v2056 = vpop.f32.mrb[0].mxu0
      %v2057 = vadd.f32 0.0, %v2056
      %v2058 = vpop.f32.mrb[0].mxu0
      %v2059 = vpop.f32.mrb[0].mxu0
      %v2060 = vadd.f32 0.0, %v2059
      %v2061 = vpop.f32.mrb[0].mxu0
      %2062 = vmatprep.mubr.bf16.mxu0 0
      %2063 = vmatmul.mubr.bf16.gmra.mrb[0].mxu0 %v1964
      %v2064 = vpop.f32.mrb[0].mxu0
      %v2065 = vadd.f32 0.0, %v2064
      %v2066 = vpop.f32.mrb[0].mxu0
      %v2067 = vpop.f32.mrb[0].mxu0
      %v2068 = vadd.f32 0.0, %v2067
      %v2069 = vpop.f32.mrb[0].mxu0
      %2070 = vmatprep.mubr.bf16.mxu0 0
      %2071 = vmatmul.mubr.bf16.gmra.mrb[0].mxu0 %v1967
      %v2072 = vpop.f32.mrb[0].mxu0
      %v2073 = vadd.f32 0.0, %v2072
      %v2074 = vpop.f32.mrb[0].mxu0
      %v2075 = vpop.f32.mrb[0].mxu0
      %v2076 = vadd.f32 0.0, %v2075
      %v2077 = vpop.f32.mrb[0].mxu0
      %2078 = vmatprep.mubr.bf16.mxu0 0
      %2079 = vmatmul.mubr.bf16.gmra.mrb[0].mxu0 %v1970
      %v2080 = vpop.f32.mrb[0].mxu0
      %v2081 = vadd.f32 0.0, %v2080
      %v2082 = vpop.f32.mrb[0].mxu0
      %v2083 = vpop.f32.mrb[0].mxu0
      %v2084 = vadd.f32 0.0, %v2083
      %v2085 = vpop.f32.mrb[0].mxu0
      %2086 = vmatprep.mubr.bf16.mxu0 0
      %2087 = vmatmul.mubr.bf16.gmra.mrb[0].mxu0 %v1973
      %v2088 = vpop.f32.mrb[0].mxu0
      %v2089 = vadd.f32 0.0, %v2088
      %v2090 = vpop.f32.mrb[0].mxu0
      %v2091 = vpop.f32.mrb[0].mxu0
      %v2092 = vadd.f32 0.0, %v2091
      %v2093 = vpop.f32.mrb[0].mxu0
      %2094 = vmatprep.mubr.bf16.mxu0 0
      %2095 = vmatmul.mubr.bf16.gmra.mrb[0].mxu0 %v1976
      %v2096 = vpop.f32.mrb[0].mxu0
      %v2097 = vadd.f32 0.0, %v2096
      %v2098 = vpop.f32.mrb[0].mxu0
      %v2099 = vpop.f32.mrb[0].mxu0
      %v2100 = vadd.f32 0.0, %v2099
      %v2101 = vpop.f32.mrb[0].mxu0
      %2102 = vmatprep.mubr.bf16.mxu0 0
      %2103 = vmatmul.mubr.bf16.gmra.mrb[0].mxu0 %v1979
      %v2104 = vpop.f32.mrb[0].mxu0
      %v2105 = vadd.f32 0.0, %v2104
      %v2106 = vpop.f32.mrb[0].mxu0
      %v2107 = vpop.f32.mrb[0].mxu0
      %v2108 = vadd.f32 0.0, %v2107
      %v2109 = vpop.f32.mrb[0].mxu0
      %2110 = vmatprep.mubr.bf16.mxu0 0
      %2111 = vmatmul.mubr.bf16.gmra.mrb[0].mxu0 %v1982
      %v2112 = vpop.f32.mrb[0].mxu0
      %v2113 = vadd.f32 0.0, %v2112
      %v2114 = vpop.f32.mrb[0].mxu0
      %v2115 = vpop.f32.mrb[0].mxu0
      %v2116 = vadd.f32 0.0, %v2115
      %v2117 = vpop.f32.mrb[0].mxu0
      %2118 = vmatprep.mubr.bf16.mxu0 0
      %2119 = vmatmul.mubr.bf16.gmra.mrb[0].mxu0 %v1985
      %v2120 = vpop.f32.mrb[0].mxu0
      %v2121 = vadd.f32 0.0, %v2120
      %v2122 = vpop.f32.mrb[0].mxu0
      %v2123 = vpop.f32.mrb[0].mxu0
      %v2124 = vadd.f32 0.0, %v2123
      %v2125 = vpop.f32.mrb[0].mxu0
      %2126 = vmatprep.mubr.bf16.mxu0 0
      %2127 = vmatmul.mubr.bf16.gmra.mrb[0].mxu0 %v1988
      %v2128 = vpop.f32.mrb[0].mxu0
      %v2129 = vadd.f32 0.0, %v2128
      %v2130 = vpop.f32.mrb[0].mxu0
      %v2131 = vpop.f32.mrb[0].mxu0
      %v2132 = vadd.f32 0.0, %v2131
      %v2133 = vpop.f32.mrb[0].mxu0
      %2134 = vmatprep.mubr.bf16.mxu0 0
      %2135 = vmatmul.mubr.bf16.gmra.mrb[0].mxu0 %v1991
      %v2136 = vpop.f32.mrb[0].mxu0
      %v2137 = vadd.f32 0.0, %v2136
      %v2138 = vpop.f32.mrb[0].mxu0
      %v2139 = vpop.f32.mrb[0].mxu0
      %v2140 = vadd.f32 0.0, %v2139
      %v2141 = vpop.f32.mrb[0].mxu0
      %2142 = vmatprep.mubr.bf16.mxu0 0
      %2143 = vmatmul.mubr.bf16.gmra.mrb[0].mxu0 %v1994
      %v2144 = vpop.f32.mrb[0].mxu0
      %v2145 = vadd.f32 0.0, %v2144
      %v2146 = vpop.f32.mrb[0].mxu0
      %v2147 = vpop.f32.mrb[0].mxu0
      %v2148 = vadd.f32 0.0, %v2147
      %v2149 = vpop.f32.mrb[0].mxu0
      %2150 = vmatprep.mubr.bf16.mxu0 0
      %2151 = vmatmul.mubr.bf16.gmra.mrb[0].mxu0 %v1997
      %v2152 = vpop.f32.mrb[0].mxu0
      %v2153 = vadd.f32 0.0, %v2152
      %v2154 = vpop.f32.mrb[0].mxu0
      %v2155 = vpop.f32.mrb[0].mxu0
      %v2156 = vadd.f32 0.0, %v2155
      %v2157 = vpop.f32.mrb[0].mxu0
      %2158 = vmatprep.mubr.bf16.mxu0 0
      %2159 = vmatmul.mubr.bf16.gmra.mrb[0].mxu0 %v2000
      %v2160 = vpop.f32.mrb[0].mxu0
      %v2161 = vadd.f32 0.0, %v2160
      %v2162 = vpop.f32.mrb[0].mxu0
      %v2163 = vpop.f32.mrb[0].mxu0
      %v2164 = vadd.f32 0.0, %v2163
      %v2165 = vpop.f32.mrb[0].mxu0
      %2166 = vdwg.mxu0
      %v2199 = vunpack.c.l.b16 %v1467
      %v2200 = vunpack.c.l.b16 %v1468
      %v2201 = vunpack.c.l.b16 %v1469
      %v2202 = vunpack.c.l.b16 %v1470
      %v2203 = vunpack.c.l.b16 %v1471
      %v2204 = vunpack.c.l.b16 %v1472
      %v2205 = vunpack.c.l.b16 %v1473
      %v2206 = vunpack.c.l.b16 %v1474
      %v2207 = vunpack.c.l.b16 %v1475
      %v2208 = vunpack.c.l.b16 %v1476
      %v2209 = vunpack.c.l.b16 %v1477
      %v2210 = vunpack.c.l.b16 %v1478
      %v2211 = vunpack.c.l.b16 %v1479
      %v2212 = vunpack.c.l.b16 %v1480
      %v2213 = vunpack.c.l.b16 %v1481
      %v2214 = vunpack.c.l.b16 %v1482
      %v2215 = vunpack.c.l.b16 %v1483
      %v2216 = vunpack.c.l.b16 %v1484
      %v2217 = vunpack.c.l.b16 %v1485
      %v2218 = vunpack.c.l.b16 %v1486
      %v2219 = vunpack.c.l.b16 %v1487
      %v2220 = vunpack.c.l.b16 %v1488
      %v2221 = vunpack.c.l.b16 %v1489
      %v2222 = vunpack.c.l.b16 %v1490
      %v2223 = vunpack.c.l.b16 %v1491
      %v2224 = vunpack.c.l.b16 %v1492
      %v2225 = vunpack.c.l.b16 %v1493
      %v2226 = vunpack.c.l.b16 %v1494
      %v2227 = vunpack.c.l.b16 %v1495
      %v2228 = vunpack.c.l.b16 %v1496
      %v2229 = vunpack.c.l.b16 %v1497
      %v2230 = vunpack.c.l.b16 %v1498
      %v2231 = vpack.c.b16 %v2200, %v2199
      %v2232 = vpack.c.b16 %v2202, %v2201
      %v2233 = vpack.c.b16 %v2204, %v2203
      %v2234 = vpack.c.b16 %v2206, %v2205
      %v2235 = vpack.c.b16 %v2208, %v2207
      %v2236 = vpack.c.b16 %v2210, %v2209
      %v2237 = vpack.c.b16 %v2212, %v2211
      %v2238 = vpack.c.b16 %v2214, %v2213
      %v2239 = vpack.c.b16 %v2216, %v2215
      %v2240 = vpack.c.b16 %v2218, %v2217
      %v2241 = vpack.c.b16 %v2220, %v2219
      %v2242 = vpack.c.b16 %v2222, %v2221
      %v2243 = vpack.c.b16 %v2224, %v2223
      %v2244 = vpack.c.b16 %v2226, %v2225
      %v2245 = vpack.c.b16 %v2228, %v2227
      %v2246 = vpack.c.b16 %v2230, %v2229
      %v2248 = vsel %vm1953, %v2231, 0
      %v2251 = vsel %vm1953, %v2232, 0
      %v2254 = vsel %vm1953, %v2233, 0
      %v2257 = vsel %vm1953, %v2234, 0
      %v2260 = vsel %vm1953, %v2235, 0
      %v2263 = vsel %vm1953, %v2236, 0
      %v2266 = vsel %vm1953, %v2237, 0
      %v2269 = vsel %vm1953, %v2238, 0
      %v2272 = vsel %vm1953, %v2239, 0
      %v2275 = vsel %vm1953, %v2240, 0
      %v2278 = vsel %vm1953, %v2241, 0
      %v2281 = vsel %vm1953, %v2242, 0
      %v2284 = vsel %vm1953, %v2243, 0
      %v2287 = vsel %vm1953, %v2244, 0
      %v2290 = vsel %vm1953, %v2245, 0
      %v2293 = vsel %vm1953, %v2246, 0
      %v2296 = vsel %vm2002, %v1499, 0
      %2298 = vmatprep.subr.bf16.mxu0 0
      %2299 = vmatpush1.bf16.msra.mxu0 %v2296
      %2300 = vmatprep.subr.bf16.mxu0 0
      %2301 = vmatpush1.bf16.msra.mxu0 0
      %2302 = vmatprep.subr.bf16.mxu0 0
      %2303 = vmatpush1.bf16.msra.mxu0 0
      %2304 = vmatprep.subr.bf16.mxu0 0
      %2305 = vmatpush1.bf16.msra.mxu0 0
      %2306 = vmatprep.subr.bf16.mxu0 0
      %2307 = vmatpush1.bf16.msra.mxu0 0
      %2308 = vmatprep.subr.bf16.mxu0 0
      %2309 = vmatpush1.bf16.msra.mxu0 0
      %2310 = vmatprep.subr.bf16.mxu0 0
      %2311 = vmatpush1.bf16.msra.mxu0 0
      %2312 = vmatprep.subr.bf16.mxu0 0
      %2313 = vmatpush1.bf16.msra.mxu0 0
      %2314 = vmatprep.subr.bf16.mxu0 0
      %2315 = vmatpush1.bf16.msra.mxu0 0
      %2316 = vmatprep.subr.bf16.mxu0 0
      %2317 = vmatpush1.bf16.msra.mxu0 0
      %2318 = vmatprep.subr.bf16.mxu0 0
      %2319 = vmatpush1.bf16.msra.mxu0 0
      %2320 = vmatprep.subr.bf16.mxu0 0
      %2321 = vmatpush1.bf16.msra.mxu0 0
      %2322 = vmatprep.subr.bf16.mxu0 0
      %2323 = vmatpush1.bf16.msra.mxu0 0
      %2324 = vmatprep.subr.bf16.mxu0 0
      %2325 = vmatpush1.bf16.msra.mxu0 0
      %2326 = vmatprep.subr.bf16.mxu0 0
      %2327 = vmatpush1.bf16.msra.mxu0 0
      %2328 = vmatprep.subr.bf16.mxu0 0
      %2329 = vmatpush1.bf16.msra.mxu0 0
      %2330 = vmatprep.mubr.bf16.mxu0 0
      %2331 = vmatmul.mubr.bf16.gmra.mrb[0].mxu0 %v2248
      %v2332 = vpop.f32.mrb[0].mxu0
      %v2333 = vadd.f32 %v2041, %v2332
      %v2334 = vpop.f32.mrb[0].mxu0
      %v2335 = vpop.f32.mrb[0].mxu0
      %v2336 = vadd.f32 %v2044, %v2335
      %v2337 = vpop.f32.mrb[0].mxu0
      %2338 = vmatprep.mubr.bf16.mxu0 0
      %2339 = vmatmul.mubr.bf16.gmra.mrb[0].mxu0 %v2251
      %v2340 = vpop.f32.mrb[0].mxu0
      %v2341 = vadd.f32 %v2049, %v2340
      %v2342 = vpop.f32.mrb[0].mxu0
      %v2343 = vpop.f32.mrb[0].mxu0
      %v2344 = vadd.f32 %v2052, %v2343
      %v2345 = vpop.f32.mrb[0].mxu0
      %2346 = vmatprep.mubr.bf16.mxu0 0
      %2347 = vmatmul.mubr.bf16.gmra.mrb[0].mxu0 %v2254
      %v2348 = vpop.f32.mrb[0].mxu0
      %v2349 = vadd.f32 %v2057, %v2348
      %v2350 = vpop.f32.mrb[0].mxu0
      %v2351 = vpop.f32.mrb[0].mxu0
      %v2352 = vadd.f32 %v2060, %v2351
      %v2353 = vpop.f32.mrb[0].mxu0
      %2354 = vmatprep.mubr.bf16.mxu0 0
      %2355 = vmatmul.mubr.bf16.gmra.mrb[0].mxu0 %v2257
      %v2356 = vpop.f32.mrb[0].mxu0
      %v2357 = vadd.f32 %v2065, %v2356
      %v2358 = vpop.f32.mrb[0].mxu0
      %v2359 = vpop.f32.mrb[0].mxu0
      %v2360 = vadd.f32 %v2068, %v2359
      %v2361 = vpop.f32.mrb[0].mxu0
      %2362 = vmatprep.mubr.bf16.mxu0 0
      %2363 = vmatmul.mubr.bf16.gmra.mrb[0].mxu0 %v2260
      %v2364 = vpop.f32.mrb[0].mxu0
      %v2365 = vadd.f32 %v2073, %v2364
      %v2366 = vpop.f32.mrb[0].mxu0
      %v2367 = vpop.f32.mrb[0].mxu0
      %v2368 = vadd.f32 %v2076, %v2367
      %v2369 = vpop.f32.mrb[0].mxu0
      %2370 = vmatprep.mubr.bf16.mxu0 0
      %2371 = vmatmul.mubr.bf16.gmra.mrb[0].mxu0 %v2263
      %v2372 = vpop.f32.mrb[0].mxu0
      %v2373 = vadd.f32 %v2081, %v2372
      %v2374 = vpop.f32.mrb[0].mxu0
      %v2375 = vpop.f32.mrb[0].mxu0
      %v2376 = vadd.f32 %v2084, %v2375
      %v2377 = vpop.f32.mrb[0].mxu0
      %2378 = vmatprep.mubr.bf16.mxu0 0
      %2379 = vmatmul.mubr.bf16.gmra.mrb[0].mxu0 %v2266
      %v2380 = vpop.f32.mrb[0].mxu0
      %v2381 = vadd.f32 %v2089, %v2380
      %v2382 = vpop.f32.mrb[0].mxu0
      %v2383 = vpop.f32.mrb[0].mxu0
      %v2384 = vadd.f32 %v2092, %v2383
      %v2385 = vpop.f32.mrb[0].mxu0
      %2386 = vmatprep.mubr.bf16.mxu0 0
      %2387 = vmatmul.mubr.bf16.gmra.mrb[0].mxu0 %v2269
      %v2388 = vpop.f32.mrb[0].mxu0
      %v2389 = vadd.f32 %v2097, %v2388
      %v2390 = vpop.f32.mrb[0].mxu0
      %v2391 = vpop.f32.mrb[0].mxu0
      %v2392 = vadd.f32 %v2100, %v2391
      %v2393 = vpop.f32.mrb[0].mxu0
      %2394 = vmatprep.mubr.bf16.mxu0 0
      %2395 = vmatmul.mubr.bf16.gmra.mrb[0].mxu0 %v2272
      %v2396 = vpop.f32.mrb[0].mxu0
      %v2397 = vadd.f32 %v2105, %v2396
      %v2398 = vpop.f32.mrb[0].mxu0
      %v2399 = vpop.f32.mrb[0].mxu0
      %v2400 = vadd.f32 %v2108, %v2399
      %v2401 = vpop.f32.mrb[0].mxu0
      %2402 = vmatprep.mubr.bf16.mxu0 0
      %2403 = vmatmul.mubr.bf16.gmra.mrb[0].mxu0 %v2275
      %v2404 = vpop.f32.mrb[0].mxu0
      %v2405 = vadd.f32 %v2113, %v2404
      %v2406 = vpop.f32.mrb[0].mxu0
      %v2407 = vpop.f32.mrb[0].mxu0
      %v2408 = vadd.f32 %v2116, %v2407
      %v2409 = vpop.f32.mrb[0].mxu0
      %2410 = vmatprep.mubr.bf16.mxu0 0
      %2411 = vmatmul.mubr.bf16.gmra.mrb[0].mxu0 %v2278
      %v2412 = vpop.f32.mrb[0].mxu0
      %v2413 = vadd.f32 %v2121, %v2412
      %v2414 = vpop.f32.mrb[0].mxu0
      %v2415 = vpop.f32.mrb[0].mxu0
      %v2416 = vadd.f32 %v2124, %v2415
      %v2417 = vpop.f32.mrb[0].mxu0
      %2418 = vmatprep.mubr.bf16.mxu0 0
      %2419 = vmatmul.mubr.bf16.gmra.mrb[0].mxu0 %v2281
      %v2420 = vpop.f32.mrb[0].mxu0
      %v2421 = vadd.f32 %v2129, %v2420
      %v2422 = vpop.f32.mrb[0].mxu0
      %v2423 = vpop.f32.mrb[0].mxu0
      %v2424 = vadd.f32 %v2132, %v2423
      %v2425 = vpop.f32.mrb[0].mxu0
      %2426 = vmatprep.mubr.bf16.mxu0 0
      %2427 = vmatmul.mubr.bf16.gmra.mrb[0].mxu0 %v2284
      %v2428 = vpop.f32.mrb[0].mxu0
      %v2429 = vadd.f32 %v2137, %v2428
      %v2430 = vpop.f32.mrb[0].mxu0
      %v2431 = vpop.f32.mrb[0].mxu0
      %v2432 = vadd.f32 %v2140, %v2431
      %v2433 = vpop.f32.mrb[0].mxu0
      %2434 = vmatprep.mubr.bf16.mxu0 0
      %2435 = vmatmul.mubr.bf16.gmra.mrb[0].mxu0 %v2287
      %v2436 = vpop.f32.mrb[0].mxu0
      %v2437 = vadd.f32 %v2145, %v2436
      %v2438 = vpop.f32.mrb[0].mxu0
      %v2439 = vpop.f32.mrb[0].mxu0
      %v2440 = vadd.f32 %v2148, %v2439
      %v2441 = vpop.f32.mrb[0].mxu0
      %2442 = vmatprep.mubr.bf16.mxu0 0
      %2443 = vmatmul.mubr.bf16.gmra.mrb[0].mxu0 %v2290
      %v2444 = vpop.f32.mrb[0].mxu0
      %v2445 = vadd.f32 %v2153, %v2444
      %v2446 = vpop.f32.mrb[0].mxu0
      %v2447 = vpop.f32.mrb[0].mxu0
      %v2448 = vadd.f32 %v2156, %v2447
      %v2449 = vpop.f32.mrb[0].mxu0
      %2450 = vmatprep.mubr.bf16.mxu0 0
      %2451 = vmatmul.mubr.bf16.gmra.mrb[0].mxu0 %v2293
      %v2452 = vpop.f32.mrb[0].mxu0
      %v2453 = vadd.f32 %v2161, %v2452
      %v2454 = vpop.f32.mrb[0].mxu0
      %v2455 = vpop.f32.mrb[0].mxu0
      %v2456 = vadd.f32 %v2164, %v2455
      %v2457 = vpop.f32.mrb[0].mxu0
      %2458 = vdwg.mxu0
      %v2459 = vld [vmem:[#allocation2] sm:$0xe]
      %v2460 = vld [vmem:[#allocation2 + $0xc] sm:$0xe]
      %v2461 = vld [vmem:[#allocation2 + $0x18] sm:$0xe]
      %v2462 = vld [vmem:[#allocation2 + $0x24] sm:$0xe]
      %v2463 = vld [vmem:[#allocation2 + $0x30] sm:$0xe]
      %v2464 = vld [vmem:[#allocation2 + $0x3c] sm:$0xe]
      %v2465 = vld [vmem:[#allocation2 + $0x48] sm:$0xe]
      %v2466 = vld [vmem:[#allocation2 + $0x54] sm:$0xe]
      %v2467 = vld [vmem:[#allocation2 + $0x60] sm:$0xe]
      %v2468 = vld [vmem:[#allocation2 + $0x6c] sm:$0xe]
      %v2469 = vld [vmem:[#allocation2 + $0x78] sm:$0xe]
      %v2470 = vld [vmem:[#allocation2 + $0x84] sm:$0xe]
      %v2471 = vld [vmem:[#allocation2 + $0x90] sm:$0xe]
      %v2472 = vld [vmem:[#allocation2 + $0x9c] sm:$0xe]
      %v2473 = vld [vmem:[#allocation2 + $0xa8] sm:$0xe]
      %v2474 = vld [vmem:[#allocation2 + $0xb4] sm:$0xe]
      %vm2507 = vcmask 1042432
      %vm2508 = vcmask 1046532
      %vm2509 = vmor %vm2507, %vm2508
      %v2510 = vrot.slane %v2459, 5
      %v2511 = vrot.slane %v2510, 4
      %v2512 = vrot.slane %v1468, 5
      %v2513 = vsel %vm2509, %v2511, %v2512
      %v2514 = vrot.slane %v2512, 4
      %v2515 = vrot.slane %v1500, 5
      %v2516 = vsel %vm2509, %v2514, %v2515
      %v2517 = vrot.slane %v2460, 5
      %v2518 = vrot.slane %v2517, 4
      %v2519 = vrot.slane %v1470, 5
      %v2520 = vsel %vm2509, %v2518, %v2519
      %v2521 = vrot.slane %v2519, 4
      %v2522 = vrot.slane %v1501, 5
      %v2523 = vsel %vm2509, %v2521, %v2522
      %v2524 = vrot.slane %v2461, 5
      %v2525 = vrot.slane %v2524, 4
      %v2526 = vrot.slane %v1472, 5
      %v2527 = vsel %vm2509, %v2525, %v2526
      %v2528 = vrot.slane %v2526, 4
      %v2529 = vrot.slane %v1502, 5
      %v2530 = vsel %vm2509, %v2528, %v2529
      %v2531 = vrot.slane %v2462, 5
      %v2532 = vrot.slane %v2531, 4
      %v2533 = vrot.slane %v1474, 5
      %v2534 = vsel %vm2509, %v2532, %v2533
      %v2535 = vrot.slane %v2533, 4
      %v2536 = vrot.slane %v1503, 5
      %v2537 = vsel %vm2509, %v2535, %v2536
      %v2538 = vrot.slane %v2463, 5
      %v2539 = vrot.slane %v2538, 4
      %v2540 = vrot.slane %v1476, 5
      %v2541 = vsel %vm2509, %v2539, %v2540
      %v2542 = vrot.slane %v2540, 4
      %v2543 = vrot.slane %v1504, 5
      %v2544 = vsel %vm2509, %v2542, %v2543
      %v2545 = vrot.slane %v2464, 5
      %v2546 = vrot.slane %v2545, 4
      %v2547 = vrot.slane %v1478, 5
      %v2548 = vsel %vm2509, %v2546, %v2547
      %v2549 = vrot.slane %v2547, 4
      %v2550 = vrot.slane %v1505, 5
      %v2551 = vsel %vm2509, %v2549, %v2550
      %v2552 = vrot.slane %v2465, 5
      %v2553 = vrot.slane %v2552, 4
      %v2554 = vrot.slane %v1480, 5
      %v2555 = vsel %vm2509, %v2553, %v2554
      %v2556 = vrot.slane %v2554, 4
      %v2557 = vrot.slane %v1506, 5
      %v2558 = vsel %vm2509, %v2556, %v2557
      %v2559 = vrot.slane %v2466, 5
      %v2560 = vrot.slane %v2559, 4
      %v2561 = vrot.slane %v1482, 5
      %v2562 = vsel %vm2509, %v2560, %v2561
      %v2563 = vrot.slane %v2561, 4
      %v2564 = vrot.slane %v1507, 5
      %v2565 = vsel %vm2509, %v2563, %v2564
      %v2566 = vrot.slane %v2467, 5
      %v2567 = vrot.slane %v2566, 4
      %v2568 = vrot.slane %v1484, 5
      %v2569 = vsel %vm2509, %v2567, %v2568
      %v2570 = vrot.slane %v2568, 4
      %v2571 = vrot.slane %v1508, 5
      %v2572 = vsel %vm2509, %v2570, %v2571
      %v2573 = vrot.slane %v2468, 5
      %v2574 = vrot.slane %v2573, 4
      %v2575 = vrot.slane %v1486, 5
      %v2576 = vsel %vm2509, %v2574, %v2575
      %v2577 = vrot.slane %v2575, 4
      %v2578 = vrot.slane %v1509, 5
      %v2579 = vsel %vm2509, %v2577, %v2578
      %v2580 = vrot.slane %v2469, 5
      %v2581 = vrot.slane %v2580, 4
      %v2582 = vrot.slane %v1488, 5
      %v2583 = vsel %vm2509, %v2581, %v2582
      %v2584 = vrot.slane %v2582, 4
      %v2585 = vrot.slane %v1510, 5
      %v2586 = vsel %vm2509, %v2584, %v2585
      %v2587 = vrot.slane %v2470, 5
      %v2588 = vrot.slane %v2587, 4
      %v2589 = vrot.slane %v1490, 5
      %v2590 = vsel %vm2509, %v2588, %v2589
      %v2591 = vrot.slane %v2589, 4
      %v2592 = vrot.slane %v1511, 5
      %v2593 = vsel %vm2509, %v2591, %v2592
      %v2594 = vrot.slane %v2471, 5
      %v2595 = vrot.slane %v2594, 4
      %v2596 = vrot.slane %v1492, 5
      %v2597 = vsel %vm2509, %v2595, %v2596
      %v2598 = vrot.slane %v2596, 4
      %v2599 = vrot.slane %v1512, 5
      %v2600 = vsel %vm2509, %v2598, %v2599
      %v2601 = vrot.slane %v2472, 5
      %v2602 = vrot.slane %v2601, 4
      %v2603 = vrot.slane %v1494, 5
      %v2604 = vsel %vm2509, %v2602, %v2603
      %v2605 = vrot.slane %v2603, 4
      %v2606 = vrot.slane %v1513, 5
      %v2607 = vsel %vm2509, %v2605, %v2606
      %v2608 = vrot.slane %v2473, 5
      %v2609 = vrot.slane %v2608, 4
      %v2610 = vrot.slane %v1496, 5
      %v2611 = vsel %vm2509, %v2609, %v2610
      %v2612 = vrot.slane %v2610, 4
      %v2613 = vrot.slane %v1514, 5
      %v2614 = vsel %vm2509, %v2612, %v2613
      %v2615 = vrot.slane %v2474, 5
      %v2616 = vrot.slane %v2615, 4
      %v2617 = vrot.slane %v1498, 5
      %v2618 = vsel %vm2509, %v2616, %v2617
      %v2619 = vrot.slane %v2617, 4
      %v2620 = vrot.slane %v1515, 5
      %v2621 = vsel %vm2509, %v2619, %v2620
      %s2622 = scalar_lea.vmem %s2, 8
      %v2623 = vld [vmem:[%s2622] sm:$0xf]
      %v2624 = vunpack.c.l.b16 %v2513
      %v2625 = vunpack.c.l.b16 %v2516
      %v2626 = vunpack.c.l.b16 %v2520
      %v2627 = vunpack.c.l.b16 %v2523
      %v2628 = vunpack.c.l.b16 %v2527
      %v2629 = vunpack.c.l.b16 %v2530
      %v2630 = vunpack.c.l.b16 %v2534
      %v2631 = vunpack.c.l.b16 %v2537
      %v2632 = vunpack.c.l.b16 %v2541
      %v2633 = vunpack.c.l.b16 %v2544
      %v2634 = vunpack.c.l.b16 %v2548
      %v2635 = vunpack.c.l.b16 %v2551
      %v2636 = vunpack.c.l.b16 %v2555
      %v2637 = vunpack.c.l.b16 %v2558
      %v2638 = vunpack.c.l.b16 %v2562
      %v2639 = vunpack.c.l.b16 %v2565
      %v2640 = vunpack.c.l.b16 %v2569
      %v2641 = vunpack.c.l.b16 %v2572
      %v2642 = vunpack.c.l.b16 %v2576
      %v2643 = vunpack.c.l.b16 %v2579
      %v2644 = vunpack.c.l.b16 %v2583
      %v2645 = vunpack.c.l.b16 %v2586
      %v2646 = vunpack.c.l.b16 %v2590
      %v2647 = vunpack.c.l.b16 %v2593
      %v2648 = vunpack.c.l.b16 %v2597
      %v2649 = vunpack.c.l.b16 %v2600
      %v2650 = vunpack.c.l.b16 %v2604
      %v2651 = vunpack.c.l.b16 %v2607
      %v2652 = vunpack.c.l.b16 %v2611
      %v2653 = vunpack.c.l.b16 %v2614
      %v2654 = vunpack.c.l.b16 %v2618
      %v2655 = vunpack.c.l.b16 %v2621
      %v2656 = vpack.c.b16 %v2625, %v2624
      %v2657 = vpack.c.b16 %v2627, %v2626
      %v2658 = vpack.c.b16 %v2629, %v2628
      %v2659 = vpack.c.b16 %v2631, %v2630
      %v2660 = vpack.c.b16 %v2633, %v2632
      %v2661 = vpack.c.b16 %v2635, %v2634
      %v2662 = vpack.c.b16 %v2637, %v2636
      %v2663 = vpack.c.b16 %v2639, %v2638
      %v2664 = vpack.c.b16 %v2641, %v2640
      %v2665 = vpack.c.b16 %v2643, %v2642
      %v2666 = vpack.c.b16 %v2645, %v2644
      %v2667 = vpack.c.b16 %v2647, %v2646
      %v2668 = vpack.c.b16 %v2649, %v2648
      %v2669 = vpack.c.b16 %v2651, %v2650
      %v2670 = vpack.c.b16 %v2653, %v2652
      %v2671 = vpack.c.b16 %v2655, %v2654
      %v2673 = vsel %vm1953, %v2656, 0
      %v2676 = vsel %vm1953, %v2657, 0
      %v2679 = vsel %vm1953, %v2658, 0
      %v2682 = vsel %vm1953, %v2659, 0
      %v2685 = vsel %vm1953, %v2660, 0
      %v2688 = vsel %vm1953, %v2661, 0
      %v2691 = vsel %vm1953, %v2662, 0
      %v2694 = vsel %vm1953, %v2663, 0
      %v2697 = vsel %vm1953, %v2664, 0
      %v2700 = vsel %vm1953, %v2665, 0
      %v2703 = vsel %vm1953, %v2666, 0
      %v2706 = vsel %vm1953, %v2667, 0
      %v2709 = vsel %vm1953, %v2668, 0
      %v2712 = vsel %vm1953, %v2669, 0
      %v2715 = vsel %vm1953, %v2670, 0
      %v2718 = vsel %vm1953, %v2671, 0
      %v2721 = vsel %vm2002, %v2623, 0
      %2723 = vmatprep.subr.bf16.mxu0 0
      %2724 = vmatpush1.bf16.msra.mxu0 %v2721
      %2725 = vmatprep.subr.bf16.mxu0 0
      %2726 = vmatpush1.bf16.msra.mxu0 0
      %2727 = vmatprep.subr.bf16.mxu0 0
      %2728 = vmatpush1.bf16.msra.mxu0 0
      %2729 = vmatprep.subr.bf16.mxu0 0
      %2730 = vmatpush1.bf16.msra.mxu0 0
      %2731 = vmatprep.subr.bf16.mxu0 0
      %2732 = vmatpush1.bf16.msra.mxu0 0
      %2733 = vmatprep.subr.bf16.mxu0 0
      %2734 = vmatpush1.bf16.msra.mxu0 0
      %2735 = vmatprep.subr.bf16.mxu0 0
      %2736 = vmatpush1.bf16.msra.mxu0 0
      %2737 = vmatprep.subr.bf16.mxu0 0
      %2738 = vmatpush1.bf16.msra.mxu0 0
      %2739 = vmatprep.subr.bf16.mxu0 0
      %2740 = vmatpush1.bf16.msra.mxu0 0
      %2741 = vmatprep.subr.bf16.mxu0 0
      %2742 = vmatpush1.bf16.msra.mxu0 0
      %2743 = vmatprep.subr.bf16.mxu0 0
      %2744 = vmatpush1.bf16.msra.mxu0 0
      %2745 = vmatprep.subr.bf16.mxu0 0
      %2746 = vmatpush1.bf16.msra.mxu0 0
      %2747 = vmatprep.subr.bf16.mxu0 0
      %2748 = vmatpush1.bf16.msra.mxu0 0
      %2749 = vmatprep.subr.bf16.mxu0 0
      %2750 = vmatpush1.bf16.msra.mxu0 0
      %2751 = vmatprep.subr.bf16.mxu0 0
      %2752 = vmatpush1.bf16.msra.mxu0 0
      %2753 = vmatprep.subr.bf16.mxu0 0
      %2754 = vmatpush1.bf16.msra.mxu0 0
      %2755 = vmatprep.mubr.bf16.mxu0 0
      %2756 = vmatmul.mubr.bf16.gmra.mrb[0].mxu0 %v2673
      %v2757 = vpop.f32.mrb[0].mxu0
      %v2758 = vadd.f32 0.0, %v2757
      %v2759 = vpop.f32.mrb[0].mxu0
      %v2760 = vpop.f32.mrb[0].mxu0
      %v2761 = vadd.f32 0.0, %v2760
      %v2762 = vpop.f32.mrb[0].mxu0
      %2763 = vmatprep.mubr.bf16.mxu0 0
      %2764 = vmatmul.mubr.bf16.gmra.mrb[0].mxu0 %v2676
      %v2765 = vpop.f32.mrb[0].mxu0
      %v2766 = vadd.f32 0.0, %v2765
      %v2767 = vpop.f32.mrb[0].mxu0
      %v2768 = vpop.f32.mrb[0].mxu0
      %v2769 = vadd.f32 0.0, %v2768
      %v2770 = vpop.f32.mrb[0].mxu0
      %2771 = vmatprep.mubr.bf16.mxu0 0
      %2772 = vmatmul.mubr.bf16.gmra.mrb[0].mxu0 %v2679
      %v2773 = vpop.f32.mrb[0].mxu0
      %v2774 = vadd.f32 0.0, %v2773
      %v2775 = vpop.f32.mrb[0].mxu0
      %v2776 = vpop.f32.mrb[0].mxu0
      %v2777 = vadd.f32 0.0, %v2776
      %v2778 = vpop.f32.mrb[0].mxu0
      %2779 = vmatprep.mubr.bf16.mxu0 0
      %2780 = vmatmul.mubr.bf16.gmra.mrb[0].mxu0 %v2682
      %v2781 = vpop.f32.mrb[0].mxu0
      %v2782 = vadd.f32 0.0, %v2781
      %v2783 = vpop.f32.mrb[0].mxu0
      %v2784 = vpop.f32.mrb[0].mxu0
      %v2785 = vadd.f32 0.0, %v2784
      %v2786 = vpop.f32.mrb[0].mxu0
      %2787 = vmatprep.mubr.bf16.mxu0 0
      %2788 = vmatmul.mubr.bf16.gmra.mrb[0].mxu0 %v2685
      %v2789 = vpop.f32.mrb[0].mxu0
      %v2790 = vadd.f32 0.0, %v2789
      %v2791 = vpop.f32.mrb[0].mxu0
      %v2792 = vpop.f32.mrb[0].mxu0
      %v2793 = vadd.f32 0.0, %v2792
      %v2794 = vpop.f32.mrb[0].mxu0
      %2795 = vmatprep.mubr.bf16.mxu0 0
      %2796 = vmatmul.mubr.bf16.gmra.mrb[0].mxu0 %v2688
      %v2797 = vpop.f32.mrb[0].mxu0
      %v2798 = vadd.f32 0.0, %v2797
      %v2799 = vpop.f32.mrb[0].mxu0
      %v2800 = vpop.f32.mrb[0].mxu0
      %v2801 = vadd.f32 0.0, %v2800
      %v2802 = vpop.f32.mrb[0].mxu0
      %2803 = vmatprep.mubr.bf16.mxu0 0
      %2804 = vmatmul.mubr.bf16.gmra.mrb[0].mxu0 %v2691
      %v2805 = vpop.f32.mrb[0].mxu0
      %v2806 = vadd.f32 0.0, %v2805
      %v2807 = vpop.f32.mrb[0].mxu0
      %v2808 = vpop.f32.mrb[0].mxu0
      %v2809 = vadd.f32 0.0, %v2808
      %v2810 = vpop.f32.mrb[0].mxu0
      %2811 = vmatprep.mubr.bf16.mxu0 0
      %2812 = vmatmul.mubr.bf16.gmra.mrb[0].mxu0 %v2694
      %v2813 = vpop.f32.mrb[0].mxu0
      %v2814 = vadd.f32 0.0, %v2813
      %v2815 = vpop.f32.mrb[0].mxu0
      %v2816 = vpop.f32.mrb[0].mxu0
      %v2817 = vadd.f32 0.0, %v2816
      %v2818 = vpop.f32.mrb[0].mxu0
      %2819 = vmatprep.mubr.bf16.mxu0 0
      %2820 = vmatmul.mubr.bf16.gmra.mrb[0].mxu0 %v2697
      %v2821 = vpop.f32.mrb[0].mxu0
      %v2822 = vadd.f32 0.0, %v2821
      %v2823 = vpop.f32.mrb[0].mxu0
      %v2824 = vpop.f32.mrb[0].mxu0
      %v2825 = vadd.f32 0.0, %v2824
      %v2826 = vpop.f32.mrb[0].mxu0
      %2827 = vmatprep.mubr.bf16.mxu0 0
      %2828 = vmatmul.mubr.bf16.gmra.mrb[0].mxu0 %v2700
      %v2829 = vpop.f32.mrb[0].mxu0
      %v2830 = vadd.f32 0.0, %v2829
      %v2831 = vpop.f32.mrb[0].mxu0
      %v2832 = vpop.f32.mrb[0].mxu0
      %v2833 = vadd.f32 0.0, %v2832
      %v2834 = vpop.f32.mrb[0].mxu0
      %2835 = vmatprep.mubr.bf16.mxu0 0
      %2836 = vmatmul.mubr.bf16.gmra.mrb[0].mxu0 %v2703
      %v2837 = vpop.f32.mrb[0].mxu0
      %v2838 = vadd.f32 0.0, %v2837
      %v2839 = vpop.f32.mrb[0].mxu0
      %v2840 = vpop.f32.mrb[0].mxu0
      %v2841 = vadd.f32 0.0, %v2840
      %v2842 = vpop.f32.mrb[0].mxu0
      %2843 = vmatprep.mubr.bf16.mxu0 0
      %2844 = vmatmul.mubr.bf16.gmra.mrb[0].mxu0 %v2706
      %v2845 = vpop.f32.mrb[0].mxu0
      %v2846 = vadd.f32 0.0, %v2845
      %v2847 = vpop.f32.mrb[0].mxu0
      %v2848 = vpop.f32.mrb[0].mxu0
      %v2849 = vadd.f32 0.0, %v2848
      %v2850 = vpop.f32.mrb[0].mxu0
      %2851 = vmatprep.mubr.bf16.mxu0 0
      %2852 = vmatmul.mubr.bf16.gmra.mrb[0].mxu0 %v2709
      %v2853 = vpop.f32.mrb[0].mxu0
      %v2854 = vadd.f32 0.0, %v2853
      %v2855 = vpop.f32.mrb[0].mxu0
      %v2856 = vpop.f32.mrb[0].mxu0
      %v2857 = vadd.f32 0.0, %v2856
      %v2858 = vpop.f32.mrb[0].mxu0
      %2859 = vmatprep.mubr.bf16.mxu0 0
      %2860 = vmatmul.mubr.bf16.gmra.mrb[0].mxu0 %v2712
      %v2861 = vpop.f32.mrb[0].mxu0
      %v2862 = vadd.f32 0.0, %v2861
      %v2863 = vpop.f32.mrb[0].mxu0
      %v2864 = vpop.f32.mrb[0].mxu0
      %v2865 = vadd.f32 0.0, %v2864
      %v2866 = vpop.f32.mrb[0].mxu0
      %2867 = vmatprep.mubr.bf16.mxu0 0
      %2868 = vmatmul.mubr.bf16.gmra.mrb[0].mxu0 %v2715
      %v2869 = vpop.f32.mrb[0].mxu0
      %v2870 = vadd.f32 0.0, %v2869
      %v2871 = vpop.f32.mrb[0].mxu0
      %v2872 = vpop.f32.mrb[0].mxu0
      %v2873 = vadd.f32 0.0, %v2872
      %v2874 = vpop.f32.mrb[0].mxu0
      %2875 = vmatprep.mubr.bf16.mxu0 0
      %2876 = vmatmul.mubr.bf16.gmra.mrb[0].mxu0 %v2718
      %v2877 = vpop.f32.mrb[0].mxu0
      %v2878 = vadd.f32 0.0, %v2877
      %v2879 = vpop.f32.mrb[0].mxu0
      %v2880 = vpop.f32.mrb[0].mxu0
      %v2881 = vadd.f32 0.0, %v2880
      %v2882 = vpop.f32.mrb[0].mxu0
      %2883 = vdwg.mxu0
      %v2884 = vadd.f32 %v2333, %v2758
      %v2885 = vadd.f32 %v2336, %v2761
      %v2886 = vadd.f32 %v2341, %v2766
      %v2887 = vadd.f32 %v2344, %v2769
      %v2888 = vadd.f32 %v2349, %v2774
      %v2889 = vadd.f32 %v2352, %v2777
      %v2890 = vadd.f32 %v2357, %v2782
      %v2891 = vadd.f32 %v2360, %v2785
      %v2892 = vadd.f32 %v2365, %v2790
      %v2893 = vadd.f32 %v2368, %v2793
      %v2894 = vadd.f32 %v2373, %v2798
      %v2895 = vadd.f32 %v2376, %v2801
      %v2896 = vadd.f32 %v2381, %v2806
      %v2897 = vadd.f32 %v2384, %v2809
      %v2898 = vadd.f32 %v2389, %v2814
      %v2899 = vadd.f32 %v2392, %v2817
      %v2900 = vadd.f32 %v2397, %v2822
      %v2901 = vadd.f32 %v2400, %v2825
      %v2902 = vadd.f32 %v2405, %v2830
      %v2903 = vadd.f32 %v2408, %v2833
      %v2904 = vadd.f32 %v2413, %v2838
      %v2905 = vadd.f32 %v2416, %v2841
      %v2906 = vadd.f32 %v2421, %v2846
      %v2907 = vadd.f32 %v2424, %v2849
      %v2908 = vadd.f32 %v2429, %v2854
      %v2909 = vadd.f32 %v2432, %v2857
      %v2910 = vadd.f32 %v2437, %v2862
      %v2911 = vadd.f32 %v2440, %v2865
      %v2912 = vadd.f32 %v2445, %v2870
      %v2913 = vadd.f32 %v2448, %v2873
      %v2914 = vadd.f32 %v2453, %v2878
      %v2915 = vadd.f32 %v2456, %v2881
      %v2916 = vld [vmem:[%s1352] sm:$0xf]
      %v2917 = vld [vmem:[%s1352 + $0x4] sm:$0xf]
      %v2918 = vld [vmem:[%s1352 + $0xc] sm:$0xf]
      %v2919 = vld [vmem:[%s1352 + $0x10] sm:$0xf]
      %v2920 = vld [vmem:[%s1352 + $0x18] sm:$0xf]
      %v2921 = vld [vmem:[%s1352 + $0x1c] sm:$0xf]
      %v2922 = vld [vmem:[%s1352 + $0x24] sm:$0xf]
      %v2923 = vld [vmem:[%s1352 + $0x28] sm:$0xf]
      %v2924 = vld [vmem:[%s1352 + $0x30] sm:$0xf]
      %v2925 = vld [vmem:[%s1352 + $0x34] sm:$0xf]
      %v2926 = vld [vmem:[%s1352 + $0x3c] sm:$0xf]
      %v2927 = vld [vmem:[%s1352 + $0x40] sm:$0xf]
      %v2928 = vld [vmem:[%s1352 + $0x48] sm:$0xf]
      %v2929 = vld [vmem:[%s1352 + $0x4c] sm:$0xf]
      %v2930 = vld [vmem:[%s1352 + $0x54] sm:$0xf]
      %v2931 = vld [vmem:[%s1352 + $0x58] sm:$0xf]
      %v2932 = vld [vmem:[%s1352 + $0x60] sm:$0xf]
      %v2933 = vld [vmem:[%s1352 + $0x64] sm:$0xf]
      %v2934 = vld [vmem:[%s1352 + $0x6c] sm:$0xf]
      %v2935 = vld [vmem:[%s1352 + $0x70] sm:$0xf]
      %v2936 = vld [vmem:[%s1352 + $0x78] sm:$0xf]
      %v2937 = vld [vmem:[%s1352 + $0x7c] sm:$0xf]
      %v2938 = vld [vmem:[%s1352 + $0x84] sm:$0xf]
      %v2939 = vld [vmem:[%s1352 + $0x88] sm:$0xf]
      %v2940 = vld [vmem:[%s1352 + $0x90] sm:$0xf]
      %v2941 = vld [vmem:[%s1352 + $0x94] sm:$0xf]
      %v2942 = vld [vmem:[%s1352 + $0x9c] sm:$0xf]
      %v2943 = vld [vmem:[%s1352 + $0xa0] sm:$0xf]
      %v2944 = vld [vmem:[%s1352 + $0xa8] sm:$0xf]
      %v2945 = vld [vmem:[%s1352 + $0xac] sm:$0xf]
      %v2946 = vld [vmem:[%s1352 + $0xb4] sm:$0xf]
      %v2947 = vld [vmem:[%s1352 + $0xb8] sm:$0xf]
      %s2948 = scalar_lea.vmem %s2, 12
      %v2949 = vld [vmem:[%s2948] sm:$0xf]
      %v2982 = vunpack.c.l.b16 %v2916
      %v2983 = vunpack.c.l.b16 %v2917
      %v2984 = vunpack.c.l.b16 %v2918
      %v2985 = vunpack.c.l.b16 %v2919
      %v2986 = vunpack.c.l.b16 %v2920
      %v2987 = vunpack.c.l.b16 %v2921
      %v2988 = vunpack.c.l.b16 %v2922
      %v2989 = vunpack.c.l.b16 %v2923
      %v2990 = vunpack.c.l.b16 %v2924
      %v2991 = vunpack.c.l.b16 %v2925
      %v2992 = vunpack.c.l.b16 %v2926
      %v2993 = vunpack.c.l.b16 %v2927
      %v2994 = vunpack.c.l.b16 %v2928
      %v2995 = vunpack.c.l.b16 %v2929
      %v2996 = vunpack.c.l.b16 %v2930
      %v2997 = vunpack.c.l.b16 %v2931
      %v2998 = vunpack.c.l.b16 %v2932
      %v2999 = vunpack.c.l.b16 %v2933
      %v3000 = vunpack.c.l.b16 %v2934
      %v3001 = vunpack.c.l.b16 %v2935
      %v3002 = vunpack.c.l.b16 %v2936
      %v3003 = vunpack.c.l.b16 %v2937
      %v3004 = vunpack.c.l.b16 %v2938
      %v3005 = vunpack.c.l.b16 %v2939
      %v3006 = vunpack.c.l.b16 %v2940
      %v3007 = vunpack.c.l.b16 %v2941
      %v3008 = vunpack.c.l.b16 %v2942
      %v3009 = vunpack.c.l.b16 %v2943
      %v3010 = vunpack.c.l.b16 %v2944
      %v3011 = vunpack.c.l.b16 %v2945
      %v3012 = vunpack.c.l.b16 %v2946
      %v3013 = vunpack.c.l.b16 %v2947
      %v3014 = vpack.c.b16 %v2983, %v2982
      %v3015 = vpack.c.b16 %v2985, %v2984
      %v3016 = vpack.c.b16 %v2987, %v2986
      %v3017 = vpack.c.b16 %v2989, %v2988
      %v3018 = vpack.c.b16 %v2991, %v2990
      %v3019 = vpack.c.b16 %v2993, %v2992
      %v3020 = vpack.c.b16 %v2995, %v2994
      %v3021 = vpack.c.b16 %v2997, %v2996
      %v3022 = vpack.c.b16 %v2999, %v2998
      %v3023 = vpack.c.b16 %v3001, %v3000
      %v3024 = vpack.c.b16 %v3003, %v3002
      %v3025 = vpack.c.b16 %v3005, %v3004
      %v3026 = vpack.c.b16 %v3007, %v3006
      %v3027 = vpack.c.b16 %v3009, %v3008
      %v3028 = vpack.c.b16 %v3011, %v3010
      %v3029 = vpack.c.b16 %v3013, %v3012
      %v3031 = vsel %vm1953, %v3014, 0
      %v3034 = vsel %vm1953, %v3015, 0
      %v3037 = vsel %vm1953, %v3016, 0
      %v3040 = vsel %vm1953, %v3017, 0
      %v3043 = vsel %vm1953, %v3018, 0
      %v3046 = vsel %vm1953, %v3019, 0
      %v3049 = vsel %vm1953, %v3020, 0
      %v3052 = vsel %vm1953, %v3021, 0
      %v3055 = vsel %vm1953, %v3022, 0
      %v3058 = vsel %vm1953, %v3023, 0
      %v3061 = vsel %vm1953, %v3024, 0
      %v3064 = vsel %vm1953, %v3025, 0
      %v3067 = vsel %vm1953, %v3026, 0
      %v3070 = vsel %vm1953, %v3027, 0
      %v3073 = vsel %vm1953, %v3028, 0
      %v3076 = vsel %vm1953, %v3029, 0
      %v3079 = vsel %vm2002, %v2949, 0
      %3081 = vmatprep.subr.bf16.mxu0 0
      %3082 = vmatpush1.bf16.msra.mxu0 %v3079
      %3083 = vmatprep.subr.bf16.mxu0 0
      %3084 = vmatpush1.bf16.msra.mxu0 0
      %3085 = vmatprep.subr.bf16.mxu0 0
      %3086 = vmatpush1.bf16.msra.mxu0 0
      %3087 = vmatprep.subr.bf16.mxu0 0
      %3088 = vmatpush1.bf16.msra.mxu0 0
      %3089 = vmatprep.subr.bf16.mxu0 0
      %3090 = vmatpush1.bf16.msra.mxu0 0
      %3091 = vmatprep.subr.bf16.mxu0 0
      %3092 = vmatpush1.bf16.msra.mxu0 0
      %3093 = vmatprep.subr.bf16.mxu0 0
      %3094 = vmatpush1.bf16.msra.mxu0 0
      %3095 = vmatprep.subr.bf16.mxu0 0
      %3096 = vmatpush1.bf16.msra.mxu0 0
      %3097 = vmatprep.subr.bf16.mxu0 0
      %3098 = vmatpush1.bf16.msra.mxu0 0
      %3099 = vmatprep.subr.bf16.mxu0 0
      %3100 = vmatpush1.bf16.msra.mxu0 0
      %3101 = vmatprep.subr.bf16.mxu0 0
      %3102 = vmatpush1.bf16.msra.mxu0 0
      %3103 = vmatprep.subr.bf16.mxu0 0
      %3104 = vmatpush1.bf16.msra.mxu0 0
      %3105 = vmatprep.subr.bf16.mxu0 0
      %3106 = vmatpush1.bf16.msra.mxu0 0
      %3107 = vmatprep.subr.bf16.mxu0 0
      %3108 = vmatpush1.bf16.msra.mxu0 0
      %3109 = vmatprep.subr.bf16.mxu0 0
      %3110 = vmatpush1.bf16.msra.mxu0 0
      %3111 = vmatprep.subr.bf16.mxu0 0
      %3112 = vmatpush1.bf16.msra.mxu0 0
      %3113 = vmatprep.mubr.bf16.mxu0 0
      %3114 = vmatmul.mubr.bf16.gmra.mrb[0].mxu0 %v3031
      %v3115 = vpop.f32.mrb[0].mxu0
      %v3116 = vadd.f32 0.0, %v3115
      %v3117 = vpop.f32.mrb[0].mxu0
      %v3118 = vpop.f32.mrb[0].mxu0
      %v3119 = vadd.f32 0.0, %v3118
      %v3120 = vpop.f32.mrb[0].mxu0
      %3121 = vmatprep.mubr.bf16.mxu0 0
      %3122 = vmatmul.mubr.bf16.gmra.mrb[0].mxu0 %v3034
      %v3123 = vpop.f32.mrb[0].mxu0
      %v3124 = vadd.f32 0.0, %v3123
      %v3125 = vpop.f32.mrb[0].mxu0
      %v3126 = vpop.f32.mrb[0].mxu0
      %v3127 = vadd.f32 0.0, %v3126
      %v3128 = vpop.f32.mrb[0].mxu0
      %3129 = vmatprep.mubr.bf16.mxu0 0
      %3130 = vmatmul.mubr.bf16.gmra.mrb[0].mxu0 %v3037
      %v3131 = vpop.f32.mrb[0].mxu0
      %v3132 = vadd.f32 0.0, %v3131
      %v3133 = vpop.f32.mrb[0].mxu0
      %v3134 = vpop.f32.mrb[0].mxu0
      %v3135 = vadd.f32 0.0, %v3134
      %v3136 = vpop.f32.mrb[0].mxu0
      %3137 = vmatprep.mubr.bf16.mxu0 0
      %3138 = vmatmul.mubr.bf16.gmra.mrb[0].mxu0 %v3040
      %v3139 = vpop.f32.mrb[0].mxu0
      %v3140 = vadd.f32 0.0, %v3139
      %v3141 = vpop.f32.mrb[0].mxu0
      %v3142 = vpop.f32.mrb[0].mxu0
      %v3143 = vadd.f32 0.0, %v3142
      %v3144 = vpop.f32.mrb[0].mxu0
      %3145 = vmatprep.mubr.bf16.mxu0 0
      %3146 = vmatmul.mubr.bf16.gmra.mrb[0].mxu0 %v3043
      %v3147 = vpop.f32.mrb[0].mxu0
      %v3148 = vadd.f32 0.0, %v3147
      %v3149 = vpop.f32.mrb[0].mxu0
      %v3150 = vpop.f32.mrb[0].mxu0
      %v3151 = vadd.f32 0.0, %v3150
      %v3152 = vpop.f32.mrb[0].mxu0
      %3153 = vmatprep.mubr.bf16.mxu0 0
      %3154 = vmatmul.mubr.bf16.gmra.mrb[0].mxu0 %v3046
      %v3155 = vpop.f32.mrb[0].mxu0
      %v3156 = vadd.f32 0.0, %v3155
      %v3157 = vpop.f32.mrb[0].mxu0
      %v3158 = vpop.f32.mrb[0].mxu0
      %v3159 = vadd.f32 0.0, %v3158
      %v3160 = vpop.f32.mrb[0].mxu0
      %3161 = vmatprep.mubr.bf16.mxu0 0
      %3162 = vmatmul.mubr.bf16.gmra.mrb[0].mxu0 %v3049
      %v3163 = vpop.f32.mrb[0].mxu0
      %v3164 = vadd.f32 0.0, %v3163
      %v3165 = vpop.f32.mrb[0].mxu0
      %v3166 = vpop.f32.mrb[0].mxu0
      %v3167 = vadd.f32 0.0, %v3166
      %v3168 = vpop.f32.mrb[0].mxu0
      %3169 = vmatprep.mubr.bf16.mxu0 0
      %3170 = vmatmul.mubr.bf16.gmra.mrb[0].mxu0 %v3052
      %v3171 = vpop.f32.mrb[0].mxu0
      %v3172 = vadd.f32 0.0, %v3171
      %v3173 = vpop.f32.mrb[0].mxu0
      %v3174 = vpop.f32.mrb[0].mxu0
      %v3175 = vadd.f32 0.0, %v3174
      %v3176 = vpop.f32.mrb[0].mxu0
      %3177 = vmatprep.mubr.bf16.mxu0 0
      %3178 = vmatmul.mubr.bf16.gmra.mrb[0].mxu0 %v3055
      %v3179 = vpop.f32.mrb[0].mxu0
      %v3180 = vadd.f32 0.0, %v3179
      %v3181 = vpop.f32.mrb[0].mxu0
      %v3182 = vpop.f32.mrb[0].mxu0
      %v3183 = vadd.f32 0.0, %v3182
      %v3184 = vpop.f32.mrb[0].mxu0
      %3185 = vmatprep.mubr.bf16.mxu0 0
      %3186 = vmatmul.mubr.bf16.gmra.mrb[0].mxu0 %v3058
      %v3187 = vpop.f32.mrb[0].mxu0
      %v3188 = vadd.f32 0.0, %v3187
      %v3189 = vpop.f32.mrb[0].mxu0
      %v3190 = vpop.f32.mrb[0].mxu0
      %v3191 = vadd.f32 0.0, %v3190
      %v3192 = vpop.f32.mrb[0].mxu0
      %3193 = vmatprep.mubr.bf16.mxu0 0
      %3194 = vmatmul.mubr.bf16.gmra.mrb[0].mxu0 %v3061
      %v3195 = vpop.f32.mrb[0].mxu0
      %v3196 = vadd.f32 0.0, %v3195
      %v3197 = vpop.f32.mrb[0].mxu0
      %v3198 = vpop.f32.mrb[0].mxu0
      %v3199 = vadd.f32 0.0, %v3198
      %v3200 = vpop.f32.mrb[0].mxu0
      %3201 = vmatprep.mubr.bf16.mxu0 0
      %3202 = vmatmul.mubr.bf16.gmra.mrb[0].mxu0 %v3064
      %v3203 = vpop.f32.mrb[0].mxu0
      %v3204 = vadd.f32 0.0, %v3203
      %v3205 = vpop.f32.mrb[0].mxu0
      %v3206 = vpop.f32.mrb[0].mxu0
      %v3207 = vadd.f32 0.0, %v3206
      %v3208 = vpop.f32.mrb[0].mxu0
      %3209 = vmatprep.mubr.bf16.mxu0 0
      %3210 = vmatmul.mubr.bf16.gmra.mrb[0].mxu0 %v3067
      %v3211 = vpop.f32.mrb[0].mxu0
      %v3212 = vadd.f32 0.0, %v3211
      %v3213 = vpop.f32.mrb[0].mxu0
      %v3214 = vpop.f32.mrb[0].mxu0
      %v3215 = vadd.f32 0.0, %v3214
      %v3216 = vpop.f32.mrb[0].mxu0
      %3217 = vmatprep.mubr.bf16.mxu0 0
      %3218 = vmatmul.mubr.bf16.gmra.mrb[0].mxu0 %v3070
      %v3219 = vpop.f32.mrb[0].mxu0
      %v3220 = vadd.f32 0.0, %v3219
      %v3221 = vpop.f32.mrb[0].mxu0
      %v3222 = vpop.f32.mrb[0].mxu0
      %v3223 = vadd.f32 0.0, %v3222
      %v3224 = vpop.f32.mrb[0].mxu0
      %3225 = vmatprep.mubr.bf16.mxu0 0
      %3226 = vmatmul.mubr.bf16.gmra.mrb[0].mxu0 %v3073
      %v3227 = vpop.f32.mrb[0].mxu0
      %v3228 = vadd.f32 0.0, %v3227
      %v3229 = vpop.f32.mrb[0].mxu0
      %v3230 = vpop.f32.mrb[0].mxu0
      %v3231 = vadd.f32 0.0, %v3230
      %v3232 = vpop.f32.mrb[0].mxu0
      %3233 = vmatprep.mubr.bf16.mxu0 0
      %3234 = vmatmul.mubr.bf16.gmra.mrb[0].mxu0 %v3076
      %v3235 = vpop.f32.mrb[0].mxu0
      %v3236 = vadd.f32 0.0, %v3235
      %v3237 = vpop.f32.mrb[0].mxu0
      %v3238 = vpop.f32.mrb[0].mxu0
      %v3239 = vadd.f32 0.0, %v3238
      %v3240 = vpop.f32.mrb[0].mxu0
      %3241 = vdwg.mxu0
      %v3242 = vadd.f32 %v2884, %v3116
      %v3243 = vadd.f32 %v2885, %v3119
      %v3244 = vadd.f32 %v2886, %v3124
      %v3245 = vadd.f32 %v2887, %v3127
      %v3246 = vadd.f32 %v2888, %v3132
      %v3247 = vadd.f32 %v2889, %v3135
      %v3248 = vadd.f32 %v2890, %v3140
      %v3249 = vadd.f32 %v2891, %v3143
      %v3250 = vadd.f32 %v2892, %v3148
      %v3251 = vadd.f32 %v2893, %v3151
      %v3252 = vadd.f32 %v2894, %v3156
      %v3253 = vadd.f32 %v2895, %v3159
      %v3254 = vadd.f32 %v2896, %v3164
      %v3255 = vadd.f32 %v2897, %v3167
      %v3256 = vadd.f32 %v2898, %v3172
      %v3257 = vadd.f32 %v2899, %v3175
      %v3258 = vadd.f32 %v2900, %v3180
      %v3259 = vadd.f32 %v2901, %v3183
      %v3260 = vadd.f32 %v2902, %v3188
      %v3261 = vadd.f32 %v2903, %v3191
      %v3262 = vadd.f32 %v2904, %v3196
      %v3263 = vadd.f32 %v2905, %v3199
      %v3264 = vadd.f32 %v2906, %v3204
      %v3265 = vadd.f32 %v2907, %v3207
      %v3266 = vadd.f32 %v2908, %v3212
      %v3267 = vadd.f32 %v2909, %v3215
      %v3268 = vadd.f32 %v2910, %v3220
      %v3269 = vadd.f32 %v2911, %v3223
      %v3270 = vadd.f32 %v2912, %v3228
      %v3271 = vadd.f32 %v2913, %v3231
      %v3272 = vadd.f32 %v2914, %v3236
      %v3273 = vadd.f32 %v2915, %v3239
      %v3274 = vld [vmem:[%s1352] sm:$0xf]
      %v3275 = vld [vmem:[%s1352 + $0x4] sm:$0xf]
      %v3276 = vld [vmem:[%s1352 + $0x8] sm:$0x1]
      %v3277 = vld [vmem:[%s1352 + $0xc] sm:$0xf]
      %v3278 = vld [vmem:[%s1352 + $0x10] sm:$0xf]
      %v3279 = vld [vmem:[%s1352 + $0x14] sm:$0x1]
      %v3280 = vld [vmem:[%s1352 + $0x18] sm:$0xf]
      %v3281 = vld [vmem:[%s1352 + $0x1c] sm:$0xf]
      %v3282 = vld [vmem:[%s1352 + $0x20] sm:$0x1]
      %v3283 = vld [vmem:[%s1352 + $0x24] sm:$0xf]
      %v3284 = vld [vmem:[%s1352 + $0x28] sm:$0xf]
      %v3285 = vld [vmem:[%s1352 + $0x2c] sm:$0x1]
      %v3286 = vld [vmem:[%s1352 + $0x30] sm:$0xf]
      %v3287 = vld [vmem:[%s1352 + $0x34] sm:$0xf]
      %v3288 = vld [vmem:[%s1352 + $0x38] sm:$0x1]
      %v3289 = vld [vmem:[%s1352 + $0x3c] sm:$0xf]
      %v3290 = vld [vmem:[%s1352 + $0x40] sm:$0xf]
      %v3291 = vld [vmem:[%s1352 + $0x44] sm:$0x1]
      %v3292 = vld [vmem:[%s1352 + $0x48] sm:$0xf]
      %v3293 = vld [vmem:[%s1352 + $0x4c] sm:$0xf]
      %v3294 = vld [vmem:[%s1352 + $0x50] sm:$0x1]
      %v3295 = vld [vmem:[%s1352 + $0x54] sm:$0xf]
      %v3296 = vld [vmem:[%s1352 + $0x58] sm:$0xf]
      %v3297 = vld [vmem:[%s1352 + $0x5c] sm:$0x1]
      %v3298 = vld [vmem:[%s1352 + $0x60] sm:$0xf]
      %v3299 = vld [vmem:[%s1352 + $0x64] sm:$0xf]
      %v3300 = vld [vmem:[%s1352 + $0x68] sm:$0x1]
      %v3301 = vld [vmem:[%s1352 + $0x6c] sm:$0xf]
      %v3302 = vld [vmem:[%s1352 + $0x70] sm:$0xf]
      %v3303 = vld [vmem:[%s1352 + $0x74] sm:$0x1]
      %v3304 = vld [vmem:[%s1352 + $0x78] sm:$0xf]
      %v3305 = vld [vmem:[%s1352 + $0x7c] sm:$0xf]
      %v3306 = vld [vmem:[%s1352 + $0x80] sm:$0x1]
      %v3307 = vld [vmem:[%s1352 + $0x84] sm:$0xf]
      %v3308 = vld [vmem:[%s1352 + $0x88] sm:$0xf]
      %v3309 = vld [vmem:[%s1352 + $0x8c] sm:$0x1]
      %v3310 = vld [vmem:[%s1352 + $0x90] sm:$0xf]
      %v3311 = vld [vmem:[%s1352 + $0x94] sm:$0xf]
      %v3312 = vld [vmem:[%s1352 + $0x98] sm:$0x1]
      %v3313 = vld [vmem:[%s1352 + $0x9c] sm:$0xf]
      %v3314 = vld [vmem:[%s1352 + $0xa0] sm:$0xf]
      %v3315 = vld [vmem:[%s1352 + $0xa4] sm:$0x1]
      %v3316 = vld [vmem:[%s1352 + $0xa8] sm:$0xf]
      %v3317 = vld [vmem:[%s1352 + $0xac] sm:$0xf]
      %v3318 = vld [vmem:[%s1352 + $0xb0] sm:$0x1]
      %v3319 = vld [vmem:[%s1352 + $0xb4] sm:$0xf]
      %v3320 = vld [vmem:[%s1352 + $0xb8] sm:$0xf]
      %v3321 = vld [vmem:[%s1352 + $0xbc] sm:$0x1]
      %v3323 = vshrl.u32 %v3274, 16
      %v3325 = vrot.slane %v3323, 4
      %v3326 = vshll.u32 %v3274, 16
      %v3328 = vrot.slane %v3326, 5
      %v3329 = vor.u32 %v3325, %v3328
      %v3330 = vrot.slane %v3329, 4
      %v3332 = vshll.u32 %v3275, 16
      %v3334 = vrot.slane %v3332, 5
      %v3335 = vsel %vm1518, %v3330, %v3334
      %v3336 = vshrl.u32 %v3275, 16
      %v3338 = vrot.slane %v3336, 4
      %v3339 = vor.u32 %v3338, %v3334
      %v3340 = vrot.slane %v3339, 4
      %v3342 = vshll.u32 %v3276, 16
      %v3344 = vrot.slane %v3342, 5
      %v3345 = vsel %vm1518, %v3340, %v3344
      %v3347 = vshrl.u32 %v3277, 16
      %v3349 = vrot.slane %v3347, 4
      %v3350 = vshll.u32 %v3277, 16
      %v3352 = vrot.slane %v3350, 5
      %v3353 = vor.u32 %v3349, %v3352
      %v3354 = vrot.slane %v3353, 4
      %v3356 = vshll.u32 %v3278, 16
      %v3358 = vrot.slane %v3356, 5
      %v3359 = vsel %vm1518, %v3354, %v3358
      %v3360 = vshrl.u32 %v3278, 16
      %v3362 = vrot.slane %v3360, 4
      %v3363 = vor.u32 %v3362, %v3358
      %v3364 = vrot.slane %v3363, 4
      %v3366 = vshll.u32 %v3279, 16
      %v3368 = vrot.slane %v3366, 5
      %v3369 = vsel %vm1518, %v3364, %v3368
      %v3371 = vshrl.u32 %v3280, 16
      %v3373 = vrot.slane %v3371, 4
      %v3374 = vshll.u32 %v3280, 16
      %v3376 = vrot.slane %v3374, 5
      %v3377 = vor.u32 %v3373, %v3376
      %v3378 = vrot.slane %v3377, 4
      %v3380 = vshll.u32 %v3281, 16
      %v3382 = vrot.slane %v3380, 5
      %v3383 = vsel %vm1518, %v3378, %v3382
      %v3384 = vshrl.u32 %v3281, 16
      %v3386 = vrot.slane %v3384, 4
      %v3387 = vor.u32 %v3386, %v3382
      %v3388 = vrot.slane %v3387, 4
      %v3390 = vshll.u32 %v3282, 16
      %v3392 = vrot.slane %v3390, 5
      %v3393 = vsel %vm1518, %v3388, %v3392
      %v3395 = vshrl.u32 %v3283, 16
      %v3397 = vrot.slane %v3395, 4
      %v3398 = vshll.u32 %v3283, 16
      %v3400 = vrot.slane %v3398, 5
      %v3401 = vor.u32 %v3397, %v3400
      %v3402 = vrot.slane %v3401, 4
      %v3404 = vshll.u32 %v3284, 16
      %v3406 = vrot.slane %v3404, 5
      %v3407 = vsel %vm1518, %v3402, %v3406
      %v3408 = vshrl.u32 %v3284, 16
      %v3410 = vrot.slane %v3408, 4
      %v3411 = vor.u32 %v3410, %v3406
      %v3412 = vrot.slane %v3411, 4
      %v3414 = vshll.u32 %v3285, 16
      %v3416 = vrot.slane %v3414, 5
      %v3417 = vsel %vm1518, %v3412, %v3416
      %v3419 = vshrl.u32 %v3286, 16
      %v3421 = vrot.slane %v3419, 4
      %v3422 = vshll.u32 %v3286, 16
      %v3424 = vrot.slane %v3422, 5
      %v3425 = vor.u32 %v3421, %v3424
      %v3426 = vrot.slane %v3425, 4
      %v3428 = vshll.u32 %v3287, 16
      %v3430 = vrot.slane %v3428, 5
      %v3431 = vsel %vm1518, %v3426, %v3430
      %v3432 = vshrl.u32 %v3287, 16
      %v3434 = vrot.slane %v3432, 4
      %v3435 = vor.u32 %v3434, %v3430
      %v3436 = vrot.slane %v3435, 4
      %v3438 = vshll.u32 %v3288, 16
      %v3440 = vrot.slane %v3438, 5
      %v3441 = vsel %vm1518, %v3436, %v3440
      %v3443 = vshrl.u32 %v3289, 16
      %v3445 = vrot.slane %v3443, 4
      %v3446 = vshll.u32 %v3289, 16
      %v3448 = vrot.slane %v3446, 5
      %v3449 = vor.u32 %v3445, %v3448
      %v3450 = vrot.slane %v3449, 4
      %v3452 = vshll.u32 %v3290, 16
      %v3454 = vrot.slane %v3452, 5
      %v3455 = vsel %vm1518, %v3450, %v3454
      %v3456 = vshrl.u32 %v3290, 16
      %v3458 = vrot.slane %v3456, 4
      %v3459 = vor.u32 %v3458, %v3454
      %v3460 = vrot.slane %v3459, 4
      %v3462 = vshll.u32 %v3291, 16
      %v3464 = vrot.slane %v3462, 5
      %v3465 = vsel %vm1518, %v3460, %v3464
      %v3467 = vshrl.u32 %v3292, 16
      %v3469 = vrot.slane %v3467, 4
      %v3470 = vshll.u32 %v3292, 16
      %v3472 = vrot.slane %v3470, 5
      %v3473 = vor.u32 %v3469, %v3472
      %v3474 = vrot.slane %v3473, 4
      %v3476 = vshll.u32 %v3293, 16
      %v3478 = vrot.slane %v3476, 5
      %v3479 = vsel %vm1518, %v3474, %v3478
      %v3480 = vshrl.u32 %v3293, 16
      %v3482 = vrot.slane %v3480, 4
      %v3483 = vor.u32 %v3482, %v3478
      %v3484 = vrot.slane %v3483, 4
      %v3486 = vshll.u32 %v3294, 16
      %v3488 = vrot.slane %v3486, 5
      %v3489 = vsel %vm1518, %v3484, %v3488
      %v3491 = vshrl.u32 %v3295, 16
      %v3493 = vrot.slane %v3491, 4
      %v3494 = vshll.u32 %v3295, 16
      %v3496 = vrot.slane %v3494, 5
      %v3497 = vor.u32 %v3493, %v3496
      %v3498 = vrot.slane %v3497, 4
      %v3500 = vshll.u32 %v3296, 16
      %v3502 = vrot.slane %v3500, 5
      %v3503 = vsel %vm1518, %v3498, %v3502
      %v3504 = vshrl.u32 %v3296, 16
      %v3506 = vrot.slane %v3504, 4
      %v3507 = vor.u32 %v3506, %v3502
      %v3508 = vrot.slane %v3507, 4
      %v3510 = vshll.u32 %v3297, 16
      %v3512 = vrot.slane %v3510, 5
      %v3513 = vsel %vm1518, %v3508, %v3512
      %v3515 = vshrl.u32 %v3298, 16
      %v3517 = vrot.slane %v3515, 4
      %v3518 = vshll.u32 %v3298, 16
      %v3520 = vrot.slane %v3518, 5
      %v3521 = vor.u32 %v3517, %v3520
      %v3522 = vrot.slane %v3521, 4
      %v3524 = vshll.u32 %v3299, 16
      %v3526 = vrot.slane %v3524, 5
      %v3527 = vsel %vm1518, %v3522, %v3526
      %v3528 = vshrl.u32 %v3299, 16
      %v3530 = vrot.slane %v3528, 4
      %v3531 = vor.u32 %v3530, %v3526
      %v3532 = vrot.slane %v3531, 4
      %v3534 = vshll.u32 %v3300, 16
      %v3536 = vrot.slane %v3534, 5
      %v3537 = vsel %vm1518, %v3532, %v3536
      %v3539 = vshrl.u32 %v3301, 16
      %v3541 = vrot.slane %v3539, 4
      %v3542 = vshll.u32 %v3301, 16
      %v3544 = vrot.slane %v3542, 5
      %v3545 = vor.u32 %v3541, %v3544
      %v3546 = vrot.slane %v3545, 4
      %v3548 = vshll.u32 %v3302, 16
      %v3550 = vrot.slane %v3548, 5
      %v3551 = vsel %vm1518, %v3546, %v3550
      %v3552 = vshrl.u32 %v3302, 16
      %v3554 = vrot.slane %v3552, 4
      %v3555 = vor.u32 %v3554, %v3550
      %v3556 = vrot.slane %v3555, 4
      %v3558 = vshll.u32 %v3303, 16
      %v3560 = vrot.slane %v3558, 5
      %v3561 = vsel %vm1518, %v3556, %v3560
      %v3563 = vshrl.u32 %v3304, 16
      %v3565 = vrot.slane %v3563, 4
      %v3566 = vshll.u32 %v3304, 16
      %v3568 = vrot.slane %v3566, 5
      %v3569 = vor.u32 %v3565, %v3568
      %v3570 = vrot.slane %v3569, 4
      %v3572 = vshll.u32 %v3305, 16
      %v3574 = vrot.slane %v3572, 5
      %v3575 = vsel %vm1518, %v3570, %v3574
      %v3576 = vshrl.u32 %v3305, 16
      %v3578 = vrot.slane %v3576, 4
      %v3579 = vor.u32 %v3578, %v3574
      %v3580 = vrot.slane %v3579, 4
      %v3582 = vshll.u32 %v3306, 16
      %v3584 = vrot.slane %v3582, 5
      %v3585 = vsel %vm1518, %v3580, %v3584
      %v3587 = vshrl.u32 %v3307, 16
      %v3589 = vrot.slane %v3587, 4
      %v3590 = vshll.u32 %v3307, 16
      %v3592 = vrot.slane %v3590, 5
      %v3593 = vor.u32 %v3589, %v3592
      %v3594 = vrot.slane %v3593, 4
      %v3596 = vshll.u32 %v3308, 16
      %v3598 = vrot.slane %v3596, 5
      %v3599 = vsel %vm1518, %v3594, %v3598
      %v3600 = vshrl.u32 %v3308, 16
      %v3602 = vrot.slane %v3600, 4
      %v3603 = vor.u32 %v3602, %v3598
      %v3604 = vrot.slane %v3603, 4
      %v3606 = vshll.u32 %v3309, 16
      %v3608 = vrot.slane %v3606, 5
      %v3609 = vsel %vm1518, %v3604, %v3608
      %v3611 = vshrl.u32 %v3310, 16
      %v3613 = vrot.slane %v3611, 4
      %v3614 = vshll.u32 %v3310, 16
      %v3616 = vrot.slane %v3614, 5
      %v3617 = vor.u32 %v3613, %v3616
      %v3618 = vrot.slane %v3617, 4
      %v3620 = vshll.u32 %v3311, 16
      %v3622 = vrot.slane %v3620, 5
      %v3623 = vsel %vm1518, %v3618, %v3622
      %v3624 = vshrl.u32 %v3311, 16
      %v3626 = vrot.slane %v3624, 4
      %v3627 = vor.u32 %v3626, %v3622
      %v3628 = vrot.slane %v3627, 4
      %v3630 = vshll.u32 %v3312, 16
      %v3632 = vrot.slane %v3630, 5
      %v3633 = vsel %vm1518, %v3628, %v3632
      %v3635 = vshrl.u32 %v3313, 16
      %v3637 = vrot.slane %v3635, 4
      %v3638 = vshll.u32 %v3313, 16
      %v3640 = vrot.slane %v3638, 5
      %v3641 = vor.u32 %v3637, %v3640
      %v3642 = vrot.slane %v3641, 4
      %v3644 = vshll.u32 %v3314, 16
      %v3646 = vrot.slane %v3644, 5
      %v3647 = vsel %vm1518, %v3642, %v3646
      %v3648 = vshrl.u32 %v3314, 16
      %v3650 = vrot.slane %v3648, 4
      %v3651 = vor.u32 %v3650, %v3646
      %v3652 = vrot.slane %v3651, 4
      %v3654 = vshll.u32 %v3315, 16
      %v3656 = vrot.slane %v3654, 5
      %v3657 = vsel %vm1518, %v3652, %v3656
      %v3659 = vshrl.u32 %v3316, 16
      %v3661 = vrot.slane %v3659, 4
      %v3662 = vshll.u32 %v3316, 16
      %v3664 = vrot.slane %v3662, 5
      %v3665 = vor.u32 %v3661, %v3664
      %v3666 = vrot.slane %v3665, 4
      %v3668 = vshll.u32 %v3317, 16
      %v3670 = vrot.slane %v3668, 5
      %v3671 = vsel %vm1518, %v3666, %v3670
      %v3672 = vshrl.u32 %v3317, 16
      %v3674 = vrot.slane %v3672, 4
      %v3675 = vor.u32 %v3674, %v3670
      %v3676 = vrot.slane %v3675, 4
      %v3678 = vshll.u32 %v3318, 16
      %v3680 = vrot.slane %v3678, 5
      %v3681 = vsel %vm1518, %v3676, %v3680
      %v3683 = vshrl.u32 %v3319, 16
      %v3685 = vrot.slane %v3683, 4
      %v3686 = vshll.u32 %v3319, 16
      %v3688 = vrot.slane %v3686, 5
      %v3689 = vor.u32 %v3685, %v3688
      %v3690 = vrot.slane %v3689, 4
      %v3692 = vshll.u32 %v3320, 16
      %v3694 = vrot.slane %v3692, 5
      %v3695 = vsel %vm1518, %v3690, %v3694
      %v3696 = vshrl.u32 %v3320, 16
      %v3698 = vrot.slane %v3696, 4
      %v3699 = vor.u32 %v3698, %v3694
      %v3700 = vrot.slane %v3699, 4
      %v3702 = vshll.u32 %v3321, 16
      %v3704 = vrot.slane %v3702, 5
      %v3705 = vsel %vm1518, %v3700, %v3704
      %s3706 = scalar_lea.vmem %s2, 16
      %v3707 = vld [vmem:[%s3706] sm:$0xf]
      %v3708 = vunpack.c.l.b16 %v3335
      %v3709 = vunpack.c.l.b16 %v3345
      %v3710 = vunpack.c.l.b16 %v3359
      %v3711 = vunpack.c.l.b16 %v3369
      %v3712 = vunpack.c.l.b16 %v3383
      %v3713 = vunpack.c.l.b16 %v3393
      %v3714 = vunpack.c.l.b16 %v3407
      %v3715 = vunpack.c.l.b16 %v3417
      %v3716 = vunpack.c.l.b16 %v3431
      %v3717 = vunpack.c.l.b16 %v3441
      %v3718 = vunpack.c.l.b16 %v3455
      %v3719 = vunpack.c.l.b16 %v3465
      %v3720 = vunpack.c.l.b16 %v3479
      %v3721 = vunpack.c.l.b16 %v3489
      %v3722 = vunpack.c.l.b16 %v3503
      %v3723 = vunpack.c.l.b16 %v3513
      %v3724 = vunpack.c.l.b16 %v3527
      %v3725 = vunpack.c.l.b16 %v3537
      %v3726 = vunpack.c.l.b16 %v3551
      %v3727 = vunpack.c.l.b16 %v3561
      %v3728 = vunpack.c.l.b16 %v3575
      %v3729 = vunpack.c.l.b16 %v3585
      %v3730 = vunpack.c.l.b16 %v3599
      %v3731 = vunpack.c.l.b16 %v3609
      %v3732 = vunpack.c.l.b16 %v3623
      %v3733 = vunpack.c.l.b16 %v3633
      %v3734 = vunpack.c.l.b16 %v3647
      %v3735 = vunpack.c.l.b16 %v3657
      %v3736 = vunpack.c.l.b16 %v3671
      %v3737 = vunpack.c.l.b16 %v3681
      %v3738 = vunpack.c.l.b16 %v3695
      %v3739 = vunpack.c.l.b16 %v3705
      %v3740 = vpack.c.b16 %v3709, %v3708
      %v3741 = vpack.c.b16 %v3711, %v3710
      %v3742 = vpack.c.b16 %v3713, %v3712
      %v3743 = vpack.c.b16 %v3715, %v3714
      %v3744 = vpack.c.b16 %v3717, %v3716
      %v3745 = vpack.c.b16 %v3719, %v3718
      %v3746 = vpack.c.b16 %v3721, %v3720
      %v3747 = vpack.c.b16 %v3723, %v3722
      %v3748 = vpack.c.b16 %v3725, %v3724
      %v3749 = vpack.c.b16 %v3727, %v3726
      %v3750 = vpack.c.b16 %v3729, %v3728
      %v3751 = vpack.c.b16 %v3731, %v3730
      %v3752 = vpack.c.b16 %v3733, %v3732
      %v3753 = vpack.c.b16 %v3735, %v3734
      %v3754 = vpack.c.b16 %v3737, %v3736
      %v3755 = vpack.c.b16 %v3739, %v3738
      %v3757 = vsel %vm1953, %v3740, 0
      %v3760 = vsel %vm1953, %v3741, 0
      %v3763 = vsel %vm1953, %v3742, 0
      %v3766 = vsel %vm1953, %v3743, 0
      %v3769 = vsel %vm1953, %v3744, 0
      %v3772 = vsel %vm1953, %v3745, 0
      %v3775 = vsel %vm1953, %v3746, 0
      %v3778 = vsel %vm1953, %v3747, 0
      %v3781 = vsel %vm1953, %v3748, 0
      %v3784 = vsel %vm1953, %v3749, 0
      %v3787 = vsel %vm1953, %v3750, 0
      %v3790 = vsel %vm1953, %v3751, 0
      %v3793 = vsel %vm1953, %v3752, 0
      %v3796 = vsel %vm1953, %v3753, 0
      %v3799 = vsel %vm1953, %v3754, 0
      %v3802 = vsel %vm1953, %v3755, 0
      %v3805 = vsel %vm2002, %v3707, 0
      %3807 = vmatprep.subr.bf16.mxu0 0
      %3808 = vmatpush1.bf16.msra.mxu0 %v3805
      %3809 = vmatprep.subr.bf16.mxu0 0
      %3810 = vmatpush1.bf16.msra.mxu0 0
      %3811 = vmatprep.subr.bf16.mxu0 0
      %3812 = vmatpush1.bf16.msra.mxu0 0
      %3813 = vmatprep.subr.bf16.mxu0 0
      %3814 = vmatpush1.bf16.msra.mxu0 0
      %3815 = vmatprep.subr.bf16.mxu0 0
      %3816 = vmatpush1.bf16.msra.mxu0 0
      %3817 = vmatprep.subr.bf16.mxu0 0
      %3818 = vmatpush1.bf16.msra.mxu0 0
      %3819 = vmatprep.subr.bf16.mxu0 0
      %3820 = vmatpush1.bf16.msra.mxu0 0
      %3821 = vmatprep.subr.bf16.mxu0 0
      %3822 = vmatpush1.bf16.msra.mxu0 0
      %3823 = vmatprep.subr.bf16.mxu0 0
      %3824 = vmatpush1.bf16.msra.mxu0 0
      %3825 = vmatprep.subr.bf16.mxu0 0
      %3826 = vmatpush1.bf16.msra.mxu0 0
      %3827 = vmatprep.subr.bf16.mxu0 0
      %3828 = vmatpush1.bf16.msra.mxu0 0
      %3829 = vmatprep.subr.bf16.mxu0 0
      %3830 = vmatpush1.bf16.msra.mxu0 0
      %3831 = vmatprep.subr.bf16.mxu0 0
      %3832 = vmatpush1.bf16.msra.mxu0 0
      %3833 = vmatprep.subr.bf16.mxu0 0
      %3834 = vmatpush1.bf16.msra.mxu0 0
      %3835 = vmatprep.subr.bf16.mxu0 0
      %3836 = vmatpush1.bf16.msra.mxu0 0
      %3837 = vmatprep.subr.bf16.mxu0 0
      %3838 = vmatpush1.bf16.msra.mxu0 0
      %3839 = vmatprep.mubr.bf16.mxu0 0
      %3840 = vmatmul.mubr.bf16.gmra.mrb[0].mxu0 %v3757
      %v3841 = vpop.f32.mrb[0].mxu0
      %v3842 = vadd.f32 0.0, %v3841
      %v3843 = vpop.f32.mrb[0].mxu0
      %v3844 = vpop.f32.mrb[0].mxu0
      %v3845 = vadd.f32 0.0, %v3844
      %v3846 = vpop.f32.mrb[0].mxu0
      %3847 = vmatprep.mubr.bf16.mxu0 0
      %3848 = vmatmul.mubr.bf16.gmra.mrb[0].mxu0 %v3760
      %v3849 = vpop.f32.mrb[0].mxu0
      %v3850 = vadd.f32 0.0, %v3849
      %v3851 = vpop.f32.mrb[0].mxu0
      %v3852 = vpop.f32.mrb[0].mxu0
      %v3853 = vadd.f32 0.0, %v3852
      %v3854 = vpop.f32.mrb[0].mxu0
      %3855 = vmatprep.mubr.bf16.mxu0 0
      %3856 = vmatmul.mubr.bf16.gmra.mrb[0].mxu0 %v3763
      %v3857 = vpop.f32.mrb[0].mxu0
      %v3858 = vadd.f32 0.0, %v3857
      %v3859 = vpop.f32.mrb[0].mxu0
      %v3860 = vpop.f32.mrb[0].mxu0
      %v3861 = vadd.f32 0.0, %v3860
      %v3862 = vpop.f32.mrb[0].mxu0
      %3863 = vmatprep.mubr.bf16.mxu0 0
      %3864 = vmatmul.mubr.bf16.gmra.mrb[0].mxu0 %v3766
      %v3865 = vpop.f32.mrb[0].mxu0
      %v3866 = vadd.f32 0.0, %v3865
      %v3867 = vpop.f32.mrb[0].mxu0
      %v3868 = vpop.f32.mrb[0].mxu0
      %v3869 = vadd.f32 0.0, %v3868
      %v3870 = vpop.f32.mrb[0].mxu0
      %3871 = vmatprep.mubr.bf16.mxu0 0
      %3872 = vmatmul.mubr.bf16.gmra.mrb[0].mxu0 %v3769
      %v3873 = vpop.f32.mrb[0].mxu0
      %v3874 = vadd.f32 0.0, %v3873
      %v3875 = vpop.f32.mrb[0].mxu0
      %v3876 = vpop.f32.mrb[0].mxu0
      %v3877 = vadd.f32 0.0, %v3876
      %v3878 = vpop.f32.mrb[0].mxu0
      %3879 = vmatprep.mubr.bf16.mxu0 0
      %3880 = vmatmul.mubr.bf16.gmra.mrb[0].mxu0 %v3772
      %v3881 = vpop.f32.mrb[0].mxu0
      %v3882 = vadd.f32 0.0, %v3881
      %v3883 = vpop.f32.mrb[0].mxu0
      %v3884 = vpop.f32.mrb[0].mxu0
      %v3885 = vadd.f32 0.0, %v3884
      %v3886 = vpop.f32.mrb[0].mxu0
      %3887 = vmatprep.mubr.bf16.mxu0 0
      %3888 = vmatmul.mubr.bf16.gmra.mrb[0].mxu0 %v3775
      %v3889 = vpop.f32.mrb[0].mxu0
      %v3890 = vadd.f32 0.0, %v3889
      %v3891 = vpop.f32.mrb[0].mxu0
      %v3892 = vpop.f32.mrb[0].mxu0
      %v3893 = vadd.f32 0.0, %v3892
      %v3894 = vpop.f32.mrb[0].mxu0
      %3895 = vmatprep.mubr.bf16.mxu0 0
      %3896 = vmatmul.mubr.bf16.gmra.mrb[0].mxu0 %v3778
      %v3897 = vpop.f32.mrb[0].mxu0
      %v3898 = vadd.f32 0.0, %v3897
      %v3899 = vpop.f32.mrb[0].mxu0
      %v3900 = vpop.f32.mrb[0].mxu0
      %v3901 = vadd.f32 0.0, %v3900
      %v3902 = vpop.f32.mrb[0].mxu0
      %3903 = vmatprep.mubr.bf16.mxu0 0
      %3904 = vmatmul.mubr.bf16.gmra.mrb[0].mxu0 %v3781
      %v3905 = vpop.f32.mrb[0].mxu0
      %v3906 = vadd.f32 0.0, %v3905
      %v3907 = vpop.f32.mrb[0].mxu0
      %v3908 = vpop.f32.mrb[0].mxu0
      %v3909 = vadd.f32 0.0, %v3908
      %v3910 = vpop.f32.mrb[0].mxu0
      %3911 = vmatprep.mubr.bf16.mxu0 0
      %3912 = vmatmul.mubr.bf16.gmra.mrb[0].mxu0 %v3784
      %v3913 = vpop.f32.mrb[0].mxu0
      %v3914 = vadd.f32 0.0, %v3913
      %v3915 = vpop.f32.mrb[0].mxu0
      %v3916 = vpop.f32.mrb[0].mxu0
      %v3917 = vadd.f32 0.0, %v3916
      %v3918 = vpop.f32.mrb[0].mxu0
      %3919 = vmatprep.mubr.bf16.mxu0 0
      %3920 = vmatmul.mubr.bf16.gmra.mrb[0].mxu0 %v3787
      %v3921 = vpop.f32.mrb[0].mxu0
      %v3922 = vadd.f32 0.0, %v3921
      %v3923 = vpop.f32.mrb[0].mxu0
      %v3924 = vpop.f32.mrb[0].mxu0
      %v3925 = vadd.f32 0.0, %v3924
      %v3926 = vpop.f32.mrb[0].mxu0
      %3927 = vmatprep.mubr.bf16.mxu0 0
      %3928 = vmatmul.mubr.bf16.gmra.mrb[0].mxu0 %v3790
      %v3929 = vpop.f32.mrb[0].mxu0
      %v3930 = vadd.f32 0.0, %v3929
      %v3931 = vpop.f32.mrb[0].mxu0
      %v3932 = vpop.f32.mrb[0].mxu0
      %v3933 = vadd.f32 0.0, %v3932
      %v3934 = vpop.f32.mrb[0].mxu0
      %3935 = vmatprep.mubr.bf16.mxu0 0
      %3936 = vmatmul.mubr.bf16.gmra.mrb[0].mxu0 %v3793
      %v3937 = vpop.f32.mrb[0].mxu0
      %v3938 = vadd.f32 0.0, %v3937
      %v3939 = vpop.f32.mrb[0].mxu0
      %v3940 = vpop.f32.mrb[0].mxu0
      %v3941 = vadd.f32 0.0, %v3940
      %v3942 = vpop.f32.mrb[0].mxu0
      %3943 = vmatprep.mubr.bf16.mxu0 0
      %3944 = vmatmul.mubr.bf16.gmra.mrb[0].mxu0 %v3796
      %v3945 = vpop.f32.mrb[0].mxu0
      %v3946 = vadd.f32 0.0, %v3945
      %v3947 = vpop.f32.mrb[0].mxu0
      %v3948 = vpop.f32.mrb[0].mxu0
      %v3949 = vadd.f32 0.0, %v3948
      %v3950 = vpop.f32.mrb[0].mxu0
      %3951 = vmatprep.mubr.bf16.mxu0 0
      %3952 = vmatmul.mubr.bf16.gmra.mrb[0].mxu0 %v3799
      %v3953 = vpop.f32.mrb[0].mxu0
      %v3954 = vadd.f32 0.0, %v3953
      %v3955 = vpop.f32.mrb[0].mxu0
      %v3956 = vpop.f32.mrb[0].mxu0
      %v3957 = vadd.f32 0.0, %v3956
      %v3958 = vpop.f32.mrb[0].mxu0
      %3959 = vmatprep.mubr.bf16.mxu0 0
      %3960 = vmatmul.mubr.bf16.gmra.mrb[0].mxu0 %v3802
      %v3961 = vpop.f32.mrb[0].mxu0
      %v3962 = vadd.f32 0.0, %v3961
      %v3963 = vpop.f32.mrb[0].mxu0
      %v3964 = vpop.f32.mrb[0].mxu0
      %v3965 = vadd.f32 0.0, %v3964
      %v3966 = vpop.f32.mrb[0].mxu0
      %3967 = vdwg.mxu0
      %v3968 = vadd.f32 %v3242, %v3842
      %v3969 = vadd.f32 %v3243, %v3845
      %v3970 = vadd.f32 %v3244, %v3850
      %v3971 = vadd.f32 %v3245, %v3853
      %v3972 = vadd.f32 %v3246, %v3858
      %v3973 = vadd.f32 %v3247, %v3861
      %v3974 = vadd.f32 %v3248, %v3866
      %v3975 = vadd.f32 %v3249, %v3869
      %v3976 = vadd.f32 %v3250, %v3874
      %v3977 = vadd.f32 %v3251, %v3877
      %v3978 = vadd.f32 %v3252, %v3882
      %v3979 = vadd.f32 %v3253, %v3885
      %v3980 = vadd.f32 %v3254, %v3890
      %v3981 = vadd.f32 %v3255, %v3893
      %v3982 = vadd.f32 %v3256, %v3898
      %v3983 = vadd.f32 %v3257, %v3901
      %v3984 = vadd.f32 %v3258, %v3906
      %v3985 = vadd.f32 %v3259, %v3909
      %v3986 = vadd.f32 %v3260, %v3914
      %v3987 = vadd.f32 %v3261, %v3917
      %v3988 = vadd.f32 %v3262, %v3922
      %v3989 = vadd.f32 %v3263, %v3925
      %v3990 = vadd.f32 %v3264, %v3930
      %v3991 = vadd.f32 %v3265, %v3933
      %v3992 = vadd.f32 %v3266, %v3938
      %v3993 = vadd.f32 %v3267, %v3941
      %v3994 = vadd.f32 %v3268, %v3946
      %v3995 = vadd.f32 %v3269, %v3949
      %v3996 = vadd.f32 %v3270, %v3954
      %v3997 = vadd.f32 %v3271, %v3957
      %v3998 = vadd.f32 %v3272, %v3962
      %v3999 = vadd.f32 %v3273, %v3965
      %v4000 = vld [vmem:[%s1352] sm:$0xe]
      %v4001 = vld [vmem:[%s1352 + $0xc] sm:$0xe]
      %v4002 = vld [vmem:[%s1352 + $0x18] sm:$0xe]
      %v4003 = vld [vmem:[%s1352 + $0x24] sm:$0xe]
      %v4004 = vld [vmem:[%s1352 + $0x30] sm:$0xe]
      %v4005 = vld [vmem:[%s1352 + $0x3c] sm:$0xe]
      %v4006 = vld [vmem:[%s1352 + $0x48] sm:$0xe]
      %v4007 = vld [vmem:[%s1352 + $0x54] sm:$0xe]
      %v4008 = vld [vmem:[%s1352 + $0x60] sm:$0xe]
      %v4009 = vld [vmem:[%s1352 + $0x6c] sm:$0xe]
      %v4010 = vld [vmem:[%s1352 + $0x78] sm:$0xe]
      %v4011 = vld [vmem:[%s1352 + $0x84] sm:$0xe]
      %v4012 = vld [vmem:[%s1352 + $0x90] sm:$0xe]
      %v4013 = vld [vmem:[%s1352 + $0x9c] sm:$0xe]
      %v4014 = vld [vmem:[%s1352 + $0xa8] sm:$0xe]
      %v4015 = vld [vmem:[%s1352 + $0xb4] sm:$0xe]
      %v4064 = vrot.slane %v4000, 5
      %v4065 = vrot.slane %v4064, 4
      %v4066 = vrot.slane %v3275, 5
      %v4067 = vsel %vm2509, %v4065, %v4066
      %v4068 = vrot.slane %v4066, 4
      %v4069 = vrot.slane %v3276, 5
      %v4070 = vsel %vm2509, %v4068, %v4069
      %v4071 = vrot.slane %v4001, 5
      %v4072 = vrot.slane %v4071, 4
      %v4073 = vrot.slane %v3278, 5
      %v4074 = vsel %vm2509, %v4072, %v4073
      %v4075 = vrot.slane %v4073, 4
      %v4076 = vrot.slane %v3279, 5
      %v4077 = vsel %vm2509, %v4075, %v4076
      %v4078 = vrot.slane %v4002, 5
      %v4079 = vrot.slane %v4078, 4
      %v4080 = vrot.slane %v3281, 5
      %v4081 = vsel %vm2509, %v4079, %v4080
      %v4082 = vrot.slane %v4080, 4
      %v4083 = vrot.slane %v3282, 5
      %v4084 = vsel %vm2509, %v4082, %v4083
      %v4085 = vrot.slane %v4003, 5
      %v4086 = vrot.slane %v4085, 4
      %v4087 = vrot.slane %v3284, 5
      %v4088 = vsel %vm2509, %v4086, %v4087
      %v4089 = vrot.slane %v4087, 4
      %v4090 = vrot.slane %v3285, 5
      %v4091 = vsel %vm2509, %v4089, %v4090
      %v4092 = vrot.slane %v4004, 5
      %v4093 = vrot.slane %v4092, 4
      %v4094 = vrot.slane %v3287, 5
      %v4095 = vsel %vm2509, %v4093, %v4094
      %v4096 = vrot.slane %v4094, 4
      %v4097 = vrot.slane %v3288, 5
      %v4098 = vsel %vm2509, %v4096, %v4097
      %v4099 = vrot.slane %v4005, 5
      %v4100 = vrot.slane %v4099, 4
      %v4101 = vrot.slane %v3290, 5
      %v4102 = vsel %vm2509, %v4100, %v4101
      %v4103 = vrot.slane %v4101, 4
      %v4104 = vrot.slane %v3291, 5
      %v4105 = vsel %vm2509, %v4103, %v4104
      %v4106 = vrot.slane %v4006, 5
      %v4107 = vrot.slane %v4106, 4
      %v4108 = vrot.slane %v3293, 5
      %v4109 = vsel %vm2509, %v4107, %v4108
      %v4110 = vrot.slane %v4108, 4
      %v4111 = vrot.slane %v3294, 5
      %v4112 = vsel %vm2509, %v4110, %v4111
      %v4113 = vrot.slane %v4007, 5
      %v4114 = vrot.slane %v4113, 4
      %v4115 = vrot.slane %v3296, 5
      %v4116 = vsel %vm2509, %v4114, %v4115
      %v4117 = vrot.slane %v4115, 4
      %v4118 = vrot.slane %v3297, 5
      %v4119 = vsel %vm2509, %v4117, %v4118
      %v4120 = vrot.slane %v4008, 5
      %v4121 = vrot.slane %v4120, 4
      %v4122 = vrot.slane %v3299, 5
      %v4123 = vsel %vm2509, %v4121, %v4122
      %v4124 = vrot.slane %v4122, 4
      %v4125 = vrot.slane %v3300, 5
      %v4126 = vsel %vm2509, %v4124, %v4125
      %v4127 = vrot.slane %v4009, 5
      %v4128 = vrot.slane %v4127, 4
      %v4129 = vrot.slane %v3302, 5
      %v4130 = vsel %vm2509, %v4128, %v4129
      %v4131 = vrot.slane %v4129, 4
      %v4132 = vrot.slane %v3303, 5
      %v4133 = vsel %vm2509, %v4131, %v4132
      %v4134 = vrot.slane %v4010, 5
      %v4135 = vrot.slane %v4134, 4
      %v4136 = vrot.slane %v3305, 5
      %v4137 = vsel %vm2509, %v4135, %v4136
      %v4138 = vrot.slane %v4136, 4
      %v4139 = vrot.slane %v3306, 5
      %v4140 = vsel %vm2509, %v4138, %v4139
      %v4141 = vrot.slane %v4011, 5
      %v4142 = vrot.slane %v4141, 4
      %v4143 = vrot.slane %v3308, 5
      %v4144 = vsel %vm2509, %v4142, %v4143
      %v4145 = vrot.slane %v4143, 4
      %v4146 = vrot.slane %v3309, 5
      %v4147 = vsel %vm2509, %v4145, %v4146
      %v4148 = vrot.slane %v4012, 5
      %v4149 = vrot.slane %v4148, 4
      %v4150 = vrot.slane %v3311, 5
      %v4151 = vsel %vm2509, %v4149, %v4150
      %v4152 = vrot.slane %v4150, 4
      %v4153 = vrot.slane %v3312, 5
      %v4154 = vsel %vm2509, %v4152, %v4153
      %v4155 = vrot.slane %v4013, 5
      %v4156 = vrot.slane %v4155, 4
      %v4157 = vrot.slane %v3314, 5
      %v4158 = vsel %vm2509, %v4156, %v4157
      %v4159 = vrot.slane %v4157, 4
      %v4160 = vrot.slane %v3315, 5
      %v4161 = vsel %vm2509, %v4159, %v4160
      %v4162 = vrot.slane %v4014, 5
      %v4163 = vrot.slane %v4162, 4
      %v4164 = vrot.slane %v3317, 5
      %v4165 = vsel %vm2509, %v4163, %v4164
      %v4166 = vrot.slane %v4164, 4
      %v4167 = vrot.slane %v3318, 5
      %v4168 = vsel %vm2509, %v4166, %v4167
      %v4169 = vrot.slane %v4015, 5
      %v4170 = vrot.slane %v4169, 4
      %v4171 = vrot.slane %v3320, 5
      %v4172 = vsel %vm2509, %v4170, %v4171
      %v4173 = vrot.slane %v4171, 4
      %v4174 = vrot.slane %v3321, 5
      %v4175 = vsel %vm2509, %v4173, %v4174
      %s4176 = scalar_lea.vmem %s2, 20
      %v4177 = vld [vmem:[%s4176] sm:$0xf]
      %v4178 = vunpack.c.l.b16 %v4067
      %v4179 = vunpack.c.l.b16 %v4070
      %v4180 = vunpack.c.l.b16 %v4074
      %v4181 = vunpack.c.l.b16 %v4077
      %v4182 = vunpack.c.l.b16 %v4081
      %v4183 = vunpack.c.l.b16 %v4084
      %v4184 = vunpack.c.l.b16 %v4088
      %v4185 = vunpack.c.l.b16 %v4091
      %v4186 = vunpack.c.l.b16 %v4095
      %v4187 = vunpack.c.l.b16 %v4098
      %v4188 = vunpack.c.l.b16 %v4102
      %v4189 = vunpack.c.l.b16 %v4105
      %v4190 = vunpack.c.l.b16 %v4109
      %v4191 = vunpack.c.l.b16 %v4112
      %v4192 = vunpack.c.l.b16 %v4116
      %v4193 = vunpack.c.l.b16 %v4119
      %v4194 = vunpack.c.l.b16 %v4123
      %v4195 = vunpack.c.l.b16 %v4126
      %v4196 = vunpack.c.l.b16 %v4130
      %v4197 = vunpack.c.l.b16 %v4133
      %v4198 = vunpack.c.l.b16 %v4137
      %v4199 = vunpack.c.l.b16 %v4140
      %v4200 = vunpack.c.l.b16 %v4144
      %v4201 = vunpack.c.l.b16 %v4147
      %v4202 = vunpack.c.l.b16 %v4151
      %v4203 = vunpack.c.l.b16 %v4154
      %v4204 = vunpack.c.l.b16 %v4158
      %v4205 = vunpack.c.l.b16 %v4161
      %v4206 = vunpack.c.l.b16 %v4165
      %v4207 = vunpack.c.l.b16 %v4168
      %v4208 = vunpack.c.l.b16 %v4172
      %v4209 = vunpack.c.l.b16 %v4175
      %v4210 = vpack.c.b16 %v4179, %v4178
      %v4211 = vpack.c.b16 %v4181, %v4180
      %v4212 = vpack.c.b16 %v4183, %v4182
      %v4213 = vpack.c.b16 %v4185, %v4184
      %v4214 = vpack.c.b16 %v4187, %v4186
      %v4215 = vpack.c.b16 %v4189, %v4188
      %v4216 = vpack.c.b16 %v4191, %v4190
      %v4217 = vpack.c.b16 %v4193, %v4192
      %v4218 = vpack.c.b16 %v4195, %v4194
      %v4219 = vpack.c.b16 %v4197, %v4196
      %v4220 = vpack.c.b16 %v4199, %v4198
      %v4221 = vpack.c.b16 %v4201, %v4200
      %v4222 = vpack.c.b16 %v4203, %v4202
      %v4223 = vpack.c.b16 %v4205, %v4204
      %v4224 = vpack.c.b16 %v4207, %v4206
      %v4225 = vpack.c.b16 %v4209, %v4208
      %v4227 = vsel %vm1953, %v4210, 0
      %v4230 = vsel %vm1953, %v4211, 0
      %v4233 = vsel %vm1953, %v4212, 0
      %v4236 = vsel %vm1953, %v4213, 0
      %v4239 = vsel %vm1953, %v4214, 0
      %v4242 = vsel %vm1953, %v4215, 0
      %v4245 = vsel %vm1953, %v4216, 0
      %v4248 = vsel %vm1953, %v4217, 0
      %v4251 = vsel %vm1953, %v4218, 0
      %v4254 = vsel %vm1953, %v4219, 0
      %v4257 = vsel %vm1953, %v4220, 0
      %v4260 = vsel %vm1953, %v4221, 0
      %v4263 = vsel %vm1953, %v4222, 0
      %v4266 = vsel %vm1953, %v4223, 0
      %v4269 = vsel %vm1953, %v4224, 0
      %v4272 = vsel %vm1953, %v4225, 0
      %v4275 = vsel %vm2002, %v4177, 0
      %4277 = vmatprep.subr.bf16.mxu0 0
      %4278 = vmatpush1.bf16.msra.mxu0 %v4275
      %4279 = vmatprep.subr.bf16.mxu0 0
      %4280 = vmatpush1.bf16.msra.mxu0 0
      %4281 = vmatprep.subr.bf16.mxu0 0
      %4282 = vmatpush1.bf16.msra.mxu0 0
      %4283 = vmatprep.subr.bf16.mxu0 0
      %4284 = vmatpush1.bf16.msra.mxu0 0
      %4285 = vmatprep.subr.bf16.mxu0 0
      %4286 = vmatpush1.bf16.msra.mxu0 0
      %4287 = vmatprep.subr.bf16.mxu0 0
      %4288 = vmatpush1.bf16.msra.mxu0 0
      %4289 = vmatprep.subr.bf16.mxu0 0
      %4290 = vmatpush1.bf16.msra.mxu0 0
      %4291 = vmatprep.subr.bf16.mxu0 0
      %4292 = vmatpush1.bf16.msra.mxu0 0
      %4293 = vmatprep.subr.bf16.mxu0 0
      %4294 = vmatpush1.bf16.msra.mxu0 0
      %4295 = vmatprep.subr.bf16.mxu0 0
      %4296 = vmatpush1.bf16.msra.mxu0 0
      %4297 = vmatprep.subr.bf16.mxu0 0
      %4298 = vmatpush1.bf16.msra.mxu0 0
      %4299 = vmatprep.subr.bf16.mxu0 0
      %4300 = vmatpush1.bf16.msra.mxu0 0
      %4301 = vmatprep.subr.bf16.mxu0 0
      %4302 = vmatpush1.bf16.msra.mxu0 0
      %4303 = vmatprep.subr.bf16.mxu0 0
      %4304 = vmatpush1.bf16.msra.mxu0 0
      %4305 = vmatprep.subr.bf16.mxu0 0
      %4306 = vmatpush1.bf16.msra.mxu0 0
      %4307 = vmatprep.subr.bf16.mxu0 0
      %4308 = vmatpush1.bf16.msra.mxu0 0
      %4309 = vmatprep.mubr.bf16.mxu0 0
      %4310 = vmatmul.mubr.bf16.gmra.mrb[0].mxu0 %v4227
      %v4311 = vpop.f32.mrb[0].mxu0
      %v4312 = vadd.f32 0.0, %v4311
      %v4313 = vpop.f32.mrb[0].mxu0
      %v4314 = vpop.f32.mrb[0].mxu0
      %v4315 = vadd.f32 0.0, %v4314
      %v4316 = vpop.f32.mrb[0].mxu0
      %4317 = vmatprep.mubr.bf16.mxu0 0
      %4318 = vmatmul.mubr.bf16.gmra.mrb[0].mxu0 %v4230
      %v4319 = vpop.f32.mrb[0].mxu0
      %v4320 = vadd.f32 0.0, %v4319
      %v4321 = vpop.f32.mrb[0].mxu0
      %v4322 = vpop.f32.mrb[0].mxu0
      %v4323 = vadd.f32 0.0, %v4322
      %v4324 = vpop.f32.mrb[0].mxu0
      %4325 = vmatprep.mubr.bf16.mxu0 0
      %4326 = vmatmul.mubr.bf16.gmra.mrb[0].mxu0 %v4233
      %v4327 = vpop.f32.mrb[0].mxu0
      %v4328 = vadd.f32 0.0, %v4327
      %v4329 = vpop.f32.mrb[0].mxu0
      %v4330 = vpop.f32.mrb[0].mxu0
      %v4331 = vadd.f32 0.0, %v4330
      %v4332 = vpop.f32.mrb[0].mxu0
      %4333 = vmatprep.mubr.bf16.mxu0 0
      %4334 = vmatmul.mubr.bf16.gmra.mrb[0].mxu0 %v4236
      %v4335 = vpop.f32.mrb[0].mxu0
      %v4336 = vadd.f32 0.0, %v4335
      %v4337 = vpop.f32.mrb[0].mxu0
      %v4338 = vpop.f32.mrb[0].mxu0
      %v4339 = vadd.f32 0.0, %v4338
      %v4340 = vpop.f32.mrb[0].mxu0
      %4341 = vmatprep.mubr.bf16.mxu0 0
      %4342 = vmatmul.mubr.bf16.gmra.mrb[0].mxu0 %v4239
      %v4343 = vpop.f32.mrb[0].mxu0
      %v4344 = vadd.f32 0.0, %v4343
      %v4345 = vpop.f32.mrb[0].mxu0
      %v4346 = vpop.f32.mrb[0].mxu0
      %v4347 = vadd.f32 0.0, %v4346
      %v4348 = vpop.f32.mrb[0].mxu0
      %4349 = vmatprep.mubr.bf16.mxu0 0
      %4350 = vmatmul.mubr.bf16.gmra.mrb[0].mxu0 %v4242
      %v4351 = vpop.f32.mrb[0].mxu0
      %v4352 = vadd.f32 0.0, %v4351
      %v4353 = vpop.f32.mrb[0].mxu0
      %v4354 = vpop.f32.mrb[0].mxu0
      %v4355 = vadd.f32 0.0, %v4354
      %v4356 = vpop.f32.mrb[0].mxu0
      %4357 = vmatprep.mubr.bf16.mxu0 0
      %4358 = vmatmul.mubr.bf16.gmra.mrb[0].mxu0 %v4245
      %v4359 = vpop.f32.mrb[0].mxu0
      %v4360 = vadd.f32 0.0, %v4359
      %v4361 = vpop.f32.mrb[0].mxu0
      %v4362 = vpop.f32.mrb[0].mxu0
      %v4363 = vadd.f32 0.0, %v4362
      %v4364 = vpop.f32.mrb[0].mxu0
      %4365 = vmatprep.mubr.bf16.mxu0 0
      %4366 = vmatmul.mubr.bf16.gmra.mrb[0].mxu0 %v4248
      %v4367 = vpop.f32.mrb[0].mxu0
      %v4368 = vadd.f32 0.0, %v4367
      %v4369 = vpop.f32.mrb[0].mxu0
      %v4370 = vpop.f32.mrb[0].mxu0
      %v4371 = vadd.f32 0.0, %v4370
      %v4372 = vpop.f32.mrb[0].mxu0
      %4373 = vmatprep.mubr.bf16.mxu0 0
      %4374 = vmatmul.mubr.bf16.gmra.mrb[0].mxu0 %v4251
      %v4375 = vpop.f32.mrb[0].mxu0
      %v4376 = vadd.f32 0.0, %v4375
      %v4377 = vpop.f32.mrb[0].mxu0
      %v4378 = vpop.f32.mrb[0].mxu0
      %v4379 = vadd.f32 0.0, %v4378
      %v4380 = vpop.f32.mrb[0].mxu0
      %4381 = vmatprep.mubr.bf16.mxu0 0
      %4382 = vmatmul.mubr.bf16.gmra.mrb[0].mxu0 %v4254
      %v4383 = vpop.f32.mrb[0].mxu0
      %v4384 = vadd.f32 0.0, %v4383
      %v4385 = vpop.f32.mrb[0].mxu0
      %v4386 = vpop.f32.mrb[0].mxu0
      %v4387 = vadd.f32 0.0, %v4386
      %v4388 = vpop.f32.mrb[0].mxu0
      %4389 = vmatprep.mubr.bf16.mxu0 0
      %4390 = vmatmul.mubr.bf16.gmra.mrb[0].mxu0 %v4257
      %v4391 = vpop.f32.mrb[0].mxu0
      %v4392 = vadd.f32 0.0, %v4391
      %v4393 = vpop.f32.mrb[0].mxu0
      %v4394 = vpop.f32.mrb[0].mxu0
      %v4395 = vadd.f32 0.0, %v4394
      %v4396 = vpop.f32.mrb[0].mxu0
      %4397 = vmatprep.mubr.bf16.mxu0 0
      %4398 = vmatmul.mubr.bf16.gmra.mrb[0].mxu0 %v4260
      %v4399 = vpop.f32.mrb[0].mxu0
      %v4400 = vadd.f32 0.0, %v4399
      %v4401 = vpop.f32.mrb[0].mxu0
      %v4402 = vpop.f32.mrb[0].mxu0
      %v4403 = vadd.f32 0.0, %v4402
      %v4404 = vpop.f32.mrb[0].mxu0
      %4405 = vmatprep.mubr.bf16.mxu0 0
      %4406 = vmatmul.mubr.bf16.gmra.mrb[0].mxu0 %v4263
      %v4407 = vpop.f32.mrb[0].mxu0
      %v4408 = vadd.f32 0.0, %v4407
      %v4409 = vpop.f32.mrb[0].mxu0
      %v4410 = vpop.f32.mrb[0].mxu0
      %v4411 = vadd.f32 0.0, %v4410
      %v4412 = vpop.f32.mrb[0].mxu0
      %4413 = vmatprep.mubr.bf16.mxu0 0
      %4414 = vmatmul.mubr.bf16.gmra.mrb[0].mxu0 %v4266
      %v4415 = vpop.f32.mrb[0].mxu0
      %v4416 = vadd.f32 0.0, %v4415
      %v4417 = vpop.f32.mrb[0].mxu0
      %v4418 = vpop.f32.mrb[0].mxu0
      %v4419 = vadd.f32 0.0, %v4418
      %v4420 = vpop.f32.mrb[0].mxu0
      %4421 = vmatprep.mubr.bf16.mxu0 0
      %4422 = vmatmul.mubr.bf16.gmra.mrb[0].mxu0 %v4269
      %v4423 = vpop.f32.mrb[0].mxu0
      %v4424 = vadd.f32 0.0, %v4423
      %v4425 = vpop.f32.mrb[0].mxu0
      %v4426 = vpop.f32.mrb[0].mxu0
      %v4427 = vadd.f32 0.0, %v4426
      %v4428 = vpop.f32.mrb[0].mxu0
      %4429 = vmatprep.mubr.bf16.mxu0 0
      %4430 = vmatmul.mubr.bf16.gmra.mrb[0].mxu0 %v4272
      %v4431 = vpop.f32.mrb[0].mxu0
      %v4432 = vadd.f32 0.0, %v4431
      %v4433 = vpop.f32.mrb[0].mxu0
      %v4434 = vpop.f32.mrb[0].mxu0
      %v4435 = vadd.f32 0.0, %v4434
      %v4436 = vpop.f32.mrb[0].mxu0
      %4437 = vdwg.mxu0
      %v4438 = vadd.f32 %v3968, %v4312
      %v4439 = vadd.f32 %v3969, %v4315
      %v4440 = vadd.f32 %v3970, %v4320
      %v4441 = vadd.f32 %v3971, %v4323
      %v4442 = vadd.f32 %v3972, %v4328
      %v4443 = vadd.f32 %v3973, %v4331
      %v4444 = vadd.f32 %v3974, %v4336
      %v4445 = vadd.f32 %v3975, %v4339
      %v4446 = vadd.f32 %v3976, %v4344
      %v4447 = vadd.f32 %v3977, %v4347
      %v4448 = vadd.f32 %v3978, %v4352
      %v4449 = vadd.f32 %v3979, %v4355
      %v4450 = vadd.f32 %v3980, %v4360
      %v4451 = vadd.f32 %v3981, %v4363
      %v4452 = vadd.f32 %v3982, %v4368
      %v4453 = vadd.f32 %v3983, %v4371
      %v4454 = vadd.f32 %v3984, %v4376
      %v4455 = vadd.f32 %v3985, %v4379
      %v4456 = vadd.f32 %v3986, %v4384
      %v4457 = vadd.f32 %v3987, %v4387
      %v4458 = vadd.f32 %v3988, %v4392
      %v4459 = vadd.f32 %v3989, %v4395
      %v4460 = vadd.f32 %v3990, %v4400
      %v4461 = vadd.f32 %v3991, %v4403
      %v4462 = vadd.f32 %v3992, %v4408
      %v4463 = vadd.f32 %v3993, %v4411
      %v4464 = vadd.f32 %v3994, %v4416
      %v4465 = vadd.f32 %v3995, %v4419
      %v4466 = vadd.f32 %v3996, %v4424
      %v4467 = vadd.f32 %v3997, %v4427
      %v4468 = vadd.f32 %v3998, %v4432
      %v4469 = vadd.f32 %v3999, %v4435
      %s4470 = scalar_lea.vmem [#allocation2], 24
      %v4471 = vld [vmem:[%s4470] sm:$0xf]
      %v4472 = vld [vmem:[%s4470 + $0x4] sm:$0xf]
      %v4473 = vld [vmem:[%s4470 + $0xc] sm:$0xf]
      %v4474 = vld [vmem:[%s4470 + $0x10] sm:$0xf]
      %v4475 = vld [vmem:[%s4470 + $0x18] sm:$0xf]
      %v4476 = vld [vmem:[%s4470 + $0x1c] sm:$0xf]
      %v4477 = vld [vmem:[%s4470 + $0x24] sm:$0xf]
      %v4478 = vld [vmem:[%s4470 + $0x28] sm:$0xf]
      %v4479 = vld [vmem:[%s4470 + $0x30] sm:$0xf]
      %v4480 = vld [vmem:[%s4470 + $0x34] sm:$0xf]
      %v4481 = vld [vmem:[%s4470 + $0x3c] sm:$0xf]
      %v4482 = vld [vmem:[%s4470 + $0x40] sm:$0xf]
      %v4483 = vld [vmem:[%s4470 + $0x48] sm:$0xf]
      %v4484 = vld [vmem:[%s4470 + $0x4c] sm:$0xf]
      %v4485 = vld [vmem:[%s4470 + $0x54] sm:$0xf]
      %v4486 = vld [vmem:[%s4470 + $0x58] sm:$0xf]
      %v4487 = vld [vmem:[%s4470 + $0x60] sm:$0xf]
      %v4488 = vld [vmem:[%s4470 + $0x64] sm:$0xf]
      %v4489 = vld [vmem:[%s4470 + $0x6c] sm:$0xf]
      %v4490 = vld [vmem:[%s4470 + $0x70] sm:$0xf]
      %v4491 = vld [vmem:[%s4470 + $0x78] sm:$0xf]
      %v4492 = vld [vmem:[%s4470 + $0x7c] sm:$0xf]
      %v4493 = vld [vmem:[%s4470 + $0x84] sm:$0xf]
      %v4494 = vld [vmem:[%s4470 + $0x88] sm:$0xf]
      %v4495 = vld [vmem:[%s4470 + $0x90] sm:$0xf]
      %v4496 = vld [vmem:[%s4470 + $0x94] sm:$0xf]
      %v4497 = vld [vmem:[%s4470 + $0x9c] sm:$0xf]
      %v4498 = vld [vmem:[%s4470 + $0xa0] sm:$0xf]
      %v4499 = vld [vmem:[%s4470 + $0xa8] sm:$0xf]
      %v4500 = vld [vmem:[%s4470 + $0xac] sm:$0xf]
      %v4501 = vld [vmem:[%s4470 + $0xb4] sm:$0xf]
      %v4502 = vld [vmem:[%s4470 + $0xb8] sm:$0xf]
      %s4503 = scalar_lea.vmem %s2, 24
      %v4504 = vld [vmem:[%s4503] sm:$0xf]
      %v4537 = vunpack.c.l.b16 %v4471
      %v4538 = vunpack.c.l.b16 %v4472
      %v4539 = vunpack.c.l.b16 %v4473
      %v4540 = vunpack.c.l.b16 %v4474
      %v4541 = vunpack.c.l.b16 %v4475
      %v4542 = vunpack.c.l.b16 %v4476
      %v4543 = vunpack.c.l.b16 %v4477
      %v4544 = vunpack.c.l.b16 %v4478
      %v4545 = vunpack.c.l.b16 %v4479
      %v4546 = vunpack.c.l.b16 %v4480
      %v4547 = vunpack.c.l.b16 %v4481
      %v4548 = vunpack.c.l.b16 %v4482
      %v4549 = vunpack.c.l.b16 %v4483
      %v4550 = vunpack.c.l.b16 %v4484
      %v4551 = vunpack.c.l.b16 %v4485
      %v4552 = vunpack.c.l.b16 %v4486
      %v4553 = vunpack.c.l.b16 %v4487
      %v4554 = vunpack.c.l.b16 %v4488
      %v4555 = vunpack.c.l.b16 %v4489
      %v4556 = vunpack.c.l.b16 %v4490
      %v4557 = vunpack.c.l.b16 %v4491
      %v4558 = vunpack.c.l.b16 %v4492
      %v4559 = vunpack.c.l.b16 %v4493
      %v4560 = vunpack.c.l.b16 %v4494
      %v4561 = vunpack.c.l.b16 %v4495
      %v4562 = vunpack.c.l.b16 %v4496
      %v4563 = vunpack.c.l.b16 %v4497
      %v4564 = vunpack.c.l.b16 %v4498
      %v4565 = vunpack.c.l.b16 %v4499
      %v4566 = vunpack.c.l.b16 %v4500
      %v4567 = vunpack.c.l.b16 %v4501
      %v4568 = vunpack.c.l.b16 %v4502
      %v4569 = vpack.c.b16 %v4538, %v4537
      %v4570 = vpack.c.b16 %v4540, %v4539
      %v4571 = vpack.c.b16 %v4542, %v4541
      %v4572 = vpack.c.b16 %v4544, %v4543
      %v4573 = vpack.c.b16 %v4546, %v4545
      %v4574 = vpack.c.b16 %v4548, %v4547
      %v4575 = vpack.c.b16 %v4550, %v4549
      %v4576 = vpack.c.b16 %v4552, %v4551
      %v4577 = vpack.c.b16 %v4554, %v4553
      %v4578 = vpack.c.b16 %v4556, %v4555
      %v4579 = vpack.c.b16 %v4558, %v4557
      %v4580 = vpack.c.b16 %v4560, %v4559
      %v4581 = vpack.c.b16 %v4562, %v4561
      %v4582 = vpack.c.b16 %v4564, %v4563
      %v4583 = vpack.c.b16 %v4566, %v4565
      %v4584 = vpack.c.b16 %v4568, %v4567
      %v4586 = vsel %vm1953, %v4569, 0
      %v4589 = vsel %vm1953, %v4570, 0
      %v4592 = vsel %vm1953, %v4571, 0
      %v4595 = vsel %vm1953, %v4572, 0
      %v4598 = vsel %vm1953, %v4573, 0
      %v4601 = vsel %vm1953, %v4574, 0
      %v4604 = vsel %vm1953, %v4575, 0
      %v4607 = vsel %vm1953, %v4576, 0
      %v4610 = vsel %vm1953, %v4577, 0
      %v4613 = vsel %vm1953, %v4578, 0
      %v4616 = vsel %vm1953, %v4579, 0
      %v4619 = vsel %vm1953, %v4580, 0
      %v4622 = vsel %vm1953, %v4581, 0
      %v4625 = vsel %vm1953, %v4582, 0
      %v4628 = vsel %vm1953, %v4583, 0
      %v4631 = vsel %vm1953, %v4584, 0
      %v4634 = vsel %vm2002, %v4504, 0
      %4636 = vmatprep.subr.bf16.mxu0 0
      %4637 = vmatpush1.bf16.msra.mxu0 %v4634
      %4638 = vmatprep.subr.bf16.mxu0 0
      %4639 = vmatpush1.bf16.msra.mxu0 0
      %4640 = vmatprep.subr.bf16.mxu0 0
      %4641 = vmatpush1.bf16.msra.mxu0 0
      %4642 = vmatprep.subr.bf16.mxu0 0
      %4643 = vmatpush1.bf16.msra.mxu0 0
      %4644 = vmatprep.subr.bf16.mxu0 0
      %4645 = vmatpush1.bf16.msra.mxu0 0
      %4646 = vmatprep.subr.bf16.mxu0 0
      %4647 = vmatpush1.bf16.msra.mxu0 0
      %4648 = vmatprep.subr.bf16.mxu0 0
      %4649 = vmatpush1.bf16.msra.mxu0 0
      %4650 = vmatprep.subr.bf16.mxu0 0
      %4651 = vmatpush1.bf16.msra.mxu0 0
      %4652 = vmatprep.subr.bf16.mxu0 0
      %4653 = vmatpush1.bf16.msra.mxu0 0
      %4654 = vmatprep.subr.bf16.mxu0 0
      %4655 = vmatpush1.bf16.msra.mxu0 0
      %4656 = vmatprep.subr.bf16.mxu0 0
      %4657 = vmatpush1.bf16.msra.mxu0 0
      %4658 = vmatprep.subr.bf16.mxu0 0
      %4659 = vmatpush1.bf16.msra.mxu0 0
      %4660 = vmatprep.subr.bf16.mxu0 0
      %4661 = vmatpush1.bf16.msra.mxu0 0
      %4662 = vmatprep.subr.bf16.mxu0 0
      %4663 = vmatpush1.bf16.msra.mxu0 0
      %4664 = vmatprep.subr.bf16.mxu0 0
      %4665 = vmatpush1.bf16.msra.mxu0 0
      %4666 = vmatprep.subr.bf16.mxu0 0
      %4667 = vmatpush1.bf16.msra.mxu0 0
      %4668 = vmatprep.mubr.bf16.mxu0 0
      %4669 = vmatmul.mubr.bf16.gmra.mrb[0].mxu0 %v4586
      %v4670 = vpop.f32.mrb[0].mxu0
      %v4671 = vadd.f32 0.0, %v4670
      %v4672 = vpop.f32.mrb[0].mxu0
      %v4673 = vpop.f32.mrb[0].mxu0
      %v4674 = vadd.f32 0.0, %v4673
      %v4675 = vpop.f32.mrb[0].mxu0
      %4676 = vmatprep.mubr.bf16.mxu0 0
      %4677 = vmatmul.mubr.bf16.gmra.mrb[0].mxu0 %v4589
      %v4678 = vpop.f32.mrb[0].mxu0
      %v4679 = vadd.f32 0.0, %v4678
      %v4680 = vpop.f32.mrb[0].mxu0
      %v4681 = vpop.f32.mrb[0].mxu0
      %v4682 = vadd.f32 0.0, %v4681
      %v4683 = vpop.f32.mrb[0].mxu0
      %4684 = vmatprep.mubr.bf16.mxu0 0
      %4685 = vmatmul.mubr.bf16.gmra.mrb[0].mxu0 %v4592
      %v4686 = vpop.f32.mrb[0].mxu0
      %v4687 = vadd.f32 0.0, %v4686
      %v4688 = vpop.f32.mrb[0].mxu0
      %v4689 = vpop.f32.mrb[0].mxu0
      %v4690 = vadd.f32 0.0, %v4689
      %v4691 = vpop.f32.mrb[0].mxu0
      %4692 = vmatprep.mubr.bf16.mxu0 0
      %4693 = vmatmul.mubr.bf16.gmra.mrb[0].mxu0 %v4595
      %v4694 = vpop.f32.mrb[0].mxu0
      %v4695 = vadd.f32 0.0, %v4694
      %v4696 = vpop.f32.mrb[0].mxu0
      %v4697 = vpop.f32.mrb[0].mxu0
      %v4698 = vadd.f32 0.0, %v4697
      %v4699 = vpop.f32.mrb[0].mxu0
      %4700 = vmatprep.mubr.bf16.mxu0 0
      %4701 = vmatmul.mubr.bf16.gmra.mrb[0].mxu0 %v4598
      %v4702 = vpop.f32.mrb[0].mxu0
      %v4703 = vadd.f32 0.0, %v4702
      %v4704 = vpop.f32.mrb[0].mxu0
      %v4705 = vpop.f32.mrb[0].mxu0
      %v4706 = vadd.f32 0.0, %v4705
      %v4707 = vpop.f32.mrb[0].mxu0
      %4708 = vmatprep.mubr.bf16.mxu0 0
      %4709 = vmatmul.mubr.bf16.gmra.mrb[0].mxu0 %v4601
      %v4710 = vpop.f32.mrb[0].mxu0
      %v4711 = vadd.f32 0.0, %v4710
      %v4712 = vpop.f32.mrb[0].mxu0
      %v4713 = vpop.f32.mrb[0].mxu0
      %v4714 = vadd.f32 0.0, %v4713
      %v4715 = vpop.f32.mrb[0].mxu0
      %4716 = vmatprep.mubr.bf16.mxu0 0
      %4717 = vmatmul.mubr.bf16.gmra.mrb[0].mxu0 %v4604
      %v4718 = vpop.f32.mrb[0].mxu0
      %v4719 = vadd.f32 0.0, %v4718
      %v4720 = vpop.f32.mrb[0].mxu0
      %v4721 = vpop.f32.mrb[0].mxu0
      %v4722 = vadd.f32 0.0, %v4721
      %v4723 = vpop.f32.mrb[0].mxu0
      %4724 = vmatprep.mubr.bf16.mxu0 0
      %4725 = vmatmul.mubr.bf16.gmra.mrb[0].mxu0 %v4607
      %v4726 = vpop.f32.mrb[0].mxu0
      %v4727 = vadd.f32 0.0, %v4726
      %v4728 = vpop.f32.mrb[0].mxu0
      %v4729 = vpop.f32.mrb[0].mxu0
      %v4730 = vadd.f32 0.0, %v4729
      %v4731 = vpop.f32.mrb[0].mxu0
      %4732 = vmatprep.mubr.bf16.mxu0 0
      %4733 = vmatmul.mubr.bf16.gmra.mrb[0].mxu0 %v4610
      %v4734 = vpop.f32.mrb[0].mxu0
      %v4735 = vadd.f32 0.0, %v4734
      %v4736 = vpop.f32.mrb[0].mxu0
      %v4737 = vpop.f32.mrb[0].mxu0
      %v4738 = vadd.f32 0.0, %v4737
      %v4739 = vpop.f32.mrb[0].mxu0
      %4740 = vmatprep.mubr.bf16.mxu0 0
      %4741 = vmatmul.mubr.bf16.gmra.mrb[0].mxu0 %v4613
      %v4742 = vpop.f32.mrb[0].mxu0
      %v4743 = vadd.f32 0.0, %v4742
      %v4744 = vpop.f32.mrb[0].mxu0
      %v4745 = vpop.f32.mrb[0].mxu0
      %v4746 = vadd.f32 0.0, %v4745
      %v4747 = vpop.f32.mrb[0].mxu0
      %4748 = vmatprep.mubr.bf16.mxu0 0
      %4749 = vmatmul.mubr.bf16.gmra.mrb[0].mxu0 %v4616
      %v4750 = vpop.f32.mrb[0].mxu0
      %v4751 = vadd.f32 0.0, %v4750
      %v4752 = vpop.f32.mrb[0].mxu0
      %v4753 = vpop.f32.mrb[0].mxu0
      %v4754 = vadd.f32 0.0, %v4753
      %v4755 = vpop.f32.mrb[0].mxu0
      %4756 = vmatprep.mubr.bf16.mxu0 0
      %4757 = vmatmul.mubr.bf16.gmra.mrb[0].mxu0 %v4619
      %v4758 = vpop.f32.mrb[0].mxu0
      %v4759 = vadd.f32 0.0, %v4758
      %v4760 = vpop.f32.mrb[0].mxu0
      %v4761 = vpop.f32.mrb[0].mxu0
      %v4762 = vadd.f32 0.0, %v4761
      %v4763 = vpop.f32.mrb[0].mxu0
      %4764 = vmatprep.mubr.bf16.mxu0 0
      %4765 = vmatmul.mubr.bf16.gmra.mrb[0].mxu0 %v4622
      %v4766 = vpop.f32.mrb[0].mxu0
      %v4767 = vadd.f32 0.0, %v4766
      %v4768 = vpop.f32.mrb[0].mxu0
      %v4769 = vpop.f32.mrb[0].mxu0
      %v4770 = vadd.f32 0.0, %v4769
      %v4771 = vpop.f32.mrb[0].mxu0
      %4772 = vmatprep.mubr.bf16.mxu0 0
      %4773 = vmatmul.mubr.bf16.gmra.mrb[0].mxu0 %v4625
      %v4774 = vpop.f32.mrb[0].mxu0
      %v4775 = vadd.f32 0.0, %v4774
      %v4776 = vpop.f32.mrb[0].mxu0
      %v4777 = vpop.f32.mrb[0].mxu0
      %v4778 = vadd.f32 0.0, %v4777
      %v4779 = vpop.f32.mrb[0].mxu0
      %4780 = vmatprep.mubr.bf16.mxu0 0
      %4781 = vmatmul.mubr.bf16.gmra.mrb[0].mxu0 %v4628
      %v4782 = vpop.f32.mrb[0].mxu0
      %v4783 = vadd.f32 0.0, %v4782
      %v4784 = vpop.f32.mrb[0].mxu0
      %v4785 = vpop.f32.mrb[0].mxu0
      %v4786 = vadd.f32 0.0, %v4785
      %v4787 = vpop.f32.mrb[0].mxu0
      %4788 = vmatprep.mubr.bf16.mxu0 0
      %4789 = vmatmul.mubr.bf16.gmra.mrb[0].mxu0 %v4631
      %v4790 = vpop.f32.mrb[0].mxu0
      %v4791 = vadd.f32 0.0, %v4790
      %v4792 = vpop.f32.mrb[0].mxu0
      %v4793 = vpop.f32.mrb[0].mxu0
      %v4794 = vadd.f32 0.0, %v4793
      %v4795 = vpop.f32.mrb[0].mxu0
      %4796 = vdwg.mxu0
      %v4797 = vadd.f32 %v4438, %v4671
      %v4798 = vadd.f32 %v4439, %v4674
      %v4799 = vadd.f32 %v4440, %v4679
      %v4800 = vadd.f32 %v4441, %v4682
      %v4801 = vadd.f32 %v4442, %v4687
      %v4802 = vadd.f32 %v4443, %v4690
      %v4803 = vadd.f32 %v4444, %v4695
      %v4804 = vadd.f32 %v4445, %v4698
      %v4805 = vadd.f32 %v4446, %v4703
      %v4806 = vadd.f32 %v4447, %v4706
      %v4807 = vadd.f32 %v4448, %v4711
      %v4808 = vadd.f32 %v4449, %v4714
      %v4809 = vadd.f32 %v4450, %v4719
      %v4810 = vadd.f32 %v4451, %v4722
      %v4811 = vadd.f32 %v4452, %v4727
      %v4812 = vadd.f32 %v4453, %v4730
      %v4813 = vadd.f32 %v4454, %v4735
      %v4814 = vadd.f32 %v4455, %v4738
      %v4815 = vadd.f32 %v4456, %v4743
      %v4816 = vadd.f32 %v4457, %v4746
      %v4817 = vadd.f32 %v4458, %v4751
      %v4818 = vadd.f32 %v4459, %v4754
      %v4819 = vadd.f32 %v4460, %v4759
      %v4820 = vadd.f32 %v4461, %v4762
      %v4821 = vadd.f32 %v4462, %v4767
      %v4822 = vadd.f32 %v4463, %v4770
      %v4823 = vadd.f32 %v4464, %v4775
      %v4824 = vadd.f32 %v4465, %v4778
      %v4825 = vadd.f32 %v4466, %v4783
      %v4826 = vadd.f32 %v4467, %v4786
      %v4827 = vadd.f32 %v4468, %v4791
      %v4828 = vadd.f32 %v4469, %v4794
      %v4829 = vld [vmem:[%s4470] sm:$0xf]
      %v4830 = vld [vmem:[%s4470 + $0x4] sm:$0xf]
      %v4831 = vld [vmem:[%s4470 + $0x8] sm:$0x1]
      %v4832 = vld [vmem:[%s4470 + $0xc] sm:$0xf]
      %v4833 = vld [vmem:[%s4470 + $0x10] sm:$0xf]
      %v4834 = vld [vmem:[%s4470 + $0x14] sm:$0x1]
      %v4835 = vld [vmem:[%s4470 + $0x18] sm:$0xf]
      %v4836 = vld [vmem:[%s4470 + $0x1c] sm:$0xf]
      %v4837 = vld [vmem:[%s4470 + $0x20] sm:$0x1]
      %v4838 = vld [vmem:[%s4470 + $0x24] sm:$0xf]
      %v4839 = vld [vmem:[%s4470 + $0x28] sm:$0xf]
      %v4840 = vld [vmem:[%s4470 + $0x2c] sm:$0x1]
      %v4841 = vld [vmem:[%s4470 + $0x30] sm:$0xf]
      %v4842 = vld [vmem:[%s4470 + $0x34] sm:$0xf]
      %v4843 = vld [vmem:[%s4470 + $0x38] sm:$0x1]
      %v4844 = vld [vmem:[%s4470 + $0x3c] sm:$0xf]
      %v4845 = vld [vmem:[%s4470 + $0x40] sm:$0xf]
      %v4846 = vld [vmem:[%s4470 + $0x44] sm:$0x1]
      %v4847 = vld [vmem:[%s4470 + $0x48] sm:$0xf]
      %v4848 = vld [vmem:[%s4470 + $0x4c] sm:$0xf]
      %v4849 = vld [vmem:[%s4470 + $0x50] sm:$0x1]
      %v4850 = vld [vmem:[%s4470 + $0x54] sm:$0xf]
      %v4851 = vld [vmem:[%s4470 + $0x58] sm:$0xf]
      %v4852 = vld [vmem:[%s4470 + $0x5c] sm:$0x1]
      %v4853 = vld [vmem:[%s4470 + $0x60] sm:$0xf]
      %v4854 = vld [vmem:[%s4470 + $0x64] sm:$0xf]
      %v4855 = vld [vmem:[%s4470 + $0x68] sm:$0x1]
      %v4856 = vld [vmem:[%s4470 + $0x6c] sm:$0xf]
      %v4857 = vld [vmem:[%s4470 + $0x70] sm:$0xf]
      %v4858 = vld [vmem:[%s4470 + $0x74] sm:$0x1]
      %v4859 = vld [vmem:[%s4470 + $0x78] sm:$0xf]
      %v4860 = vld [vmem:[%s4470 + $0x7c] sm:$0xf]
      %v4861 = vld [vmem:[%s4470 + $0x80] sm:$0x1]
      %v4862 = vld [vmem:[%s4470 + $0x84] sm:$0xf]
      %v4863 = vld [vmem:[%s4470 + $0x88] sm:$0xf]
      %v4864 = vld [vmem:[%s4470 + $0x8c] sm:$0x1]
      %v4865 = vld [vmem:[%s4470 + $0x90] sm:$0xf]
      %v4866 = vld [vmem:[%s4470 + $0x94] sm:$0xf]
      %v4867 = vld [vmem:[%s4470 + $0x98] sm:$0x1]
      %v4868 = vld [vmem:[%s4470 + $0x9c] sm:$0xf]
      %v4869 = vld [vmem:[%s4470 + $0xa0] sm:$0xf]
      %v4870 = vld [vmem:[%s4470 + $0xa4] sm:$0x1]
      %v4871 = vld [vmem:[%s4470 + $0xa8] sm:$0xf]
      %v4872 = vld [vmem:[%s4470 + $0xac] sm:$0xf]
      %v4873 = vld [vmem:[%s4470 + $0xb0] sm:$0x1]
      %v4874 = vld [vmem:[%s4470 + $0xb4] sm:$0xf]
      %v4875 = vld [vmem:[%s4470 + $0xb8] sm:$0xf]
      %v4876 = vld [vmem:[%s4470 + $0xbc] sm:$0x1]
      %v4878 = vshrl.u32 %v4829, 16
      %v4880 = vrot.slane %v4878, 4
      %v4881 = vshll.u32 %v4829, 16
      %v4883 = vrot.slane %v4881, 5
      %v4884 = vor.u32 %v4880, %v4883
      %v4885 = vrot.slane %v4884, 4
      %v4887 = vshll.u32 %v4830, 16
      %v4889 = vrot.slane %v4887, 5
      %v4890 = vsel %vm1518, %v4885, %v4889
      %v4891 = vshrl.u32 %v4830, 16
      %v4893 = vrot.slane %v4891, 4
      %v4894 = vor.u32 %v4893, %v4889
      %v4895 = vrot.slane %v4894, 4
      %v4897 = vshll.u32 %v4831, 16
      %v4899 = vrot.slane %v4897, 5
      %v4900 = vsel %vm1518, %v4895, %v4899
      %v4902 = vshrl.u32 %v4832, 16
      %v4904 = vrot.slane %v4902, 4
      %v4905 = vshll.u32 %v4832, 16
      %v4907 = vrot.slane %v4905, 5
      %v4908 = vor.u32 %v4904, %v4907
      %v4909 = vrot.slane %v4908, 4
      %v4911 = vshll.u32 %v4833, 16
      %v4913 = vrot.slane %v4911, 5
      %v4914 = vsel %vm1518, %v4909, %v4913
      %v4915 = vshrl.u32 %v4833, 16
      %v4917 = vrot.slane %v4915, 4
      %v4918 = vor.u32 %v4917, %v4913
      %v4919 = vrot.slane %v4918, 4
      %v4921 = vshll.u32 %v4834, 16
      %v4923 = vrot.slane %v4921, 5
      %v4924 = vsel %vm1518, %v4919, %v4923
      %v4926 = vshrl.u32 %v4835, 16
      %v4928 = vrot.slane %v4926, 4
      %v4929 = vshll.u32 %v4835, 16
      %v4931 = vrot.slane %v4929, 5
      %v4932 = vor.u32 %v4928, %v4931
      %v4933 = vrot.slane %v4932, 4
      %v4935 = vshll.u32 %v4836, 16
      %v4937 = vrot.slane %v4935, 5
      %v4938 = vsel %vm1518, %v4933, %v4937
      %v4939 = vshrl.u32 %v4836, 16
      %v4941 = vrot.slane %v4939, 4
      %v4942 = vor.u32 %v4941, %v4937
      %v4943 = vrot.slane %v4942, 4
      %v4945 = vshll.u32 %v4837, 16
      %v4947 = vrot.slane %v4945, 5
      %v4948 = vsel %vm1518, %v4943, %v4947
      %v4950 = vshrl.u32 %v4838, 16
      %v4952 = vrot.slane %v4950, 4
      %v4953 = vshll.u32 %v4838, 16
      %v4955 = vrot.slane %v4953, 5
      %v4956 = vor.u32 %v4952, %v4955
      %v4957 = vrot.slane %v4956, 4
      %v4959 = vshll.u32 %v4839, 16
      %v4961 = vrot.slane %v4959, 5
      %v4962 = vsel %vm1518, %v4957, %v4961
      %v4963 = vshrl.u32 %v4839, 16
      %v4965 = vrot.slane %v4963, 4
      %v4966 = vor.u32 %v4965, %v4961
      %v4967 = vrot.slane %v4966, 4
      %v4969 = vshll.u32 %v4840, 16
      %v4971 = vrot.slane %v4969, 5
      %v4972 = vsel %vm1518, %v4967, %v4971
      %v4974 = vshrl.u32 %v4841, 16
      %v4976 = vrot.slane %v4974, 4
      %v4977 = vshll.u32 %v4841, 16
      %v4979 = vrot.slane %v4977, 5
      %v4980 = vor.u32 %v4976, %v4979
      %v4981 = vrot.slane %v4980, 4
      %v4983 = vshll.u32 %v4842, 16
      %v4985 = vrot.slane %v4983, 5
      %v4986 = vsel %vm1518, %v4981, %v4985
      %v4987 = vshrl.u32 %v4842, 16
      %v4989 = vrot.slane %v4987, 4
      %v4990 = vor.u32 %v4989, %v4985
      %v4991 = vrot.slane %v4990, 4
      %v4993 = vshll.u32 %v4843, 16
      %v4995 = vrot.slane %v4993, 5
      %v4996 = vsel %vm1518, %v4991, %v4995
      %v4998 = vshrl.u32 %v4844, 16
      %v5000 = vrot.slane %v4998, 4
      %v5001 = vshll.u32 %v4844, 16
      %v5003 = vrot.slane %v5001, 5
      %v5004 = vor.u32 %v5000, %v5003
      %v5005 = vrot.slane %v5004, 4
      %v5007 = vshll.u32 %v4845, 16
      %v5009 = vrot.slane %v5007, 5
      %v5010 = vsel %vm1518, %v5005, %v5009
      %v5011 = vshrl.u32 %v4845, 16
      %v5013 = vrot.slane %v5011, 4
      %v5014 = vor.u32 %v5013, %v5009
      %v5015 = vrot.slane %v5014, 4
      %v5017 = vshll.u32 %v4846, 16
      %v5019 = vrot.slane %v5017, 5
      %v5020 = vsel %vm1518, %v5015, %v5019
      %v5022 = vshrl.u32 %v4847, 16
      %v5024 = vrot.slane %v5022, 4
      %v5025 = vshll.u32 %v4847, 16
      %v5027 = vrot.slane %v5025, 5
      %v5028 = vor.u32 %v5024, %v5027
      %v5029 = vrot.slane %v5028, 4
      %v5031 = vshll.u32 %v4848, 16
      %v5033 = vrot.slane %v5031, 5
      %v5034 = vsel %vm1518, %v5029, %v5033
      %v5035 = vshrl.u32 %v4848, 16
      %v5037 = vrot.slane %v5035, 4
      %v5038 = vor.u32 %v5037, %v5033
      %v5039 = vrot.slane %v5038, 4
      %v5041 = vshll.u32 %v4849, 16
      %v5043 = vrot.slane %v5041, 5
      %v5044 = vsel %vm1518, %v5039, %v5043
      %v5046 = vshrl.u32 %v4850, 16
      %v5048 = vrot.slane %v5046, 4
      %v5049 = vshll.u32 %v4850, 16
      %v5051 = vrot.slane %v5049, 5
      %v5052 = vor.u32 %v5048, %v5051
      %v5053 = vrot.slane %v5052, 4
      %v5055 = vshll.u32 %v4851, 16
      %v5057 = vrot.slane %v5055, 5
      %v5058 = vsel %vm1518, %v5053, %v5057
      %v5059 = vshrl.u32 %v4851, 16
      %v5061 = vrot.slane %v5059, 4
      %v5062 = vor.u32 %v5061, %v5057
      %v5063 = vrot.slane %v5062, 4
      %v5065 = vshll.u32 %v4852, 16
      %v5067 = vrot.slane %v5065, 5
      %v5068 = vsel %vm1518, %v5063, %v5067
      %v5070 = vshrl.u32 %v4853, 16
      %v5072 = vrot.slane %v5070, 4
      %v5073 = vshll.u32 %v4853, 16
      %v5075 = vrot.slane %v5073, 5
      %v5076 = vor.u32 %v5072, %v5075
      %v5077 = vrot.slane %v5076, 4
      %v5079 = vshll.u32 %v4854, 16
      %v5081 = vrot.slane %v5079, 5
      %v5082 = vsel %vm1518, %v5077, %v5081
      %v5083 = vshrl.u32 %v4854, 16
      %v5085 = vrot.slane %v5083, 4
      %v5086 = vor.u32 %v5085, %v5081
      %v5087 = vrot.slane %v5086, 4
      %v5089 = vshll.u32 %v4855, 16
      %v5091 = vrot.slane %v5089, 5
      %v5092 = vsel %vm1518, %v5087, %v5091
      %v5094 = vshrl.u32 %v4856, 16
      %v5096 = vrot.slane %v5094, 4
      %v5097 = vshll.u32 %v4856, 16
      %v5099 = vrot.slane %v5097, 5
      %v5100 = vor.u32 %v5096, %v5099
      %v5101 = vrot.slane %v5100, 4
      %v5103 = vshll.u32 %v4857, 16
      %v5105 = vrot.slane %v5103, 5
      %v5106 = vsel %vm1518, %v5101, %v5105
      %v5107 = vshrl.u32 %v4857, 16
      %v5109 = vrot.slane %v5107, 4
      %v5110 = vor.u32 %v5109, %v5105
      %v5111 = vrot.slane %v5110, 4
      %v5113 = vshll.u32 %v4858, 16
      %v5115 = vrot.slane %v5113, 5
      %v5116 = vsel %vm1518, %v5111, %v5115
      %v5118 = vshrl.u32 %v4859, 16
      %v5120 = vrot.slane %v5118, 4
      %v5121 = vshll.u32 %v4859, 16
      %v5123 = vrot.slane %v5121, 5
      %v5124 = vor.u32 %v5120, %v5123
      %v5125 = vrot.slane %v5124, 4
      %v5127 = vshll.u32 %v4860, 16
      %v5129 = vrot.slane %v5127, 5
      %v5130 = vsel %vm1518, %v5125, %v5129
      %v5131 = vshrl.u32 %v4860, 16
      %v5133 = vrot.slane %v5131, 4
      %v5134 = vor.u32 %v5133, %v5129
      %v5135 = vrot.slane %v5134, 4
      %v5137 = vshll.u32 %v4861, 16
      %v5139 = vrot.slane %v5137, 5
      %v5140 = vsel %vm1518, %v5135, %v5139
      %v5142 = vshrl.u32 %v4862, 16
      %v5144 = vrot.slane %v5142, 4
      %v5145 = vshll.u32 %v4862, 16
      %v5147 = vrot.slane %v5145, 5
      %v5148 = vor.u32 %v5144, %v5147
      %v5149 = vrot.slane %v5148, 4
      %v5151 = vshll.u32 %v4863, 16
      %v5153 = vrot.slane %v5151, 5
      %v5154 = vsel %vm1518, %v5149, %v5153
      %v5155 = vshrl.u32 %v4863, 16
      %v5157 = vrot.slane %v5155, 4
      %v5158 = vor.u32 %v5157, %v5153
      %v5159 = vrot.slane %v5158, 4
      %v5161 = vshll.u32 %v4864, 16
      %v5163 = vrot.slane %v5161, 5
      %v5164 = vsel %vm1518, %v5159, %v5163
      %v5166 = vshrl.u32 %v4865, 16
      %v5168 = vrot.slane %v5166, 4
      %v5169 = vshll.u32 %v4865, 16
      %v5171 = vrot.slane %v5169, 5
      %v5172 = vor.u32 %v5168, %v5171
      %v5173 = vrot.slane %v5172, 4
      %v5175 = vshll.u32 %v4866, 16
      %v5177 = vrot.slane %v5175, 5
      %v5178 = vsel %vm1518, %v5173, %v5177
      %v5179 = vshrl.u32 %v4866, 16
      %v5181 = vrot.slane %v5179, 4
      %v5182 = vor.u32 %v5181, %v5177
      %v5183 = vrot.slane %v5182, 4
      %v5185 = vshll.u32 %v4867, 16
      %v5187 = vrot.slane %v5185, 5
      %v5188 = vsel %vm1518, %v5183, %v5187
      %v5190 = vshrl.u32 %v4868, 16
      %v5192 = vrot.slane %v5190, 4
      %v5193 = vshll.u32 %v4868, 16
      %v5195 = vrot.slane %v5193, 5
      %v5196 = vor.u32 %v5192, %v5195
      %v5197 = vrot.slane %v5196, 4
      %v5199 = vshll.u32 %v4869, 16
      %v5201 = vrot.slane %v5199, 5
      %v5202 = vsel %vm1518, %v5197, %v5201
      %v5203 = vshrl.u32 %v4869, 16
      %v5205 = vrot.slane %v5203, 4
      %v5206 = vor.u32 %v5205, %v5201
      %v5207 = vrot.slane %v5206, 4
      %v5209 = vshll.u32 %v4870, 16
      %v5211 = vrot.slane %v5209, 5
      %v5212 = vsel %vm1518, %v5207, %v5211
      %v5214 = vshrl.u32 %v4871, 16
      %v5216 = vrot.slane %v5214, 4
      %v5217 = vshll.u32 %v4871, 16
      %v5219 = vrot.slane %v5217, 5
      %v5220 = vor.u32 %v5216, %v5219
      %v5221 = vrot.slane %v5220, 4
      %v5223 = vshll.u32 %v4872, 16
      %v5225 = vrot.slane %v5223, 5
      %v5226 = vsel %vm1518, %v5221, %v5225
      %v5227 = vshrl.u32 %v4872, 16
      %v5229 = vrot.slane %v5227, 4
      %v5230 = vor.u32 %v5229, %v5225
      %v5231 = vrot.slane %v5230, 4
      %v5233 = vshll.u32 %v4873, 16
      %v5235 = vrot.slane %v5233, 5
      %v5236 = vsel %vm1518, %v5231, %v5235
      %v5238 = vshrl.u32 %v4874, 16
      %v5240 = vrot.slane %v5238, 4
      %v5241 = vshll.u32 %v4874, 16
      %v5243 = vrot.slane %v5241, 5
      %v5244 = vor.u32 %v5240, %v5243
      %v5245 = vrot.slane %v5244, 4
      %v5247 = vshll.u32 %v4875, 16
      %v5249 = vrot.slane %v5247, 5
      %v5250 = vsel %vm1518, %v5245, %v5249
      %v5251 = vshrl.u32 %v4875, 16
      %v5253 = vrot.slane %v5251, 4
      %v5254 = vor.u32 %v5253, %v5249
      %v5255 = vrot.slane %v5254, 4
      %v5257 = vshll.u32 %v4876, 16
      %v5259 = vrot.slane %v5257, 5
      %v5260 = vsel %vm1518, %v5255, %v5259
      %s5261 = scalar_lea.vmem %s2, 28
      %v5262 = vld [vmem:[%s5261] sm:$0xf]
      %v5263 = vunpack.c.l.b16 %v4890
      %v5264 = vunpack.c.l.b16 %v4900
      %v5265 = vunpack.c.l.b16 %v4914
      %v5266 = vunpack.c.l.b16 %v4924
      %v5267 = vunpack.c.l.b16 %v4938
      %v5268 = vunpack.c.l.b16 %v4948
      %v5269 = vunpack.c.l.b16 %v4962
      %v5270 = vunpack.c.l.b16 %v4972
      %v5271 = vunpack.c.l.b16 %v4986
      %v5272 = vunpack.c.l.b16 %v4996
      %v5273 = vunpack.c.l.b16 %v5010
      %v5274 = vunpack.c.l.b16 %v5020
      %v5275 = vunpack.c.l.b16 %v5034
      %v5276 = vunpack.c.l.b16 %v5044
      %v5277 = vunpack.c.l.b16 %v5058
      %v5278 = vunpack.c.l.b16 %v5068
      %v5279 = vunpack.c.l.b16 %v5082
      %v5280 = vunpack.c.l.b16 %v5092
      %v5281 = vunpack.c.l.b16 %v5106
      %v5282 = vunpack.c.l.b16 %v5116
      %v5283 = vunpack.c.l.b16 %v5130
      %v5284 = vunpack.c.l.b16 %v5140
      %v5285 = vunpack.c.l.b16 %v5154
      %v5286 = vunpack.c.l.b16 %v5164
      %v5287 = vunpack.c.l.b16 %v5178
      %v5288 = vunpack.c.l.b16 %v5188
      %v5289 = vunpack.c.l.b16 %v5202
      %v5290 = vunpack.c.l.b16 %v5212
      %v5291 = vunpack.c.l.b16 %v5226
      %v5292 = vunpack.c.l.b16 %v5236
      %v5293 = vunpack.c.l.b16 %v5250
      %v5294 = vunpack.c.l.b16 %v5260
      %v5295 = vpack.c.b16 %v5264, %v5263
      %v5296 = vpack.c.b16 %v5266, %v5265
      %v5297 = vpack.c.b16 %v5268, %v5267
      %v5298 = vpack.c.b16 %v5270, %v5269
      %v5299 = vpack.c.b16 %v5272, %v5271
      %v5300 = vpack.c.b16 %v5274, %v5273
      %v5301 = vpack.c.b16 %v5276, %v5275
      %v5302 = vpack.c.b16 %v5278, %v5277
      %v5303 = vpack.c.b16 %v5280, %v5279
      %v5304 = vpack.c.b16 %v5282, %v5281
      %v5305 = vpack.c.b16 %v5284, %v5283
      %v5306 = vpack.c.b16 %v5286, %v5285
      %v5307 = vpack.c.b16 %v5288, %v5287
      %v5308 = vpack.c.b16 %v5290, %v5289
      %v5309 = vpack.c.b16 %v5292, %v5291
      %v5310 = vpack.c.b16 %v5294, %v5293
      %v5312 = vsel %vm1953, %v5295, 0
      %v5315 = vsel %vm1953, %v5296, 0
      %v5318 = vsel %vm1953, %v5297, 0
      %v5321 = vsel %vm1953, %v5298, 0
      %v5324 = vsel %vm1953, %v5299, 0
      %v5327 = vsel %vm1953, %v5300, 0
      %v5330 = vsel %vm1953, %v5301, 0
      %v5333 = vsel %vm1953, %v5302, 0
      %v5336 = vsel %vm1953, %v5303, 0
      %v5339 = vsel %vm1953, %v5304, 0
      %v5342 = vsel %vm1953, %v5305, 0
      %v5345 = vsel %vm1953, %v5306, 0
      %v5348 = vsel %vm1953, %v5307, 0
      %v5351 = vsel %vm1953, %v5308, 0
      %v5354 = vsel %vm1953, %v5309, 0
      %v5357 = vsel %vm1953, %v5310, 0
      %v5360 = vsel %vm2002, %v5262, 0
      %5362 = vmatprep.subr.bf16.mxu0 0
      %5363 = vmatpush1.bf16.msra.mxu0 %v5360
      %5364 = vmatprep.subr.bf16.mxu0 0
      %5365 = vmatpush1.bf16.msra.mxu0 0
      %5366 = vmatprep.subr.bf16.mxu0 0
      %5367 = vmatpush1.bf16.msra.mxu0 0
      %5368 = vmatprep.subr.bf16.mxu0 0
      %5369 = vmatpush1.bf16.msra.mxu0 0
      %5370 = vmatprep.subr.bf16.mxu0 0
      %5371 = vmatpush1.bf16.msra.mxu0 0
      %5372 = vmatprep.subr.bf16.mxu0 0
      %5373 = vmatpush1.bf16.msra.mxu0 0
      %5374 = vmatprep.subr.bf16.mxu0 0
      %5375 = vmatpush1.bf16.msra.mxu0 0
      %5376 = vmatprep.subr.bf16.mxu0 0
      %5377 = vmatpush1.bf16.msra.mxu0 0
      %5378 = vmatprep.subr.bf16.mxu0 0
      %5379 = vmatpush1.bf16.msra.mxu0 0
      %5380 = vmatprep.subr.bf16.mxu0 0
      %5381 = vmatpush1.bf16.msra.mxu0 0
      %5382 = vmatprep.subr.bf16.mxu0 0
      %5383 = vmatpush1.bf16.msra.mxu0 0
      %5384 = vmatprep.subr.bf16.mxu0 0
      %5385 = vmatpush1.bf16.msra.mxu0 0
      %5386 = vmatprep.subr.bf16.mxu0 0
      %5387 = vmatpush1.bf16.msra.mxu0 0
      %5388 = vmatprep.subr.bf16.mxu0 0
      %5389 = vmatpush1.bf16.msra.mxu0 0
      %5390 = vmatprep.subr.bf16.mxu0 0
      %5391 = vmatpush1.bf16.msra.mxu0 0
      %5392 = vmatprep.subr.bf16.mxu0 0
      %5393 = vmatpush1.bf16.msra.mxu0 0
      %5394 = vmatprep.mubr.bf16.mxu0 0
      %5395 = vmatmul.mubr.bf16.gmra.mrb[0].mxu0 %v5312
      %v5396 = vpop.f32.mrb[0].mxu0
      %v5397 = vadd.f32 0.0, %v5396
      %v5398 = vpop.f32.mrb[0].mxu0
      %v5399 = vpop.f32.mrb[0].mxu0
      %v5400 = vadd.f32 0.0, %v5399
      %v5401 = vpop.f32.mrb[0].mxu0
      %5402 = vmatprep.mubr.bf16.mxu0 0
      %5403 = vmatmul.mubr.bf16.gmra.mrb[0].mxu0 %v5315
      %v5404 = vpop.f32.mrb[0].mxu0
      %v5405 = vadd.f32 0.0, %v5404
      %v5406 = vpop.f32.mrb[0].mxu0
      %v5407 = vpop.f32.mrb[0].mxu0
      %v5408 = vadd.f32 0.0, %v5407
      %v5409 = vpop.f32.mrb[0].mxu0
      %5410 = vmatprep.mubr.bf16.mxu0 0
      %5411 = vmatmul.mubr.bf16.gmra.mrb[0].mxu0 %v5318
      %v5412 = vpop.f32.mrb[0].mxu0
      %v5413 = vadd.f32 0.0, %v5412
      %v5414 = vpop.f32.mrb[0].mxu0
      %v5415 = vpop.f32.mrb[0].mxu0
      %v5416 = vadd.f32 0.0, %v5415
      %v5417 = vpop.f32.mrb[0].mxu0
      %5418 = vmatprep.mubr.bf16.mxu0 0
      %5419 = vmatmul.mubr.bf16.gmra.mrb[0].mxu0 %v5321
      %v5420 = vpop.f32.mrb[0].mxu0
      %v5421 = vadd.f32 0.0, %v5420
      %v5422 = vpop.f32.mrb[0].mxu0
      %v5423 = vpop.f32.mrb[0].mxu0
      %v5424 = vadd.f32 0.0, %v5423
      %v5425 = vpop.f32.mrb[0].mxu0
      %5426 = vmatprep.mubr.bf16.mxu0 0
      %5427 = vmatmul.mubr.bf16.gmra.mrb[0].mxu0 %v5324
      %v5428 = vpop.f32.mrb[0].mxu0
      %v5429 = vadd.f32 0.0, %v5428
      %v5430 = vpop.f32.mrb[0].mxu0
      %v5431 = vpop.f32.mrb[0].mxu0
      %v5432 = vadd.f32 0.0, %v5431
      %v5433 = vpop.f32.mrb[0].mxu0
      %5434 = vmatprep.mubr.bf16.mxu0 0
      %5435 = vmatmul.mubr.bf16.gmra.mrb[0].mxu0 %v5327
      %v5436 = vpop.f32.mrb[0].mxu0
      %v5437 = vadd.f32 0.0, %v5436
      %v5438 = vpop.f32.mrb[0].mxu0
      %v5439 = vpop.f32.mrb[0].mxu0
      %v5440 = vadd.f32 0.0, %v5439
      %v5441 = vpop.f32.mrb[0].mxu0
      %5442 = vmatprep.mubr.bf16.mxu0 0
      %5443 = vmatmul.mubr.bf16.gmra.mrb[0].mxu0 %v5330
      %v5444 = vpop.f32.mrb[0].mxu0
      %v5445 = vadd.f32 0.0, %v5444
      %v5446 = vpop.f32.mrb[0].mxu0
      %v5447 = vpop.f32.mrb[0].mxu0
      %v5448 = vadd.f32 0.0, %v5447
      %v5449 = vpop.f32.mrb[0].mxu0
      %5450 = vmatprep.mubr.bf16.mxu0 0
      %5451 = vmatmul.mubr.bf16.gmra.mrb[0].mxu0 %v5333
      %v5452 = vpop.f32.mrb[0].mxu0
      %v5453 = vadd.f32 0.0, %v5452
      %v5454 = vpop.f32.mrb[0].mxu0
      %v5455 = vpop.f32.mrb[0].mxu0
      %v5456 = vadd.f32 0.0, %v5455
      %v5457 = vpop.f32.mrb[0].mxu0
      %5458 = vmatprep.mubr.bf16.mxu0 0
      %5459 = vmatmul.mubr.bf16.gmra.mrb[0].mxu0 %v5336
      %v5460 = vpop.f32.mrb[0].mxu0
      %v5461 = vadd.f32 0.0, %v5460
      %v5462 = vpop.f32.mrb[0].mxu0
      %v5463 = vpop.f32.mrb[0].mxu0
      %v5464 = vadd.f32 0.0, %v5463
      %v5465 = vpop.f32.mrb[0].mxu0
      %5466 = vmatprep.mubr.bf16.mxu0 0
      %5467 = vmatmul.mubr.bf16.gmra.mrb[0].mxu0 %v5339
      %v5468 = vpop.f32.mrb[0].mxu0
      %v5469 = vadd.f32 0.0, %v5468
      %v5470 = vpop.f32.mrb[0].mxu0
      %v5471 = vpop.f32.mrb[0].mxu0
      %v5472 = vadd.f32 0.0, %v5471
      %v5473 = vpop.f32.mrb[0].mxu0
      %5474 = vmatprep.mubr.bf16.mxu0 0
      %5475 = vmatmul.mubr.bf16.gmra.mrb[0].mxu0 %v5342
      %v5476 = vpop.f32.mrb[0].mxu0
      %v5477 = vadd.f32 0.0, %v5476
      %v5478 = vpop.f32.mrb[0].mxu0
      %v5479 = vpop.f32.mrb[0].mxu0
      %v5480 = vadd.f32 0.0, %v5479
      %v5481 = vpop.f32.mrb[0].mxu0
      %5482 = vmatprep.mubr.bf16.mxu0 0
      %5483 = vmatmul.mubr.bf16.gmra.mrb[0].mxu0 %v5345
      %v5484 = vpop.f32.mrb[0].mxu0
      %v5485 = vadd.f32 0.0, %v5484
      %v5486 = vpop.f32.mrb[0].mxu0
      %v5487 = vpop.f32.mrb[0].mxu0
      %v5488 = vadd.f32 0.0, %v5487
      %v5489 = vpop.f32.mrb[0].mxu0
      %5490 = vmatprep.mubr.bf16.mxu0 0
      %5491 = vmatmul.mubr.bf16.gmra.mrb[0].mxu0 %v5348
      %v5492 = vpop.f32.mrb[0].mxu0
      %v5493 = vadd.f32 0.0, %v5492
      %v5494 = vpop.f32.mrb[0].mxu0
      %v5495 = vpop.f32.mrb[0].mxu0
      %v5496 = vadd.f32 0.0, %v5495
      %v5497 = vpop.f32.mrb[0].mxu0
      %5498 = vmatprep.mubr.bf16.mxu0 0
      %5499 = vmatmul.mubr.bf16.gmra.mrb[0].mxu0 %v5351
      %v5500 = vpop.f32.mrb[0].mxu0
      %v5501 = vadd.f32 0.0, %v5500
      %v5502 = vpop.f32.mrb[0].mxu0
      %v5503 = vpop.f32.mrb[0].mxu0
      %v5504 = vadd.f32 0.0, %v5503
      %v5505 = vpop.f32.mrb[0].mxu0
      %5506 = vmatprep.mubr.bf16.mxu0 0
      %5507 = vmatmul.mubr.bf16.gmra.mrb[0].mxu0 %v5354
      %v5508 = vpop.f32.mrb[0].mxu0
      %v5509 = vadd.f32 0.0, %v5508
      %v5510 = vpop.f32.mrb[0].mxu0
      %v5511 = vpop.f32.mrb[0].mxu0
      %v5512 = vadd.f32 0.0, %v5511
      %v5513 = vpop.f32.mrb[0].mxu0
      %5514 = vmatprep.mubr.bf16.mxu0 0
      %5515 = vmatmul.mubr.bf16.gmra.mrb[0].mxu0 %v5357
      %v5516 = vpop.f32.mrb[0].mxu0
      %v5517 = vadd.f32 0.0, %v5516
      %v5518 = vpop.f32.mrb[0].mxu0
      %v5519 = vpop.f32.mrb[0].mxu0
      %v5520 = vadd.f32 0.0, %v5519
      %v5521 = vpop.f32.mrb[0].mxu0
      %5522 = vdwg.mxu0
      %v5523 = vadd.f32 %v4797, %v5397
      %v5524 = vadd.f32 %v4798, %v5400
      %v5525 = vadd.f32 %v4799, %v5405
      %v5526 = vadd.f32 %v4800, %v5408
      %v5527 = vadd.f32 %v4801, %v5413
      %v5528 = vadd.f32 %v4802, %v5416
      %v5529 = vadd.f32 %v4803, %v5421
      %v5530 = vadd.f32 %v4804, %v5424
      %v5531 = vadd.f32 %v4805, %v5429
      %v5532 = vadd.f32 %v4806, %v5432
      %v5533 = vadd.f32 %v4807, %v5437
      %v5534 = vadd.f32 %v4808, %v5440
      %v5535 = vadd.f32 %v4809, %v5445
      %v5536 = vadd.f32 %v4810, %v5448
      %v5537 = vadd.f32 %v4811, %v5453
      %v5538 = vadd.f32 %v4812, %v5456
      %v5539 = vadd.f32 %v4813, %v5461
      %v5540 = vadd.f32 %v4814, %v5464
      %v5541 = vadd.f32 %v4815, %v5469
      %v5542 = vadd.f32 %v4816, %v5472
      %v5543 = vadd.f32 %v4817, %v5477
      %v5544 = vadd.f32 %v4818, %v5480
      %v5545 = vadd.f32 %v4819, %v5485
      %v5546 = vadd.f32 %v4820, %v5488
      %v5547 = vadd.f32 %v4821, %v5493
      %v5548 = vadd.f32 %v4822, %v5496
      %v5549 = vadd.f32 %v4823, %v5501
      %v5550 = vadd.f32 %v4824, %v5504
      %v5551 = vadd.f32 %v4825, %v5509
      %v5552 = vadd.f32 %v4826, %v5512
      %v5553 = vadd.f32 %v4827, %v5517
      %v5554 = vadd.f32 %v4828, %v5520
      %v5555 = vld [vmem:[%s4470] sm:$0xe]
      %v5556 = vld [vmem:[%s4470 + $0xc] sm:$0xe]
      %v5557 = vld [vmem:[%s4470 + $0x18] sm:$0xe]
      %v5558 = vld [vmem:[%s4470 + $0x24] sm:$0xe]
      %v5559 = vld [vmem:[%s4470 + $0x30] sm:$0xe]
      %v5560 = vld [vmem:[%s4470 + $0x3c] sm:$0xe]
      %v5561 = vld [vmem:[%s4470 + $0x48] sm:$0xe]
      %v5562 = vld [vmem:[%s4470 + $0x54] sm:$0xe]
      %v5563 = vld [vmem:[%s4470 + $0x60] sm:$0xe]
      %v5564 = vld [vmem:[%s4470 + $0x6c] sm:$0xe]
      %v5565 = vld [vmem:[%s4470 + $0x78] sm:$0xe]
      %v5566 = vld [vmem:[%s4470 + $0x84] sm:$0xe]
      %v5567 = vld [vmem:[%s4470 + $0x90] sm:$0xe]
      %v5568 = vld [vmem:[%s4470 + $0x9c] sm:$0xe]
      %v5569 = vld [vmem:[%s4470 + $0xa8] sm:$0xe]
      %v5570 = vld [vmem:[%s4470 + $0xb4] sm:$0xe]
      %v5619 = vrot.slane %v5555, 5
      %v5620 = vrot.slane %v5619, 4
      %v5621 = vrot.slane %v4830, 5
      %v5622 = vsel %vm2509, %v5620, %v5621
      %v5623 = vrot.slane %v5621, 4
      %v5624 = vrot.slane %v4831, 5
      %v5625 = vsel %vm2509, %v5623, %v5624
      %v5626 = vrot.slane %v5556, 5
      %v5627 = vrot.slane %v5626, 4
      %v5628 = vrot.slane %v4833, 5
      %v5629 = vsel %vm2509, %v5627, %v5628
      %v5630 = vrot.slane %v5628, 4
      %v5631 = vrot.slane %v4834, 5
      %v5632 = vsel %vm2509, %v5630, %v5631
      %v5633 = vrot.slane %v5557, 5
      %v5634 = vrot.slane %v5633, 4
      %v5635 = vrot.slane %v4836, 5
      %v5636 = vsel %vm2509, %v5634, %v5635
      %v5637 = vrot.slane %v5635, 4
      %v5638 = vrot.slane %v4837, 5
      %v5639 = vsel %vm2509, %v5637, %v5638
      %v5640 = vrot.slane %v5558, 5
      %v5641 = vrot.slane %v5640, 4
      %v5642 = vrot.slane %v4839, 5
      %v5643 = vsel %vm2509, %v5641, %v5642
      %v5644 = vrot.slane %v5642, 4
      %v5645 = vrot.slane %v4840, 5
      %v5646 = vsel %vm2509, %v5644, %v5645
      %v5647 = vrot.slane %v5559, 5
      %v5648 = vrot.slane %v5647, 4
      %v5649 = vrot.slane %v4842, 5
      %v5650 = vsel %vm2509, %v5648, %v5649
      %v5651 = vrot.slane %v5649, 4
      %v5652 = vrot.slane %v4843, 5
      %v5653 = vsel %vm2509, %v5651, %v5652
      %v5654 = vrot.slane %v5560, 5
      %v5655 = vrot.slane %v5654, 4
      %v5656 = vrot.slane %v4845, 5
      %v5657 = vsel %vm2509, %v5655, %v5656
      %v5658 = vrot.slane %v5656, 4
      %v5659 = vrot.slane %v4846, 5
      %v5660 = vsel %vm2509, %v5658, %v5659
      %v5661 = vrot.slane %v5561, 5
      %v5662 = vrot.slane %v5661, 4
      %v5663 = vrot.slane %v4848, 5
      %v5664 = vsel %vm2509, %v5662, %v5663
      %v5665 = vrot.slane %v5663, 4
      %v5666 = vrot.slane %v4849, 5
      %v5667 = vsel %vm2509, %v5665, %v5666
      %v5668 = vrot.slane %v5562, 5
      %v5669 = vrot.slane %v5668, 4
      %v5670 = vrot.slane %v4851, 5
      %v5671 = vsel %vm2509, %v5669, %v5670
      %v5672 = vrot.slane %v5670, 4
      %v5673 = vrot.slane %v4852, 5
      %v5674 = vsel %vm2509, %v5672, %v5673
      %v5675 = vrot.slane %v5563, 5
      %v5676 = vrot.slane %v5675, 4
      %v5677 = vrot.slane %v4854, 5
      %v5678 = vsel %vm2509, %v5676, %v5677
      %v5679 = vrot.slane %v5677, 4
      %v5680 = vrot.slane %v4855, 5
      %v5681 = vsel %vm2509, %v5679, %v5680
      %v5682 = vrot.slane %v5564, 5
      %v5683 = vrot.slane %v5682, 4
      %v5684 = vrot.slane %v4857, 5
      %v5685 = vsel %vm2509, %v5683, %v5684
      %v5686 = vrot.slane %v5684, 4
      %v5687 = vrot.slane %v4858, 5
      %v5688 = vsel %vm2509, %v5686, %v5687
      %v5689 = vrot.slane %v5565, 5
      %v5690 = vrot.slane %v5689, 4
      %v5691 = vrot.slane %v4860, 5
      %v5692 = vsel %vm2509, %v5690, %v5691
      %v5693 = vrot.slane %v5691, 4
      %v5694 = vrot.slane %v4861, 5
      %v5695 = vsel %vm2509, %v5693, %v5694
      %v5696 = vrot.slane %v5566, 5
      %v5697 = vrot.slane %v5696, 4
      %v5698 = vrot.slane %v4863, 5
      %v5699 = vsel %vm2509, %v5697, %v5698
      %v5700 = vrot.slane %v5698, 4
      %v5701 = vrot.slane %v4864, 5
      %v5702 = vsel %vm2509, %v5700, %v5701
      %v5703 = vrot.slane %v5567, 5
      %v5704 = vrot.slane %v5703, 4
      %v5705 = vrot.slane %v4866, 5
      %v5706 = vsel %vm2509, %v5704, %v5705
      %v5707 = vrot.slane %v5705, 4
      %v5708 = vrot.slane %v4867, 5
      %v5709 = vsel %vm2509, %v5707, %v5708
      %v5710 = vrot.slane %v5568, 5
      %v5711 = vrot.slane %v5710, 4
      %v5712 = vrot.slane %v4869, 5
      %v5713 = vsel %vm2509, %v5711, %v5712
      %v5714 = vrot.slane %v5712, 4
      %v5715 = vrot.slane %v4870, 5
      %v5716 = vsel %vm2509, %v5714, %v5715
      %v5717 = vrot.slane %v5569, 5
      %v5718 = vrot.slane %v5717, 4
      %v5719 = vrot.slane %v4872, 5
      %v5720 = vsel %vm2509, %v5718, %v5719
      %v5721 = vrot.slane %v5719, 4
      %v5722 = vrot.slane %v4873, 5
      %v5723 = vsel %vm2509, %v5721, %v5722
      %v5724 = vrot.slane %v5570, 5
      %v5725 = vrot.slane %v5724, 4
      %v5726 = vrot.slane %v4875, 5
      %v5727 = vsel %vm2509, %v5725, %v5726
      %v5728 = vrot.slane %v5726, 4
      %v5729 = vrot.slane %v4876, 5
      %v5730 = vsel %vm2509, %v5728, %v5729
      %s5731 = scalar_lea.vmem %s2, 32
      %v5732 = vld [vmem:[%s5731] sm:$0xf]
      %v5733 = vunpack.c.l.b16 %v5622
      %v5734 = vunpack.c.l.b16 %v5625
      %v5735 = vunpack.c.l.b16 %v5629
      %v5736 = vunpack.c.l.b16 %v5632
      %v5737 = vunpack.c.l.b16 %v5636
      %v5738 = vunpack.c.l.b16 %v5639
      %v5739 = vunpack.c.l.b16 %v5643
      %v5740 = vunpack.c.l.b16 %v5646
      %v5741 = vunpack.c.l.b16 %v5650
      %v5742 = vunpack.c.l.b16 %v5653
      %v5743 = vunpack.c.l.b16 %v5657
      %v5744 = vunpack.c.l.b16 %v5660
      %v5745 = vunpack.c.l.b16 %v5664
      %v5746 = vunpack.c.l.b16 %v5667
      %v5747 = vunpack.c.l.b16 %v5671
      %v5748 = vunpack.c.l.b16 %v5674
      %v5749 = vunpack.c.l.b16 %v5678
      %v5750 = vunpack.c.l.b16 %v5681
      %v5751 = vunpack.c.l.b16 %v5685
      %v5752 = vunpack.c.l.b16 %v5688
      %v5753 = vunpack.c.l.b16 %v5692
      %v5754 = vunpack.c.l.b16 %v5695
      %v5755 = vunpack.c.l.b16 %v5699
      %v5756 = vunpack.c.l.b16 %v5702
      %v5757 = vunpack.c.l.b16 %v5706
      %v5758 = vunpack.c.l.b16 %v5709
      %v5759 = vunpack.c.l.b16 %v5713
      %v5760 = vunpack.c.l.b16 %v5716
      %v5761 = vunpack.c.l.b16 %v5720
      %v5762 = vunpack.c.l.b16 %v5723
      %v5763 = vunpack.c.l.b16 %v5727
      %v5764 = vunpack.c.l.b16 %v5730
      %v5765 = vpack.c.b16 %v5734, %v5733
      %v5766 = vpack.c.b16 %v5736, %v5735
      %v5767 = vpack.c.b16 %v5738, %v5737
      %v5768 = vpack.c.b16 %v5740, %v5739
      %v5769 = vpack.c.b16 %v5742, %v5741
      %v5770 = vpack.c.b16 %v5744, %v5743
      %v5771 = vpack.c.b16 %v5746, %v5745
      %v5772 = vpack.c.b16 %v5748, %v5747
      %v5773 = vpack.c.b16 %v5750, %v5749
      %v5774 = vpack.c.b16 %v5752, %v5751
      %v5775 = vpack.c.b16 %v5754, %v5753
      %v5776 = vpack.c.b16 %v5756, %v5755
      %v5777 = vpack.c.b16 %v5758, %v5757
      %v5778 = vpack.c.b16 %v5760, %v5759
      %v5779 = vpack.c.b16 %v5762, %v5761
      %v5780 = vpack.c.b16 %v5764, %v5763
      %v5782 = vsel %vm1953, %v5765, 0
      %v5785 = vsel %vm1953, %v5766, 0
      %v5788 = vsel %vm1953, %v5767, 0
      %v5791 = vsel %vm1953, %v5768, 0
      %v5794 = vsel %vm1953, %v5769, 0
      %v5797 = vsel %vm1953, %v5770, 0
      %v5800 = vsel %vm1953, %v5771, 0
      %v5803 = vsel %vm1953, %v5772, 0
      %v5806 = vsel %vm1953, %v5773, 0
      %v5809 = vsel %vm1953, %v5774, 0
      %v5812 = vsel %vm1953, %v5775, 0
      %v5815 = vsel %vm1953, %v5776, 0
      %v5818 = vsel %vm1953, %v5777, 0
      %v5821 = vsel %vm1953, %v5778, 0
      %v5824 = vsel %vm1953, %v5779, 0
      %v5827 = vsel %vm1953, %v5780, 0
      %v5830 = vsel %vm2002, %v5732, 0
      %5832 = vmatprep.subr.bf16.mxu0 0
      %5833 = vmatpush1.bf16.msra.mxu0 %v5830
      %5834 = vmatprep.subr.bf16.mxu0 0
      %5835 = vmatpush1.bf16.msra.mxu0 0
      %5836 = vmatprep.subr.bf16.mxu0 0
      %5837 = vmatpush1.bf16.msra.mxu0 0
      %5838 = vmatprep.subr.bf16.mxu0 0
      %5839 = vmatpush1.bf16.msra.mxu0 0
      %5840 = vmatprep.subr.bf16.mxu0 0
      %5841 = vmatpush1.bf16.msra.mxu0 0
      %5842 = vmatprep.subr.bf16.mxu0 0
      %5843 = vmatpush1.bf16.msra.mxu0 0
      %5844 = vmatprep.subr.bf16.mxu0 0
      %5845 = vmatpush1.bf16.msra.mxu0 0
      %5846 = vmatprep.subr.bf16.mxu0 0
      %5847 = vmatpush1.bf16.msra.mxu0 0
      %5848 = vmatprep.subr.bf16.mxu0 0
      %5849 = vmatpush1.bf16.msra.mxu0 0
      %5850 = vmatprep.subr.bf16.mxu0 0
      %5851 = vmatpush1.bf16.msra.mxu0 0
      %5852 = vmatprep.subr.bf16.mxu0 0
      %5853 = vmatpush1.bf16.msra.mxu0 0
      %5854 = vmatprep.subr.bf16.mxu0 0
      %5855 = vmatpush1.bf16.msra.mxu0 0
      %5856 = vmatprep.subr.bf16.mxu0 0
      %5857 = vmatpush1.bf16.msra.mxu0 0
      %5858 = vmatprep.subr.bf16.mxu0 0
      %5859 = vmatpush1.bf16.msra.mxu0 0
      %5860 = vmatprep.subr.bf16.mxu0 0
      %5861 = vmatpush1.bf16.msra.mxu0 0
      %5862 = vmatprep.subr.bf16.mxu0 0
      %5863 = vmatpush1.bf16.msra.mxu0 0
      %5864 = vmatprep.mubr.bf16.mxu0 0
      %5865 = vmatmul.mubr.bf16.gmra.mrb[0].mxu0 %v5782
      %v5866 = vpop.f32.mrb[0].mxu0
      %v5867 = vadd.f32 0.0, %v5866
      %v5868 = vpop.f32.mrb[0].mxu0
      %v5869 = vpop.f32.mrb[0].mxu0
      %v5870 = vadd.f32 0.0, %v5869
      %v5871 = vpop.f32.mrb[0].mxu0
      %5872 = vmatprep.mubr.bf16.mxu0 0
      %5873 = vmatmul.mubr.bf16.gmra.mrb[0].mxu0 %v5785
      %v5874 = vpop.f32.mrb[0].mxu0
      %v5875 = vadd.f32 0.0, %v5874
      %v5876 = vpop.f32.mrb[0].mxu0
      %v5877 = vpop.f32.mrb[0].mxu0
      %v5878 = vadd.f32 0.0, %v5877
      %v5879 = vpop.f32.mrb[0].mxu0
      %5880 = vmatprep.mubr.bf16.mxu0 0
      %5881 = vmatmul.mubr.bf16.gmra.mrb[0].mxu0 %v5788
      %v5882 = vpop.f32.mrb[0].mxu0
      %v5883 = vadd.f32 0.0, %v5882
      %v5884 = vpop.f32.mrb[0].mxu0
      %v5885 = vpop.f32.mrb[0].mxu0
      %v5886 = vadd.f32 0.0, %v5885
      %v5887 = vpop.f32.mrb[0].mxu0
      %5888 = vmatprep.mubr.bf16.mxu0 0
      %5889 = vmatmul.mubr.bf16.gmra.mrb[0].mxu0 %v5791
      %v5890 = vpop.f32.mrb[0].mxu0
      %v5891 = vadd.f32 0.0, %v5890
      %v5892 = vpop.f32.mrb[0].mxu0
      %v5893 = vpop.f32.mrb[0].mxu0
      %v5894 = vadd.f32 0.0, %v5893
      %v5895 = vpop.f32.mrb[0].mxu0
      %5896 = vmatprep.mubr.bf16.mxu0 0
      %5897 = vmatmul.mubr.bf16.gmra.mrb[0].mxu0 %v5794
      %v5898 = vpop.f32.mrb[0].mxu0
      %v5899 = vadd.f32 0.0, %v5898
      %v5900 = vpop.f32.mrb[0].mxu0
      %v5901 = vpop.f32.mrb[0].mxu0
      %v5902 = vadd.f32 0.0, %v5901
      %v5903 = vpop.f32.mrb[0].mxu0
      %5904 = vmatprep.mubr.bf16.mxu0 0
      %5905 = vmatmul.mubr.bf16.gmra.mrb[0].mxu0 %v5797
      %v5906 = vpop.f32.mrb[0].mxu0
      %v5907 = vadd.f32 0.0, %v5906
      %v5908 = vpop.f32.mrb[0].mxu0
      %v5909 = vpop.f32.mrb[0].mxu0
      %v5910 = vadd.f32 0.0, %v5909
      %v5911 = vpop.f32.mrb[0].mxu0
      %5912 = vmatprep.mubr.bf16.mxu0 0
      %5913 = vmatmul.mubr.bf16.gmra.mrb[0].mxu0 %v5800
      %v5914 = vpop.f32.mrb[0].mxu0
      %v5915 = vadd.f32 0.0, %v5914
      %v5916 = vpop.f32.mrb[0].mxu0
      %v5917 = vpop.f32.mrb[0].mxu0
      %v5918 = vadd.f32 0.0, %v5917
      %v5919 = vpop.f32.mrb[0].mxu0
      %5920 = vmatprep.mubr.bf16.mxu0 0
      %5921 = vmatmul.mubr.bf16.gmra.mrb[0].mxu0 %v5803
      %v5922 = vpop.f32.mrb[0].mxu0
      %v5923 = vadd.f32 0.0, %v5922
      %v5924 = vpop.f32.mrb[0].mxu0
      %v5925 = vpop.f32.mrb[0].mxu0
      %v5926 = vadd.f32 0.0, %v5925
      %v5927 = vpop.f32.mrb[0].mxu0
      %5928 = vmatprep.mubr.bf16.mxu0 0
      %5929 = vmatmul.mubr.bf16.gmra.mrb[0].mxu0 %v5806
      %v5930 = vpop.f32.mrb[0].mxu0
      %v5931 = vadd.f32 0.0, %v5930
      %v5932 = vpop.f32.mrb[0].mxu0
      %v5933 = vpop.f32.mrb[0].mxu0
      %v5934 = vadd.f32 0.0, %v5933
      %v5935 = vpop.f32.mrb[0].mxu0
      %5936 = vmatprep.mubr.bf16.mxu0 0
      %5937 = vmatmul.mubr.bf16.gmra.mrb[0].mxu0 %v5809
      %v5938 = vpop.f32.mrb[0].mxu0
      %v5939 = vadd.f32 0.0, %v5938
      %v5940 = vpop.f32.mrb[0].mxu0
      %v5941 = vpop.f32.mrb[0].mxu0
      %v5942 = vadd.f32 0.0, %v5941
      %v5943 = vpop.f32.mrb[0].mxu0
      %5944 = vmatprep.mubr.bf16.mxu0 0
      %5945 = vmatmul.mubr.bf16.gmra.mrb[0].mxu0 %v5812
      %v5946 = vpop.f32.mrb[0].mxu0
      %v5947 = vadd.f32 0.0, %v5946
      %v5948 = vpop.f32.mrb[0].mxu0
      %v5949 = vpop.f32.mrb[0].mxu0
      %v5950 = vadd.f32 0.0, %v5949
      %v5951 = vpop.f32.mrb[0].mxu0
      %5952 = vmatprep.mubr.bf16.mxu0 0
      %5953 = vmatmul.mubr.bf16.gmra.mrb[0].mxu0 %v5815
      %v5954 = vpop.f32.mrb[0].mxu0
      %v5955 = vadd.f32 0.0, %v5954
      %v5956 = vpop.f32.mrb[0].mxu0
      %v5957 = vpop.f32.mrb[0].mxu0
      %v5958 = vadd.f32 0.0, %v5957
      %v5959 = vpop.f32.mrb[0].mxu0
      %5960 = vmatprep.mubr.bf16.mxu0 0
      %5961 = vmatmul.mubr.bf16.gmra.mrb[0].mxu0 %v5818
      %v5962 = vpop.f32.mrb[0].mxu0
      %v5963 = vadd.f32 0.0, %v5962
      %v5964 = vpop.f32.mrb[0].mxu0
      %v5965 = vpop.f32.mrb[0].mxu0
      %v5966 = vadd.f32 0.0, %v5965
      %v5967 = vpop.f32.mrb[0].mxu0
      %5968 = vmatprep.mubr.bf16.mxu0 0
      %5969 = vmatmul.mubr.bf16.gmra.mrb[0].mxu0 %v5821
      %v5970 = vpop.f32.mrb[0].mxu0
      %v5971 = vadd.f32 0.0, %v5970
      %v5972 = vpop.f32.mrb[0].mxu0
      %v5973 = vpop.f32.mrb[0].mxu0
      %v5974 = vadd.f32 0.0, %v5973
      %v5975 = vpop.f32.mrb[0].mxu0
      %5976 = vmatprep.mubr.bf16.mxu0 0
      %5977 = vmatmul.mubr.bf16.gmra.mrb[0].mxu0 %v5824
      %v5978 = vpop.f32.mrb[0].mxu0
      %v5979 = vadd.f32 0.0, %v5978
      %v5980 = vpop.f32.mrb[0].mxu0
      %v5981 = vpop.f32.mrb[0].mxu0
      %v5982 = vadd.f32 0.0, %v5981
      %v5983 = vpop.f32.mrb[0].mxu0
      %5984 = vmatprep.mubr.bf16.mxu0 0
      %5985 = vmatmul.mubr.bf16.gmra.mrb[0].mxu0 %v5827
      %v5986 = vpop.f32.mrb[0].mxu0
      %v5987 = vadd.f32 0.0, %v5986
      %v5988 = vpop.f32.mrb[0].mxu0
      %v5989 = vpop.f32.mrb[0].mxu0
      %v5990 = vadd.f32 0.0, %v5989
      %v5991 = vpop.f32.mrb[0].mxu0
      %5992 = vdwg.mxu0
      %v5993 = vadd.f32 %v5523, %v5867
      %v5994 = vadd.f32 %v5524, %v5870
      %v5995 = vadd.f32 %v5525, %v5875
      %v5996 = vadd.f32 %v5526, %v5878
      %v5997 = vadd.f32 %v5527, %v5883
      %v5998 = vadd.f32 %v5528, %v5886
      %v5999 = vadd.f32 %v5529, %v5891
      %v6000 = vadd.f32 %v5530, %v5894
      %v6001 = vadd.f32 %v5531, %v5899
      %v6002 = vadd.f32 %v5532, %v5902
      %v6003 = vadd.f32 %v5533, %v5907
      %v6004 = vadd.f32 %v5534, %v5910
      %v6005 = vadd.f32 %v5535, %v5915
      %v6006 = vadd.f32 %v5536, %v5918
      %v6007 = vadd.f32 %v5537, %v5923
      %v6008 = vadd.f32 %v5538, %v5926
      %v6009 = vadd.f32 %v5539, %v5931
      %v6010 = vadd.f32 %v5540, %v5934
      %v6011 = vadd.f32 %v5541, %v5939
      %v6012 = vadd.f32 %v5542, %v5942
      %v6013 = vadd.f32 %v5543, %v5947
      %v6014 = vadd.f32 %v5544, %v5950
      %v6015 = vadd.f32 %v5545, %v5955
      %v6016 = vadd.f32 %v5546, %v5958
      %v6017 = vadd.f32 %v5547, %v5963
      %v6018 = vadd.f32 %v5548, %v5966
      %v6019 = vadd.f32 %v5549, %v5971
      %v6020 = vadd.f32 %v5550, %v5974
      %v6021 = vadd.f32 %v5551, %v5979
      %v6022 = vadd.f32 %v5552, %v5982
      %v6023 = vadd.f32 %v5553, %v5987
      %v6024 = vadd.f32 %v5554, %v5990
      %v6025 = vld [vmem:[%s3] sm:$0x1]
      %v6027 = vlaneseq
      %v6028 = vshrl.u32 %v6027, 7
      %v6029 = vsub.s32 0, %v6028
      %v6030 = vrot.slane %v6025, %v6029
      %v6032 = vadd.f32 %v5993, %v6030
      %v6033 = vadd.f32 %v5994, %v6030
      %v6034 = vadd.f32 %v5995, %v6030
      %v6035 = vadd.f32 %v5996, %v6030
      %v6036 = vadd.f32 %v5997, %v6030
      %v6037 = vadd.f32 %v5998, %v6030
      %v6038 = vadd.f32 %v5999, %v6030
      %v6039 = vadd.f32 %v6000, %v6030
      %v6040 = vadd.f32 %v6001, %v6030
      %v6041 = vadd.f32 %v6002, %v6030
      %v6042 = vadd.f32 %v6003, %v6030
      %v6043 = vadd.f32 %v6004, %v6030
      %v6044 = vadd.f32 %v6005, %v6030
      %v6045 = vadd.f32 %v6006, %v6030
      %v6046 = vadd.f32 %v6007, %v6030
      %v6047 = vadd.f32 %v6008, %v6030
      %v6048 = vadd.f32 %v6009, %v6030
      %v6049 = vadd.f32 %v6010, %v6030
      %v6050 = vadd.f32 %v6011, %v6030
      %v6051 = vadd.f32 %v6012, %v6030
      %v6052 = vadd.f32 %v6013, %v6030
      %v6053 = vadd.f32 %v6014, %v6030
      %v6054 = vadd.f32 %v6015, %v6030
      %v6055 = vadd.f32 %v6016, %v6030
      %v6056 = vadd.f32 %v6017, %v6030
      %v6057 = vadd.f32 %v6018, %v6030
      %v6058 = vadd.f32 %v6019, %v6030
      %v6059 = vadd.f32 %v6020, %v6030
      %v6060 = vadd.f32 %v6021, %v6030
      %v6061 = vadd.f32 %v6022, %v6030
      %v6062 = vadd.f32 %v6023, %v6030
      %v6063 = vadd.f32 %v6024, %v6030
      %v6064 = vmax.f32 %v6032, 0.0
      %v6065 = vmax.f32 %v6033, 0.0
      %v6066 = vmax.f32 %v6034, 0.0
      %v6067 = vmax.f32 %v6035, 0.0
      %v6068 = vmax.f32 %v6036, 0.0
      %v6069 = vmax.f32 %v6037, 0.0
      %v6070 = vmax.f32 %v6038, 0.0
      %v6071 = vmax.f32 %v6039, 0.0
      %v6072 = vmax.f32 %v6040, 0.0
      %v6073 = vmax.f32 %v6041, 0.0
      %v6074 = vmax.f32 %v6042, 0.0
      %v6075 = vmax.f32 %v6043, 0.0
      %v6076 = vmax.f32 %v6044, 0.0
      %v6077 = vmax.f32 %v6045, 0.0
      %v6078 = vmax.f32 %v6046, 0.0
      %v6079 = vmax.f32 %v6047, 0.0
      %v6080 = vmax.f32 %v6048, 0.0
      %v6081 = vmax.f32 %v6049, 0.0
      %v6082 = vmax.f32 %v6050, 0.0
      %v6083 = vmax.f32 %v6051, 0.0
      %v6084 = vmax.f32 %v6052, 0.0
      %v6085 = vmax.f32 %v6053, 0.0
      %v6086 = vmax.f32 %v6054, 0.0
      %v6087 = vmax.f32 %v6055, 0.0
      %v6088 = vmax.f32 %v6056, 0.0
      %v6089 = vmax.f32 %v6057, 0.0
      %v6090 = vmax.f32 %v6058, 0.0
      %v6091 = vmax.f32 %v6059, 0.0
      %v6092 = vmax.f32 %v6060, 0.0
      %v6093 = vmax.f32 %v6061, 0.0
      %v6094 = vmax.f32 %v6062, 0.0
      %v6095 = vmax.f32 %v6063, 0.0
      %v6096 = vpack.c.bf16 %v6065, %v6064
      %v6097 = vpack.c.bf16 %v6067, %v6066
      %v6098 = vpack.c.bf16 %v6069, %v6068
      %v6099 = vpack.c.bf16 %v6071, %v6070
      %v6100 = vpack.c.bf16 %v6073, %v6072
      %v6101 = vpack.c.bf16 %v6075, %v6074
      %v6102 = vpack.c.bf16 %v6077, %v6076
      %v6103 = vpack.c.bf16 %v6079, %v6078
      %v6104 = vpack.c.bf16 %v6081, %v6080
      %v6105 = vpack.c.bf16 %v6083, %v6082
      %v6106 = vpack.c.bf16 %v6085, %v6084
      %v6107 = vpack.c.bf16 %v6087, %v6086
      %v6108 = vpack.c.bf16 %v6089, %v6088
      %v6109 = vpack.c.bf16 %v6091, %v6090
      %v6110 = vpack.c.bf16 %v6093, %v6092
      %v6111 = vpack.c.bf16 %v6095, %v6094
      %v6128 = vunpack.c.l.b16 %v6096
      %v6129 = vunpack.c.h.b16 %v6096
      %v6130 = vunpack.c.l.b16 %v6097
      %v6131 = vunpack.c.h.b16 %v6097
      %v6132 = vunpack.c.l.b16 %v6098
      %v6133 = vunpack.c.h.b16 %v6098
      %v6134 = vunpack.c.l.b16 %v6099
      %v6135 = vunpack.c.h.b16 %v6099
      %v6136 = vunpack.c.l.b16 %v6100
      %v6137 = vunpack.c.h.b16 %v6100
      %v6138 = vunpack.c.l.b16 %v6101
      %v6139 = vunpack.c.h.b16 %v6101
      %v6140 = vunpack.c.l.b16 %v6102
      %v6141 = vunpack.c.h.b16 %v6102
      %v6142 = vunpack.c.l.b16 %v6103
      %v6143 = vunpack.c.h.b16 %v6103
      %v6144 = vunpack.c.l.b16 %v6104
      %v6145 = vunpack.c.h.b16 %v6104
      %v6146 = vunpack.c.l.b16 %v6105
      %v6147 = vunpack.c.h.b16 %v6105
      %v6148 = vunpack.c.l.b16 %v6106
      %v6149 = vunpack.c.h.b16 %v6106
      %v6150 = vunpack.c.l.b16 %v6107
      %v6151 = vunpack.c.h.b16 %v6107
      %v6152 = vunpack.c.l.b16 %v6108
      %v6153 = vunpack.c.h.b16 %v6108
      %v6154 = vunpack.c.l.b16 %v6109
      %v6155 = vunpack.c.h.b16 %v6109
      %v6156 = vunpack.c.l.b16 %v6110
      %v6157 = vunpack.c.h.b16 %v6110
      %v6158 = vunpack.c.l.b16 %v6111
      %v6159 = vunpack.c.h.b16 %v6111
      %v6160 = vpack.c.b16 %v6128, %v6128
      %v6161 = vpack.c.b16 %v6129, %v6129
      %v6162 = vpack.c.b16 %v6130, %v6130
      %v6163 = vpack.c.b16 %v6131, %v6131
      %v6164 = vpack.c.b16 %v6132, %v6132
      %v6165 = vpack.c.b16 %v6133, %v6133
      %v6166 = vpack.c.b16 %v6134, %v6134
      %v6167 = vpack.c.b16 %v6135, %v6135
      %v6168 = vpack.c.b16 %v6136, %v6136
      %v6169 = vpack.c.b16 %v6137, %v6137
      %v6170 = vpack.c.b16 %v6138, %v6138
      %v6171 = vpack.c.b16 %v6139, %v6139
      %v6172 = vpack.c.b16 %v6140, %v6140
      %v6173 = vpack.c.b16 %v6141, %v6141
      %v6174 = vpack.c.b16 %v6142, %v6142
      %v6175 = vpack.c.b16 %v6143, %v6143
      %v6176 = vpack.c.b16 %v6144, %v6144
      %v6177 = vpack.c.b16 %v6145, %v6145
      %v6178 = vpack.c.b16 %v6146, %v6146
      %v6179 = vpack.c.b16 %v6147, %v6147
      %v6180 = vpack.c.b16 %v6148, %v6148
      %v6181 = vpack.c.b16 %v6149, %v6149
      %v6182 = vpack.c.b16 %v6150, %v6150
      %v6183 = vpack.c.b16 %v6151, %v6151
      %v6184 = vpack.c.b16 %v6152, %v6152
      %v6185 = vpack.c.b16 %v6153, %v6153
      %v6186 = vpack.c.b16 %v6154, %v6154
      %v6187 = vpack.c.b16 %v6155, %v6155
      %v6188 = vpack.c.b16 %v6156, %v6156
      %v6189 = vpack.c.b16 %v6157, %v6157
      %v6190 = vpack.c.b16 %v6158, %v6158
      %v6191 = vpack.c.b16 %v6159, %v6159
      %v6193 = vshrl.u32 %v6160, 16
      %v6195 = vrot.slane %v6193, 7
      %v6196 = vshll.u32 %v6160, 16
      %v6198 = vor.u32 %v6195, %v6196
      %v6199 = vrot.slane %v6195, 4
      %v6201 = vshrl.u32 %v6161, 16
      %v6203 = vrot.slane %v6201, 7
      %v6204 = vshll.u32 %v6161, 16
      %v6206 = vor.u32 %v6203, %v6204
      %v6207 = vsel %vm1031, %v6199, %v6206
      %v6208 = vrot.slane %v6203, 4
      %v6210 = vshrl.u32 %v6162, 16
      %v6212 = vrot.slane %v6210, 7
      %v6213 = vshll.u32 %v6162, 16
      %v6215 = vor.u32 %v6212, %v6213
      %v6216 = vrot.slane %v6212, 4
      %v6218 = vshrl.u32 %v6163, 16
      %v6220 = vrot.slane %v6218, 7
      %v6221 = vshll.u32 %v6163, 16
      %v6223 = vor.u32 %v6220, %v6221
      %v6224 = vsel %vm1031, %v6216, %v6223
      %v6225 = vrot.slane %v6220, 4
      %v6227 = vshrl.u32 %v6164, 16
      %v6229 = vrot.slane %v6227, 7
      %v6230 = vshll.u32 %v6164, 16
      %v6232 = vor.u32 %v6229, %v6230
      %v6233 = vrot.slane %v6229, 4
      %v6235 = vshrl.u32 %v6165, 16
      %v6237 = vrot.slane %v6235, 7
      %v6238 = vshll.u32 %v6165, 16
      %v6240 = vor.u32 %v6237, %v6238
      %v6241 = vsel %vm1031, %v6233, %v6240
      %v6242 = vrot.slane %v6237, 4
      %v6244 = vshrl.u32 %v6166, 16
      %v6246 = vrot.slane %v6244, 7
      %v6247 = vshll.u32 %v6166, 16
      %v6249 = vor.u32 %v6246, %v6247
      %v6250 = vrot.slane %v6246, 4
      %v6252 = vshrl.u32 %v6167, 16
      %v6254 = vrot.slane %v6252, 7
      %v6255 = vshll.u32 %v6167, 16
      %v6257 = vor.u32 %v6254, %v6255
      %v6258 = vsel %vm1031, %v6250, %v6257
      %v6259 = vrot.slane %v6254, 4
      %v6261 = vshrl.u32 %v6168, 16
      %v6263 = vrot.slane %v6261, 7
      %v6264 = vshll.u32 %v6168, 16
      %v6266 = vor.u32 %v6263, %v6264
      %v6267 = vrot.slane %v6263, 4
      %v6269 = vshrl.u32 %v6169, 16
      %v6271 = vrot.slane %v6269, 7
      %v6272 = vshll.u32 %v6169, 16
      %v6274 = vor.u32 %v6271, %v6272
      %v6275 = vsel %vm1031, %v6267, %v6274
      %v6276 = vrot.slane %v6271, 4
      %v6278 = vshrl.u32 %v6170, 16
      %v6280 = vrot.slane %v6278, 7
      %v6281 = vshll.u32 %v6170, 16
      %v6283 = vor.u32 %v6280, %v6281
      %v6284 = vrot.slane %v6280, 4
      %v6286 = vshrl.u32 %v6171, 16
      %v6288 = vrot.slane %v6286, 7
      %v6289 = vshll.u32 %v6171, 16
      %v6291 = vor.u32 %v6288, %v6289
      %v6292 = vsel %vm1031, %v6284, %v6291
      %v6293 = vrot.slane %v6288, 4
      %v6295 = vshrl.u32 %v6172, 16
      %v6297 = vrot.slane %v6295, 7
      %v6298 = vshll.u32 %v6172, 16
      %v6300 = vor.u32 %v6297, %v6298
      %v6301 = vrot.slane %v6297, 4
      %v6303 = vshrl.u32 %v6173, 16
      %v6305 = vrot.slane %v6303, 7
      %v6306 = vshll.u32 %v6173, 16
      %v6308 = vor.u32 %v6305, %v6306
      %v6309 = vsel %vm1031, %v6301, %v6308
      %v6310 = vrot.slane %v6305, 4
      %v6312 = vshrl.u32 %v6174, 16
      %v6314 = vrot.slane %v6312, 7
      %v6315 = vshll.u32 %v6174, 16
      %v6317 = vor.u32 %v6314, %v6315
      %v6318 = vrot.slane %v6314, 4
      %v6320 = vshrl.u32 %v6175, 16
      %v6322 = vrot.slane %v6320, 7
      %v6323 = vshll.u32 %v6175, 16
      %v6325 = vor.u32 %v6322, %v6323
      %v6326 = vsel %vm1031, %v6318, %v6325
      %v6327 = vrot.slane %v6322, 4
      %v6329 = vshrl.u32 %v6176, 16
      %v6331 = vrot.slane %v6329, 7
      %v6332 = vshll.u32 %v6176, 16
      %v6334 = vor.u32 %v6331, %v6332
      %v6335 = vrot.slane %v6331, 4
      %v6337 = vshrl.u32 %v6177, 16
      %v6339 = vrot.slane %v6337, 7
      %v6340 = vshll.u32 %v6177, 16
      %v6342 = vor.u32 %v6339, %v6340
      %v6343 = vsel %vm1031, %v6335, %v6342
      %v6344 = vrot.slane %v6339, 4
      %v6346 = vshrl.u32 %v6178, 16
      %v6348 = vrot.slane %v6346, 7
      %v6349 = vshll.u32 %v6178, 16
      %v6351 = vor.u32 %v6348, %v6349
      %v6352 = vrot.slane %v6348, 4
      %v6354 = vshrl.u32 %v6179, 16
      %v6356 = vrot.slane %v6354, 7
      %v6357 = vshll.u32 %v6179, 16
      %v6359 = vor.u32 %v6356, %v6357
      %v6360 = vsel %vm1031, %v6352, %v6359
      %v6361 = vrot.slane %v6356, 4
      %v6363 = vshrl.u32 %v6180, 16
      %v6365 = vrot.slane %v6363, 7
      %v6366 = vshll.u32 %v6180, 16
      %v6368 = vor.u32 %v6365, %v6366
      %v6369 = vrot.slane %v6365, 4
      %v6371 = vshrl.u32 %v6181, 16
      %v6373 = vrot.slane %v6371, 7
      %v6374 = vshll.u32 %v6181, 16
      %v6376 = vor.u32 %v6373, %v6374
      %v6377 = vsel %vm1031, %v6369, %v6376
      %v6378 = vrot.slane %v6373, 4
      %v6380 = vshrl.u32 %v6182, 16
      %v6382 = vrot.slane %v6380, 7
      %v6383 = vshll.u32 %v6182, 16
      %v6385 = vor.u32 %v6382, %v6383
      %v6386 = vrot.slane %v6382, 4
      %v6388 = vshrl.u32 %v6183, 16
      %v6390 = vrot.slane %v6388, 7
      %v6391 = vshll.u32 %v6183, 16
      %v6393 = vor.u32 %v6390, %v6391
      %v6394 = vsel %vm1031, %v6386, %v6393
      %v6395 = vrot.slane %v6390, 4
      %v6397 = vshrl.u32 %v6184, 16
      %v6399 = vrot.slane %v6397, 7
      %v6400 = vshll.u32 %v6184, 16
      %v6402 = vor.u32 %v6399, %v6400
      %v6403 = vrot.slane %v6399, 4
      %v6405 = vshrl.u32 %v6185, 16
      %v6407 = vrot.slane %v6405, 7
      %v6408 = vshll.u32 %v6185, 16
      %v6410 = vor.u32 %v6407, %v6408
      %v6411 = vsel %vm1031, %v6403, %v6410
      %v6412 = vrot.slane %v6407, 4
      %v6414 = vshrl.u32 %v6186, 16
      %v6416 = vrot.slane %v6414, 7
      %v6417 = vshll.u32 %v6186, 16
      %v6419 = vor.u32 %v6416, %v6417
      %v6420 = vrot.slane %v6416, 4
      %v6422 = vshrl.u32 %v6187, 16
      %v6424 = vrot.slane %v6422, 7
      %v6425 = vshll.u32 %v6187, 16
      %v6427 = vor.u32 %v6424, %v6425
      %v6428 = vsel %vm1031, %v6420, %v6427
      %v6429 = vrot.slane %v6424, 4
      %v6431 = vshrl.u32 %v6188, 16
      %v6433 = vrot.slane %v6431, 7
      %v6434 = vshll.u32 %v6188, 16
      %v6436 = vor.u32 %v6433, %v6434
      %v6437 = vrot.slane %v6433, 4
      %v6439 = vshrl.u32 %v6189, 16
      %v6441 = vrot.slane %v6439, 7
      %v6442 = vshll.u32 %v6189, 16
      %v6444 = vor.u32 %v6441, %v6442
      %v6445 = vsel %vm1031, %v6437, %v6444
      %v6446 = vrot.slane %v6441, 4
      %v6448 = vshrl.u32 %v6190, 16
      %v6450 = vrot.slane %v6448, 7
      %v6451 = vshll.u32 %v6190, 16
      %v6453 = vor.u32 %v6450, %v6451
      %v6454 = vrot.slane %v6450, 4
      %v6456 = vshrl.u32 %v6191, 16
      %v6458 = vrot.slane %v6456, 7
      %v6459 = vshll.u32 %v6191, 16
      %v6461 = vor.u32 %v6458, %v6459
      %v6462 = vsel %vm1031, %v6454, %v6461
      %v6463 = vrot.slane %v6458, 4
      %s6512 = scalar_lea.vmem [#allocation3], 12
      %v6513 = vld [vmem:[%s6512] sm:$0xf]
      %v6514 = vsel %vm1354, %v6198, %v6513
      %6515 = vst [vmem:[%s6512] sm:$0xf] %v6514
      %6516 = vst.msk [vmem:[%s6512 + $0x4] sm:$0xf] %vm408, %v6207
      %v6517 = vld [vmem:[%s6512 + $0x8] sm:$0x1]
      %v6518 = vsel %vm419, %v6208, %v6517
      %6519 = vst [vmem:[%s6512 + $0x8] sm:$0x1] %v6518
      %v6520 = vld [vmem:[%s6512 + $0xc] sm:$0xf]
      %v6521 = vsel %vm1354, %v6215, %v6520
      %6522 = vst [vmem:[%s6512 + $0xc] sm:$0xf] %v6521
      %6523 = vst.msk [vmem:[%s6512 + $0x10] sm:$0xf] %vm408, %v6224
      %v6524 = vld [vmem:[%s6512 + $0x14] sm:$0x1]
      %v6525 = vsel %vm419, %v6225, %v6524
      %6526 = vst [vmem:[%s6512 + $0x14] sm:$0x1] %v6525
      %v6527 = vld [vmem:[%s6512 + $0x18] sm:$0xf]
      %v6528 = vsel %vm1354, %v6232, %v6527
      %6529 = vst [vmem:[%s6512 + $0x18] sm:$0xf] %v6528
      %6530 = vst.msk [vmem:[%s6512 + $0x1c] sm:$0xf] %vm408, %v6241
      %v6531 = vld [vmem:[%s6512 + $0x20] sm:$0x1]
      %v6532 = vsel %vm419, %v6242, %v6531
      %6533 = vst [vmem:[%s6512 + $0x20] sm:$0x1] %v6532
      %v6534 = vld [vmem:[%s6512 + $0x24] sm:$0xf]
      %v6535 = vsel %vm1354, %v6249, %v6534
      %6536 = vst [vmem:[%s6512 + $0x24] sm:$0xf] %v6535
      %6537 = vst.msk [vmem:[%s6512 + $0x28] sm:$0xf] %vm408, %v6258
      %v6538 = vld [vmem:[%s6512 + $0x2c] sm:$0x1]
      %v6539 = vsel %vm419, %v6259, %v6538
      %6540 = vst [vmem:[%s6512 + $0x2c] sm:$0x1] %v6539
      %v6541 = vld [vmem:[%s6512 + $0x30] sm:$0xf]
      %v6542 = vsel %vm1354, %v6266, %v6541
      %6543 = vst [vmem:[%s6512 + $0x30] sm:$0xf] %v6542
      %6544 = vst.msk [vmem:[%s6512 + $0x34] sm:$0xf] %vm408, %v6275
      %v6545 = vld [vmem:[%s6512 + $0x38] sm:$0x1]
      %v6546 = vsel %vm419, %v6276, %v6545
      %6547 = vst [vmem:[%s6512 + $0x38] sm:$0x1] %v6546
      %v6548 = vld [vmem:[%s6512 + $0x3c] sm:$0xf]
      %v6549 = vsel %vm1354, %v6283, %v6548
      %6550 = vst [vmem:[%s6512 + $0x3c] sm:$0xf] %v6549
      %6551 = vst.msk [vmem:[%s6512 + $0x40] sm:$0xf] %vm408, %v6292
      %v6552 = vld [vmem:[%s6512 + $0x44] sm:$0x1]
      %v6553 = vsel %vm419, %v6293, %v6552
      %6554 = vst [vmem:[%s6512 + $0x44] sm:$0x1] %v6553
      %v6555 = vld [vmem:[%s6512 + $0x48] sm:$0xf]
      %v6556 = vsel %vm1354, %v6300, %v6555
      %6557 = vst [vmem:[%s6512 + $0x48] sm:$0xf] %v6556
      %6558 = vst.msk [vmem:[%s6512 + $0x4c] sm:$0xf] %vm408, %v6309
      %v6559 = vld [vmem:[%s6512 + $0x50] sm:$0x1]
      %v6560 = vsel %vm419, %v6310, %v6559
      %6561 = vst [vmem:[%s6512 + $0x50] sm:$0x1] %v6560
      %v6562 = vld [vmem:[%s6512 + $0x54] sm:$0xf]
      %v6563 = vsel %vm1354, %v6317, %v6562
      %6564 = vst [vmem:[%s6512 + $0x54] sm:$0xf] %v6563
      %6565 = vst.msk [vmem:[%s6512 + $0x58] sm:$0xf] %vm408, %v6326
      %v6566 = vld [vmem:[%s6512 + $0x5c] sm:$0x1]
      %v6567 = vsel %vm419, %v6327, %v6566
      %6568 = vst [vmem:[%s6512 + $0x5c] sm:$0x1] %v6567
      %v6569 = vld [vmem:[%s6512 + $0x60] sm:$0xf]
      %v6570 = vsel %vm1354, %v6334, %v6569
      %6571 = vst [vmem:[%s6512 + $0x60] sm:$0xf] %v6570
      %6572 = vst.msk [vmem:[%s6512 + $0x64] sm:$0xf] %vm408, %v6343
      %v6573 = vld [vmem:[%s6512 + $0x68] sm:$0x1]
      %v6574 = vsel %vm419, %v6344, %v6573
      %6575 = vst [vmem:[%s6512 + $0x68] sm:$0x1] %v6574
      %v6576 = vld [vmem:[%s6512 + $0x6c] sm:$0xf]
      %v6577 = vsel %vm1354, %v6351, %v6576
      %6578 = vst [vmem:[%s6512 + $0x6c] sm:$0xf] %v6577
      %6579 = vst.msk [vmem:[%s6512 + $0x70] sm:$0xf] %vm408, %v6360
      %v6580 = vld [vmem:[%s6512 + $0x74] sm:$0x1]
      %v6581 = vsel %vm419, %v6361, %v6580
      %6582 = vst [vmem:[%s6512 + $0x74] sm:$0x1] %v6581
      %v6583 = vld [vmem:[%s6512 + $0x78] sm:$0xf]
      %v6584 = vsel %vm1354, %v6368, %v6583
      %6585 = vst [vmem:[%s6512 + $0x78] sm:$0xf] %v6584
      %6586 = vst.msk [vmem:[%s6512 + $0x7c] sm:$0xf] %vm408, %v6377
      %v6587 = vld [vmem:[%s6512 + $0x80] sm:$0x1]
      %v6588 = vsel %vm419, %v6378, %v6587
      %6589 = vst [vmem:[%s6512 + $0x80] sm:$0x1] %v6588
      %v6590 = vld [vmem:[%s6512 + $0x84] sm:$0xf]
      %v6591 = vsel %vm1354, %v6385, %v6590
      %6592 = vst [vmem:[%s6512 + $0x84] sm:$0xf] %v6591
      %6593 = vst.msk [vmem:[%s6512 + $0x88] sm:$0xf] %vm408, %v6394
      %v6594 = vld [vmem:[%s6512 + $0x8c] sm:$0x1]
      %v6595 = vsel %vm419, %v6395, %v6594
      %6596 = vst [vmem:[%s6512 + $0x8c] sm:$0x1] %v6595
      %v6597 = vld [vmem:[%s6512 + $0x90] sm:$0xf]
      %v6598 = vsel %vm1354, %v6402, %v6597
      %6599 = vst [vmem:[%s6512 + $0x90] sm:$0xf] %v6598
      %6600 = vst.msk [vmem:[%s6512 + $0x94] sm:$0xf] %vm408, %v6411
      %v6601 = vld [vmem:[%s6512 + $0x98] sm:$0x1]
      %v6602 = vsel %vm419, %v6412, %v6601
      %6603 = vst [vmem:[%s6512 + $0x98] sm:$0x1] %v6602
      %v6604 = vld [vmem:[%s6512 + $0x9c] sm:$0xf]
      %v6605 = vsel %vm1354, %v6419, %v6604
      %6606 = vst [vmem:[%s6512 + $0x9c] sm:$0xf] %v6605
      %6607 = vst.msk [vmem:[%s6512 + $0xa0] sm:$0xf] %vm408, %v6428
      %v6608 = vld [vmem:[%s6512 + $0xa4] sm:$0x1]
      %v6609 = vsel %vm419, %v6429, %v6608
      %6610 = vst [vmem:[%s6512 + $0xa4] sm:$0x1] %v6609
      %v6611 = vld [vmem:[%s6512 + $0xa8] sm:$0xf]
      %v6612 = vsel %vm1354, %v6436, %v6611
      %6613 = vst [vmem:[%s6512 + $0xa8] sm:$0xf] %v6612
      %6614 = vst.msk [vmem:[%s6512 + $0xac] sm:$0xf] %vm408, %v6445
      %v6615 = vld [vmem:[%s6512 + $0xb0] sm:$0x1]
      %v6616 = vsel %vm419, %v6446, %v6615
      %6617 = vst [vmem:[%s6512 + $0xb0] sm:$0x1] %v6616
      %v6618 = vld [vmem:[%s6512 + $0xb4] sm:$0xf]
      %v6619 = vsel %vm1354, %v6453, %v6618
      %6620 = vst [vmem:[%s6512 + $0xb4] sm:$0xf] %v6619
      %6621 = vst.msk [vmem:[%s6512 + $0xb8] sm:$0xf] %vm408, %v6462
      %v6622 = vld [vmem:[%s6512 + $0xbc] sm:$0x1]
      %v6623 = vsel %vm419, %v6463, %v6622
      %6624 = vst [vmem:[%s6512 + $0xbc] sm:$0x1] %v6623
      %v6625 = vld [vmem:[#allocation3] sm:$0xf]
      %v6626 = vld [vmem:[#allocation3 + $0x4] sm:$0xf]
      %v6627 = vld [vmem:[#allocation3 + $0xc] sm:$0xf]
      %v6628 = vld [vmem:[#allocation3 + $0x10] sm:$0xf]
      %v6629 = vld [vmem:[#allocation3 + $0x18] sm:$0xf]
      %v6630 = vld [vmem:[#allocation3 + $0x1c] sm:$0xf]
      %v6631 = vld [vmem:[#allocation3 + $0x24] sm:$0xf]
      %v6632 = vld [vmem:[#allocation3 + $0x28] sm:$0xf]
      %v6633 = vld [vmem:[#allocation3 + $0x30] sm:$0xf]
      %v6634 = vld [vmem:[#allocation3 + $0x34] sm:$0xf]
      %v6635 = vld [vmem:[#allocation3 + $0x3c] sm:$0xf]
      %v6636 = vld [vmem:[#allocation3 + $0x40] sm:$0xf]
      %v6637 = vld [vmem:[#allocation3 + $0x48] sm:$0xf]
      %v6638 = vld [vmem:[#allocation3 + $0x4c] sm:$0xf]
      %v6639 = vld [vmem:[#allocation3 + $0x54] sm:$0xf]
      %v6640 = vld [vmem:[#allocation3 + $0x58] sm:$0xf]
      %v6641 = vld [vmem:[#allocation3 + $0x60] sm:$0xf]
      %v6642 = vld [vmem:[#allocation3 + $0x64] sm:$0xf]
      %v6643 = vld [vmem:[#allocation3 + $0x6c] sm:$0xf]
      %v6644 = vld [vmem:[#allocation3 + $0x70] sm:$0xf]
      %v6645 = vld [vmem:[#allocation3 + $0x78] sm:$0xf]
      %v6646 = vld [vmem:[#allocation3 + $0x7c] sm:$0xf]
      %v6647 = vld [vmem:[#allocation3 + $0x84] sm:$0xf]
      %v6648 = vld [vmem:[#allocation3 + $0x88] sm:$0xf]
      %v6649 = vld [vmem:[#allocation3 + $0x90] sm:$0xf]
      %v6650 = vld [vmem:[#allocation3 + $0x94] sm:$0xf]
      %v6651 = vld [vmem:[#allocation3 + $0x9c] sm:$0xf]
      %v6652 = vld [vmem:[#allocation3 + $0xa0] sm:$0xf]
      %v6653 = vld [vmem:[#allocation3 + $0xa8] sm:$0xf]
      %v6654 = vld [vmem:[#allocation3 + $0xac] sm:$0xf]
      %v6655 = vld [vmem:[#allocation3 + $0xb4] sm:$0xf]
      %v6656 = vld [vmem:[#allocation3 + $0xb8] sm:$0xf]
      %v6657 = vld [vmem:[%s4] sm:$0xf]
      %v6658 = vld [vmem:[#allocation3 + $0x8] sm:$0x1]
      %v6659 = vld [vmem:[#allocation3 + $0x14] sm:$0x1]
      %v6660 = vld [vmem:[#allocation3 + $0x20] sm:$0x1]
      %v6661 = vld [vmem:[#allocation3 + $0x2c] sm:$0x1]
      %v6662 = vld [vmem:[#allocation3 + $0x38] sm:$0x1]
      %v6663 = vld [vmem:[#allocation3 + $0x44] sm:$0x1]
      %v6664 = vld [vmem:[#allocation3 + $0x50] sm:$0x1]
      %v6665 = vld [vmem:[#allocation3 + $0x5c] sm:$0x1]
      %v6666 = vld [vmem:[#allocation3 + $0x68] sm:$0x1]
      %v6667 = vld [vmem:[#allocation3 + $0x74] sm:$0x1]
      %v6668 = vld [vmem:[#allocation3 + $0x80] sm:$0x1]
      %v6669 = vld [vmem:[#allocation3 + $0x8c] sm:$0x1]
      %v6670 = vld [vmem:[#allocation3 + $0x98] sm:$0x1]
      %v6671 = vld [vmem:[#allocation3 + $0xa4] sm:$0x1]
      %v6672 = vld [vmem:[#allocation3 + $0xb0] sm:$0x1]
      %v6673 = vld [vmem:[#allocation3 + $0xbc] sm:$0x1]
      %v6675 = vshrl.u32 %v6625, 16
      %v6677 = vrot.slane %v6675, 4
      %v6678 = vshll.u32 %v6625, 16
      %v6680 = vrot.slane %v6678, 5
      %v6681 = vor.u32 %v6677, %v6680
      %v6682 = vrot.slane %v6681, 4
      %v6684 = vshll.u32 %v6626, 16
      %v6686 = vrot.slane %v6684, 5
      %v6687 = vsel %vm1518, %v6682, %v6686
      %v6688 = vshrl.u32 %v6626, 16
      %v6690 = vrot.slane %v6688, 4
      %v6691 = vor.u32 %v6690, %v6686
      %v6692 = vrot.slane %v6691, 4
      %v6694 = vshll.u32 %v6658, 16
      %v6696 = vrot.slane %v6694, 5
      %v6697 = vsel %vm1518, %v6692, %v6696
      %v6699 = vshrl.u32 %v6627, 16
      %v6701 = vrot.slane %v6699, 4
      %v6702 = vshll.u32 %v6627, 16
      %v6704 = vrot.slane %v6702, 5
      %v6705 = vor.u32 %v6701, %v6704
      %v6706 = vrot.slane %v6705, 4
      %v6708 = vshll.u32 %v6628, 16
      %v6710 = vrot.slane %v6708, 5
      %v6711 = vsel %vm1518, %v6706, %v6710
      %v6712 = vshrl.u32 %v6628, 16
      %v6714 = vrot.slane %v6712, 4
      %v6715 = vor.u32 %v6714, %v6710
      %v6716 = vrot.slane %v6715, 4
      %v6718 = vshll.u32 %v6659, 16
      %v6720 = vrot.slane %v6718, 5
      %v6721 = vsel %vm1518, %v6716, %v6720
      %v6723 = vshrl.u32 %v6629, 16
      %v6725 = vrot.slane %v6723, 4
      %v6726 = vshll.u32 %v6629, 16
      %v6728 = vrot.slane %v6726, 5
      %v6729 = vor.u32 %v6725, %v6728
      %v6730 = vrot.slane %v6729, 4
      %v6732 = vshll.u32 %v6630, 16
      %v6734 = vrot.slane %v6732, 5
      %v6735 = vsel %vm1518, %v6730, %v6734
      %v6736 = vshrl.u32 %v6630, 16
      %v6738 = vrot.slane %v6736, 4
      %v6739 = vor.u32 %v6738, %v6734
      %v6740 = vrot.slane %v6739, 4
      %v6742 = vshll.u32 %v6660, 16
      %v6744 = vrot.slane %v6742, 5
      %v6745 = vsel %vm1518, %v6740, %v6744
      %v6747 = vshrl.u32 %v6631, 16
      %v6749 = vrot.slane %v6747, 4
      %v6750 = vshll.u32 %v6631, 16
      %v6752 = vrot.slane %v6750, 5
      %v6753 = vor.u32 %v6749, %v6752
      %v6754 = vrot.slane %v6753, 4
      %v6756 = vshll.u32 %v6632, 16
      %v6758 = vrot.slane %v6756, 5
      %v6759 = vsel %vm1518, %v6754, %v6758
      %v6760 = vshrl.u32 %v6632, 16
      %v6762 = vrot.slane %v6760, 4
      %v6763 = vor.u32 %v6762, %v6758
      %v6764 = vrot.slane %v6763, 4
      %v6766 = vshll.u32 %v6661, 16
      %v6768 = vrot.slane %v6766, 5
      %v6769 = vsel %vm1518, %v6764, %v6768
      %v6771 = vshrl.u32 %v6633, 16
      %v6773 = vrot.slane %v6771, 4
      %v6774 = vshll.u32 %v6633, 16
      %v6776 = vrot.slane %v6774, 5
      %v6777 = vor.u32 %v6773, %v6776
      %v6778 = vrot.slane %v6777, 4
      %v6780 = vshll.u32 %v6634, 16
      %v6782 = vrot.slane %v6780, 5
      %v6783 = vsel %vm1518, %v6778, %v6782
      %v6784 = vshrl.u32 %v6634, 16
      %v6786 = vrot.slane %v6784, 4
      %v6787 = vor.u32 %v6786, %v6782
      %v6788 = vrot.slane %v6787, 4
      %v6790 = vshll.u32 %v6662, 16
      %v6792 = vrot.slane %v6790, 5
      %v6793 = vsel %vm1518, %v6788, %v6792
      %v6795 = vshrl.u32 %v6635, 16
      %v6797 = vrot.slane %v6795, 4
      %v6798 = vshll.u32 %v6635, 16
      %v6800 = vrot.slane %v6798, 5
      %v6801 = vor.u32 %v6797, %v6800
      %v6802 = vrot.slane %v6801, 4
      %v6804 = vshll.u32 %v6636, 16
      %v6806 = vrot.slane %v6804, 5
      %v6807 = vsel %vm1518, %v6802, %v6806
      %v6808 = vshrl.u32 %v6636, 16
      %v6810 = vrot.slane %v6808, 4
      %v6811 = vor.u32 %v6810, %v6806
      %v6812 = vrot.slane %v6811, 4
      %v6814 = vshll.u32 %v6663, 16
      %v6816 = vrot.slane %v6814, 5
      %v6817 = vsel %vm1518, %v6812, %v6816
      %v6819 = vshrl.u32 %v6637, 16
      %v6821 = vrot.slane %v6819, 4
      %v6822 = vshll.u32 %v6637, 16
      %v6824 = vrot.slane %v6822, 5
      %v6825 = vor.u32 %v6821, %v6824
      %v6826 = vrot.slane %v6825, 4
      %v6828 = vshll.u32 %v6638, 16
      %v6830 = vrot.slane %v6828, 5
      %v6831 = vsel %vm1518, %v6826, %v6830
      %v6832 = vshrl.u32 %v6638, 16
      %v6834 = vrot.slane %v6832, 4
      %v6835 = vor.u32 %v6834, %v6830
      %v6836 = vrot.slane %v6835, 4
      %v6838 = vshll.u32 %v6664, 16
      %v6840 = vrot.slane %v6838, 5
      %v6841 = vsel %vm1518, %v6836, %v6840
      %v6843 = vshrl.u32 %v6639, 16
      %v6845 = vrot.slane %v6843, 4
      %v6846 = vshll.u32 %v6639, 16
      %v6848 = vrot.slane %v6846, 5
      %v6849 = vor.u32 %v6845, %v6848
      %v6850 = vrot.slane %v6849, 4
      %v6852 = vshll.u32 %v6640, 16
      %v6854 = vrot.slane %v6852, 5
      %v6855 = vsel %vm1518, %v6850, %v6854
      %v6856 = vshrl.u32 %v6640, 16
      %v6858 = vrot.slane %v6856, 4
      %v6859 = vor.u32 %v6858, %v6854
      %v6860 = vrot.slane %v6859, 4
      %v6862 = vshll.u32 %v6665, 16
      %v6864 = vrot.slane %v6862, 5
      %v6865 = vsel %vm1518, %v6860, %v6864
      %v6867 = vshrl.u32 %v6641, 16
      %v6869 = vrot.slane %v6867, 4
      %v6870 = vshll.u32 %v6641, 16
      %v6872 = vrot.slane %v6870, 5
      %v6873 = vor.u32 %v6869, %v6872
      %v6874 = vrot.slane %v6873, 4
      %v6876 = vshll.u32 %v6642, 16
      %v6878 = vrot.slane %v6876, 5
      %v6879 = vsel %vm1518, %v6874, %v6878
      %v6880 = vshrl.u32 %v6642, 16
      %v6882 = vrot.slane %v6880, 4
      %v6883 = vor.u32 %v6882, %v6878
      %v6884 = vrot.slane %v6883, 4
      %v6886 = vshll.u32 %v6666, 16
      %v6888 = vrot.slane %v6886, 5
      %v6889 = vsel %vm1518, %v6884, %v6888
      %v6891 = vshrl.u32 %v6643, 16
      %v6893 = vrot.slane %v6891, 4
      %v6894 = vshll.u32 %v6643, 16
      %v6896 = vrot.slane %v6894, 5
      %v6897 = vor.u32 %v6893, %v6896
      %v6898 = vrot.slane %v6897, 4
      %v6900 = vshll.u32 %v6644, 16
      %v6902 = vrot.slane %v6900, 5
      %v6903 = vsel %vm1518, %v6898, %v6902
      %v6904 = vshrl.u32 %v6644, 16
      %v6906 = vrot.slane %v6904, 4
      %v6907 = vor.u32 %v6906, %v6902
      %v6908 = vrot.slane %v6907, 4
      %v6910 = vshll.u32 %v6667, 16
      %v6912 = vrot.slane %v6910, 5
      %v6913 = vsel %vm1518, %v6908, %v6912
      %v6915 = vshrl.u32 %v6645, 16
      %v6917 = vrot.slane %v6915, 4
      %v6918 = vshll.u32 %v6645, 16
      %v6920 = vrot.slane %v6918, 5
      %v6921 = vor.u32 %v6917, %v6920
      %v6922 = vrot.slane %v6921, 4
      %v6924 = vshll.u32 %v6646, 16
      %v6926 = vrot.slane %v6924, 5
      %v6927 = vsel %vm1518, %v6922, %v6926
      %v6928 = vshrl.u32 %v6646, 16
      %v6930 = vrot.slane %v6928, 4
      %v6931 = vor.u32 %v6930, %v6926
      %v6932 = vrot.slane %v6931, 4
      %v6934 = vshll.u32 %v6668, 16
      %v6936 = vrot.slane %v6934, 5
      %v6937 = vsel %vm1518, %v6932, %v6936
      %v6939 = vshrl.u32 %v6647, 16
      %v6941 = vrot.slane %v6939, 4
      %v6942 = vshll.u32 %v6647, 16
      %v6944 = vrot.slane %v6942, 5
      %v6945 = vor.u32 %v6941, %v6944
      %v6946 = vrot.slane %v6945, 4
      %v6948 = vshll.u32 %v6648, 16
      %v6950 = vrot.slane %v6948, 5
      %v6951 = vsel %vm1518, %v6946, %v6950
      %v6952 = vshrl.u32 %v6648, 16
      %v6954 = vrot.slane %v6952, 4
      %v6955 = vor.u32 %v6954, %v6950
      %v6956 = vrot.slane %v6955, 4
      %v6958 = vshll.u32 %v6669, 16
      %v6960 = vrot.slane %v6958, 5
      %v6961 = vsel %vm1518, %v6956, %v6960
      %v6963 = vshrl.u32 %v6649, 16
      %v6965 = vrot.slane %v6963, 4
      %v6966 = vshll.u32 %v6649, 16
      %v6968 = vrot.slane %v6966, 5
      %v6969 = vor.u32 %v6965, %v6968
      %v6970 = vrot.slane %v6969, 4
      %v6972 = vshll.u32 %v6650, 16
      %v6974 = vrot.slane %v6972, 5
      %v6975 = vsel %vm1518, %v6970, %v6974
      %v6976 = vshrl.u32 %v6650, 16
      %v6978 = vrot.slane %v6976, 4
      %v6979 = vor.u32 %v6978, %v6974
      %v6980 = vrot.slane %v6979, 4
      %v6982 = vshll.u32 %v6670, 16
      %v6984 = vrot.slane %v6982, 5
      %v6985 = vsel %vm1518, %v6980, %v6984
      %v6987 = vshrl.u32 %v6651, 16
      %v6989 = vrot.slane %v6987, 4
      %v6990 = vshll.u32 %v6651, 16
      %v6992 = vrot.slane %v6990, 5
      %v6993 = vor.u32 %v6989, %v6992
      %v6994 = vrot.slane %v6993, 4
      %v6996 = vshll.u32 %v6652, 16
      %v6998 = vrot.slane %v6996, 5
      %v6999 = vsel %vm1518, %v6994, %v6998
      %v7000 = vshrl.u32 %v6652, 16
      %v7002 = vrot.slane %v7000, 4
      %v7003 = vor.u32 %v7002, %v6998
      %v7004 = vrot.slane %v7003, 4
      %v7006 = vshll.u32 %v6671, 16
      %v7008 = vrot.slane %v7006, 5
      %v7009 = vsel %vm1518, %v7004, %v7008
      %v7011 = vshrl.u32 %v6653, 16
      %v7013 = vrot.slane %v7011, 4
      %v7014 = vshll.u32 %v6653, 16
      %v7016 = vrot.slane %v7014, 5
      %v7017 = vor.u32 %v7013, %v7016
      %v7018 = vrot.slane %v7017, 4
      %v7020 = vshll.u32 %v6654, 16
      %v7022 = vrot.slane %v7020, 5
      %v7023 = vsel %vm1518, %v7018, %v7022
      %v7024 = vshrl.u32 %v6654, 16
      %v7026 = vrot.slane %v7024, 4
      %v7027 = vor.u32 %v7026, %v7022
      %v7028 = vrot.slane %v7027, 4
      %v7030 = vshll.u32 %v6672, 16
      %v7032 = vrot.slane %v7030, 5
      %v7033 = vsel %vm1518, %v7028, %v7032
      %v7035 = vshrl.u32 %v6655, 16
      %v7037 = vrot.slane %v7035, 4
      %v7038 = vshll.u32 %v6655, 16
      %v7040 = vrot.slane %v7038, 5
      %v7041 = vor.u32 %v7037, %v7040
      %v7042 = vrot.slane %v7041, 4
      %v7044 = vshll.u32 %v6656, 16
      %v7046 = vrot.slane %v7044, 5
      %v7047 = vsel %vm1518, %v7042, %v7046
      %v7048 = vshrl.u32 %v6656, 16
      %v7050 = vrot.slane %v7048, 4
      %v7051 = vor.u32 %v7050, %v7046
      %v7052 = vrot.slane %v7051, 4
      %v7054 = vshll.u32 %v6673, 16
      %v7056 = vrot.slane %v7054, 5
      %v7057 = vsel %vm1518, %v7052, %v7056
      %s7058 = scalar_lea.vmem %s4, 4
      %v7059 = vld [vmem:[%s7058] sm:$0xf]
      %v7060 = vunpack.c.l.b16 %v6687
      %v7061 = vunpack.c.l.b16 %v6697
      %v7062 = vunpack.c.l.b16 %v6711
      %v7063 = vunpack.c.l.b16 %v6721
      %v7064 = vunpack.c.l.b16 %v6735
      %v7065 = vunpack.c.l.b16 %v6745
      %v7066 = vunpack.c.l.b16 %v6759
      %v7067 = vunpack.c.l.b16 %v6769
      %v7068 = vunpack.c.l.b16 %v6783
      %v7069 = vunpack.c.l.b16 %v6793
      %v7070 = vunpack.c.l.b16 %v6807
      %v7071 = vunpack.c.l.b16 %v6817
      %v7072 = vunpack.c.l.b16 %v6831
      %v7073 = vunpack.c.l.b16 %v6841
      %v7074 = vunpack.c.l.b16 %v6855
      %v7075 = vunpack.c.l.b16 %v6865
      %v7076 = vunpack.c.l.b16 %v6879
      %v7077 = vunpack.c.l.b16 %v6889
      %v7078 = vunpack.c.l.b16 %v6903
      %v7079 = vunpack.c.l.b16 %v6913
      %v7080 = vunpack.c.l.b16 %v6927
      %v7081 = vunpack.c.l.b16 %v6937
      %v7082 = vunpack.c.l.b16 %v6951
      %v7083 = vunpack.c.l.b16 %v6961
      %v7084 = vunpack.c.l.b16 %v6975
      %v7085 = vunpack.c.l.b16 %v6985
      %v7086 = vunpack.c.l.b16 %v6999
      %v7087 = vunpack.c.l.b16 %v7009
      %v7088 = vunpack.c.l.b16 %v7023
      %v7089 = vunpack.c.l.b16 %v7033
      %v7090 = vunpack.c.l.b16 %v7047
      %v7091 = vunpack.c.l.b16 %v7057
      %v7092 = vpack.c.b16 %v7061, %v7060
      %v7093 = vpack.c.b16 %v7063, %v7062
      %v7094 = vpack.c.b16 %v7065, %v7064
      %v7095 = vpack.c.b16 %v7067, %v7066
      %v7096 = vpack.c.b16 %v7069, %v7068
      %v7097 = vpack.c.b16 %v7071, %v7070
      %v7098 = vpack.c.b16 %v7073, %v7072
      %v7099 = vpack.c.b16 %v7075, %v7074
      %v7100 = vpack.c.b16 %v7077, %v7076
      %v7101 = vpack.c.b16 %v7079, %v7078
      %v7102 = vpack.c.b16 %v7081, %v7080
      %v7103 = vpack.c.b16 %v7083, %v7082
      %v7104 = vpack.c.b16 %v7085, %v7084
      %v7105 = vpack.c.b16 %v7087, %v7086
      %v7106 = vpack.c.b16 %v7089, %v7088
      %v7107 = vpack.c.b16 %v7091, %v7090
      %v7109 = vsel %vm1953, %v7059, 0
      %v7112 = vsel %vm1953, %v7092, 0
      %v7115 = vsel %vm1953, %v7093, 0
      %v7118 = vsel %vm1953, %v7094, 0
      %v7121 = vsel %vm1953, %v7095, 0
      %v7124 = vsel %vm1953, %v7096, 0
      %v7127 = vsel %vm1953, %v7097, 0
      %v7130 = vsel %vm1953, %v7098, 0
      %v7133 = vsel %vm1953, %v7099, 0
      %v7136 = vsel %vm1953, %v7100, 0
      %v7139 = vsel %vm1953, %v7101, 0
      %v7142 = vsel %vm1953, %v7102, 0
      %v7145 = vsel %vm1953, %v7103, 0
      %v7148 = vsel %vm1953, %v7104, 0
      %v7151 = vsel %vm1953, %v7105, 0
      %v7154 = vsel %vm1953, %v7106, 0
      %v7157 = vsel %vm1953, %v7107, 0
      %7159 = vmatprep.subr.bf16.mxu0 0
      %7160 = vmatpush1.bf16.xpose.msra.mxu0 %v7112
      %7161 = vmatprep.subr.bf16.mxu0 0
      %7162 = vmatpush1.bf16.xpose.msra.mxu0 %v7115
      %7163 = vmatprep.subr.bf16.mxu0 0
      %7164 = vmatpush1.bf16.xpose.msra.mxu0 %v7118
      %7165 = vmatprep.subr.bf16.mxu0 0
      %7166 = vmatpush1.bf16.xpose.msra.mxu0 %v7121
      %7167 = vmatprep.subr.bf16.mxu0 0
      %7168 = vmatpush1.bf16.xpose.msra.mxu0 %v7124
      %7169 = vmatprep.subr.bf16.mxu0 0
      %7170 = vmatpush1.bf16.xpose.msra.mxu0 %v7127
      %7171 = vmatprep.subr.bf16.mxu0 0
      %7172 = vmatpush1.bf16.xpose.msra.mxu0 %v7130
      %7173 = vmatprep.subr.bf16.mxu0 0
      %7174 = vmatpush1.bf16.xpose.msra.mxu0 %v7133
      %7175 = vmatprep.subr.bf16.mxu0 0
      %7176 = vmatpush1.bf16.xpose.msra.mxu0 %v7136
      %7177 = vmatprep.subr.bf16.mxu0 0
      %7178 = vmatpush1.bf16.xpose.msra.mxu0 %v7139
      %7179 = vmatprep.subr.bf16.mxu0 0
      %7180 = vmatpush1.bf16.xpose.msra.mxu0 %v7142
      %7181 = vmatprep.subr.bf16.mxu0 0
      %7182 = vmatpush1.bf16.xpose.msra.mxu0 %v7145
      %7183 = vmatprep.subr.bf16.mxu0 0
      %7184 = vmatpush1.bf16.xpose.msra.mxu0 %v7148
      %7185 = vmatprep.subr.bf16.mxu0 0
      %7186 = vmatpush1.bf16.xpose.msra.mxu0 %v7151
      %7187 = vmatprep.subr.bf16.mxu0 0
      %7188 = vmatpush1.bf16.xpose.msra.mxu0 %v7154
      %7189 = vmatprep.subr.bf16.mxu0 0
      %7190 = vmatpush1.bf16.xpose.msra.mxu0 %v7157
      %7191 = vmatprep.mubr.bf16.mxu0 0
      %7192 = vmatmul.mubr.bf16.gmra.mrb[0].mxu0 %v7109
      %v7193 = vpop.f32.mrb[0].mxu0
      %v7194 = vadd.f32 0.0, %v7193
      %v7195 = vpop.f32.mrb[0].mxu0
      %v7196 = vadd.f32 0.0, %v7195
      %v7197 = vpop.f32.mrb[0].mxu0
      %v7198 = vpop.f32.mrb[0].mxu0
      %7199 = vdwg.mxu0
      %v7232 = vunpack.c.l.b16 %v6625
      %v7233 = vunpack.c.l.b16 %v6626
      %v7234 = vunpack.c.l.b16 %v6627
      %v7235 = vunpack.c.l.b16 %v6628
      %v7236 = vunpack.c.l.b16 %v6629
      %v7237 = vunpack.c.l.b16 %v6630
      %v7238 = vunpack.c.l.b16 %v6631
      %v7239 = vunpack.c.l.b16 %v6632
      %v7240 = vunpack.c.l.b16 %v6633
      %v7241 = vunpack.c.l.b16 %v6634
      %v7242 = vunpack.c.l.b16 %v6635
      %v7243 = vunpack.c.l.b16 %v6636
      %v7244 = vunpack.c.l.b16 %v6637
      %v7245 = vunpack.c.l.b16 %v6638
      %v7246 = vunpack.c.l.b16 %v6639
      %v7247 = vunpack.c.l.b16 %v6640
      %v7248 = vunpack.c.l.b16 %v6641
      %v7249 = vunpack.c.l.b16 %v6642
      %v7250 = vunpack.c.l.b16 %v6643
      %v7251 = vunpack.c.l.b16 %v6644
      %v7252 = vunpack.c.l.b16 %v6645
      %v7253 = vunpack.c.l.b16 %v6646
      %v7254 = vunpack.c.l.b16 %v6647
      %v7255 = vunpack.c.l.b16 %v6648
      %v7256 = vunpack.c.l.b16 %v6649
      %v7257 = vunpack.c.l.b16 %v6650
      %v7258 = vunpack.c.l.b16 %v6651
      %v7259 = vunpack.c.l.b16 %v6652
      %v7260 = vunpack.c.l.b16 %v6653
      %v7261 = vunpack.c.l.b16 %v6654
      %v7262 = vunpack.c.l.b16 %v6655
      %v7263 = vunpack.c.l.b16 %v6656
      %v7264 = vpack.c.b16 %v7233, %v7232
      %v7265 = vpack.c.b16 %v7235, %v7234
      %v7266 = vpack.c.b16 %v7237, %v7236
      %v7267 = vpack.c.b16 %v7239, %v7238
      %v7268 = vpack.c.b16 %v7241, %v7240
      %v7269 = vpack.c.b16 %v7243, %v7242
      %v7270 = vpack.c.b16 %v7245, %v7244
      %v7271 = vpack.c.b16 %v7247, %v7246
      %v7272 = vpack.c.b16 %v7249, %v7248
      %v7273 = vpack.c.b16 %v7251, %v7250
      %v7274 = vpack.c.b16 %v7253, %v7252
      %v7275 = vpack.c.b16 %v7255, %v7254
      %v7276 = vpack.c.b16 %v7257, %v7256
      %v7277 = vpack.c.b16 %v7259, %v7258
      %v7278 = vpack.c.b16 %v7261, %v7260
      %v7279 = vpack.c.b16 %v7263, %v7262
      %v7281 = vsel %vm1953, %v6657, 0
      %v7284 = vsel %vm1953, %v7264, 0
      %v7287 = vsel %vm1953, %v7265, 0
      %v7290 = vsel %vm1953, %v7266, 0
      %v7293 = vsel %vm1953, %v7267, 0
      %v7296 = vsel %vm1953, %v7268, 0
      %v7299 = vsel %vm1953, %v7269, 0
      %v7302 = vsel %vm1953, %v7270, 0
      %v7305 = vsel %vm1953, %v7271, 0
      %v7308 = vsel %vm1953, %v7272, 0
      %v7311 = vsel %vm1953, %v7273, 0
      %v7314 = vsel %vm1953, %v7274, 0
      %v7317 = vsel %vm1953, %v7275, 0
      %v7320 = vsel %vm1953, %v7276, 0
      %v7323 = vsel %vm1953, %v7277, 0
      %v7326 = vsel %vm1953, %v7278, 0
      %v7329 = vsel %vm1953, %v7279, 0
      %7331 = vmatprep.subr.bf16.mxu0 0
      %7332 = vmatpush1.bf16.xpose.msra.mxu0 %v7284
      %7333 = vmatprep.subr.bf16.mxu0 0
      %7334 = vmatpush1.bf16.xpose.msra.mxu0 %v7287
      %7335 = vmatprep.subr.bf16.mxu0 0
      %7336 = vmatpush1.bf16.xpose.msra.mxu0 %v7290
      %7337 = vmatprep.subr.bf16.mxu0 0
      %7338 = vmatpush1.bf16.xpose.msra.mxu0 %v7293
      %7339 = vmatprep.subr.bf16.mxu0 0
      %7340 = vmatpush1.bf16.xpose.msra.mxu0 %v7296
      %7341 = vmatprep.subr.bf16.mxu0 0
      %7342 = vmatpush1.bf16.xpose.msra.mxu0 %v7299
      %7343 = vmatprep.subr.bf16.mxu0 0
      %7344 = vmatpush1.bf16.xpose.msra.mxu0 %v7302
      %7345 = vmatprep.subr.bf16.mxu0 0
      %7346 = vmatpush1.bf16.xpose.msra.mxu0 %v7305
      %7347 = vmatprep.subr.bf16.mxu0 0
      %7348 = vmatpush1.bf16.xpose.msra.mxu0 %v7308
      %7349 = vmatprep.subr.bf16.mxu0 0
      %7350 = vmatpush1.bf16.xpose.msra.mxu0 %v7311
      %7351 = vmatprep.subr.bf16.mxu0 0
      %7352 = vmatpush1.bf16.xpose.msra.mxu0 %v7314
      %7353 = vmatprep.subr.bf16.mxu0 0
      %7354 = vmatpush1.bf16.xpose.msra.mxu0 %v7317
      %7355 = vmatprep.subr.bf16.mxu0 0
      %7356 = vmatpush1.bf16.xpose.msra.mxu0 %v7320
      %7357 = vmatprep.subr.bf16.mxu0 0
      %7358 = vmatpush1.bf16.xpose.msra.mxu0 %v7323
      %7359 = vmatprep.subr.bf16.mxu0 0
      %7360 = vmatpush1.bf16.xpose.msra.mxu0 %v7326
      %7361 = vmatprep.subr.bf16.mxu0 0
      %7362 = vmatpush1.bf16.xpose.msra.mxu0 %v7329
      %7363 = vmatprep.mubr.bf16.mxu0 0
      %7364 = vmatmul.mubr.bf16.gmra.mrb[0].mxu0 %v7281
      %v7365 = vpop.f32.mrb[0].mxu0
      %v7366 = vadd.f32 %v7194, %v7365
      %v7367 = vpop.f32.mrb[0].mxu0
      %v7368 = vadd.f32 %v7196, %v7367
      %v7369 = vpop.f32.mrb[0].mxu0
      %v7370 = vpop.f32.mrb[0].mxu0
      %7371 = vdwg.mxu0
      %v7372 = vld [vmem:[#allocation3] sm:$0xe]
      %v7373 = vld [vmem:[#allocation3 + $0xc] sm:$0xe]
      %v7374 = vld [vmem:[#allocation3 + $0x18] sm:$0xe]
      %v7375 = vld [vmem:[#allocation3 + $0x24] sm:$0xe]
      %v7376 = vld [vmem:[#allocation3 + $0x30] sm:$0xe]
      %v7377 = vld [vmem:[#allocation3 + $0x3c] sm:$0xe]
      %v7378 = vld [vmem:[#allocation3 + $0x48] sm:$0xe]
      %v7379 = vld [vmem:[#allocation3 + $0x54] sm:$0xe]
      %v7380 = vld [vmem:[#allocation3 + $0x60] sm:$0xe]
      %v7381 = vld [vmem:[#allocation3 + $0x6c] sm:$0xe]
      %v7382 = vld [vmem:[#allocation3 + $0x78] sm:$0xe]
      %v7383 = vld [vmem:[#allocation3 + $0x84] sm:$0xe]
      %v7384 = vld [vmem:[#allocation3 + $0x90] sm:$0xe]
      %v7385 = vld [vmem:[#allocation3 + $0x9c] sm:$0xe]
      %v7386 = vld [vmem:[#allocation3 + $0xa8] sm:$0xe]
      %v7387 = vld [vmem:[#allocation3 + $0xb4] sm:$0xe]
      %v7420 = vrot.slane %v7372, 5
      %v7421 = vrot.slane %v7420, 4
      %v7422 = vrot.slane %v6626, 5
      %v7423 = vsel %vm2509, %v7421, %v7422
      %v7424 = vrot.slane %v7422, 4
      %v7425 = vrot.slane %v6658, 5
      %v7426 = vsel %vm2509, %v7424, %v7425
      %v7427 = vrot.slane %v7373, 5
      %v7428 = vrot.slane %v7427, 4
      %v7429 = vrot.slane %v6628, 5
      %v7430 = vsel %vm2509, %v7428, %v7429
      %v7431 = vrot.slane %v7429, 4
      %v7432 = vrot.slane %v6659, 5
      %v7433 = vsel %vm2509, %v7431, %v7432
      %v7434 = vrot.slane %v7374, 5
      %v7435 = vrot.slane %v7434, 4
      %v7436 = vrot.slane %v6630, 5
      %v7437 = vsel %vm2509, %v7435, %v7436
      %v7438 = vrot.slane %v7436, 4
      %v7439 = vrot.slane %v6660, 5
      %v7440 = vsel %vm2509, %v7438, %v7439
      %v7441 = vrot.slane %v7375, 5
      %v7442 = vrot.slane %v7441, 4
      %v7443 = vrot.slane %v6632, 5
      %v7444 = vsel %vm2509, %v7442, %v7443
      %v7445 = vrot.slane %v7443, 4
      %v7446 = vrot.slane %v6661, 5
      %v7447 = vsel %vm2509, %v7445, %v7446
      %v7448 = vrot.slane %v7376, 5
      %v7449 = vrot.slane %v7448, 4
      %v7450 = vrot.slane %v6634, 5
      %v7451 = vsel %vm2509, %v7449, %v7450
      %v7452 = vrot.slane %v7450, 4
      %v7453 = vrot.slane %v6662, 5
      %v7454 = vsel %vm2509, %v7452, %v7453
      %v7455 = vrot.slane %v7377, 5
      %v7456 = vrot.slane %v7455, 4
      %v7457 = vrot.slane %v6636, 5
      %v7458 = vsel %vm2509, %v7456, %v7457
      %v7459 = vrot.slane %v7457, 4
      %v7460 = vrot.slane %v6663, 5
      %v7461 = vsel %vm2509, %v7459, %v7460
      %v7462 = vrot.slane %v7378, 5
      %v7463 = vrot.slane %v7462, 4
      %v7464 = vrot.slane %v6638, 5
      %v7465 = vsel %vm2509, %v7463, %v7464
      %v7466 = vrot.slane %v7464, 4
      %v7467 = vrot.slane %v6664, 5
      %v7468 = vsel %vm2509, %v7466, %v7467
      %v7469 = vrot.slane %v7379, 5
      %v7470 = vrot.slane %v7469, 4
      %v7471 = vrot.slane %v6640, 5
      %v7472 = vsel %vm2509, %v7470, %v7471
      %v7473 = vrot.slane %v7471, 4
      %v7474 = vrot.slane %v6665, 5
      %v7475 = vsel %vm2509, %v7473, %v7474
      %v7476 = vrot.slane %v7380, 5
      %v7477 = vrot.slane %v7476, 4
      %v7478 = vrot.slane %v6642, 5
      %v7479 = vsel %vm2509, %v7477, %v7478
      %v7480 = vrot.slane %v7478, 4
      %v7481 = vrot.slane %v6666, 5
      %v7482 = vsel %vm2509, %v7480, %v7481
      %v7483 = vrot.slane %v7381, 5
      %v7484 = vrot.slane %v7483, 4
      %v7485 = vrot.slane %v6644, 5
      %v7486 = vsel %vm2509, %v7484, %v7485
      %v7487 = vrot.slane %v7485, 4
      %v7488 = vrot.slane %v6667, 5
      %v7489 = vsel %vm2509, %v7487, %v7488
      %v7490 = vrot.slane %v7382, 5
      %v7491 = vrot.slane %v7490, 4
      %v7492 = vrot.slane %v6646, 5
      %v7493 = vsel %vm2509, %v7491, %v7492
      %v7494 = vrot.slane %v7492, 4
      %v7495 = vrot.slane %v6668, 5
      %v7496 = vsel %vm2509, %v7494, %v7495
      %v7497 = vrot.slane %v7383, 5
      %v7498 = vrot.slane %v7497, 4
      %v7499 = vrot.slane %v6648, 5
      %v7500 = vsel %vm2509, %v7498, %v7499
      %v7501 = vrot.slane %v7499, 4
      %v7502 = vrot.slane %v6669, 5
      %v7503 = vsel %vm2509, %v7501, %v7502
      %v7504 = vrot.slane %v7384, 5
      %v7505 = vrot.slane %v7504, 4
      %v7506 = vrot.slane %v6650, 5
      %v7507 = vsel %vm2509, %v7505, %v7506
      %v7508 = vrot.slane %v7506, 4
      %v7509 = vrot.slane %v6670, 5
      %v7510 = vsel %vm2509, %v7508, %v7509
      %v7511 = vrot.slane %v7385, 5
      %v7512 = vrot.slane %v7511, 4
      %v7513 = vrot.slane %v6652, 5
      %v7514 = vsel %vm2509, %v7512, %v7513
      %v7515 = vrot.slane %v7513, 4
      %v7516 = vrot.slane %v6671, 5
      %v7517 = vsel %vm2509, %v7515, %v7516
      %v7518 = vrot.slane %v7386, 5
      %v7519 = vrot.slane %v7518, 4
      %v7520 = vrot.slane %v6654, 5
      %v7521 = vsel %vm2509, %v7519, %v7520
      %v7522 = vrot.slane %v7520, 4
      %v7523 = vrot.slane %v6672, 5
      %v7524 = vsel %vm2509, %v7522, %v7523
      %v7525 = vrot.slane %v7387, 5
      %v7526 = vrot.slane %v7525, 4
      %v7527 = vrot.slane %v6656, 5
      %v7528 = vsel %vm2509, %v7526, %v7527
      %v7529 = vrot.slane %v7527, 4
      %v7530 = vrot.slane %v6673, 5
      %v7531 = vsel %vm2509, %v7529, %v7530
      %s7532 = scalar_lea.vmem %s4, 8
      %v7533 = vld [vmem:[%s7532] sm:$0xf]
      %v7534 = vunpack.c.l.b16 %v7423
      %v7535 = vunpack.c.l.b16 %v7426
      %v7536 = vunpack.c.l.b16 %v7430
      %v7537 = vunpack.c.l.b16 %v7433
      %v7538 = vunpack.c.l.b16 %v7437
      %v7539 = vunpack.c.l.b16 %v7440
      %v7540 = vunpack.c.l.b16 %v7444
      %v7541 = vunpack.c.l.b16 %v7447
      %v7542 = vunpack.c.l.b16 %v7451
      %v7543 = vunpack.c.l.b16 %v7454
      %v7544 = vunpack.c.l.b16 %v7458
      %v7545 = vunpack.c.l.b16 %v7461
      %v7546 = vunpack.c.l.b16 %v7465
      %v7547 = vunpack.c.l.b16 %v7468
      %v7548 = vunpack.c.l.b16 %v7472
      %v7549 = vunpack.c.l.b16 %v7475
      %v7550 = vunpack.c.l.b16 %v7479
      %v7551 = vunpack.c.l.b16 %v7482
      %v7552 = vunpack.c.l.b16 %v7486
      %v7553 = vunpack.c.l.b16 %v7489
      %v7554 = vunpack.c.l.b16 %v7493
      %v7555 = vunpack.c.l.b16 %v7496
      %v7556 = vunpack.c.l.b16 %v7500
      %v7557 = vunpack.c.l.b16 %v7503
      %v7558 = vunpack.c.l.b16 %v7507
      %v7559 = vunpack.c.l.b16 %v7510
      %v7560 = vunpack.c.l.b16 %v7514
      %v7561 = vunpack.c.l.b16 %v7517
      %v7562 = vunpack.c.l.b16 %v7521
      %v7563 = vunpack.c.l.b16 %v7524
      %v7564 = vunpack.c.l.b16 %v7528
      %v7565 = vunpack.c.l.b16 %v7531
      %v7566 = vpack.c.b16 %v7535, %v7534
      %v7567 = vpack.c.b16 %v7537, %v7536
      %v7568 = vpack.c.b16 %v7539, %v7538
      %v7569 = vpack.c.b16 %v7541, %v7540
      %v7570 = vpack.c.b16 %v7543, %v7542
      %v7571 = vpack.c.b16 %v7545, %v7544
      %v7572 = vpack.c.b16 %v7547, %v7546
      %v7573 = vpack.c.b16 %v7549, %v7548
      %v7574 = vpack.c.b16 %v7551, %v7550
      %v7575 = vpack.c.b16 %v7553, %v7552
      %v7576 = vpack.c.b16 %v7555, %v7554
      %v7577 = vpack.c.b16 %v7557, %v7556
      %v7578 = vpack.c.b16 %v7559, %v7558
      %v7579 = vpack.c.b16 %v7561, %v7560
      %v7580 = vpack.c.b16 %v7563, %v7562
      %v7581 = vpack.c.b16 %v7565, %v7564
      %v7583 = vsel %vm1953, %v7533, 0
      %v7586 = vsel %vm1953, %v7566, 0
      %v7589 = vsel %vm1953, %v7567, 0
      %v7592 = vsel %vm1953, %v7568, 0
      %v7595 = vsel %vm1953, %v7569, 0
      %v7598 = vsel %vm1953, %v7570, 0
      %v7601 = vsel %vm1953, %v7571, 0
      %v7604 = vsel %vm1953, %v7572, 0
      %v7607 = vsel %vm1953, %v7573, 0
      %v7610 = vsel %vm1953, %v7574, 0
      %v7613 = vsel %vm1953, %v7575, 0
      %v7616 = vsel %vm1953, %v7576, 0
      %v7619 = vsel %vm1953, %v7577, 0
      %v7622 = vsel %vm1953, %v7578, 0
      %v7625 = vsel %vm1953, %v7579, 0
      %v7628 = vsel %vm1953, %v7580, 0
      %v7631 = vsel %vm1953, %v7581, 0
      %7633 = vmatprep.subr.bf16.mxu0 0
      %7634 = vmatpush1.bf16.xpose.msra.mxu0 %v7586
      %7635 = vmatprep.subr.bf16.mxu0 0
      %7636 = vmatpush1.bf16.xpose.msra.mxu0 %v7589
      %7637 = vmatprep.subr.bf16.mxu0 0
      %7638 = vmatpush1.bf16.xpose.msra.mxu0 %v7592
      %7639 = vmatprep.subr.bf16.mxu0 0
      %7640 = vmatpush1.bf16.xpose.msra.mxu0 %v7595
      %7641 = vmatprep.subr.bf16.mxu0 0
      %7642 = vmatpush1.bf16.xpose.msra.mxu0 %v7598
      %7643 = vmatprep.subr.bf16.mxu0 0
      %7644 = vmatpush1.bf16.xpose.msra.mxu0 %v7601
      %7645 = vmatprep.subr.bf16.mxu0 0
      %7646 = vmatpush1.bf16.xpose.msra.mxu0 %v7604
      %7647 = vmatprep.subr.bf16.mxu0 0
      %7648 = vmatpush1.bf16.xpose.msra.mxu0 %v7607
      %7649 = vmatprep.subr.bf16.mxu0 0
      %7650 = vmatpush1.bf16.xpose.msra.mxu0 %v7610
      %7651 = vmatprep.subr.bf16.mxu0 0
      %7652 = vmatpush1.bf16.xpose.msra.mxu0 %v7613
      %7653 = vmatprep.subr.bf16.mxu0 0
      %7654 = vmatpush1.bf16.xpose.msra.mxu0 %v7616
      %7655 = vmatprep.subr.bf16.mxu0 0
      %7656 = vmatpush1.bf16.xpose.msra.mxu0 %v7619
      %7657 = vmatprep.subr.bf16.mxu0 0
      %7658 = vmatpush1.bf16.xpose.msra.mxu0 %v7622
      %7659 = vmatprep.subr.bf16.mxu0 0
      %7660 = vmatpush1.bf16.xpose.msra.mxu0 %v7625
      %7661 = vmatprep.subr.bf16.mxu0 0
      %7662 = vmatpush1.bf16.xpose.msra.mxu0 %v7628
      %7663 = vmatprep.subr.bf16.mxu0 0
      %7664 = vmatpush1.bf16.xpose.msra.mxu0 %v7631
      %7665 = vmatprep.mubr.bf16.mxu0 0
      %7666 = vmatmul.mubr.bf16.gmra.mrb[0].mxu0 %v7583
      %v7667 = vpop.f32.mrb[0].mxu0
      %v7668 = vadd.f32 0.0, %v7667
      %v7669 = vpop.f32.mrb[0].mxu0
      %v7670 = vadd.f32 0.0, %v7669
      %v7671 = vpop.f32.mrb[0].mxu0
      %v7672 = vpop.f32.mrb[0].mxu0
      %7673 = vdwg.mxu0
      %v7674 = vadd.f32 %v7366, %v7668
      %v7675 = vadd.f32 %v7368, %v7670
      %v7676 = vld [vmem:[%s6512] sm:$0xf]
      %v7677 = vld [vmem:[%s6512 + $0x4] sm:$0xf]
      %v7678 = vld [vmem:[%s6512 + $0xc] sm:$0xf]
      %v7679 = vld [vmem:[%s6512 + $0x10] sm:$0xf]
      %v7680 = vld [vmem:[%s6512 + $0x18] sm:$0xf]
      %v7681 = vld [vmem:[%s6512 + $0x1c] sm:$0xf]
      %v7682 = vld [vmem:[%s6512 + $0x24] sm:$0xf]
      %v7683 = vld [vmem:[%s6512 + $0x28] sm:$0xf]
      %v7684 = vld [vmem:[%s6512 + $0x30] sm:$0xf]
      %v7685 = vld [vmem:[%s6512 + $0x34] sm:$0xf]
      %v7686 = vld [vmem:[%s6512 + $0x3c] sm:$0xf]
      %v7687 = vld [vmem:[%s6512 + $0x40] sm:$0xf]
      %v7688 = vld [vmem:[%s6512 + $0x48] sm:$0xf]
      %v7689 = vld [vmem:[%s6512 + $0x4c] sm:$0xf]
      %v7690 = vld [vmem:[%s6512 + $0x54] sm:$0xf]
      %v7691 = vld [vmem:[%s6512 + $0x58] sm:$0xf]
      %v7692 = vld [vmem:[%s6512 + $0x60] sm:$0xf]
      %v7693 = vld [vmem:[%s6512 + $0x64] sm:$0xf]
      %v7694 = vld [vmem:[%s6512 + $0x6c] sm:$0xf]
      %v7695 = vld [vmem:[%s6512 + $0x70] sm:$0xf]
      %v7696 = vld [vmem:[%s6512 + $0x78] sm:$0xf]
      %v7697 = vld [vmem:[%s6512 + $0x7c] sm:$0xf]
      %v7698 = vld [vmem:[%s6512 + $0x84] sm:$0xf]
      %v7699 = vld [vmem:[%s6512 + $0x88] sm:$0xf]
      %v7700 = vld [vmem:[%s6512 + $0x90] sm:$0xf]
      %v7701 = vld [vmem:[%s6512 + $0x94] sm:$0xf]
      %v7702 = vld [vmem:[%s6512 + $0x9c] sm:$0xf]
      %v7703 = vld [vmem:[%s6512 + $0xa0] sm:$0xf]
      %v7704 = vld [vmem:[%s6512 + $0xa8] sm:$0xf]
      %v7705 = vld [vmem:[%s6512 + $0xac] sm:$0xf]
      %v7706 = vld [vmem:[%s6512 + $0xb4] sm:$0xf]
      %v7707 = vld [vmem:[%s6512 + $0xb8] sm:$0xf]
      %s7708 = scalar_lea.vmem %s4, 12
      %v7709 = vld [vmem:[%s7708] sm:$0xf]
      %v7742 = vunpack.c.l.b16 %v7676
      %v7743 = vunpack.c.l.b16 %v7677
      %v7744 = vunpack.c.l.b16 %v7678
      %v7745 = vunpack.c.l.b16 %v7679
      %v7746 = vunpack.c.l.b16 %v7680
      %v7747 = vunpack.c.l.b16 %v7681
      %v7748 = vunpack.c.l.b16 %v7682
      %v7749 = vunpack.c.l.b16 %v7683
      %v7750 = vunpack.c.l.b16 %v7684
      %v7751 = vunpack.c.l.b16 %v7685
      %v7752 = vunpack.c.l.b16 %v7686
      %v7753 = vunpack.c.l.b16 %v7687
      %v7754 = vunpack.c.l.b16 %v7688
      %v7755 = vunpack.c.l.b16 %v7689
      %v7756 = vunpack.c.l.b16 %v7690
      %v7757 = vunpack.c.l.b16 %v7691
      %v7758 = vunpack.c.l.b16 %v7692
      %v7759 = vunpack.c.l.b16 %v7693
      %v7760 = vunpack.c.l.b16 %v7694
      %v7761 = vunpack.c.l.b16 %v7695
      %v7762 = vunpack.c.l.b16 %v7696
      %v7763 = vunpack.c.l.b16 %v7697
      %v7764 = vunpack.c.l.b16 %v7698
      %v7765 = vunpack.c.l.b16 %v7699
      %v7766 = vunpack.c.l.b16 %v7700
      %v7767 = vunpack.c.l.b16 %v7701
      %v7768 = vunpack.c.l.b16 %v7702
      %v7769 = vunpack.c.l.b16 %v7703
      %v7770 = vunpack.c.l.b16 %v7704
      %v7771 = vunpack.c.l.b16 %v7705
      %v7772 = vunpack.c.l.b16 %v7706
      %v7773 = vunpack.c.l.b16 %v7707
      %v7774 = vpack.c.b16 %v7743, %v7742
      %v7775 = vpack.c.b16 %v7745, %v7744
      %v7776 = vpack.c.b16 %v7747, %v7746
      %v7777 = vpack.c.b16 %v7749, %v7748
      %v7778 = vpack.c.b16 %v7751, %v7750
      %v7779 = vpack.c.b16 %v7753, %v7752
      %v7780 = vpack.c.b16 %v7755, %v7754
      %v7781 = vpack.c.b16 %v7757, %v7756
      %v7782 = vpack.c.b16 %v7759, %v7758
      %v7783 = vpack.c.b16 %v7761, %v7760
      %v7784 = vpack.c.b16 %v7763, %v7762
      %v7785 = vpack.c.b16 %v7765, %v7764
      %v7786 = vpack.c.b16 %v7767, %v7766
      %v7787 = vpack.c.b16 %v7769, %v7768
      %v7788 = vpack.c.b16 %v7771, %v7770
      %v7789 = vpack.c.b16 %v7773, %v7772
      %v7791 = vsel %vm1953, %v7709, 0
      %v7794 = vsel %vm1953, %v7774, 0
      %v7797 = vsel %vm1953, %v7775, 0
      %v7800 = vsel %vm1953, %v7776, 0
      %v7803 = vsel %vm1953, %v7777, 0
      %v7806 = vsel %vm1953, %v7778, 0
      %v7809 = vsel %vm1953, %v7779, 0
      %v7812 = vsel %vm1953, %v7780, 0
      %v7815 = vsel %vm1953, %v7781, 0
      %v7818 = vsel %vm1953, %v7782, 0
      %v7821 = vsel %vm1953, %v7783, 0
      %v7824 = vsel %vm1953, %v7784, 0
      %v7827 = vsel %vm1953, %v7785, 0
      %v7830 = vsel %vm1953, %v7786, 0
      %v7833 = vsel %vm1953, %v7787, 0
      %v7836 = vsel %vm1953, %v7788, 0
      %v7839 = vsel %vm1953, %v7789, 0
      %7841 = vmatprep.subr.bf16.mxu0 0
      %7842 = vmatpush1.bf16.xpose.msra.mxu0 %v7794
      %7843 = vmatprep.subr.bf16.mxu0 0
      %7844 = vmatpush1.bf16.xpose.msra.mxu0 %v7797
      %7845 = vmatprep.subr.bf16.mxu0 0
      %7846 = vmatpush1.bf16.xpose.msra.mxu0 %v7800
      %7847 = vmatprep.subr.bf16.mxu0 0
      %7848 = vmatpush1.bf16.xpose.msra.mxu0 %v7803
      %7849 = vmatprep.subr.bf16.mxu0 0
      %7850 = vmatpush1.bf16.xpose.msra.mxu0 %v7806
      %7851 = vmatprep.subr.bf16.mxu0 0
      %7852 = vmatpush1.bf16.xpose.msra.mxu0 %v7809
      %7853 = vmatprep.subr.bf16.mxu0 0
      %7854 = vmatpush1.bf16.xpose.msra.mxu0 %v7812
      %7855 = vmatprep.subr.bf16.mxu0 0
      %7856 = vmatpush1.bf16.xpose.msra.mxu0 %v7815
      %7857 = vmatprep.subr.bf16.mxu0 0
      %7858 = vmatpush1.bf16.xpose.msra.mxu0 %v7818
      %7859 = vmatprep.subr.bf16.mxu0 0
      %7860 = vmatpush1.bf16.xpose.msra.mxu0 %v7821
      %7861 = vmatprep.subr.bf16.mxu0 0
      %7862 = vmatpush1.bf16.xpose.msra.mxu0 %v7824
      %7863 = vmatprep.subr.bf16.mxu0 0
      %7864 = vmatpush1.bf16.xpose.msra.mxu0 %v7827
      %7865 = vmatprep.subr.bf16.mxu0 0
      %7866 = vmatpush1.bf16.xpose.msra.mxu0 %v7830
      %7867 = vmatprep.subr.bf16.mxu0 0
      %7868 = vmatpush1.bf16.xpose.msra.mxu0 %v7833
      %7869 = vmatprep.subr.bf16.mxu0 0
      %7870 = vmatpush1.bf16.xpose.msra.mxu0 %v7836
      %7871 = vmatprep.subr.bf16.mxu0 0
      %7872 = vmatpush1.bf16.xpose.msra.mxu0 %v7839
      %7873 = vmatprep.mubr.bf16.mxu0 0
      %7874 = vmatmul.mubr.bf16.gmra.mrb[0].mxu0 %v7791
      %v7875 = vpop.f32.mrb[0].mxu0
      %v7876 = vadd.f32 0.0, %v7875
      %v7877 = vpop.f32.mrb[0].mxu0
      %v7878 = vadd.f32 0.0, %v7877
      %v7879 = vpop.f32.mrb[0].mxu0
      %v7880 = vpop.f32.mrb[0].mxu0
      %7881 = vdwg.mxu0
      %v7882 = vadd.f32 %v7674, %v7876
      %v7883 = vadd.f32 %v7675, %v7878
      %v7884 = vld [vmem:[%s6512] sm:$0xf]
      %v7885 = vld [vmem:[%s6512 + $0x4] sm:$0xf]
      %v7886 = vld [vmem:[%s6512 + $0x8] sm:$0x1]
      %v7887 = vld [vmem:[%s6512 + $0xc] sm:$0xf]
      %v7888 = vld [vmem:[%s6512 + $0x10] sm:$0xf]
      %v7889 = vld [vmem:[%s6512 + $0x14] sm:$0x1]
      %v7890 = vld [vmem:[%s6512 + $0x18] sm:$0xf]
      %v7891 = vld [vmem:[%s6512 + $0x1c] sm:$0xf]
      %v7892 = vld [vmem:[%s6512 + $0x20] sm:$0x1]
      %v7893 = vld [vmem:[%s6512 + $0x24] sm:$0xf]
      %v7894 = vld [vmem:[%s6512 + $0x28] sm:$0xf]
      %v7895 = vld [vmem:[%s6512 + $0x2c] sm:$0x1]
      %v7896 = vld [vmem:[%s6512 + $0x30] sm:$0xf]
      %v7897 = vld [vmem:[%s6512 + $0x34] sm:$0xf]
      %v7898 = vld [vmem:[%s6512 + $0x38] sm:$0x1]
      %v7899 = vld [vmem:[%s6512 + $0x3c] sm:$0xf]
      %v7900 = vld [vmem:[%s6512 + $0x40] sm:$0xf]
      %v7901 = vld [vmem:[%s6512 + $0x44] sm:$0x1]
      %v7902 = vld [vmem:[%s6512 + $0x48] sm:$0xf]
      %v7903 = vld [vmem:[%s6512 + $0x4c] sm:$0xf]
      %v7904 = vld [vmem:[%s6512 + $0x50] sm:$0x1]
      %v7905 = vld [vmem:[%s6512 + $0x54] sm:$0xf]
      %v7906 = vld [vmem:[%s6512 + $0x58] sm:$0xf]
      %v7907 = vld [vmem:[%s6512 + $0x5c] sm:$0x1]
      %v7908 = vld [vmem:[%s6512 + $0x60] sm:$0xf]
      %v7909 = vld [vmem:[%s6512 + $0x64] sm:$0xf]
      %v7910 = vld [vmem:[%s6512 + $0x68] sm:$0x1]
      %v7911 = vld [vmem:[%s6512 + $0x6c] sm:$0xf]
      %v7912 = vld [vmem:[%s6512 + $0x70] sm:$0xf]
      %v7913 = vld [vmem:[%s6512 + $0x74] sm:$0x1]
      %v7914 = vld [vmem:[%s6512 + $0x78] sm:$0xf]
      %v7915 = vld [vmem:[%s6512 + $0x7c] sm:$0xf]
      %v7916 = vld [vmem:[%s6512 + $0x80] sm:$0x1]
      %v7917 = vld [vmem:[%s6512 + $0x84] sm:$0xf]
      %v7918 = vld [vmem:[%s6512 + $0x88] sm:$0xf]
      %v7919 = vld [vmem:[%s6512 + $0x8c] sm:$0x1]
      %v7920 = vld [vmem:[%s6512 + $0x90] sm:$0xf]
      %v7921 = vld [vmem:[%s6512 + $0x94] sm:$0xf]
      %v7922 = vld [vmem:[%s6512 + $0x98] sm:$0x1]
      %v7923 = vld [vmem:[%s6512 + $0x9c] sm:$0xf]
      %v7924 = vld [vmem:[%s6512 + $0xa0] sm:$0xf]
      %v7925 = vld [vmem:[%s6512 + $0xa4] sm:$0x1]
      %v7926 = vld [vmem:[%s6512 + $0xa8] sm:$0xf]
      %v7927 = vld [vmem:[%s6512 + $0xac] sm:$0xf]
      %v7928 = vld [vmem:[%s6512 + $0xb0] sm:$0x1]
      %v7929 = vld [vmem:[%s6512 + $0xb4] sm:$0xf]
      %v7930 = vld [vmem:[%s6512 + $0xb8] sm:$0xf]
      %v7931 = vld [vmem:[%s6512 + $0xbc] sm:$0x1]
      %v7933 = vshrl.u32 %v7884, 16
      %v7935 = vrot.slane %v7933, 4
      %v7936 = vshll.u32 %v7884, 16
      %v7938 = vrot.slane %v7936, 5
      %v7939 = vor.u32 %v7935, %v7938
      %v7940 = vrot.slane %v7939, 4
      %v7942 = vshll.u32 %v7885, 16
      %v7944 = vrot.slane %v7942, 5
      %v7945 = vsel %vm1518, %v7940, %v7944
      %v7946 = vshrl.u32 %v7885, 16
      %v7948 = vrot.slane %v7946, 4
      %v7949 = vor.u32 %v7948, %v7944
      %v7950 = vrot.slane %v7949, 4
      %v7952 = vshll.u32 %v7886, 16
      %v7954 = vrot.slane %v7952, 5
      %v7955 = vsel %vm1518, %v7950, %v7954
      %v7957 = vshrl.u32 %v7887, 16
      %v7959 = vrot.slane %v7957, 4
      %v7960 = vshll.u32 %v7887, 16
      %v7962 = vrot.slane %v7960, 5
      %v7963 = vor.u32 %v7959, %v7962
      %v7964 = vrot.slane %v7963, 4
      %v7966 = vshll.u32 %v7888, 16
      %v7968 = vrot.slane %v7966, 5
      %v7969 = vsel %vm1518, %v7964, %v7968
      %v7970 = vshrl.u32 %v7888, 16
      %v7972 = vrot.slane %v7970, 4
      %v7973 = vor.u32 %v7972, %v7968
      %v7974 = vrot.slane %v7973, 4
      %v7976 = vshll.u32 %v7889, 16
      %v7978 = vrot.slane %v7976, 5
      %v7979 = vsel %vm1518, %v7974, %v7978
      %v7981 = vshrl.u32 %v7890, 16
      %v7983 = vrot.slane %v7981, 4
      %v7984 = vshll.u32 %v7890, 16
      %v7986 = vrot.slane %v7984, 5
      %v7987 = vor.u32 %v7983, %v7986
      %v7988 = vrot.slane %v7987, 4
      %v7990 = vshll.u32 %v7891, 16
      %v7992 = vrot.slane %v7990, 5
      %v7993 = vsel %vm1518, %v7988, %v7992
      %v7994 = vshrl.u32 %v7891, 16
      %v7996 = vrot.slane %v7994, 4
      %v7997 = vor.u32 %v7996, %v7992
      %v7998 = vrot.slane %v7997, 4
      %v8000 = vshll.u32 %v7892, 16
      %v8002 = vrot.slane %v8000, 5
      %v8003 = vsel %vm1518, %v7998, %v8002
      %v8005 = vshrl.u32 %v7893, 16
      %v8007 = vrot.slane %v8005, 4
      %v8008 = vshll.u32 %v7893, 16
      %v8010 = vrot.slane %v8008, 5
      %v8011 = vor.u32 %v8007, %v8010
      %v8012 = vrot.slane %v8011, 4
      %v8014 = vshll.u32 %v7894, 16
      %v8016 = vrot.slane %v8014, 5
      %v8017 = vsel %vm1518, %v8012, %v8016
      %v8018 = vshrl.u32 %v7894, 16
      %v8020 = vrot.slane %v8018, 4
      %v8021 = vor.u32 %v8020, %v8016
      %v8022 = vrot.slane %v8021, 4
      %v8024 = vshll.u32 %v7895, 16
      %v8026 = vrot.slane %v8024, 5
      %v8027 = vsel %vm1518, %v8022, %v8026
      %v8029 = vshrl.u32 %v7896, 16
      %v8031 = vrot.slane %v8029, 4
      %v8032 = vshll.u32 %v7896, 16
      %v8034 = vrot.slane %v8032, 5
      %v8035 = vor.u32 %v8031, %v8034
      %v8036 = vrot.slane %v8035, 4
      %v8038 = vshll.u32 %v7897, 16
      %v8040 = vrot.slane %v8038, 5
      %v8041 = vsel %vm1518, %v8036, %v8040
      %v8042 = vshrl.u32 %v7897, 16
      %v8044 = vrot.slane %v8042, 4
      %v8045 = vor.u32 %v8044, %v8040
      %v8046 = vrot.slane %v8045, 4
      %v8048 = vshll.u32 %v7898, 16
      %v8050 = vrot.slane %v8048, 5
      %v8051 = vsel %vm1518, %v8046, %v8050
      %v8053 = vshrl.u32 %v7899, 16
      %v8055 = vrot.slane %v8053, 4
      %v8056 = vshll.u32 %v7899, 16
      %v8058 = vrot.slane %v8056, 5
      %v8059 = vor.u32 %v8055, %v8058
      %v8060 = vrot.slane %v8059, 4
      %v8062 = vshll.u32 %v7900, 16
      %v8064 = vrot.slane %v8062, 5
      %v8065 = vsel %vm1518, %v8060, %v8064
      %v8066 = vshrl.u32 %v7900, 16
      %v8068 = vrot.slane %v8066, 4
      %v8069 = vor.u32 %v8068, %v8064
      %v8070 = vrot.slane %v8069, 4
      %v8072 = vshll.u32 %v7901, 16
      %v8074 = vrot.slane %v8072, 5
      %v8075 = vsel %vm1518, %v8070, %v8074
      %v8077 = vshrl.u32 %v7902, 16
      %v8079 = vrot.slane %v8077, 4
      %v8080 = vshll.u32 %v7902, 16
      %v8082 = vrot.slane %v8080, 5
      %v8083 = vor.u32 %v8079, %v8082
      %v8084 = vrot.slane %v8083, 4
      %v8086 = vshll.u32 %v7903, 16
      %v8088 = vrot.slane %v8086, 5
      %v8089 = vsel %vm1518, %v8084, %v8088
      %v8090 = vshrl.u32 %v7903, 16
      %v8092 = vrot.slane %v8090, 4
      %v8093 = vor.u32 %v8092, %v8088
      %v8094 = vrot.slane %v8093, 4
      %v8096 = vshll.u32 %v7904, 16
      %v8098 = vrot.slane %v8096, 5
      %v8099 = vsel %vm1518, %v8094, %v8098
      %v8101 = vshrl.u32 %v7905, 16
      %v8103 = vrot.slane %v8101, 4
      %v8104 = vshll.u32 %v7905, 16
      %v8106 = vrot.slane %v8104, 5
      %v8107 = vor.u32 %v8103, %v8106
      %v8108 = vrot.slane %v8107, 4
      %v8110 = vshll.u32 %v7906, 16
      %v8112 = vrot.slane %v8110, 5
      %v8113 = vsel %vm1518, %v8108, %v8112
      %v8114 = vshrl.u32 %v7906, 16
      %v8116 = vrot.slane %v8114, 4
      %v8117 = vor.u32 %v8116, %v8112
      %v8118 = vrot.slane %v8117, 4
      %v8120 = vshll.u32 %v7907, 16
      %v8122 = vrot.slane %v8120, 5
      %v8123 = vsel %vm1518, %v8118, %v8122
      %v8125 = vshrl.u32 %v7908, 16
      %v8127 = vrot.slane %v8125, 4
      %v8128 = vshll.u32 %v7908, 16
      %v8130 = vrot.slane %v8128, 5
      %v8131 = vor.u32 %v8127, %v8130
      %v8132 = vrot.slane %v8131, 4
      %v8134 = vshll.u32 %v7909, 16
      %v8136 = vrot.slane %v8134, 5
      %v8137 = vsel %vm1518, %v8132, %v8136
      %v8138 = vshrl.u32 %v7909, 16
      %v8140 = vrot.slane %v8138, 4
      %v8141 = vor.u32 %v8140, %v8136
      %v8142 = vrot.slane %v8141, 4
      %v8144 = vshll.u32 %v7910, 16
      %v8146 = vrot.slane %v8144, 5
      %v8147 = vsel %vm1518, %v8142, %v8146
      %v8149 = vshrl.u32 %v7911, 16
      %v8151 = vrot.slane %v8149, 4
      %v8152 = vshll.u32 %v7911, 16
      %v8154 = vrot.slane %v8152, 5
      %v8155 = vor.u32 %v8151, %v8154
      %v8156 = vrot.slane %v8155, 4
      %v8158 = vshll.u32 %v7912, 16
      %v8160 = vrot.slane %v8158, 5
      %v8161 = vsel %vm1518, %v8156, %v8160
      %v8162 = vshrl.u32 %v7912, 16
      %v8164 = vrot.slane %v8162, 4
      %v8165 = vor.u32 %v8164, %v8160
      %v8166 = vrot.slane %v8165, 4
      %v8168 = vshll.u32 %v7913, 16
      %v8170 = vrot.slane %v8168, 5
      %v8171 = vsel %vm1518, %v8166, %v8170
      %v8173 = vshrl.u32 %v7914, 16
      %v8175 = vrot.slane %v8173, 4
      %v8176 = vshll.u32 %v7914, 16
      %v8178 = vrot.slane %v8176, 5
      %v8179 = vor.u32 %v8175, %v8178
      %v8180 = vrot.slane %v8179, 4
      %v8182 = vshll.u32 %v7915, 16
      %v8184 = vrot.slane %v8182, 5
      %v8185 = vsel %vm1518, %v8180, %v8184
      %v8186 = vshrl.u32 %v7915, 16
      %v8188 = vrot.slane %v8186, 4
      %v8189 = vor.u32 %v8188, %v8184
      %v8190 = vrot.slane %v8189, 4
      %v8192 = vshll.u32 %v7916, 16
      %v8194 = vrot.slane %v8192, 5
      %v8195 = vsel %vm1518, %v8190, %v8194
      %v8197 = vshrl.u32 %v7917, 16
      %v8199 = vrot.slane %v8197, 4
      %v8200 = vshll.u32 %v7917, 16
      %v8202 = vrot.slane %v8200, 5
      %v8203 = vor.u32 %v8199, %v8202
      %v8204 = vrot.slane %v8203, 4
      %v8206 = vshll.u32 %v7918, 16
      %v8208 = vrot.slane %v8206, 5
      %v8209 = vsel %vm1518, %v8204, %v8208
      %v8210 = vshrl.u32 %v7918, 16
      %v8212 = vrot.slane %v8210, 4
      %v8213 = vor.u32 %v8212, %v8208
      %v8214 = vrot.slane %v8213, 4
      %v8216 = vshll.u32 %v7919, 16
      %v8218 = vrot.slane %v8216, 5
      %v8219 = vsel %vm1518, %v8214, %v8218
      %v8221 = vshrl.u32 %v7920, 16
      %v8223 = vrot.slane %v8221, 4
      %v8224 = vshll.u32 %v7920, 16
      %v8226 = vrot.slane %v8224, 5
      %v8227 = vor.u32 %v8223, %v8226
      %v8228 = vrot.slane %v8227, 4
      %v8230 = vshll.u32 %v7921, 16
      %v8232 = vrot.slane %v8230, 5
      %v8233 = vsel %vm1518, %v8228, %v8232
      %v8234 = vshrl.u32 %v7921, 16
      %v8236 = vrot.slane %v8234, 4
      %v8237 = vor.u32 %v8236, %v8232
      %v8238 = vrot.slane %v8237, 4
      %v8240 = vshll.u32 %v7922, 16
      %v8242 = vrot.slane %v8240, 5
      %v8243 = vsel %vm1518, %v8238, %v8242
      %v8245 = vshrl.u32 %v7923, 16
      %v8247 = vrot.slane %v8245, 4
      %v8248 = vshll.u32 %v7923, 16
      %v8250 = vrot.slane %v8248, 5
      %v8251 = vor.u32 %v8247, %v8250
      %v8252 = vrot.slane %v8251, 4
      %v8254 = vshll.u32 %v7924, 16
      %v8256 = vrot.slane %v8254, 5
      %v8257 = vsel %vm1518, %v8252, %v8256
      %v8258 = vshrl.u32 %v7924, 16
      %v8260 = vrot.slane %v8258, 4
      %v8261 = vor.u32 %v8260, %v8256
      %v8262 = vrot.slane %v8261, 4
      %v8264 = vshll.u32 %v7925, 16
      %v8266 = vrot.slane %v8264, 5
      %v8267 = vsel %vm1518, %v8262, %v8266
      %v8269 = vshrl.u32 %v7926, 16
      %v8271 = vrot.slane %v8269, 4
      %v8272 = vshll.u32 %v7926, 16
      %v8274 = vrot.slane %v8272, 5
      %v8275 = vor.u32 %v8271, %v8274
      %v8276 = vrot.slane %v8275, 4
      %v8278 = vshll.u32 %v7927, 16
      %v8280 = vrot.slane %v8278, 5
      %v8281 = vsel %vm1518, %v8276, %v8280
      %v8282 = vshrl.u32 %v7927, 16
      %v8284 = vrot.slane %v8282, 4
      %v8285 = vor.u32 %v8284, %v8280
      %v8286 = vrot.slane %v8285, 4
      %v8288 = vshll.u32 %v7928, 16
      %v8290 = vrot.slane %v8288, 5
      %v8291 = vsel %vm1518, %v8286, %v8290
      %v8293 = vshrl.u32 %v7929, 16
      %v8295 = vrot.slane %v8293, 4
      %v8296 = vshll.u32 %v7929, 16
      %v8298 = vrot.slane %v8296, 5
      %v8299 = vor.u32 %v8295, %v8298
      %v8300 = vrot.slane %v8299, 4
      %v8302 = vshll.u32 %v7930, 16
      %v8304 = vrot.slane %v8302, 5
      %v8305 = vsel %vm1518, %v8300, %v8304
      %v8306 = vshrl.u32 %v7930, 16
      %v8308 = vrot.slane %v8306, 4
      %v8309 = vor.u32 %v8308, %v8304
      %v8310 = vrot.slane %v8309, 4
      %v8312 = vshll.u32 %v7931, 16
      %v8314 = vrot.slane %v8312, 5
      %v8315 = vsel %vm1518, %v8310, %v8314
      %s8316 = scalar_lea.vmem %s4, 16
      %v8317 = vld [vmem:[%s8316] sm:$0xf]
      %v8318 = vunpack.c.l.b16 %v7945
      %v8319 = vunpack.c.l.b16 %v7955
      %v8320 = vunpack.c.l.b16 %v7969
      %v8321 = vunpack.c.l.b16 %v7979
      %v8322 = vunpack.c.l.b16 %v7993
      %v8323 = vunpack.c.l.b16 %v8003
      %v8324 = vunpack.c.l.b16 %v8017
      %v8325 = vunpack.c.l.b16 %v8027
      %v8326 = vunpack.c.l.b16 %v8041
      %v8327 = vunpack.c.l.b16 %v8051
      %v8328 = vunpack.c.l.b16 %v8065
      %v8329 = vunpack.c.l.b16 %v8075
      %v8330 = vunpack.c.l.b16 %v8089
      %v8331 = vunpack.c.l.b16 %v8099
      %v8332 = vunpack.c.l.b16 %v8113
      %v8333 = vunpack.c.l.b16 %v8123
      %v8334 = vunpack.c.l.b16 %v8137
      %v8335 = vunpack.c.l.b16 %v8147
      %v8336 = vunpack.c.l.b16 %v8161
      %v8337 = vunpack.c.l.b16 %v8171
      %v8338 = vunpack.c.l.b16 %v8185
      %v8339 = vunpack.c.l.b16 %v8195
      %v8340 = vunpack.c.l.b16 %v8209
      %v8341 = vunpack.c.l.b16 %v8219
      %v8342 = vunpack.c.l.b16 %v8233
      %v8343 = vunpack.c.l.b16 %v8243
      %v8344 = vunpack.c.l.b16 %v8257
      %v8345 = vunpack.c.l.b16 %v8267
      %v8346 = vunpack.c.l.b16 %v8281
      %v8347 = vunpack.c.l.b16 %v8291
      %v8348 = vunpack.c.l.b16 %v8305
      %v8349 = vunpack.c.l.b16 %v8315
      %v8350 = vpack.c.b16 %v8319, %v8318
      %v8351 = vpack.c.b16 %v8321, %v8320
      %v8352 = vpack.c.b16 %v8323, %v8322
      %v8353 = vpack.c.b16 %v8325, %v8324
      %v8354 = vpack.c.b16 %v8327, %v8326
      %v8355 = vpack.c.b16 %v8329, %v8328
      %v8356 = vpack.c.b16 %v8331, %v8330
      %v8357 = vpack.c.b16 %v8333, %v8332
      %v8358 = vpack.c.b16 %v8335, %v8334
      %v8359 = vpack.c.b16 %v8337, %v8336
      %v8360 = vpack.c.b16 %v8339, %v8338
      %v8361 = vpack.c.b16 %v8341, %v8340
      %v8362 = vpack.c.b16 %v8343, %v8342
      %v8363 = vpack.c.b16 %v8345, %v8344
      %v8364 = vpack.c.b16 %v8347, %v8346
      %v8365 = vpack.c.b16 %v8349, %v8348
      %v8367 = vsel %vm1953, %v8317, 0
      %v8370 = vsel %vm1953, %v8350, 0
      %v8373 = vsel %vm1953, %v8351, 0
      %v8376 = vsel %vm1953, %v8352, 0
      %v8379 = vsel %vm1953, %v8353, 0
      %v8382 = vsel %vm1953, %v8354, 0
      %v8385 = vsel %vm1953, %v8355, 0
      %v8388 = vsel %vm1953, %v8356, 0
      %v8391 = vsel %vm1953, %v8357, 0
      %v8394 = vsel %vm1953, %v8358, 0
      %v8397 = vsel %vm1953, %v8359, 0
      %v8400 = vsel %vm1953, %v8360, 0
      %v8403 = vsel %vm1953, %v8361, 0
      %v8406 = vsel %vm1953, %v8362, 0
      %v8409 = vsel %vm1953, %v8363, 0
      %v8412 = vsel %vm1953, %v8364, 0
      %v8415 = vsel %vm1953, %v8365, 0
      %8417 = vmatprep.subr.bf16.mxu0 0
      %8418 = vmatpush1.bf16.xpose.msra.mxu0 %v8370
      %8419 = vmatprep.subr.bf16.mxu0 0
      %8420 = vmatpush1.bf16.xpose.msra.mxu0 %v8373
      %8421 = vmatprep.subr.bf16.mxu0 0
      %8422 = vmatpush1.bf16.xpose.msra.mxu0 %v8376
      %8423 = vmatprep.subr.bf16.mxu0 0
      %8424 = vmatpush1.bf16.xpose.msra.mxu0 %v8379
      %8425 = vmatprep.subr.bf16.mxu0 0
      %8426 = vmatpush1.bf16.xpose.msra.mxu0 %v8382
      %8427 = vmatprep.subr.bf16.mxu0 0
      %8428 = vmatpush1.bf16.xpose.msra.mxu0 %v8385
      %8429 = vmatprep.subr.bf16.mxu0 0
      %8430 = vmatpush1.bf16.xpose.msra.mxu0 %v8388
      %8431 = vmatprep.subr.bf16.mxu0 0
      %8432 = vmatpush1.bf16.xpose.msra.mxu0 %v8391
      %8433 = vmatprep.subr.bf16.mxu0 0
      %8434 = vmatpush1.bf16.xpose.msra.mxu0 %v8394
      %8435 = vmatprep.subr.bf16.mxu0 0
      %8436 = vmatpush1.bf16.xpose.msra.mxu0 %v8397
      %8437 = vmatprep.subr.bf16.mxu0 0
      %8438 = vmatpush1.bf16.xpose.msra.mxu0 %v8400
      %8439 = vmatprep.subr.bf16.mxu0 0
      %8440 = vmatpush1.bf16.xpose.msra.mxu0 %v8403
      %8441 = vmatprep.subr.bf16.mxu0 0
      %8442 = vmatpush1.bf16.xpose.msra.mxu0 %v8406
      %8443 = vmatprep.subr.bf16.mxu0 0
      %8444 = vmatpush1.bf16.xpose.msra.mxu0 %v8409
      %8445 = vmatprep.subr.bf16.mxu0 0
      %8446 = vmatpush1.bf16.xpose.msra.mxu0 %v8412
      %8447 = vmatprep.subr.bf16.mxu0 0
      %8448 = vmatpush1.bf16.xpose.msra.mxu0 %v8415
      %8449 = vmatprep.mubr.bf16.mxu0 0
      %8450 = vmatmul.mubr.bf16.gmra.mrb[0].mxu0 %v8367
      %v8451 = vpop.f32.mrb[0].mxu0
      %v8452 = vadd.f32 0.0, %v8451
      %v8453 = vpop.f32.mrb[0].mxu0
      %v8454 = vadd.f32 0.0, %v8453
      %v8455 = vpop.f32.mrb[0].mxu0
      %v8456 = vpop.f32.mrb[0].mxu0
      %8457 = vdwg.mxu0
      %v8458 = vadd.f32 %v7882, %v8452
      %v8459 = vadd.f32 %v7883, %v8454
      %v8460 = vld [vmem:[%s6512] sm:$0xe]
      %v8461 = vld [vmem:[%s6512 + $0xc] sm:$0xe]
      %v8462 = vld [vmem:[%s6512 + $0x18] sm:$0xe]
      %v8463 = vld [vmem:[%s6512 + $0x24] sm:$0xe]
      %v8464 = vld [vmem:[%s6512 + $0x30] sm:$0xe]
      %v8465 = vld [vmem:[%s6512 + $0x3c] sm:$0xe]
      %v8466 = vld [vmem:[%s6512 + $0x48] sm:$0xe]
      %v8467 = vld [vmem:[%s6512 + $0x54] sm:$0xe]
      %v8468 = vld [vmem:[%s6512 + $0x60] sm:$0xe]
      %v8469 = vld [vmem:[%s6512 + $0x6c] sm:$0xe]
      %v8470 = vld [vmem:[%s6512 + $0x78] sm:$0xe]
      %v8471 = vld [vmem:[%s6512 + $0x84] sm:$0xe]
      %v8472 = vld [vmem:[%s6512 + $0x90] sm:$0xe]
      %v8473 = vld [vmem:[%s6512 + $0x9c] sm:$0xe]
      %v8474 = vld [vmem:[%s6512 + $0xa8] sm:$0xe]
      %v8475 = vld [vmem:[%s6512 + $0xb4] sm:$0xe]
      %v8524 = vrot.slane %v8460, 5
      %v8525 = vrot.slane %v8524, 4
      %v8526 = vrot.slane %v7885, 5
      %v8527 = vsel %vm2509, %v8525, %v8526
      %v8528 = vrot.slane %v8526, 4
      %v8529 = vrot.slane %v7886, 5
      %v8530 = vsel %vm2509, %v8528, %v8529
      %v8531 = vrot.slane %v8461, 5
      %v8532 = vrot.slane %v8531, 4
      %v8533 = vrot.slane %v7888, 5
      %v8534 = vsel %vm2509, %v8532, %v8533
      %v8535 = vrot.slane %v8533, 4
      %v8536 = vrot.slane %v7889, 5
      %v8537 = vsel %vm2509, %v8535, %v8536
      %v8538 = vrot.slane %v8462, 5
      %v8539 = vrot.slane %v8538, 4
      %v8540 = vrot.slane %v7891, 5
      %v8541 = vsel %vm2509, %v8539, %v8540
      %v8542 = vrot.slane %v8540, 4
      %v8543 = vrot.slane %v7892, 5
      %v8544 = vsel %vm2509, %v8542, %v8543
      %v8545 = vrot.slane %v8463, 5
      %v8546 = vrot.slane %v8545, 4
      %v8547 = vrot.slane %v7894, 5
      %v8548 = vsel %vm2509, %v8546, %v8547
      %v8549 = vrot.slane %v8547, 4
      %v8550 = vrot.slane %v7895, 5
      %v8551 = vsel %vm2509, %v8549, %v8550
      %v8552 = vrot.slane %v8464, 5
      %v8553 = vrot.slane %v8552, 4
      %v8554 = vrot.slane %v7897, 5
      %v8555 = vsel %vm2509, %v8553, %v8554
      %v8556 = vrot.slane %v8554, 4
      %v8557 = vrot.slane %v7898, 5
      %v8558 = vsel %vm2509, %v8556, %v8557
      %v8559 = vrot.slane %v8465, 5
      %v8560 = vrot.slane %v8559, 4
      %v8561 = vrot.slane %v7900, 5
      %v8562 = vsel %vm2509, %v8560, %v8561
      %v8563 = vrot.slane %v8561, 4
      %v8564 = vrot.slane %v7901, 5
      %v8565 = vsel %vm2509, %v8563, %v8564
      %v8566 = vrot.slane %v8466, 5
      %v8567 = vrot.slane %v8566, 4
      %v8568 = vrot.slane %v7903, 5
      %v8569 = vsel %vm2509, %v8567, %v8568
      %v8570 = vrot.slane %v8568, 4
      %v8571 = vrot.slane %v7904, 5
      %v8572 = vsel %vm2509, %v8570, %v8571
      %v8573 = vrot.slane %v8467, 5
      %v8574 = vrot.slane %v8573, 4
      %v8575 = vrot.slane %v7906, 5
      %v8576 = vsel %vm2509, %v8574, %v8575
      %v8577 = vrot.slane %v8575, 4
      %v8578 = vrot.slane %v7907, 5
      %v8579 = vsel %vm2509, %v8577, %v8578
      %v8580 = vrot.slane %v8468, 5
      %v8581 = vrot.slane %v8580, 4
      %v8582 = vrot.slane %v7909, 5
      %v8583 = vsel %vm2509, %v8581, %v8582
      %v8584 = vrot.slane %v8582, 4
      %v8585 = vrot.slane %v7910, 5
      %v8586 = vsel %vm2509, %v8584, %v8585
      %v8587 = vrot.slane %v8469, 5
      %v8588 = vrot.slane %v8587, 4
      %v8589 = vrot.slane %v7912, 5
      %v8590 = vsel %vm2509, %v8588, %v8589
      %v8591 = vrot.slane %v8589, 4
      %v8592 = vrot.slane %v7913, 5
      %v8593 = vsel %vm2509, %v8591, %v8592
      %v8594 = vrot.slane %v8470, 5
      %v8595 = vrot.slane %v8594, 4
      %v8596 = vrot.slane %v7915, 5
      %v8597 = vsel %vm2509, %v8595, %v8596
      %v8598 = vrot.slane %v8596, 4
      %v8599 = vrot.slane %v7916, 5
      %v8600 = vsel %vm2509, %v8598, %v8599
      %v8601 = vrot.slane %v8471, 5
      %v8602 = vrot.slane %v8601, 4
      %v8603 = vrot.slane %v7918, 5
      %v8604 = vsel %vm2509, %v8602, %v8603
      %v8605 = vrot.slane %v8603, 4
      %v8606 = vrot.slane %v7919, 5
      %v8607 = vsel %vm2509, %v8605, %v8606
      %v8608 = vrot.slane %v8472, 5
      %v8609 = vrot.slane %v8608, 4
      %v8610 = vrot.slane %v7921, 5
      %v8611 = vsel %vm2509, %v8609, %v8610
      %v8612 = vrot.slane %v8610, 4
      %v8613 = vrot.slane %v7922, 5
      %v8614 = vsel %vm2509, %v8612, %v8613
      %v8615 = vrot.slane %v8473, 5
      %v8616 = vrot.slane %v8615, 4
      %v8617 = vrot.slane %v7924, 5
      %v8618 = vsel %vm2509, %v8616, %v8617
      %v8619 = vrot.slane %v8617, 4
      %v8620 = vrot.slane %v7925, 5
      %v8621 = vsel %vm2509, %v8619, %v8620
      %v8622 = vrot.slane %v8474, 5
      %v8623 = vrot.slane %v8622, 4
      %v8624 = vrot.slane %v7927, 5
      %v8625 = vsel %vm2509, %v8623, %v8624
      %v8626 = vrot.slane %v8624, 4
      %v8627 = vrot.slane %v7928, 5
      %v8628 = vsel %vm2509, %v8626, %v8627
      %v8629 = vrot.slane %v8475, 5
      %v8630 = vrot.slane %v8629, 4
      %v8631 = vrot.slane %v7930, 5
      %v8632 = vsel %vm2509, %v8630, %v8631
      %v8633 = vrot.slane %v8631, 4
      %v8634 = vrot.slane %v7931, 5
      %v8635 = vsel %vm2509, %v8633, %v8634
      %s8636 = scalar_lea.vmem %s4, 20
      %v8637 = vld [vmem:[%s8636] sm:$0xf]
      %v8638 = vunpack.c.l.b16 %v8527
      %v8639 = vunpack.c.l.b16 %v8530
      %v8640 = vunpack.c.l.b16 %v8534
      %v8641 = vunpack.c.l.b16 %v8537
      %v8642 = vunpack.c.l.b16 %v8541
      %v8643 = vunpack.c.l.b16 %v8544
      %v8644 = vunpack.c.l.b16 %v8548
      %v8645 = vunpack.c.l.b16 %v8551
      %v8646 = vunpack.c.l.b16 %v8555
      %v8647 = vunpack.c.l.b16 %v8558
      %v8648 = vunpack.c.l.b16 %v8562
      %v8649 = vunpack.c.l.b16 %v8565
      %v8650 = vunpack.c.l.b16 %v8569
      %v8651 = vunpack.c.l.b16 %v8572
      %v8652 = vunpack.c.l.b16 %v8576
      %v8653 = vunpack.c.l.b16 %v8579
      %v8654 = vunpack.c.l.b16 %v8583
      %v8655 = vunpack.c.l.b16 %v8586
      %v8656 = vunpack.c.l.b16 %v8590
      %v8657 = vunpack.c.l.b16 %v8593
      %v8658 = vunpack.c.l.b16 %v8597
      %v8659 = vunpack.c.l.b16 %v8600
      %v8660 = vunpack.c.l.b16 %v8604
      %v8661 = vunpack.c.l.b16 %v8607
      %v8662 = vunpack.c.l.b16 %v8611
      %v8663 = vunpack.c.l.b16 %v8614
      %v8664 = vunpack.c.l.b16 %v8618
      %v8665 = vunpack.c.l.b16 %v8621
      %v8666 = vunpack.c.l.b16 %v8625
      %v8667 = vunpack.c.l.b16 %v8628
      %v8668 = vunpack.c.l.b16 %v8632
      %v8669 = vunpack.c.l.b16 %v8635
      %v8670 = vpack.c.b16 %v8639, %v8638
      %v8671 = vpack.c.b16 %v8641, %v8640
      %v8672 = vpack.c.b16 %v8643, %v8642
      %v8673 = vpack.c.b16 %v8645, %v8644
      %v8674 = vpack.c.b16 %v8647, %v8646
      %v8675 = vpack.c.b16 %v8649, %v8648
      %v8676 = vpack.c.b16 %v8651, %v8650
      %v8677 = vpack.c.b16 %v8653, %v8652
      %v8678 = vpack.c.b16 %v8655, %v8654
      %v8679 = vpack.c.b16 %v8657, %v8656
      %v8680 = vpack.c.b16 %v8659, %v8658
      %v8681 = vpack.c.b16 %v8661, %v8660
      %v8682 = vpack.c.b16 %v8663, %v8662
      %v8683 = vpack.c.b16 %v8665, %v8664
      %v8684 = vpack.c.b16 %v8667, %v8666
      %v8685 = vpack.c.b16 %v8669, %v8668
      %v8687 = vsel %vm1953, %v8637, 0
      %v8690 = vsel %vm1953, %v8670, 0
      %v8693 = vsel %vm1953, %v8671, 0
      %v8696 = vsel %vm1953, %v8672, 0
      %v8699 = vsel %vm1953, %v8673, 0
      %v8702 = vsel %vm1953, %v8674, 0
      %v8705 = vsel %vm1953, %v8675, 0
      %v8708 = vsel %vm1953, %v8676, 0
      %v8711 = vsel %vm1953, %v8677, 0
      %v8714 = vsel %vm1953, %v8678, 0
      %v8717 = vsel %vm1953, %v8679, 0
      %v8720 = vsel %vm1953, %v8680, 0
      %v8723 = vsel %vm1953, %v8681, 0
      %v8726 = vsel %vm1953, %v8682, 0
      %v8729 = vsel %vm1953, %v8683, 0
      %v8732 = vsel %vm1953, %v8684, 0
      %v8735 = vsel %vm1953, %v8685, 0
      %8737 = vmatprep.subr.bf16.mxu0 0
      %8738 = vmatpush1.bf16.xpose.msra.mxu0 %v8690
      %8739 = vmatprep.subr.bf16.mxu0 0
      %8740 = vmatpush1.bf16.xpose.msra.mxu0 %v8693
      %8741 = vmatprep.subr.bf16.mxu0 0
      %8742 = vmatpush1.bf16.xpose.msra.mxu0 %v8696
      %8743 = vmatprep.subr.bf16.mxu0 0
      %8744 = vmatpush1.bf16.xpose.msra.mxu0 %v8699
      %8745 = vmatprep.subr.bf16.mxu0 0
      %8746 = vmatpush1.bf16.xpose.msra.mxu0 %v8702
      %8747 = vmatprep.subr.bf16.mxu0 0
      %8748 = vmatpush1.bf16.xpose.msra.mxu0 %v8705
      %8749 = vmatprep.subr.bf16.mxu0 0
      %8750 = vmatpush1.bf16.xpose.msra.mxu0 %v8708
      %8751 = vmatprep.subr.bf16.mxu0 0
      %8752 = vmatpush1.bf16.xpose.msra.mxu0 %v8711
      %8753 = vmatprep.subr.bf16.mxu0 0
      %8754 = vmatpush1.bf16.xpose.msra.mxu0 %v8714
      %8755 = vmatprep.subr.bf16.mxu0 0
      %8756 = vmatpush1.bf16.xpose.msra.mxu0 %v8717
      %8757 = vmatprep.subr.bf16.mxu0 0
      %8758 = vmatpush1.bf16.xpose.msra.mxu0 %v8720
      %8759 = vmatprep.subr.bf16.mxu0 0
      %8760 = vmatpush1.bf16.xpose.msra.mxu0 %v8723
      %8761 = vmatprep.subr.bf16.mxu0 0
      %8762 = vmatpush1.bf16.xpose.msra.mxu0 %v8726
      %8763 = vmatprep.subr.bf16.mxu0 0
      %8764 = vmatpush1.bf16.xpose.msra.mxu0 %v8729
      %8765 = vmatprep.subr.bf16.mxu0 0
      %8766 = vmatpush1.bf16.xpose.msra.mxu0 %v8732
      %8767 = vmatprep.subr.bf16.mxu0 0
      %8768 = vmatpush1.bf16.xpose.msra.mxu0 %v8735
      %8769 = vmatprep.mubr.bf16.mxu0 0
      %8770 = vmatmul.mubr.bf16.gmra.mrb[0].mxu0 %v8687
      %v8771 = vpop.f32.mrb[0].mxu0
      %v8772 = vadd.f32 0.0, %v8771
      %v8773 = vpop.f32.mrb[0].mxu0
      %v8774 = vadd.f32 0.0, %v8773
      %v8775 = vpop.f32.mrb[0].mxu0
      %v8776 = vpop.f32.mrb[0].mxu0
      %8777 = vdwg.mxu0
      %v8778 = vadd.f32 %v8458, %v8772
      %v8779 = vadd.f32 %v8459, %v8774
      %s8780 = scalar_lea.vmem [#allocation3], 24
      %v8781 = vld [vmem:[%s8780] sm:$0xf]
      %v8782 = vld [vmem:[%s8780 + $0x4] sm:$0xf]
      %v8783 = vld [vmem:[%s8780 + $0xc] sm:$0xf]
      %v8784 = vld [vmem:[%s8780 + $0x10] sm:$0xf]
      %v8785 = vld [vmem:[%s8780 + $0x18] sm:$0xf]
      %v8786 = vld [vmem:[%s8780 + $0x1c] sm:$0xf]
      %v8787 = vld [vmem:[%s8780 + $0x24] sm:$0xf]
      %v8788 = vld [vmem:[%s8780 + $0x28] sm:$0xf]
      %v8789 = vld [vmem:[%s8780 + $0x30] sm:$0xf]
      %v8790 = vld [vmem:[%s8780 + $0x34] sm:$0xf]
      %v8791 = vld [vmem:[%s8780 + $0x3c] sm:$0xf]
      %v8792 = vld [vmem:[%s8780 + $0x40] sm:$0xf]
      %v8793 = vld [vmem:[%s8780 + $0x48] sm:$0xf]
      %v8794 = vld [vmem:[%s8780 + $0x4c] sm:$0xf]
      %v8795 = vld [vmem:[%s8780 + $0x54] sm:$0xf]
      %v8796 = vld [vmem:[%s8780 + $0x58] sm:$0xf]
      %v8797 = vld [vmem:[%s8780 + $0x60] sm:$0xf]
      %v8798 = vld [vmem:[%s8780 + $0x64] sm:$0xf]
      %v8799 = vld [vmem:[%s8780 + $0x6c] sm:$0xf]
      %v8800 = vld [vmem:[%s8780 + $0x70] sm:$0xf]
      %v8801 = vld [vmem:[%s8780 + $0x78] sm:$0xf]
      %v8802 = vld [vmem:[%s8780 + $0x7c] sm:$0xf]
      %v8803 = vld [vmem:[%s8780 + $0x84] sm:$0xf]
      %v8804 = vld [vmem:[%s8780 + $0x88] sm:$0xf]
      %v8805 = vld [vmem:[%s8780 + $0x90] sm:$0xf]
      %v8806 = vld [vmem:[%s8780 + $0x94] sm:$0xf]
      %v8807 = vld [vmem:[%s8780 + $0x9c] sm:$0xf]
      %v8808 = vld [vmem:[%s8780 + $0xa0] sm:$0xf]
      %v8809 = vld [vmem:[%s8780 + $0xa8] sm:$0xf]
      %v8810 = vld [vmem:[%s8780 + $0xac] sm:$0xf]
      %v8811 = vld [vmem:[%s8780 + $0xb4] sm:$0xf]
      %v8812 = vld [vmem:[%s8780 + $0xb8] sm:$0xf]
      %s8813 = scalar_lea.vmem %s4, 24
      %v8814 = vld [vmem:[%s8813] sm:$0xf]
      %v8847 = vunpack.c.l.b16 %v8781
      %v8848 = vunpack.c.l.b16 %v8782
      %v8849 = vunpack.c.l.b16 %v8783
      %v8850 = vunpack.c.l.b16 %v8784
      %v8851 = vunpack.c.l.b16 %v8785
      %v8852 = vunpack.c.l.b16 %v8786
      %v8853 = vunpack.c.l.b16 %v8787
      %v8854 = vunpack.c.l.b16 %v8788
      %v8855 = vunpack.c.l.b16 %v8789
      %v8856 = vunpack.c.l.b16 %v8790
      %v8857 = vunpack.c.l.b16 %v8791
      %v8858 = vunpack.c.l.b16 %v8792
      %v8859 = vunpack.c.l.b16 %v8793
      %v8860 = vunpack.c.l.b16 %v8794
      %v8861 = vunpack.c.l.b16 %v8795
      %v8862 = vunpack.c.l.b16 %v8796
      %v8863 = vunpack.c.l.b16 %v8797
      %v8864 = vunpack.c.l.b16 %v8798
      %v8865 = vunpack.c.l.b16 %v8799
      %v8866 = vunpack.c.l.b16 %v8800
      %v8867 = vunpack.c.l.b16 %v8801
      %v8868 = vunpack.c.l.b16 %v8802
      %v8869 = vunpack.c.l.b16 %v8803
      %v8870 = vunpack.c.l.b16 %v8804
      %v8871 = vunpack.c.l.b16 %v8805
      %v8872 = vunpack.c.l.b16 %v8806
      %v8873 = vunpack.c.l.b16 %v8807
      %v8874 = vunpack.c.l.b16 %v8808
      %v8875 = vunpack.c.l.b16 %v8809
      %v8876 = vunpack.c.l.b16 %v8810
      %v8877 = vunpack.c.l.b16 %v8811
      %v8878 = vunpack.c.l.b16 %v8812
      %v8879 = vpack.c.b16 %v8848, %v8847
      %v8880 = vpack.c.b16 %v8850, %v8849
      %v8881 = vpack.c.b16 %v8852, %v8851
      %v8882 = vpack.c.b16 %v8854, %v8853
      %v8883 = vpack.c.b16 %v8856, %v8855
      %v8884 = vpack.c.b16 %v8858, %v8857
      %v8885 = vpack.c.b16 %v8860, %v8859
      %v8886 = vpack.c.b16 %v8862, %v8861
      %v8887 = vpack.c.b16 %v8864, %v8863
      %v8888 = vpack.c.b16 %v8866, %v8865
      %v8889 = vpack.c.b16 %v8868, %v8867
      %v8890 = vpack.c.b16 %v8870, %v8869
      %v8891 = vpack.c.b16 %v8872, %v8871
      %v8892 = vpack.c.b16 %v8874, %v8873
      %v8893 = vpack.c.b16 %v8876, %v8875
      %v8894 = vpack.c.b16 %v8878, %v8877
      %v8896 = vsel %vm1953, %v8814, 0
      %v8899 = vsel %vm1953, %v8879, 0
      %v8902 = vsel %vm1953, %v8880, 0
      %v8905 = vsel %vm1953, %v8881, 0
      %v8908 = vsel %vm1953, %v8882, 0
      %v8911 = vsel %vm1953, %v8883, 0
      %v8914 = vsel %vm1953, %v8884, 0
      %v8917 = vsel %vm1953, %v8885, 0
      %v8920 = vsel %vm1953, %v8886, 0
      %v8923 = vsel %vm1953, %v8887, 0
      %v8926 = vsel %vm1953, %v8888, 0
      %v8929 = vsel %vm1953, %v8889, 0
      %v8932 = vsel %vm1953, %v8890, 0
      %v8935 = vsel %vm1953, %v8891, 0
      %v8938 = vsel %vm1953, %v8892, 0
      %v8941 = vsel %vm1953, %v8893, 0
      %v8944 = vsel %vm1953, %v8894, 0
      %8946 = vmatprep.subr.bf16.mxu0 0
      %8947 = vmatpush1.bf16.xpose.msra.mxu0 %v8899
      %8948 = vmatprep.subr.bf16.mxu0 0
      %8949 = vmatpush1.bf16.xpose.msra.mxu0 %v8902
      %8950 = vmatprep.subr.bf16.mxu0 0
      %8951 = vmatpush1.bf16.xpose.msra.mxu0 %v8905
      %8952 = vmatprep.subr.bf16.mxu0 0
      %8953 = vmatpush1.bf16.xpose.msra.mxu0 %v8908
      %8954 = vmatprep.subr.bf16.mxu0 0
      %8955 = vmatpush1.bf16.xpose.msra.mxu0 %v8911
      %8956 = vmatprep.subr.bf16.mxu0 0
      %8957 = vmatpush1.bf16.xpose.msra.mxu0 %v8914
      %8958 = vmatprep.subr.bf16.mxu0 0
      %8959 = vmatpush1.bf16.xpose.msra.mxu0 %v8917
      %8960 = vmatprep.subr.bf16.mxu0 0
      %8961 = vmatpush1.bf16.xpose.msra.mxu0 %v8920
      %8962 = vmatprep.subr.bf16.mxu0 0
      %8963 = vmatpush1.bf16.xpose.msra.mxu0 %v8923
      %8964 = vmatprep.subr.bf16.mxu0 0
      %8965 = vmatpush1.bf16.xpose.msra.mxu0 %v8926
      %8966 = vmatprep.subr.bf16.mxu0 0
      %8967 = vmatpush1.bf16.xpose.msra.mxu0 %v8929
      %8968 = vmatprep.subr.bf16.mxu0 0
      %8969 = vmatpush1.bf16.xpose.msra.mxu0 %v8932
      %8970 = vmatprep.subr.bf16.mxu0 0
      %8971 = vmatpush1.bf16.xpose.msra.mxu0 %v8935
      %8972 = vmatprep.subr.bf16.mxu0 0
      %8973 = vmatpush1.bf16.xpose.msra.mxu0 %v8938
      %8974 = vmatprep.subr.bf16.mxu0 0
      %8975 = vmatpush1.bf16.xpose.msra.mxu0 %v8941
      %8976 = vmatprep.subr.bf16.mxu0 0
      %8977 = vmatpush1.bf16.xpose.msra.mxu0 %v8944
      %8978 = vmatprep.mubr.bf16.mxu0 0
      %8979 = vmatmul.mubr.bf16.gmra.mrb[0].mxu0 %v8896
      %v8980 = vpop.f32.mrb[0].mxu0
      %v8981 = vadd.f32 0.0, %v8980
      %v8982 = vpop.f32.mrb[0].mxu0
      %v8983 = vadd.f32 0.0, %v8982
      %v8984 = vpop.f32.mrb[0].mxu0
      %v8985 = vpop.f32.mrb[0].mxu0
      %8986 = vdwg.mxu0
      %v8987 = vadd.f32 %v8778, %v8981
      %v8988 = vadd.f32 %v8779, %v8983
      %v8989 = vld [vmem:[%s8780] sm:$0xf]
      %v8990 = vld [vmem:[%s8780 + $0x4] sm:$0xf]
      %v8991 = vld [vmem:[%s8780 + $0x8] sm:$0x1]
      %v8992 = vld [vmem:[%s8780 + $0xc] sm:$0xf]
      %v8993 = vld [vmem:[%s8780 + $0x10] sm:$0xf]
      %v8994 = vld [vmem:[%s8780 + $0x14] sm:$0x1]
      %v8995 = vld [vmem:[%s8780 + $0x18] sm:$0xf]
      %v8996 = vld [vmem:[%s8780 + $0x1c] sm:$0xf]
      %v8997 = vld [vmem:[%s8780 + $0x20] sm:$0x1]
      %v8998 = vld [vmem:[%s8780 + $0x24] sm:$0xf]
      %v8999 = vld [vmem:[%s8780 + $0x28] sm:$0xf]
      %v9000 = vld [vmem:[%s8780 + $0x2c] sm:$0x1]
      %v9001 = vld [vmem:[%s8780 + $0x30] sm:$0xf]
      %v9002 = vld [vmem:[%s8780 + $0x34] sm:$0xf]
      %v9003 = vld [vmem:[%s8780 + $0x38] sm:$0x1]
      %v9004 = vld [vmem:[%s8780 + $0x3c] sm:$0xf]
      %v9005 = vld [vmem:[%s8780 + $0x40] sm:$0xf]
      %v9006 = vld [vmem:[%s8780 + $0x44] sm:$0x1]
      %v9007 = vld [vmem:[%s8780 + $0x48] sm:$0xf]
      %v9008 = vld [vmem:[%s8780 + $0x4c] sm:$0xf]
      %v9009 = vld [vmem:[%s8780 + $0x50] sm:$0x1]
      %v9010 = vld [vmem:[%s8780 + $0x54] sm:$0xf]
      %v9011 = vld [vmem:[%s8780 + $0x58] sm:$0xf]
      %v9012 = vld [vmem:[%s8780 + $0x5c] sm:$0x1]
      %v9013 = vld [vmem:[%s8780 + $0x60] sm:$0xf]
      %v9014 = vld [vmem:[%s8780 + $0x64] sm:$0xf]
      %v9015 = vld [vmem:[%s8780 + $0x68] sm:$0x1]
      %v9016 = vld [vmem:[%s8780 + $0x6c] sm:$0xf]
      %v9017 = vld [vmem:[%s8780 + $0x70] sm:$0xf]
      %v9018 = vld [vmem:[%s8780 + $0x74] sm:$0x1]
      %v9019 = vld [vmem:[%s8780 + $0x78] sm:$0xf]
      %v9020 = vld [vmem:[%s8780 + $0x7c] sm:$0xf]
      %v9021 = vld [vmem:[%s8780 + $0x80] sm:$0x1]
      %v9022 = vld [vmem:[%s8780 + $0x84] sm:$0xf]
      %v9023 = vld [vmem:[%s8780 + $0x88] sm:$0xf]
      %v9024 = vld [vmem:[%s8780 + $0x8c] sm:$0x1]
      %v9025 = vld [vmem:[%s8780 + $0x90] sm:$0xf]
      %v9026 = vld [vmem:[%s8780 + $0x94] sm:$0xf]
      %v9027 = vld [vmem:[%s8780 + $0x98] sm:$0x1]
      %v9028 = vld [vmem:[%s8780 + $0x9c] sm:$0xf]
      %v9029 = vld [vmem:[%s8780 + $0xa0] sm:$0xf]
      %v9030 = vld [vmem:[%s8780 + $0xa4] sm:$0x1]
      %v9031 = vld [vmem:[%s8780 + $0xa8] sm:$0xf]
      %v9032 = vld [vmem:[%s8780 + $0xac] sm:$0xf]
      %v9033 = vld [vmem:[%s8780 + $0xb0] sm:$0x1]
      %v9034 = vld [vmem:[%s8780 + $0xb4] sm:$0xf]
      %v9035 = vld [vmem:[%s8780 + $0xb8] sm:$0xf]
      %v9036 = vld [vmem:[%s8780 + $0xbc] sm:$0x1]
      %v9038 = vshrl.u32 %v8989, 16
      %v9040 = vrot.slane %v9038, 4
      %v9041 = vshll.u32 %v8989, 16
      %v9043 = vrot.slane %v9041, 5
      %v9044 = vor.u32 %v9040, %v9043
      %v9045 = vrot.slane %v9044, 4
      %v9047 = vshll.u32 %v8990, 16
      %v9049 = vrot.slane %v9047, 5
      %v9050 = vsel %vm1518, %v9045, %v9049
      %v9051 = vshrl.u32 %v8990, 16
      %v9053 = vrot.slane %v9051, 4
      %v9054 = vor.u32 %v9053, %v9049
      %v9055 = vrot.slane %v9054, 4
      %v9057 = vshll.u32 %v8991, 16
      %v9059 = vrot.slane %v9057, 5
      %v9060 = vsel %vm1518, %v9055, %v9059
      %v9062 = vshrl.u32 %v8992, 16
      %v9064 = vrot.slane %v9062, 4
      %v9065 = vshll.u32 %v8992, 16
      %v9067 = vrot.slane %v9065, 5
      %v9068 = vor.u32 %v9064, %v9067
      %v9069 = vrot.slane %v9068, 4
      %v9071 = vshll.u32 %v8993, 16
      %v9073 = vrot.slane %v9071, 5
      %v9074 = vsel %vm1518, %v9069, %v9073
      %v9075 = vshrl.u32 %v8993, 16
      %v9077 = vrot.slane %v9075, 4
      %v9078 = vor.u32 %v9077, %v9073
      %v9079 = vrot.slane %v9078, 4
      %v9081 = vshll.u32 %v8994, 16
      %v9083 = vrot.slane %v9081, 5
      %v9084 = vsel %vm1518, %v9079, %v9083
      %v9086 = vshrl.u32 %v8995, 16
      %v9088 = vrot.slane %v9086, 4
      %v9089 = vshll.u32 %v8995, 16
      %v9091 = vrot.slane %v9089, 5
      %v9092 = vor.u32 %v9088, %v9091
      %v9093 = vrot.slane %v9092, 4
      %v9095 = vshll.u32 %v8996, 16
      %v9097 = vrot.slane %v9095, 5
      %v9098 = vsel %vm1518, %v9093, %v9097
      %v9099 = vshrl.u32 %v8996, 16
      %v9101 = vrot.slane %v9099, 4
      %v9102 = vor.u32 %v9101, %v9097
      %v9103 = vrot.slane %v9102, 4
      %v9105 = vshll.u32 %v8997, 16
      %v9107 = vrot.slane %v9105, 5
      %v9108 = vsel %vm1518, %v9103, %v9107
      %v9110 = vshrl.u32 %v8998, 16
      %v9112 = vrot.slane %v9110, 4
      %v9113 = vshll.u32 %v8998, 16
      %v9115 = vrot.slane %v9113, 5
      %v9116 = vor.u32 %v9112, %v9115
      %v9117 = vrot.slane %v9116, 4
      %v9119 = vshll.u32 %v8999, 16
      %v9121 = vrot.slane %v9119, 5
      %v9122 = vsel %vm1518, %v9117, %v9121
      %v9123 = vshrl.u32 %v8999, 16
      %v9125 = vrot.slane %v9123, 4
      %v9126 = vor.u32 %v9125, %v9121
      %v9127 = vrot.slane %v9126, 4
      %v9129 = vshll.u32 %v9000, 16
      %v9131 = vrot.slane %v9129, 5
      %v9132 = vsel %vm1518, %v9127, %v9131
      %v9134 = vshrl.u32 %v9001, 16
      %v9136 = vrot.slane %v9134, 4
      %v9137 = vshll.u32 %v9001, 16
      %v9139 = vrot.slane %v9137, 5
      %v9140 = vor.u32 %v9136, %v9139
      %v9141 = vrot.slane %v9140, 4
      %v9143 = vshll.u32 %v9002, 16
      %v9145 = vrot.slane %v9143, 5
      %v9146 = vsel %vm1518, %v9141, %v9145
      %v9147 = vshrl.u32 %v9002, 16
      %v9149 = vrot.slane %v9147, 4
      %v9150 = vor.u32 %v9149, %v9145
      %v9151 = vrot.slane %v9150, 4
      %v9153 = vshll.u32 %v9003, 16
      %v9155 = vrot.slane %v9153, 5
      %v9156 = vsel %vm1518, %v9151, %v9155
      %v9158 = vshrl.u32 %v9004, 16
      %v9160 = vrot.slane %v9158, 4
      %v9161 = vshll.u32 %v9004, 16
      %v9163 = vrot.slane %v9161, 5
      %v9164 = vor.u32 %v9160, %v9163
      %v9165 = vrot.slane %v9164, 4
      %v9167 = vshll.u32 %v9005, 16
      %v9169 = vrot.slane %v9167, 5
      %v9170 = vsel %vm1518, %v9165, %v9169
      %v9171 = vshrl.u32 %v9005, 16
      %v9173 = vrot.slane %v9171, 4
      %v9174 = vor.u32 %v9173, %v9169
      %v9175 = vrot.slane %v9174, 4
      %v9177 = vshll.u32 %v9006, 16
      %v9179 = vrot.slane %v9177, 5
      %v9180 = vsel %vm1518, %v9175, %v9179
      %v9182 = vshrl.u32 %v9007, 16
      %v9184 = vrot.slane %v9182, 4
      %v9185 = vshll.u32 %v9007, 16
      %v9187 = vrot.slane %v9185, 5
      %v9188 = vor.u32 %v9184, %v9187
      %v9189 = vrot.slane %v9188, 4
      %v9191 = vshll.u32 %v9008, 16
      %v9193 = vrot.slane %v9191, 5
      %v9194 = vsel %vm1518, %v9189, %v9193
      %v9195 = vshrl.u32 %v9008, 16
      %v9197 = vrot.slane %v9195, 4
      %v9198 = vor.u32 %v9197, %v9193
      %v9199 = vrot.slane %v9198, 4
      %v9201 = vshll.u32 %v9009, 16
      %v9203 = vrot.slane %v9201, 5
      %v9204 = vsel %vm1518, %v9199, %v9203
      %v9206 = vshrl.u32 %v9010, 16
      %v9208 = vrot.slane %v9206, 4
      %v9209 = vshll.u32 %v9010, 16
      %v9211 = vrot.slane %v9209, 5
      %v9212 = vor.u32 %v9208, %v9211
      %v9213 = vrot.slane %v9212, 4
      %v9215 = vshll.u32 %v9011, 16
      %v9217 = vrot.slane %v9215, 5
      %v9218 = vsel %vm1518, %v9213, %v9217
      %v9219 = vshrl.u32 %v9011, 16
      %v9221 = vrot.slane %v9219, 4
      %v9222 = vor.u32 %v9221, %v9217
      %v9223 = vrot.slane %v9222, 4
      %v9225 = vshll.u32 %v9012, 16
      %v9227 = vrot.slane %v9225, 5
      %v9228 = vsel %vm1518, %v9223, %v9227
      %v9230 = vshrl.u32 %v9013, 16
      %v9232 = vrot.slane %v9230, 4
      %v9233 = vshll.u32 %v9013, 16
      %v9235 = vrot.slane %v9233, 5
      %v9236 = vor.u32 %v9232, %v9235
      %v9237 = vrot.slane %v9236, 4
      %v9239 = vshll.u32 %v9014, 16
      %v9241 = vrot.slane %v9239, 5
      %v9242 = vsel %vm1518, %v9237, %v9241
      %v9243 = vshrl.u32 %v9014, 16
      %v9245 = vrot.slane %v9243, 4
      %v9246 = vor.u32 %v9245, %v9241
      %v9247 = vrot.slane %v9246, 4
      %v9249 = vshll.u32 %v9015, 16
      %v9251 = vrot.slane %v9249, 5
      %v9252 = vsel %vm1518, %v9247, %v9251
      %v9254 = vshrl.u32 %v9016, 16
      %v9256 = vrot.slane %v9254, 4
      %v9257 = vshll.u32 %v9016, 16
      %v9259 = vrot.slane %v9257, 5
      %v9260 = vor.u32 %v9256, %v9259
      %v9261 = vrot.slane %v9260, 4
      %v9263 = vshll.u32 %v9017, 16
      %v9265 = vrot.slane %v9263, 5
      %v9266 = vsel %vm1518, %v9261, %v9265
      %v9267 = vshrl.u32 %v9017, 16
      %v9269 = vrot.slane %v9267, 4
      %v9270 = vor.u32 %v9269, %v9265
      %v9271 = vrot.slane %v9270, 4
      %v9273 = vshll.u32 %v9018, 16
      %v9275 = vrot.slane %v9273, 5
      %v9276 = vsel %vm1518, %v9271, %v9275
      %v9278 = vshrl.u32 %v9019, 16
      %v9280 = vrot.slane %v9278, 4
      %v9281 = vshll.u32 %v9019, 16
      %v9283 = vrot.slane %v9281, 5
      %v9284 = vor.u32 %v9280, %v9283
      %v9285 = vrot.slane %v9284, 4
      %v9287 = vshll.u32 %v9020, 16
      %v9289 = vrot.slane %v9287, 5
      %v9290 = vsel %vm1518, %v9285, %v9289
      %v9291 = vshrl.u32 %v9020, 16
      %v9293 = vrot.slane %v9291, 4
      %v9294 = vor.u32 %v9293, %v9289
      %v9295 = vrot.slane %v9294, 4
      %v9297 = vshll.u32 %v9021, 16
      %v9299 = vrot.slane %v9297, 5
      %v9300 = vsel %vm1518, %v9295, %v9299
      %v9302 = vshrl.u32 %v9022, 16
      %v9304 = vrot.slane %v9302, 4
      %v9305 = vshll.u32 %v9022, 16
      %v9307 = vrot.slane %v9305, 5
      %v9308 = vor.u32 %v9304, %v9307
      %v9309 = vrot.slane %v9308, 4
      %v9311 = vshll.u32 %v9023, 16
      %v9313 = vrot.slane %v9311, 5
      %v9314 = vsel %vm1518, %v9309, %v9313
      %v9315 = vshrl.u32 %v9023, 16
      %v9317 = vrot.slane %v9315, 4
      %v9318 = vor.u32 %v9317, %v9313
      %v9319 = vrot.slane %v9318, 4
      %v9321 = vshll.u32 %v9024, 16
      %v9323 = vrot.slane %v9321, 5
      %v9324 = vsel %vm1518, %v9319, %v9323
      %v9326 = vshrl.u32 %v9025, 16
      %v9328 = vrot.slane %v9326, 4
      %v9329 = vshll.u32 %v9025, 16
      %v9331 = vrot.slane %v9329, 5
      %v9332 = vor.u32 %v9328, %v9331
      %v9333 = vrot.slane %v9332, 4
      %v9335 = vshll.u32 %v9026, 16
      %v9337 = vrot.slane %v9335, 5
      %v9338 = vsel %vm1518, %v9333, %v9337
      %v9339 = vshrl.u32 %v9026, 16
      %v9341 = vrot.slane %v9339, 4
      %v9342 = vor.u32 %v9341, %v9337
      %v9343 = vrot.slane %v9342, 4
      %v9345 = vshll.u32 %v9027, 16
      %v9347 = vrot.slane %v9345, 5
      %v9348 = vsel %vm1518, %v9343, %v9347
      %v9350 = vshrl.u32 %v9028, 16
      %v9352 = vrot.slane %v9350, 4
      %v9353 = vshll.u32 %v9028, 16
      %v9355 = vrot.slane %v9353, 5
      %v9356 = vor.u32 %v9352, %v9355
      %v9357 = vrot.slane %v9356, 4
      %v9359 = vshll.u32 %v9029, 16
      %v9361 = vrot.slane %v9359, 5
      %v9362 = vsel %vm1518, %v9357, %v9361
      %v9363 = vshrl.u32 %v9029, 16
      %v9365 = vrot.slane %v9363, 4
      %v9366 = vor.u32 %v9365, %v9361
      %v9367 = vrot.slane %v9366, 4
      %v9369 = vshll.u32 %v9030, 16
      %v9371 = vrot.slane %v9369, 5
      %v9372 = vsel %vm1518, %v9367, %v9371
      %v9374 = vshrl.u32 %v9031, 16
      %v9376 = vrot.slane %v9374, 4
      %v9377 = vshll.u32 %v9031, 16
      %v9379 = vrot.slane %v9377, 5
      %v9380 = vor.u32 %v9376, %v9379
      %v9381 = vrot.slane %v9380, 4
      %v9383 = vshll.u32 %v9032, 16
      %v9385 = vrot.slane %v9383, 5
      %v9386 = vsel %vm1518, %v9381, %v9385
      %v9387 = vshrl.u32 %v9032, 16
      %v9389 = vrot.slane %v9387, 4
      %v9390 = vor.u32 %v9389, %v9385
      %v9391 = vrot.slane %v9390, 4
      %v9393 = vshll.u32 %v9033, 16
      %v9395 = vrot.slane %v9393, 5
      %v9396 = vsel %vm1518, %v9391, %v9395
      %v9398 = vshrl.u32 %v9034, 16
      %v9400 = vrot.slane %v9398, 4
      %v9401 = vshll.u32 %v9034, 16
      %v9403 = vrot.slane %v9401, 5
      %v9404 = vor.u32 %v9400, %v9403
      %v9405 = vrot.slane %v9404, 4
      %v9407 = vshll.u32 %v9035, 16
      %v9409 = vrot.slane %v9407, 5
      %v9410 = vsel %vm1518, %v9405, %v9409
      %v9411 = vshrl.u32 %v9035, 16
      %v9413 = vrot.slane %v9411, 4
      %v9414 = vor.u32 %v9413, %v9409
      %v9415 = vrot.slane %v9414, 4
      %v9417 = vshll.u32 %v9036, 16
      %v9419 = vrot.slane %v9417, 5
      %v9420 = vsel %vm1518, %v9415, %v9419
      %s9421 = scalar_lea.vmem %s4, 28
      %v9422 = vld [vmem:[%s9421] sm:$0xf]
      %v9423 = vunpack.c.l.b16 %v9050
      %v9424 = vunpack.c.l.b16 %v9060
      %v9425 = vunpack.c.l.b16 %v9074
      %v9426 = vunpack.c.l.b16 %v9084
      %v9427 = vunpack.c.l.b16 %v9098
      %v9428 = vunpack.c.l.b16 %v9108
      %v9429 = vunpack.c.l.b16 %v9122
      %v9430 = vunpack.c.l.b16 %v9132
      %v9431 = vunpack.c.l.b16 %v9146
      %v9432 = vunpack.c.l.b16 %v9156
      %v9433 = vunpack.c.l.b16 %v9170
      %v9434 = vunpack.c.l.b16 %v9180
      %v9435 = vunpack.c.l.b16 %v9194
      %v9436 = vunpack.c.l.b16 %v9204
      %v9437 = vunpack.c.l.b16 %v9218
      %v9438 = vunpack.c.l.b16 %v9228
      %v9439 = vunpack.c.l.b16 %v9242
      %v9440 = vunpack.c.l.b16 %v9252
      %v9441 = vunpack.c.l.b16 %v9266
      %v9442 = vunpack.c.l.b16 %v9276
      %v9443 = vunpack.c.l.b16 %v9290
      %v9444 = vunpack.c.l.b16 %v9300
      %v9445 = vunpack.c.l.b16 %v9314
      %v9446 = vunpack.c.l.b16 %v9324
      %v9447 = vunpack.c.l.b16 %v9338
      %v9448 = vunpack.c.l.b16 %v9348
      %v9449 = vunpack.c.l.b16 %v9362
      %v9450 = vunpack.c.l.b16 %v9372
      %v9451 = vunpack.c.l.b16 %v9386
      %v9452 = vunpack.c.l.b16 %v9396
      %v9453 = vunpack.c.l.b16 %v9410
      %v9454 = vunpack.c.l.b16 %v9420
      %v9455 = vpack.c.b16 %v9424, %v9423
      %v9456 = vpack.c.b16 %v9426, %v9425
      %v9457 = vpack.c.b16 %v9428, %v9427
      %v9458 = vpack.c.b16 %v9430, %v9429
      %v9459 = vpack.c.b16 %v9432, %v9431
      %v9460 = vpack.c.b16 %v9434, %v9433
      %v9461 = vpack.c.b16 %v9436, %v9435
      %v9462 = vpack.c.b16 %v9438, %v9437
      %v9463 = vpack.c.b16 %v9440, %v9439
      %v9464 = vpack.c.b16 %v9442, %v9441
      %v9465 = vpack.c.b16 %v9444, %v9443
      %v9466 = vpack.c.b16 %v9446, %v9445
      %v9467 = vpack.c.b16 %v9448, %v9447
      %v9468 = vpack.c.b16 %v9450, %v9449
      %v9469 = vpack.c.b16 %v9452, %v9451
      %v9470 = vpack.c.b16 %v9454, %v9453
      %v9472 = vsel %vm1953, %v9422, 0
      %v9475 = vsel %vm1953, %v9455, 0
      %v9478 = vsel %vm1953, %v9456, 0
      %v9481 = vsel %vm1953, %v9457, 0
      %v9484 = vsel %vm1953, %v9458, 0
      %v9487 = vsel %vm1953, %v9459, 0
      %v9490 = vsel %vm1953, %v9460, 0
      %v9493 = vsel %vm1953, %v9461, 0
      %v9496 = vsel %vm1953, %v9462, 0
      %v9499 = vsel %vm1953, %v9463, 0
      %v9502 = vsel %vm1953, %v9464, 0
      %v9505 = vsel %vm1953, %v9465, 0
      %v9508 = vsel %vm1953, %v9466, 0
      %v9511 = vsel %vm1953, %v9467, 0
      %v9514 = vsel %vm1953, %v9468, 0
      %v9517 = vsel %vm1953, %v9469, 0
      %v9520 = vsel %vm1953, %v9470, 0
      %9522 = vmatprep.subr.bf16.mxu0 0
      %9523 = vmatpush1.bf16.xpose.msra.mxu0 %v9475
      %9524 = vmatprep.subr.bf16.mxu0 0
      %9525 = vmatpush1.bf16.xpose.msra.mxu0 %v9478
      %9526 = vmatprep.subr.bf16.mxu0 0
      %9527 = vmatpush1.bf16.xpose.msra.mxu0 %v9481
      %9528 = vmatprep.subr.bf16.mxu0 0
      %9529 = vmatpush1.bf16.xpose.msra.mxu0 %v9484
      %9530 = vmatprep.subr.bf16.mxu0 0
      %9531 = vmatpush1.bf16.xpose.msra.mxu0 %v9487
      %9532 = vmatprep.subr.bf16.mxu0 0
      %9533 = vmatpush1.bf16.xpose.msra.mxu0 %v9490
      %9534 = vmatprep.subr.bf16.mxu0 0
      %9535 = vmatpush1.bf16.xpose.msra.mxu0 %v9493
      %9536 = vmatprep.subr.bf16.mxu0 0
      %9537 = vmatpush1.bf16.xpose.msra.mxu0 %v9496
      %9538 = vmatprep.subr.bf16.mxu0 0
      %9539 = vmatpush1.bf16.xpose.msra.mxu0 %v9499
      %9540 = vmatprep.subr.bf16.mxu0 0
      %9541 = vmatpush1.bf16.xpose.msra.mxu0 %v9502
      %9542 = vmatprep.subr.bf16.mxu0 0
      %9543 = vmatpush1.bf16.xpose.msra.mxu0 %v9505
      %9544 = vmatprep.subr.bf16.mxu0 0
      %9545 = vmatpush1.bf16.xpose.msra.mxu0 %v9508
      %9546 = vmatprep.subr.bf16.mxu0 0
      %9547 = vmatpush1.bf16.xpose.msra.mxu0 %v9511
      %9548 = vmatprep.subr.bf16.mxu0 0
      %9549 = vmatpush1.bf16.xpose.msra.mxu0 %v9514
      %9550 = vmatprep.subr.bf16.mxu0 0
      %9551 = vmatpush1.bf16.xpose.msra.mxu0 %v9517
      %9552 = vmatprep.subr.bf16.mxu0 0
      %9553 = vmatpush1.bf16.xpose.msra.mxu0 %v9520
      %9554 = vmatprep.mubr.bf16.mxu0 0
      %9555 = vmatmul.mubr.bf16.gmra.mrb[0].mxu0 %v9472
      %v9556 = vpop.f32.mrb[0].mxu0
      %v9557 = vadd.f32 0.0, %v9556
      %v9558 = vpop.f32.mrb[0].mxu0
      %v9559 = vadd.f32 0.0, %v9558
      %v9560 = vpop.f32.mrb[0].mxu0
      %v9561 = vpop.f32.mrb[0].mxu0
      %9562 = vdwg.mxu0
      %v9563 = vadd.f32 %v8987, %v9557
      %v9564 = vadd.f32 %v8988, %v9559
      %v9565 = vld [vmem:[%s8780] sm:$0xe]
      %v9566 = vld [vmem:[%s8780 + $0xc] sm:$0xe]
      %v9567 = vld [vmem:[%s8780 + $0x18] sm:$0xe]
      %v9568 = vld [vmem:[%s8780 + $0x24] sm:$0xe]
      %v9569 = vld [vmem:[%s8780 + $0x30] sm:$0xe]
      %v9570 = vld [vmem:[%s8780 + $0x3c] sm:$0xe]
      %v9571 = vld [vmem:[%s8780 + $0x48] sm:$0xe]
      %v9572 = vld [vmem:[%s8780 + $0x54] sm:$0xe]
      %v9573 = vld [vmem:[%s8780 + $0x60] sm:$0xe]
      %v9574 = vld [vmem:[%s8780 + $0x6c] sm:$0xe]
      %v9575 = vld [vmem:[%s8780 + $0x78] sm:$0xe]
      %v9576 = vld [vmem:[%s8780 + $0x84] sm:$0xe]
      %v9577 = vld [vmem:[%s8780 + $0x90] sm:$0xe]
      %v9578 = vld [vmem:[%s8780 + $0x9c] sm:$0xe]
      %v9579 = vld [vmem:[%s8780 + $0xa8] sm:$0xe]
      %v9580 = vld [vmem:[%s8780 + $0xb4] sm:$0xe]
      %v9629 = vrot.slane %v9565, 5
      %v9630 = vrot.slane %v9629, 4
      %v9631 = vrot.slane %v8990, 5
      %v9632 = vsel %vm2509, %v9630, %v9631
      %v9633 = vrot.slane %v9631, 4
      %v9634 = vrot.slane %v8991, 5
      %v9635 = vsel %vm2509, %v9633, %v9634
      %v9636 = vrot.slane %v9566, 5
      %v9637 = vrot.slane %v9636, 4
      %v9638 = vrot.slane %v8993, 5
      %v9639 = vsel %vm2509, %v9637, %v9638
      %v9640 = vrot.slane %v9638, 4
      %v9641 = vrot.slane %v8994, 5
      %v9642 = vsel %vm2509, %v9640, %v9641
      %v9643 = vrot.slane %v9567, 5
      %v9644 = vrot.slane %v9643, 4
      %v9645 = vrot.slane %v8996, 5
      %v9646 = vsel %vm2509, %v9644, %v9645
      %v9647 = vrot.slane %v9645, 4
      %v9648 = vrot.slane %v8997, 5
      %v9649 = vsel %vm2509, %v9647, %v9648
      %v9650 = vrot.slane %v9568, 5
      %v9651 = vrot.slane %v9650, 4
      %v9652 = vrot.slane %v8999, 5
      %v9653 = vsel %vm2509, %v9651, %v9652
      %v9654 = vrot.slane %v9652, 4
      %v9655 = vrot.slane %v9000, 5
      %v9656 = vsel %vm2509, %v9654, %v9655
      %v9657 = vrot.slane %v9569, 5
      %v9658 = vrot.slane %v9657, 4
      %v9659 = vrot.slane %v9002, 5
      %v9660 = vsel %vm2509, %v9658, %v9659
      %v9661 = vrot.slane %v9659, 4
      %v9662 = vrot.slane %v9003, 5
      %v9663 = vsel %vm2509, %v9661, %v9662
      %v9664 = vrot.slane %v9570, 5
      %v9665 = vrot.slane %v9664, 4
      %v9666 = vrot.slane %v9005, 5
      %v9667 = vsel %vm2509, %v9665, %v9666
      %v9668 = vrot.slane %v9666, 4
      %v9669 = vrot.slane %v9006, 5
      %v9670 = vsel %vm2509, %v9668, %v9669
      %v9671 = vrot.slane %v9571, 5
      %v9672 = vrot.slane %v9671, 4
      %v9673 = vrot.slane %v9008, 5
      %v9674 = vsel %vm2509, %v9672, %v9673
      %v9675 = vrot.slane %v9673, 4
      %v9676 = vrot.slane %v9009, 5
      %v9677 = vsel %vm2509, %v9675, %v9676
      %v9678 = vrot.slane %v9572, 5
      %v9679 = vrot.slane %v9678, 4
      %v9680 = vrot.slane %v9011, 5
      %v9681 = vsel %vm2509, %v9679, %v9680
      %v9682 = vrot.slane %v9680, 4
      %v9683 = vrot.slane %v9012, 5
      %v9684 = vsel %vm2509, %v9682, %v9683
      %v9685 = vrot.slane %v9573, 5
      %v9686 = vrot.slane %v9685, 4
      %v9687 = vrot.slane %v9014, 5
      %v9688 = vsel %vm2509, %v9686, %v9687
      %v9689 = vrot.slane %v9687, 4
      %v9690 = vrot.slane %v9015, 5
      %v9691 = vsel %vm2509, %v9689, %v9690
      %v9692 = vrot.slane %v9574, 5
      %v9693 = vrot.slane %v9692, 4
      %v9694 = vrot.slane %v9017, 5
      %v9695 = vsel %vm2509, %v9693, %v9694
      %v9696 = vrot.slane %v9694, 4
      %v9697 = vrot.slane %v9018, 5
      %v9698 = vsel %vm2509, %v9696, %v9697
      %v9699 = vrot.slane %v9575, 5
      %v9700 = vrot.slane %v9699, 4
      %v9701 = vrot.slane %v9020, 5
      %v9702 = vsel %vm2509, %v9700, %v9701
      %v9703 = vrot.slane %v9701, 4
      %v9704 = vrot.slane %v9021, 5
      %v9705 = vsel %vm2509, %v9703, %v9704
      %v9706 = vrot.slane %v9576, 5
      %v9707 = vrot.slane %v9706, 4
      %v9708 = vrot.slane %v9023, 5
      %v9709 = vsel %vm2509, %v9707, %v9708
      %v9710 = vrot.slane %v9708, 4
      %v9711 = vrot.slane %v9024, 5
      %v9712 = vsel %vm2509, %v9710, %v9711
      %v9713 = vrot.slane %v9577, 5
      %v9714 = vrot.slane %v9713, 4
      %v9715 = vrot.slane %v9026, 5
      %v9716 = vsel %vm2509, %v9714, %v9715
      %v9717 = vrot.slane %v9715, 4
      %v9718 = vrot.slane %v9027, 5
      %v9719 = vsel %vm2509, %v9717, %v9718
      %v9720 = vrot.slane %v9578, 5
      %v9721 = vrot.slane %v9720, 4
      %v9722 = vrot.slane %v9029, 5
      %v9723 = vsel %vm2509, %v9721, %v9722
      %v9724 = vrot.slane %v9722, 4
      %v9725 = vrot.slane %v9030, 5
      %v9726 = vsel %vm2509, %v9724, %v9725
      %v9727 = vrot.slane %v9579, 5
      %v9728 = vrot.slane %v9727, 4
      %v9729 = vrot.slane %v9032, 5
      %v9730 = vsel %vm2509, %v9728, %v9729
      %v9731 = vrot.slane %v9729, 4
      %v9732 = vrot.slane %v9033, 5
      %v9733 = vsel %vm2509, %v9731, %v9732
      %v9734 = vrot.slane %v9580, 5
      %v9735 = vrot.slane %v9734, 4
      %v9736 = vrot.slane %v9035, 5
      %v9737 = vsel %vm2509, %v9735, %v9736
      %v9738 = vrot.slane %v9736, 4
      %v9739 = vrot.slane %v9036, 5
      %v9740 = vsel %vm2509, %v9738, %v9739
      %s9741 = scalar_lea.vmem %s4, 32
      %v9742 = vld [vmem:[%s9741] sm:$0xf]
      %v9743 = vunpack.c.l.b16 %v9632
      %v9744 = vunpack.c.l.b16 %v9635
      %v9745 = vunpack.c.l.b16 %v9639
      %v9746 = vunpack.c.l.b16 %v9642
      %v9747 = vunpack.c.l.b16 %v9646
      %v9748 = vunpack.c.l.b16 %v9649
      %v9749 = vunpack.c.l.b16 %v9653
      %v9750 = vunpack.c.l.b16 %v9656
      %v9751 = vunpack.c.l.b16 %v9660
      %v9752 = vunpack.c.l.b16 %v9663
      %v9753 = vunpack.c.l.b16 %v9667
      %v9754 = vunpack.c.l.b16 %v9670
      %v9755 = vunpack.c.l.b16 %v9674
      %v9756 = vunpack.c.l.b16 %v9677
      %v9757 = vunpack.c.l.b16 %v9681
      %v9758 = vunpack.c.l.b16 %v9684
      %v9759 = vunpack.c.l.b16 %v9688
      %v9760 = vunpack.c.l.b16 %v9691
      %v9761 = vunpack.c.l.b16 %v9695
      %v9762 = vunpack.c.l.b16 %v9698
      %v9763 = vunpack.c.l.b16 %v9702
      %v9764 = vunpack.c.l.b16 %v9705
      %v9765 = vunpack.c.l.b16 %v9709
      %v9766 = vunpack.c.l.b16 %v9712
      %v9767 = vunpack.c.l.b16 %v9716
      %v9768 = vunpack.c.l.b16 %v9719
      %v9769 = vunpack.c.l.b16 %v9723
      %v9770 = vunpack.c.l.b16 %v9726
      %v9771 = vunpack.c.l.b16 %v9730
      %v9772 = vunpack.c.l.b16 %v9733
      %v9773 = vunpack.c.l.b16 %v9737
      %v9774 = vunpack.c.l.b16 %v9740
      %v9775 = vpack.c.b16 %v9744, %v9743
      %v9776 = vpack.c.b16 %v9746, %v9745
      %v9777 = vpack.c.b16 %v9748, %v9747
      %v9778 = vpack.c.b16 %v9750, %v9749
      %v9779 = vpack.c.b16 %v9752, %v9751
      %v9780 = vpack.c.b16 %v9754, %v9753
      %v9781 = vpack.c.b16 %v9756, %v9755
      %v9782 = vpack.c.b16 %v9758, %v9757
      %v9783 = vpack.c.b16 %v9760, %v9759
      %v9784 = vpack.c.b16 %v9762, %v9761
      %v9785 = vpack.c.b16 %v9764, %v9763
      %v9786 = vpack.c.b16 %v9766, %v9765
      %v9787 = vpack.c.b16 %v9768, %v9767
      %v9788 = vpack.c.b16 %v9770, %v9769
      %v9789 = vpack.c.b16 %v9772, %v9771
      %v9790 = vpack.c.b16 %v9774, %v9773
      %v9792 = vsel %vm1953, %v9742, 0
      %v9795 = vsel %vm1953, %v9775, 0
      %v9798 = vsel %vm1953, %v9776, 0
      %v9801 = vsel %vm1953, %v9777, 0
      %v9804 = vsel %vm1953, %v9778, 0
      %v9807 = vsel %vm1953, %v9779, 0
      %v9810 = vsel %vm1953, %v9780, 0
      %v9813 = vsel %vm1953, %v9781, 0
      %v9816 = vsel %vm1953, %v9782, 0
      %v9819 = vsel %vm1953, %v9783, 0
      %v9822 = vsel %vm1953, %v9784, 0
      %v9825 = vsel %vm1953, %v9785, 0
      %v9828 = vsel %vm1953, %v9786, 0
      %v9831 = vsel %vm1953, %v9787, 0
      %v9834 = vsel %vm1953, %v9788, 0
      %v9837 = vsel %vm1953, %v9789, 0
      %v9840 = vsel %vm1953, %v9790, 0
      %9842 = vmatprep.subr.bf16.mxu0 0
      %9843 = vmatpush1.bf16.xpose.msra.mxu0 %v9795
      %9844 = vmatprep.subr.bf16.mxu0 0
      %9845 = vmatpush1.bf16.xpose.msra.mxu0 %v9798
      %9846 = vmatprep.subr.bf16.mxu0 0
      %9847 = vmatpush1.bf16.xpose.msra.mxu0 %v9801
      %9848 = vmatprep.subr.bf16.mxu0 0
      %9849 = vmatpush1.bf16.xpose.msra.mxu0 %v9804
      %9850 = vmatprep.subr.bf16.mxu0 0
      %9851 = vmatpush1.bf16.xpose.msra.mxu0 %v9807
      %9852 = vmatprep.subr.bf16.mxu0 0
      %9853 = vmatpush1.bf16.xpose.msra.mxu0 %v9810
      %9854 = vmatprep.subr.bf16.mxu0 0
      %9855 = vmatpush1.bf16.xpose.msra.mxu0 %v9813
      %9856 = vmatprep.subr.bf16.mxu0 0
      %9857 = vmatpush1.bf16.xpose.msra.mxu0 %v9816
      %9858 = vmatprep.subr.bf16.mxu0 0
      %9859 = vmatpush1.bf16.xpose.msra.mxu0 %v9819
      %9860 = vmatprep.subr.bf16.mxu0 0
      %9861 = vmatpush1.bf16.xpose.msra.mxu0 %v9822
      %9862 = vmatprep.subr.bf16.mxu0 0
      %9863 = vmatpush1.bf16.xpose.msra.mxu0 %v9825
      %9864 = vmatprep.subr.bf16.mxu0 0
      %9865 = vmatpush1.bf16.xpose.msra.mxu0 %v9828
      %9866 = vmatprep.subr.bf16.mxu0 0
      %9867 = vmatpush1.bf16.xpose.msra.mxu0 %v9831
      %9868 = vmatprep.subr.bf16.mxu0 0
      %9869 = vmatpush1.bf16.xpose.msra.mxu0 %v9834
      %9870 = vmatprep.subr.bf16.mxu0 0
      %9871 = vmatpush1.bf16.xpose.msra.mxu0 %v9837
      %9872 = vmatprep.subr.bf16.mxu0 0
      %9873 = vmatpush1.bf16.xpose.msra.mxu0 %v9840
      %9874 = vmatprep.mubr.bf16.mxu0 0
      %9875 = vmatmul.mubr.bf16.gmra.mrb[0].mxu0 %v9792
      %v9876 = vpop.f32.mrb[0].mxu0
      %v9877 = vadd.f32 0.0, %v9876
      %v9878 = vpop.f32.mrb[0].mxu0
      %v9879 = vadd.f32 0.0, %v9878
      %v9880 = vpop.f32.mrb[0].mxu0
      %v9881 = vpop.f32.mrb[0].mxu0
      %9882 = vdwg.mxu0
      %v9883 = vadd.f32 %v9563, %v9877
      %v9884 = vadd.f32 %v9564, %v9879
      %v9885 = vld [vmem:[%s5] sm:$0xff]
      %9887 = vset.pattern.permute.xlu0 0
      %9888 = vperm.xlu0 %9887, %v9885
      %v9889 = vpop.permute.xlu0 %9888
      %v9891 = vadd.f32 %v9883, %v9889
      %v9892 = vadd.f32 %v9884, %v9889
      %v9893 = vmax.f32 %v9891, 0.0
      %v9894 = vmax.f32 %v9892, 0.0
      %v9895 = vadd.f32 %v9893, %v9894
      %9896 = vadd.xlane.f32.xlu0 %v9895
      %v9897 = vpop.xlane.xlu0 %9896
      %v9898 = vrcp.pop 256.0
      %v9899 = vmul.f32 %v9897, %v9898
      %v9900 = vld [vmem:[%s6] sm:$0xf]
      %v9901 = vld [vmem:[%s7] sm:$0xf]
      %v9903 = vsel %vm1953, %v9900, 0
      %9905 = vmatprep.subr.mxu0 0.0
      %9906 = vmatpush1.msra.mxu0 %v9899
      %9907 = vmatprep.subr.mxu0 0.0
      %9908 = vmatpush1.msra.mxu0 0.0
      %9909 = vmatprep.subr.mxu0 0.0
      %9910 = vmatpush1.msra.mxu0 0.0
      %9911 = vmatprep.subr.mxu0 0.0
      %9912 = vmatpush1.msra.mxu0 0.0
      %9913 = vmatprep.subr.mxu0 0.0
      %9914 = vmatpush1.msra.mxu0 0.0
      %9915 = vmatprep.subr.mxu0 0.0
      %9916 = vmatpush1.msra.mxu0 0.0
      %9917 = vmatprep.subr.mxu0 0.0
      %9918 = vmatpush1.msra.mxu0 0.0
      %9919 = vmatprep.subr.mxu0 0.0
      %9920 = vmatpush1.msra.mxu0 0.0
      %9921 = vmatprep.subr.mxu0 0.0
      %9922 = vmatpush1.msra.mxu0 0.0
      %9923 = vmatprep.subr.mxu0 0.0
      %9924 = vmatpush1.msra.mxu0 0.0
      %9925 = vmatprep.subr.mxu0 0.0
      %9926 = vmatpush1.msra.mxu0 0.0
      %9927 = vmatprep.subr.mxu0 0.0
      %9928 = vmatpush1.msra.mxu0 0.0
      %9929 = vmatprep.subr.mxu0 0.0
      %9930 = vmatpush1.msra.mxu0 0.0
      %9931 = vmatprep.subr.mxu0 0.0
      %9932 = vmatpush1.msra.mxu0 0.0
      %9933 = vmatprep.subr.mxu0 0.0
      %9934 = vmatpush1.msra.mxu0 0.0
      %9935 = vmatprep.subr.mxu0 0.0
      %9936 = vmatpush1.msra.mxu0 0.0
      %9937 = vmatprep.subr.mxu0 0.0
      %9938 = vmatpush1.msra.mxu0 0.0
      %9939 = vmatprep.subr.mxu0 0.0
      %9940 = vmatpush1.msra.mxu0 0.0
      %9941 = vmatprep.subr.mxu0 0.0
      %9942 = vmatpush1.msra.mxu0 0.0
      %9943 = vmatprep.subr.mxu0 0.0
      %9944 = vmatpush1.msra.mxu0 0.0
      %9945 = vmatprep.subr.mxu0 0.0
      %9946 = vmatpush1.msra.mxu0 0.0
      %9947 = vmatprep.subr.mxu0 0.0
      %9948 = vmatpush1.msra.mxu0 0.0
      %9949 = vmatprep.subr.mxu0 0.0
      %9950 = vmatpush1.msra.mxu0 0.0
      %9951 = vmatprep.subr.mxu0 0.0
      %9952 = vmatpush1.msra.mxu0 0.0
      %9953 = vmatprep.subr.mxu0 0.0
      %9954 = vmatpush1.msra.mxu0 0.0
      %9955 = vmatprep.subr.mxu0 0.0
      %9956 = vmatpush1.msra.mxu0 0.0
      %9957 = vmatprep.subr.mxu0 0.0
      %9958 = vmatpush1.msra.mxu0 0.0
      %9959 = vmatprep.subr.mxu0 0.0
      %9960 = vmatpush1.msra.mxu0 0.0
      %9961 = vmatprep.subr.mxu0 0.0
      %9962 = vmatpush1.msra.mxu0 0.0
      %9963 = vmatprep.subr.mxu0 0.0
      %9964 = vmatpush1.msra.mxu0 0.0
      %9965 = vmatprep.subr.mxu0 0.0
      %9966 = vmatpush1.msra.mxu0 0.0
      %9967 = vmatprep.subr.mxu0 0.0
      %9968 = vmatpush1.msra.mxu0 0.0
      %9969 = vmatprep.mubr.f32.mxu0 0.0
      %9970 = vmatmul.mubr.f32.gmra.mrb[0].mxu0 %v9903
      %v9971 = vpop.f32.mrb[0].mxu0
      %v9972 = vadd.f32 %v9901, %v9971
      %v9973 = vpop.f32.mrb[0].mxu0
      %9974 = vdwg.mxu0
      %v9975 = vmax.f32 %v9972, 0.0
      %v9976 = vld [vmem:[%s8] sm:$0xff]
      %v9977 = vld [vmem:[%s9] sm:$0xff]
      %v9979 = vsel %vm901, %v9976, 0
      %v9982 = vsel %vm2002, %v9975, 0
      %9984 = vmatprep.subr.mxu0 0.0
      %9985 = vmatpush1.msra.mxu0 %v9982
      %9986 = vmatprep.subr.mxu0 0.0
      %9987 = vmatpush1.msra.mxu0 0.0
      %9988 = vmatprep.subr.mxu0 0.0
      %9989 = vmatpush1.msra.mxu0 0.0
      %9990 = vmatprep.subr.mxu0 0.0
      %9991 = vmatpush1.msra.mxu0 0.0
      %9992 = vmatprep.subr.mxu0 0.0
      %9993 = vmatpush1.msra.mxu0 0.0
      %9994 = vmatprep.subr.mxu0 0.0
      %9995 = vmatpush1.msra.mxu0 0.0
      %9996 = vmatprep.subr.mxu0 0.0
      %9997 = vmatpush1.msra.mxu0 0.0
      %9998 = vmatprep.subr.mxu0 0.0
      %9999 = vmatpush1.msra.mxu0 0.0
      %10000 = vmatprep.subr.mxu0 0.0
      %10001 = vmatpush1.msra.mxu0 0.0
      %10002 = vmatprep.subr.mxu0 0.0
      %10003 = vmatpush1.msra.mxu0 0.0
      %10004 = vmatprep.subr.mxu0 0.0
      %10005 = vmatpush1.msra.mxu0 0.0
      %10006 = vmatprep.subr.mxu0 0.0
      %10007 = vmatpush1.msra.mxu0 0.0
      %10008 = vmatprep.subr.mxu0 0.0
      %10009 = vmatpush1.msra.mxu0 0.0
      %10010 = vmatprep.subr.mxu0 0.0
      %10011 = vmatpush1.msra.mxu0 0.0
      %10012 = vmatprep.subr.mxu0 0.0
      %10013 = vmatpush1.msra.mxu0 0.0
      %10014 = vmatprep.subr.mxu0 0.0
      %10015 = vmatpush1.msra.mxu0 0.0
      %10016 = vmatprep.subr.mxu0 0.0
      %10017 = vmatpush1.msra.mxu0 0.0
      %10018 = vmatprep.subr.mxu0 0.0
      %10019 = vmatpush1.msra.mxu0 0.0
      %10020 = vmatprep.subr.mxu0 0.0
      %10021 = vmatpush1.msra.mxu0 0.0
      %10022 = vmatprep.subr.mxu0 0.0
      %10023 = vmatpush1.msra.mxu0 0.0
      %10024 = vmatprep.subr.mxu0 0.0
      %10025 = vmatpush1.msra.mxu0 0.0
      %10026 = vmatprep.subr.mxu0 0.0
      %10027 = vmatpush1.msra.mxu0 0.0
      %10028 = vmatprep.subr.mxu0 0.0
      %10029 = vmatpush1.msra.mxu0 0.0
      %10030 = vmatprep.subr.mxu0 0.0
      %10031 = vmatpush1.msra.mxu0 0.0
      %10032 = vmatprep.subr.mxu0 0.0
      %10033 = vmatpush1.msra.mxu0 0.0
      %10034 = vmatprep.subr.mxu0 0.0
      %10035 = vmatpush1.msra.mxu0 0.0
      %10036 = vmatprep.subr.mxu0 0.0
      %10037 = vmatpush1.msra.mxu0 0.0
      %10038 = vmatprep.subr.mxu0 0.0
      %10039 = vmatpush1.msra.mxu0 0.0
      %10040 = vmatprep.subr.mxu0 0.0
      %10041 = vmatpush1.msra.mxu0 0.0
      %10042 = vmatprep.subr.mxu0 0.0
      %10043 = vmatpush1.msra.mxu0 0.0
      %10044 = vmatprep.subr.mxu0 0.0
      %10045 = vmatpush1.msra.mxu0 0.0
      %10046 = vmatprep.subr.mxu0 0.0
      %10047 = vmatpush1.msra.mxu0 0.0
      %10048 = vmatprep.mubr.f32.mxu0 0.0
      %10049 = vmatmul.mubr.f32.gmra.mrb[0].mxu0 %v9979
      %v10050 = vpop.f32.mrb[0].mxu0
      %v10051 = vadd.f32 %v9977, %v10050
      %v10052 = vpop.f32.mrb[0].mxu0
      %10053 = vdwg.mxu0
      %v10054 = vxor.u32 %v10051, 2147483648
      %v10055 = vmul.f32 %v10054, 1.442695
      %v10056 = vpow.pop %v10055
      %v10057 = vadd.f32 %v10056, 1.0
      %v10058 = vrcp.pop %v10057
      %v10059 = vmul.f32 1.0, %v10058
      %v10060 = vld [vmem:[%s10] sm:$0xff]
      %10062 = vset.pattern.permute.xlu0 0
      %10063 = vperm.xlu0 %10062, %v10060
      %v10064 = vpop.permute.xlu0 %10063
      %v10066 = vmul.f32 %v9893, %v10064
      %v10067 = vmul.f32 %v9894, %v10064
      %v10068 = vrot.slane %v10066, 4
      %v10069 = vadd.f32 %v10066, %v10068
      %v10070 = vrot.slane %v10069, 2
      %v10071 = vadd.f32 %v10069, %v10070
      %v10072 = vrot.slane %v10071, 1
      %v10073 = vadd.f32 %v10071, %v10072
      %v10074 = vrot.slane %v10067, 4
      %v10075 = vadd.f32 %v10067, %v10074
      %v10076 = vrot.slane %v10075, 2
      %v10077 = vadd.f32 %v10075, %v10076
      %v10078 = vrot.slane %v10077, 1
      %v10079 = vadd.f32 %v10077, %v10078
      %v10080 = vxor.u32 %v10073, 2147483648
      %v10081 = vxor.u32 %v10079, 2147483648
      %v10082 = vmul.f32 %v10080, 1.442695
      %v10083 = vpow.pop %v10082
      %v10084 = vmul.f32 %v10081, 1.442695
      %v10085 = vpow.pop %v10084
      %v10086 = vadd.f32 %v10083, 1.0
      %v10087 = vadd.f32 %v10085, 1.0
      %v10088 = vrcp.pop %v10086
      %v10089 = vmul.f32 1.0, %v10088
      %v10090 = vrcp.pop %v10087
      %v10091 = vmul.f32 1.0, %v10090
      %10093 = vset.pattern.permute.xlu0 0
      %10094 = vperm.xlu0 %10093, %v10059
      %v10095 = vpop.permute.xlu0 %10094
      %v10097 = vmul.f32 %v9893, %v10095
      %v10098 = vmul.f32 %v9894, %v10095
      %v10099 = vmul.f32 %v10097, %v10089
      %v10100 = vmul.f32 %v10098, %v10091
      %10101 = vst [vmem:[%s406] sm:$0xff] %v10099
      %10102 = vst [vmem:[%s406 + $0x8] sm:$0xff] %v10100
      %p10103 = scmp.lt.s32.totalorder %s22, 1
      %s10104 = scalar_select %p10103, %s22, 1
      %s10105 = smul.addr %s10104, 2
      %s10106 = smul.addr %s10105, 8
      %s10107 = scalar_lea.vmem %s11, %s10106
      // Predicated region
      $region65: #{decoder_forward.1} parent=63 // pred_check
        %p10108 = pneg %p281
      $region66: #{decoder_forward.1} parent=63 // pred_check_branch
        %10110 = sbr.rel (%p10108) target = $region68
      $region67: #{decoder_forward.1} parent=63 // pred_region
        _
      $region68: #{decoder_forward.1} parent=63 // pred_fallthru
        _
    $region64: #{decoder_forward.1} parent=5 // pred_fallthru
      _
    %p10111 = scmp.le.s32.totalorder 2, %s17
    // Predicated region
    $region69: #{decoder_forward.1} parent=5 // pred_check
      %p10112 = pneg %p10111
    $region70: #{decoder_forward.1} parent=5 // pred_check_branch
      %10114 = sbr.rel (%p10112) target = $region72
    $region71: #{decoder_forward.1} parent=5 // pred_region
      %s10115 = ssub.s32 %s17, 2
      // Predicated region
      $region73: #{decoder_forward.1} parent=71 // pred_check
        %p10116 = pneg %p287
      $region74: #{decoder_forward.1} parent=71 // pred_check_branch
        %10118 = sbr.rel (%p10116) target = $region76
      $region75: #{decoder_forward.1} parent=71 // pred_region
        %p10119 = scmp.lt.s32.totalorder %s23, 1
        %s10120 = scalar_select %p10119, %s23, 1
        %s10121 = smul.addr %s10120, 2
        %s10122 = smul.addr %s10121, 8
        %s10123 = scalar_lea.vmem %s11, %s10122
      $region76: #{decoder_forward.1} parent=71 // pred_fallthru
        _
    $region72: #{decoder_forward.1} parent=5 // pred_fallthru
      _
  $region6: #{decoder_forward.1} parent=0 // loop_footer
    %s21 = sadd.s32 1, %s17
  $region7: #{decoder_forward.1} parent=0 // loop_footer_branch
    %16 = sbr.rel target = $region3
  $region8: #{decoder_forward.1} parent=0 // loop_exit
    _

</llo_original>
